<compile_context>
chip_gen: v7x
topology: tpu7x:2x2x1
jax: 0.10.0
libtpu: 0.0.40
codegen_flags: <defaults>
</compile_context>

<pallas_src>
import functools
import math

import jax
import jax.numpy as jnp
from jax.experimental import pallas as pl
from jax.experimental.pallas import tpu as pltpu

# ----------------------------- synthetic config -----------------------------
B       = 2      # batch
L_TXT   = 16     # text sequence length
T_AUD   = 16     # audio patches ("AST" sequence length)
F_AUD   = 32     # per-patch audio feature size
D_AUD   = 64     # audio hidden  (analogue of AST 768)
D_LM    = 128    # LM hidden     (analogue of BERT-large 1024 -> exercises self.linear)
H_AUD   = 4      # audio attention heads
H_LM    = 4      # LM attention heads
FF_AUD  = 128
FF_LM   = 256
VOCAB   = 256
MAX_POS = 64
MASK_ID   = 5    # tokenizer.mask_token_id
LOWER_ID  = 10   # tokenizer id of 'lower'
HIGHER_ID = 11   # tokenizer id of 'higher'

LN_EPS = 1e-12

# ------------------------------ Pallas kernels ------------------------------


def _layernorm(x, gamma, beta):
    mu = jnp.mean(x, axis=-1, keepdims=True)
    var = jnp.mean((x - mu) ** 2, axis=-1, keepdims=True)
    return (x - mu) * jax.lax.rsqrt(var + LN_EPS) * gamma + beta


def _linear_kernel(x_ref, w_ref, b_ref, o_ref, *, activation):
    x = x_ref[...].astype(jnp.float32)
    w = w_ref[...].astype(jnp.float32)
    y = jnp.dot(x, w, preferred_element_type=jnp.float32) + b_ref[...]
    if activation == "gelu":
        # TODO(synk): HF BERT/AST default is the exact erf GELU; tanh approx kept
        # for guaranteed Mosaic lowering.
        y = jax.nn.gelu(y, approximate=True)
    o_ref[...] = y.astype(o_ref.dtype)


def linear(x, w, b, activation=None, block_n=512):
    """x: (M, K) @ w: (K, N) + b: (N,) -> (M, N).  N-tiled when N is large so the
    same kernel stays VMEM-safe at real model scale (v7x has 64 MiB VMEM)."""
    M, K = x.shape
    _, N = w.shape
    bn = N if N <= block_n else block_n
    assert N % bn == 0
    return pl.pallas_call(
        functools.partial(_linear_kernel, activation=activation),
        out_shape=jax.ShapeDtypeStruct((M, N), jnp.float32),
        grid=(N // bn,),
        in_specs=[pl.BlockSpec((M, K), lambda j: (0, 0)),
                  pl.BlockSpec((K, bn), lambda j: (0, j)),
                  pl.BlockSpec((1, bn), lambda j: (0, j))],
        out_specs=pl.BlockSpec((M, bn), lambda j: (0, j)),
        compiler_params=pltpu.CompilerParams(dimension_semantics=("parallel",)),
    )(x, w, b.reshape(1, N))


def _add_ln_kernel(a_ref, b_ref, g_ref, be_ref, o_ref):
    x = a_ref[...].astype(jnp.float32) + b_ref[...].astype(jnp.float32)
    o_ref[...] = _layernorm(x, g_ref[...], be_ref[...]).astype(o_ref.dtype)


def add_layernorm(a, b, gamma, beta):
    """LayerNorm(a + b) over last dim.  a, b: (M, D)."""
    M, D = a.shape
    return pl.pallas_call(
        _add_ln_kernel,
        out_shape=jax.ShapeDtypeStruct((M, D), jnp.float32),
        grid=(1,),
        in_specs=[pl.BlockSpec((M, D), lambda i: (0, 0)),
                  pl.BlockSpec((M, D), lambda i: (0, 0)),
                  pl.BlockSpec((1, D), lambda i: (0, 0)),
                  pl.BlockSpec((1, D), lambda i: (0, 0))],
        out_specs=pl.BlockSpec((M, D), lambda i: (0, 0)),
    )(a, b, gamma.reshape(1, D), beta.reshape(1, D))


def _proj_add_ln_kernel(x_ref, res_ref, w_ref, b_ref, g_ref, be_ref, o_ref):
    """LayerNorm(x @ w + b + res): fuses a projection, residual add and LN."""
    x = jnp.dot(x_ref[...].astype(jnp.float32), w_ref[...].astype(jnp.float32),
                preferred_element_type=jnp.float32)
    x = x + b_ref[...] + res_ref[...].astype(jnp.float32)
    o_ref[...] = _layernorm(x, g_ref[...], be_ref[...]).astype(o_ref.dtype)


def proj_add_ln(x, res, w, b, gamma, beta):
    M, K = x.shape
    _, N = w.shape
    return pl.pallas_call(
        _proj_add_ln_kernel,
        out_shape=jax.ShapeDtypeStruct((M, N), jnp.float32),
        grid=(1,),
        in_specs=[pl.BlockSpec((M, K), lambda i: (0, 0)),
                  pl.BlockSpec((M, N), lambda i: (0, 0)),
                  pl.BlockSpec((K, N), lambda i: (0, 0)),
                  pl.BlockSpec((1, N), lambda i: (0, 0)),
                  pl.BlockSpec((1, N), lambda i: (0, 0)),
                  pl.BlockSpec((1, N), lambda i: (0, 0))],
        out_specs=pl.BlockSpec((M, N), lambda i: (0, 0)),
    )(x, res, w, b.reshape(1, N), gamma.reshape(1, N), beta.reshape(1, N))


def _ffn_ln_kernel(h_ref, w1_ref, b1_ref, w2_ref, b2_ref, g_ref, be_ref, o_ref):
    """LayerNorm(h + gelu(h@w1+b1)@w2 + b2): the (M, FF) intermediate stays in VMEM."""
    h = h_ref[...].astype(jnp.float32)
    ff = jnp.dot(h, w1_ref[...].astype(jnp.float32),
                 preferred_element_type=jnp.float32) + b1_ref[...]
    ff = jax.nn.gelu(ff, approximate=True)
    x = jnp.dot(ff, w2_ref[...].astype(jnp.float32),
                preferred_element_type=jnp.float32) + b2_ref[...] + h
    o_ref[...] = _layernorm(x, g_ref[...], be_ref[...]).astype(o_ref.dtype)


def ffn_ln(h, w1, b1, w2, b2, gamma, beta):
    # TODO(synk): at real BERT scale (D=1024, FF=4096) tile this over FF/N.
    M, D = h.shape
    FF = w1.shape[1]
    return pl.pallas_call(
        _ffn_ln_kernel,
        out_shape=jax.ShapeDtypeStruct((M, D), jnp.float32),
        grid=(1,),
        in_specs=[pl.BlockSpec((M, D), lambda i: (0, 0)),
                  pl.BlockSpec((D, FF), lambda i: (0, 0)),
                  pl.BlockSpec((1, FF), lambda i: (0, 0)),
                  pl.BlockSpec((FF, D), lambda i: (0, 0)),
                  pl.BlockSpec((1, D), lambda i: (0, 0)),
                  pl.BlockSpec((1, D), lambda i: (0, 0)),
                  pl.BlockSpec((1, D), lambda i: (0, 0))],
        out_specs=pl.BlockSpec((M, D), lambda i: (0, 0)),
    )(h, w1, b1.reshape(1, FF), w2, b2.reshape(1, D),
      gamma.reshape(1, D), beta.reshape(1, D))


def _attn_kernel(q_ref, k_ref, v_ref, o_ref, *, scale):
    q = q_ref[...].astype(jnp.float32)                       # (BH, L, Dh)
    k = k_ref[...].astype(jnp.float32)
    v = v_ref[...].astype(jnp.float32)
    s = jnp.einsum("bqd,bkd->bqk", q, k,
                   preferred_element_type=jnp.float32) * scale
    m = jnp.max(s, axis=-1, keepdims=True)
    p = jnp.exp(s - m)
    l = jnp.sum(p, axis=-1, keepdims=True)
    ctx = jnp.einsum("bqk,bkd->bqd", p, v, preferred_element_type=jnp.float32)
    o_ref[...] = (ctx * pl.reciprocal(l, approx=True)).astype(o_ref.dtype)


def attention(q, k, v):
    """q, k, v: (B*H, L, Dh) -> (B*H, L, Dh); one batched call over all heads."""
    BH, L, Dh = q.shape
    scale = 1.0 / math.sqrt(Dh)
    spec = pl.BlockSpec((BH, L, Dh), lambda i: (0, 0, 0))
    return pl.pallas_call(
        functools.partial(_attn_kernel, scale=scale),
        out_shape=jax.ShapeDtypeStruct((BH, L, Dh), jnp.float32),
        grid=(1,),
        in_specs=[spec, spec, spec],
        out_specs=spec,
    )(q, k, v)


def _pool_proj_kernel(pm_ref, x_ref, w_ref, b_ref, o_ref):
    # mean over T expressed as a tiny matmul (pm is the 1/T pooling matrix),
    # fused with the D_AUD -> D_LM projection: lane-dense (Bn, 128) output.
    m = jnp.dot(pm_ref[...], x_ref[...].astype(jnp.float32),
                preferred_element_type=jnp.float32)
    o_ref[...] = (jnp.dot(m, w_ref[...].astype(jnp.float32),
                          preferred_element_type=jnp.float32)
                  + b_ref[...]).astype(o_ref.dtype)


def pool_proj(x, w, b):
    """x: (Bn, T, D) -> mean over T -> @ w (D, N) + b -> (Bn, N)."""
    Bn, T, D = x.shape
    N = w.shape[1]
    pm = jnp.repeat(jnp.eye(Bn, dtype=jnp.float32), T, axis=1) / float(T)  # (Bn, Bn*T)
    x2 = x.reshape(Bn * T, D)
    return pl.pallas_call(
        _pool_proj_kernel,
        out_shape=jax.ShapeDtypeStruct((Bn, N), jnp.float32),
        grid=(1,),
        in_specs=[pl.BlockSpec((Bn, Bn * T), lambda i: (0, 0)),
                  pl.BlockSpec((Bn * T, D), lambda i: (0, 0)),
                  pl.BlockSpec((D, N), lambda i: (0, 0)),
                  pl.BlockSpec((1, N), lambda i: (0, 0))],
        out_specs=pl.BlockSpec((Bn, N), lambda i: (0, 0)),
    )(pm, x2, w, b.reshape(1, N))


def _mlm_head_kernel(h_ref, w_ref, b_ref, g_ref, be_ref, dw_ref, db_ref, o_ref):
    h = h_ref[...].astype(jnp.float32)
    t = jnp.dot(h, w_ref[...].astype(jnp.float32),
                preferred_element_type=jnp.float32) + b_ref[...]
    t = jax.nn.gelu(t, approximate=True)
    t = _layernorm(t, g_ref[...], be_ref[...])
    o_ref[...] = (jnp.dot(t, dw_ref[...].astype(jnp.float32),
                          preferred_element_type=jnp.float32)
                  + db_ref[...]).astype(o_ref.dtype)


def mlm_head(h, lmp):
    """Fused MLM head: dense + GELU + LayerNorm + vocab decoder."""
    # TODO(synk): at real vocab size (~30k) tile the decoder matmul over N.
    M, D = h.shape
    V = lmp["dec_w"].shape[1]
    return pl.pallas_call(
        _mlm_head_kernel,
        out_shape=jax.ShapeDtypeStruct((M, V), jnp.float32),
        grid=(1,),
        in_specs=[pl.BlockSpec((M, D), lambda i: (0, 0)),
                  pl.BlockSpec((D, D), lambda i: (0, 0)),
                  pl.BlockSpec((1, D), lambda i: (0, 0)),
                  pl.BlockSpec((1, D), lambda i: (0, 0)),
                  pl.BlockSpec((1, D), lambda i: (0, 0)),
                  pl.BlockSpec((D, V), lambda i: (0, 0)),
                  pl.BlockSpec((1, V), lambda i: (0, 0))],
        out_specs=pl.BlockSpec((M, V), lambda i: (0, 0)),
    )(h, lmp["head_w"], lmp["head_b"].reshape(1, D),
      lmp["head_ln_g"].reshape(1, D), lmp["head_ln_b"].reshape(1, D),
      lmp["dec_w"], lmp["dec_b"].reshape(1, V))


def _scatter_kernel(idx_ref, lm_ref, audio_ref, o_ref):
    # Per-batch row replacement: lm[b, idx[b,0]] = audio[b,0]; lm[b, idx[b,1]] = audio[b,1].
    # Indices are scalar-prefetched into SMEM; the select is a broadcasted-iota
    # mask + jnp.where entirely in VMEM (no aliasing, no manual DMA needed).
    b = pl.program_id(0)
    i1 = idx_ref[b, 0]
    i2 = idx_ref[b, 1]
    lm = lm_ref[...].astype(jnp.float32)                     # (1, L, D)
    a1 = audio_ref[:, 0:1, :].astype(jnp.float32)            # (1, 1, D)
    a2 = audio_ref[:, 1:2, :].astype(jnp.float32)            # (1, 1, D)
    rows = jax.lax.broadcasted_iota(jnp.int32, lm.shape, 1)  # seq index per element
    out = jnp.where(rows == i1, a1, lm)
    out = jnp.where(rows == i2, a2, out)
    o_ref[...] = out.astype(o_ref.dtype)


def scatter_audio(lm_embs, audio_vecs, first_token_pos):
    """Row scatter: out[b, first_token_pos[b, s]] = audio_vecs[b, s], else lm_embs."""
    Bn, L, D = lm_embs.shape
    return pl.pallas_call(
        _scatter_kernel,
        out_shape=jax.ShapeDtypeStruct((Bn, L, D), jnp.float32),
        grid_spec=pltpu.PrefetchScalarGridSpec(
            num_scalar_prefetch=1,
            grid=(Bn,),
            in_specs=[pl.BlockSpec((1, L, D), lambda b, idx: (b, 0, 0)),
                      pl.BlockSpec((1, 2, D), lambda b, idx: (b, 0, 0))],
            out_specs=pl.BlockSpec((1, L, D), lambda b, idx: (b, 0, 0))),
        compiler_params=pltpu.CompilerParams(dimension_semantics=("parallel",)),
    )(first_token_pos.astype(jnp.int32), lm_embs, audio_vecs)

# ------------------------ model pieces (glue + kernels) ----------------------


def transformer_layer(x, p, num_heads):
    Bn, L, D = x.shape
    Dh = D // num_heads
    x2 = x.reshape(Bn * L, D)

    # fused QKV projection: one (D, 3D) matmul instead of three lane-thin ones.
    qkv = linear(x2, p["wqkv"], p["bqkv"])                       # (Bn*L, 3D)
    qkv = qkv.reshape(Bn, L, 3, num_heads, Dh).transpose(2, 0, 3, 1, 4)  # (3, Bn, H, L, Dh)
    q = qkv[0].reshape(Bn * num_heads, L, Dh)
    k = qkv[1].reshape(Bn * num_heads, L, Dh)
    v = qkv[2].reshape(Bn * num_heads, L, Dh)

    ctx = attention(q, k, v)                                     # (Bn*H, L, Dh)
    ctx = (ctx.reshape(Bn, num_heads, L, Dh)
              .transpose(0, 2, 1, 3)
              .reshape(Bn * L, D))

    # fused: output proj + residual + LayerNorm
    h = proj_add_ln(ctx, x2, p["wo"], p["bo"], p["ln1_g"], p["ln1_b"])
    # fused: FFN + residual + LayerNorm
    out = ffn_ln(h, p["w1"], p["b1"], p["w2"], p["b2"], p["ln2_g"], p["ln2_b"])
    return out.reshape(Bn, L, D)


def audio_encoder(p, audio_features):
    # TODO(synk): AST's Conv2d patch embedding, CLS/distill tokens and 12-layer
    # stack are reduced to a per-patch linear projection + 1 transformer layer.
    Bn, T, F = audio_features.shape
    pos = jnp.broadcast_to(p["pos"][None], (Bn, T, D_AUD)).reshape(Bn * T, D_AUD)
    # fused: patch projection + positional add + LayerNorm
    h = proj_add_ln(audio_features.reshape(Bn * T, F), pos,
                    p["patch_w"], p["patch_b"], p["emb_ln_g"], p["emb_ln_b"])
    h = transformer_layer(h.reshape(Bn, T, D_AUD), p["layer"], H_AUD)
    return h  # last_hidden_state analogue: (Bn, T_AUD, D_AUD)


def bert_embeddings(p, input_ids):
    # TODO(synk): dropout and LoRA adapters (zero-init => identity) omitted.
    Bn, L = input_ids.shape
    word = jnp.take(p["word"], input_ids, axis=0)              # (B, L, D_LM) gather (glue)
    other = p["pos"][:L] + p["type"][0][None]                  # (L, D_LM)
    a = word.reshape(Bn * L, D_LM)
    b = jnp.broadcast_to(other[None], (Bn, L, D_LM)).reshape(Bn * L, D_LM)
    h = add_layernorm(a, b, p["emb_ln_g"], p["emb_ln_b"])
    return h.reshape(Bn, L, D_LM)


def ak_bert_forward(params, audio_features_1, audio_features_2,
                    first_token_pos, input_ids, targets):
    # mask_token_index: exactly one [MASK] per row by construction (boolean
    # fancy-indexing of the PyTorch code would be dynamic-shape under jit).
    mask_pos = jnp.argmax((input_ids == MASK_ID).astype(jnp.int32), axis=1)

    lm_embs = bert_embeddings(params["lm"], input_ids)               # (B, L, D_LM)

    # both audio streams in one encoder pass (concat along batch).
    audio_in = jnp.concatenate([audio_features_1, audio_features_2], axis=0)  # (2B, T, F)
    a = audio_encoder(params["audio"], audio_in)                     # (2B, T, D_AUD)
    # fused mean-pool over T + 'large' model projection (self.linear analogue).
    av = pool_proj(a, params["proj_w"], params["proj_b"])            # (2B, D_LM)
    audio_vecs = jnp.stack([av[:B], av[B:]], axis=1)                 # (B, 2, D_LM)

    lm_embs = scatter_audio(lm_embs, audio_vecs, first_token_pos)    # (B, L, D_LM)

    # language encoder on inputs_embeds + fused MLM head.
    h = transformer_layer(lm_embs, params["lm"]["layer"], H_LM)
    logits = mlm_head(h.reshape(B * L_TXT, D_LM), params["lm"]).reshape(B, L_TXT, VOCAB)

    # masked-LM cross entropy (ignore_index = -100), like outputs.loss.
    logp = jax.nn.log_softmax(logits, axis=-1)
    valid = (targets != -100)
    tgt = jnp.where(valid, targets, 0)
    nll = -jnp.take_along_axis(logp, tgt[..., None], axis=-1)[..., 0]
    loss = jnp.sum(nll * valid) / jnp.maximum(jnp.sum(valid), 1)

    # logits[mask_token_index][..., [lower, higher]] -> argmax -> token id.
    masked_logits = logits[jnp.arange(B), mask_pos]                  # (B, VOCAB)
    lower_higher = masked_logits[:, jnp.array([LOWER_ID, HIGHER_ID])]
    predicted_index = jnp.argmax(lower_higher, axis=-1)
    predicted_token_id = jnp.where(predicted_index == 0, LOWER_ID, HIGHER_ID).astype(jnp.int32)

    return (loss, logits), predicted_token_id

# ------------------------------- parameters ---------------------------------


def init_params(key):
    keys = iter(jax.random.split(key, 32))

    def dense(din, dout):
        w = 0.02 * jax.random.normal(next(keys), (din, dout), jnp.float32)
        return w, jnp.zeros((dout,), jnp.float32)

    def layer_params(d, dff):
        wq, bq = dense(d, d); wk, bk = dense(d, d); wv, bv = dense(d, d)
        wqkv = jnp.concatenate([wq, wk, wv], axis=1)       # fused QKV weight (d, 3d)
        bqkv = jnp.concatenate([bq, bk, bv], axis=0)
        wo, bo = dense(d, d)
        w1, b1 = dense(d, dff); w2, b2 = dense(dff, d)
        return dict(wqkv=wqkv, bqkv=bqkv, wo=wo, bo=bo,
                    w1=w1, b1=b1, w2=w2, b2=b2,
                    ln1_g=jnp.ones((d,), jnp.float32), ln1_b=jnp.zeros((d,), jnp.float32),
                    ln2_g=jnp.ones((d,), jnp.float32), ln2_b=jnp.zeros((d,), jnp.float32))

    patch_w, patch_b = dense(F_AUD, D_AUD)
    audio = dict(
        patch_w=patch_w, patch_b=patch_b,
        pos=0.02 * jax.random.normal(next(keys), (T_AUD, D_AUD), jnp.float32),
        emb_ln_g=jnp.ones((D_AUD,), jnp.float32), emb_ln_b=jnp.zeros((D_AUD,), jnp.float32),
        layer=layer_params(D_AUD, FF_AUD))

    head_w, head_b = dense(D_LM, D_LM)
    dec_w, dec_b = dense(D_LM, VOCAB)
    lm = dict(
        word=0.02 * jax.random.normal(next(keys), (VOCAB, D_LM), jnp.float32),
        pos=0.02 * jax.random.normal(next(keys), (MAX_POS, D_LM), jnp.float32),
        type=0.02 * jax.random.normal(next(keys), (2, D_LM), jnp.float32),
        emb_ln_g=jnp.ones((D_LM,), jnp.float32), emb_ln_b=jnp.zeros((D_LM,), jnp.float32),
        layer=layer_params(D_LM, FF_LM),
        head_w=head_w, head_b=head_b,
        head_ln_g=jnp.ones((D_LM,), jnp.float32), head_ln_b=jnp.zeros((D_LM,), jnp.float32),
        dec_w=dec_w, dec_b=dec_b)

    proj_w, proj_b = dense(D_AUD, D_LM)   # self.linear (768 -> 1024 analogue)
    return dict(audio=audio, lm=lm, proj_w=proj_w, proj_b=proj_b)

# ---------------------------------- main -------------------------------------

if __name__ == "__main__":
    key = jax.random.PRNGKey(0)
    pkey, k1, k2, k3 = jax.random.split(key, 4)
    params = init_params(pkey)

    audio_features_1 = jax.random.normal(k1, (B, T_AUD, F_AUD), jnp.float32)
    audio_features_2 = jax.random.normal(k2, (B, T_AUD, F_AUD), jnp.float32)

    input_ids = jax.random.randint(k3, (B, L_TXT), 20, VOCAB, dtype=jnp.int32)
    mask_positions = jnp.array([7, 9], dtype=jnp.int32)       # one [MASK] per row
    input_ids = input_ids.at[jnp.arange(B), mask_positions].set(MASK_ID)

    first_token_pos = jnp.array([[1, 3], [2, 5]], dtype=jnp.int32)

    targets = jnp.full((B, L_TXT), -100, dtype=jnp.int32)
    targets = targets.at[jnp.arange(B), mask_positions].set(
        jnp.array([LOWER_ID, HIGHER_ID], dtype=jnp.int32))

    fwd = jax.jit(functools.partial(ak_bert_forward, params))
    (loss, logits), predicted_token_id = fwd(
        audio_features_1, audio_features_2, first_token_pos, input_ids, targets)
    jax.block_until_ready((loss, logits, predicted_token_id))
    print("KERNEL_OK")
</pallas_src>

<mosaic_0001>
module attributes {stable_mosaic.version = 11 : i64} {
  func.func @_proj_add_ln_kernel(%arg0: i32, %arg1: memref<64x32xf32, #tpu.memory_space<vmem>>, %arg2: memref<64x64xf32, #tpu.memory_space<vmem>>, %arg3: memref<32x64xf32, #tpu.memory_space<vmem>>, %arg4: memref<1x64xf32, #tpu.memory_space<vmem>>, %arg5: memref<1x64xf32, #tpu.memory_space<vmem>>, %arg6: memref<1x64xf32, #tpu.memory_space<vmem>>, %arg7: memref<64x64xf32, #tpu.memory_space<vmem>>) attributes {dimension_semantics = [#tpu.dimension_semantics<arbitrary>], iteration_bounds = array<i64: 1>, scalar_prefetch = 0 : i64, scratch_operands = 0 : i64, tpu.core_type = #tpu.core_type<tc>, window_params = [{pipeline_mode = #tpu.pipeline_mode<synchronous>, transform_indices = @transform_0, window_bounds = array<i64: 64, 32>}, {pipeline_mode = #tpu.pipeline_mode<synchronous>, transform_indices = @transform_1, window_bounds = array<i64: 64, 64>}, {pipeline_mode = #tpu.pipeline_mode<synchronous>, transform_indices = @transform_2, window_bounds = array<i64: 32, 64>}, {pipeline_mode = #tpu.pipeline_mode<synchronous>, transform_indices = @transform_3, window_bounds = array<i64: 1, 64>}, {pipeline_mode = #tpu.pipeline_mode<synchronous>, transform_indices = @transform_4, window_bounds = array<i64: 1, 64>}, {pipeline_mode = #tpu.pipeline_mode<synchronous>, transform_indices = @transform_5, window_bounds = array<i64: 1, 64>}, {pipeline_mode = #tpu.pipeline_mode<synchronous>, transform_indices = @transform_6, window_bounds = array<i64: 64, 64>}]} {
    %c0 = arith.constant 0 : index
    %c0_0 = arith.constant 0 : index
    %0 = vector.load %arg1[%c0, %c0_0] : memref<64x32xf32, #tpu.memory_space<vmem>>, vector<64x32xf32>
    %c0_1 = arith.constant 0 : index
    %c0_2 = arith.constant 0 : index
    %1 = vector.load %arg3[%c0_1, %c0_2] : memref<32x64xf32, #tpu.memory_space<vmem>>, vector<32x64xf32>
    %cst = arith.constant dense<0.000000e+00> : vector<64x64xf32>
    %2 = tpu.matmul %0, %1, %cst {dimension_numbers = #tpu.dot_dimension_numbers<[1], [0], [0], [1], [0, 0, 1, 1], [], []>} : vector<64x32xf32>, vector<32x64xf32>, vector<64x64xf32> -> vector<64x64xf32>
    %c0_3 = arith.constant 0 : index
    %c0_4 = arith.constant 0 : index
    %3 = vector.load %arg4[%c0_3, %c0_4] : memref<1x64xf32, #tpu.memory_space<vmem>>, vector<1x64xf32>
    %4 = vector.broadcast %3 : vector<1x64xf32> to vector<64x64xf32>
    %5 = arith.addf %2, %4 : vector<64x64xf32>
    %c0_5 = arith.constant 0 : index
    %c0_6 = arith.constant 0 : index
    %6 = vector.load %arg2[%c0_5, %c0_6] : memref<64x64xf32, #tpu.memory_space<vmem>>, vector<64x64xf32>
    %7 = arith.addf %5, %6 : vector<64x64xf32>
    %c0_7 = arith.constant 0 : index
    %c0_8 = arith.constant 0 : index
    %8 = vector.load %arg5[%c0_7, %c0_8] : memref<1x64xf32, #tpu.memory_space<vmem>>, vector<1x64xf32>
    %c0_9 = arith.constant 0 : index
    %c0_10 = arith.constant 0 : index
    %9 = vector.load %arg6[%c0_9, %c0_10] : memref<1x64xf32, #tpu.memory_space<vmem>>, vector<1x64xf32>
    %cst_11 = arith.constant dense<0.000000e+00> : vector<64xf32>
    %10 = vector.multi_reduction <add>, %7, %cst_11 [1] : vector<64x64xf32> to vector<64xf32>
    %11 = vector.shape_cast %10 : vector<64xf32> to vector<64x1xf32>
    %cst_12 = arith.constant 6.400000e+01 : f32
    %12 = vector.broadcast %cst_12 : f32 to vector<64x1xf32>
    %13 = arith.divf %11, %12 : vector<64x1xf32>
    %14 = vector.broadcast %13 : vector<64x1xf32> to vector<64x64xf32>
    %15 = arith.subf %7, %14 : vector<64x64xf32>
    %16 = arith.mulf %15, %15 : vector<64x64xf32>
    %cst_13 = arith.constant dense<0.000000e+00> : vector<64xf32>
    %17 = vector.multi_reduction <add>, %16, %cst_13 [1] : vector<64x64xf32> to vector<64xf32>
    %18 = vector.shape_cast %17 : vector<64xf32> to vector<64x1xf32>
    %cst_14 = arith.constant 6.400000e+01 : f32
    %19 = vector.broadcast %cst_14 : f32 to vector<64x1xf32>
    %20 = arith.divf %18, %19 : vector<64x1xf32>
    %21 = vector.broadcast %13 : vector<64x1xf32> to vector<64x64xf32>
    %22 = arith.subf %7, %21 : vector<64x64xf32>
    %cst_15 = arith.constant 9.99999996E-13 : f32
    %23 = vector.broadcast %cst_15 : f32 to vector<64x1xf32>
    %24 = arith.addf %20, %23 : vector<64x1xf32>
    %25 = math.rsqrt %24 : vector<64x1xf32>
    %26 = vector.broadcast %25 : vector<64x1xf32> to vector<64x64xf32>
    %27 = arith.mulf %22, %26 : vector<64x64xf32>
    %28 = vector.broadcast %8 : vector<1x64xf32> to vector<64x64xf32>
    %29 = arith.mulf %27, %28 : vector<64x64xf32>
    %30 = vector.broadcast %9 : vector<1x64xf32> to vector<64x64xf32>
    %31 = arith.addf %29, %30 : vector<64x64xf32>
    %c0_16 = arith.constant 0 : index
    %c0_17 = arith.constant 0 : index
    %32 = vector.load %arg7[%c0_16, %c0_17] : memref<64x64xf32, #tpu.memory_space<vmem>>, vector<64x64xf32>
    tpu.vector_store %arg7[%c0_16, %c0_17], %31 {strides = array<i32>} : memref<64x64xf32, #tpu.memory_space<vmem>>, vector<64x64xf32>,
    return
  }
  func.func @transform_0(%arg0: i32) -> (i32, i32) {
    %c0_i32 = arith.constant 0 : i32
    %c0_i32_0 = arith.constant 0 : i32
    %c0_i32_1 = arith.constant 0 : i32
    return %c0_i32, %c0_i32_0 : i32, i32
  }
  func.func @transform_1(%arg0: i32) -> (i32, i32) {
    %c0_i32 = arith.constant 0 : i32
    %c0_i32_0 = arith.constant 0 : i32
    %c0_i32_1 = arith.constant 0 : i32
    return %c0_i32, %c0_i32_0 : i32, i32
  }
  func.func @transform_2(%arg0: i32) -> (i32, i32) {
    %c0_i32 = arith.constant 0 : i32
    %c0_i32_0 = arith.constant 0 : i32
    %c0_i32_1 = arith.constant 0 : i32
    return %c0_i32, %c0_i32_0 : i32, i32
  }
  func.func @transform_3(%arg0: i32) -> (i32, i32) {
    %c0_i32 = arith.constant 0 : i32
    %c0_i32_0 = arith.constant 0 : i32
    %c0_i32_1 = arith.constant 0 : i32
    return %c0_i32, %c0_i32_0 : i32, i32
  }
  func.func @transform_4(%arg0: i32) -> (i32, i32) {
    %c0_i32 = arith.constant 0 : i32
    %c0_i32_0 = arith.constant 0 : i32
    %c0_i32_1 = arith.constant 0 : i32
    return %c0_i32, %c0_i32_0 : i32, i32
  }
  func.func @transform_5(%arg0: i32) -> (i32, i32) {
    %c0_i32 = arith.constant 0 : i32
    %c0_i32_0 = arith.constant 0 : i32
    %c0_i32_1 = arith.constant 0 : i32
    return %c0_i32, %c0_i32_0 : i32, i32
  }
  func.func @transform_6(%arg0: i32) -> (i32, i32) {
    %c0_i32 = arith.constant 0 : i32
    %c0_i32_0 = arith.constant 0 : i32
    %c0_i32_1 = arith.constant 0 : i32
    return %c0_i32, %c0_i32_0 : i32, i32
  }
}

module attributes {stable_mosaic.version = 11 : i64} {
  func.func @_linear_kernel(%arg0: i32, %arg1: memref<64x64xf32, #tpu.memory_space<vmem>>, %arg2: memref<64x192xf32, #tpu.memory_space<vmem>>, %arg3: memref<1x192xf32, #tpu.memory_space<vmem>>, %arg4: memref<64x192xf32, #tpu.memory_space<vmem>>) attributes {dimension_semantics = [#tpu.dimension_semantics<parallel>], iteration_bounds = array<i64: 1>, scalar_prefetch = 0 : i64, scratch_operands = 0 : i64, tpu.core_type = #tpu.core_type<tc>, window_params = [{pipeline_mode = #tpu.pipeline_mode<synchronous>, transform_indices = @transform_0, window_bounds = array<i64: 64, 64>}, {transform_indices = @transform_1, window_bounds = array<i64: 64, 192>}, {transform_indices = @transform_2, window_bounds = array<i64: 1, 192>}, {transform_indices = @transform_3, window_bounds = array<i64: 64, 192>}]} {
    %c0 = arith.constant 0 : index
    %c0_0 = arith.constant 0 : index
    %0 = vector.load %arg1[%c0, %c0_0] : memref<64x64xf32, #tpu.memory_space<vmem>>, vector<64x64xf32>
    %c0_1 = arith.constant 0 : index
    %c0_2 = arith.constant 0 : index
    %1 = vector.load %arg2[%c0_1, %c0_2] : memref<64x192xf32, #tpu.memory_space<vmem>>, vector<64x192xf32>
    %cst = arith.constant dense<0.000000e+00> : vector<64x192xf32>
    %2 = tpu.matmul %0, %1, %cst {dimension_numbers = #tpu.dot_dimension_numbers<[1], [0], [0], [1], [0, 0, 1, 1], [], []>} : vector<64x64xf32>, vector<64x192xf32>, vector<64x192xf32> -> vector<64x192xf32>
    %c0_3 = arith.constant 0 : index
    %c0_4 = arith.constant 0 : index
    %3 = vector.load %arg3[%c0_3, %c0_4] : memref<1x192xf32, #tpu.memory_space<vmem>>, vector<1x192xf32>
    %4 = vector.broadcast %3 : vector<1x192xf32> to vector<64x192xf32>
    %5 = arith.addf %2, %4 : vector<64x192xf32>
    %c0_5 = arith.constant 0 : index
    %c0_6 = arith.constant 0 : index
    %6 = vector.load %arg4[%c0_5, %c0_6] : memref<64x192xf32, #tpu.memory_space<vmem>>, vector<64x192xf32>
    tpu.vector_store %arg4[%c0_5, %c0_6], %5 {strides = array<i32>} : memref<64x192xf32, #tpu.memory_space<vmem>>, vector<64x192xf32>,
    return
  }
  func.func @transform_0(%arg0: i32) -> (i32, i32) {
    %c0_i32 = arith.constant 0 : i32
    %c0_i32_0 = arith.constant 0 : i32
    %c0_i32_1 = arith.constant 0 : i32
    return %c0_i32, %c0_i32_0 : i32, i32
  }
  func.func @transform_1(%arg0: i32) -> (i32, i32) {
    %c0_i32 = arith.constant 0 : i32
    %c0_i32_0 = arith.constant 0 : i32
    return %c0_i32, %arg0 : i32, i32
  }
  func.func @transform_2(%arg0: i32) -> (i32, i32) {
    %c0_i32 = arith.constant 0 : i32
    %c0_i32_0 = arith.constant 0 : i32
    return %c0_i32, %arg0 : i32, i32
  }
  func.func @transform_3(%arg0: i32) -> (i32, i32) {
    %c0_i32 = arith.constant 0 : i32
    %c0_i32_0 = arith.constant 0 : i32
    return %c0_i32, %arg0 : i32, i32
  }
}

module attributes {stable_mosaic.version = 11 : i64} {
  func.func @_attn_kernel(%arg0: i32, %arg1: memref<16x16x16xf32, #tpu.memory_space<vmem>>, %arg2: memref<16x16x16xf32, #tpu.memory_space<vmem>>, %arg3: memref<16x16x16xf32, #tpu.memory_space<vmem>>, %arg4: memref<16x16x16xf32, #tpu.memory_space<vmem>>) attributes {dimension_semantics = [#tpu.dimension_semantics<arbitrary>], iteration_bounds = array<i64: 1>, scalar_prefetch = 0 : i64, scratch_operands = 0 : i64, tpu.core_type = #tpu.core_type<tc>, window_params = [{pipeline_mode = #tpu.pipeline_mode<synchronous>, transform_indices = @transform_0, window_bounds = array<i64: 16, 16, 16>}, {pipeline_mode = #tpu.pipeline_mode<synchronous>, transform_indices = @transform_1, window_bounds = array<i64: 16, 16, 16>}, {pipeline_mode = #tpu.pipeline_mode<synchronous>, transform_indices = @transform_2, window_bounds = array<i64: 16, 16, 16>}, {pipeline_mode = #tpu.pipeline_mode<synchronous>, transform_indices = @transform_3, window_bounds = array<i64: 16, 16, 16>}]} {
    %c0 = arith.constant 0 : index
    %c0_0 = arith.constant 0 : index
    %c0_1 = arith.constant 0 : index
    %0 = vector.load %arg1[%c0, %c0_0, %c0_1] : memref<16x16x16xf32, #tpu.memory_space<vmem>>, vector<16x16x16xf32>
    %c0_2 = arith.constant 0 : index
    %c0_3 = arith.constant 0 : index
    %c0_4 = arith.constant 0 : index
    %1 = vector.load %arg2[%c0_2, %c0_3, %c0_4] : memref<16x16x16xf32, #tpu.memory_space<vmem>>, vector<16x16x16xf32>
    %c0_5 = arith.constant 0 : index
    %c0_6 = arith.constant 0 : index
    %c0_7 = arith.constant 0 : index
    %2 = vector.load %arg3[%c0_5, %c0_6, %c0_7] : memref<16x16x16xf32, #tpu.memory_space<vmem>>, vector<16x16x16xf32>
    "tpu.trace_start"() <{level = 10 : i32, message = "bqd,bkd->bqk"}> : () -> ()
    %cst = arith.constant dense<0.000000e+00> : vector<16x16x16xf32>
    %3 = tpu.matmul %0, %1, %cst {dimension_numbers = #tpu.dot_dimension_numbers<[2], [2], [1], [1], [0, 0, 0, 1, 1, 1], [0], [0]>} : vector<16x16x16xf32>, vector<16x16x16xf32>, vector<16x16x16xf32> -> vector<16x16x16xf32>
    "tpu.trace_stop"() : () -> ()
    %cst_8 = arith.constant 2.500000e-01 : f32
    %4 = vector.broadcast %cst_8 : f32 to vector<16x16x16xf32>
    %5 = arith.mulf %3, %4 : vector<16x16x16xf32>
    %cst_9 = arith.constant dense<0xFF800000> : vector<16x16xf32>
    %6 = vector.multi_reduction <maximumf>, %5, %cst_9 [2] : vector<16x16x16xf32> to vector<16x16xf32>
    %7 = vector.shape_cast %6 : vector<16x16xf32> to vector<16x16x1xf32>
    %8 = vector.broadcast %7 : vector<16x16x1xf32> to vector<16x16x16xf32>
    %9 = arith.subf %5, %8 : vector<16x16x16xf32>
    %10 = math.exp %9 : vector<16x16x16xf32>
    %cst_10 = arith.constant dense<0.000000e+00> : vector<16x16xf32>
    %11 = vector.multi_reduction <add>, %10, %cst_10 [2] : vector<16x16x16xf32> to vector<16x16xf32>
    %12 = vector.shape_cast %11 : vector<16x16xf32> to vector<16x16x1xf32>
    "tpu.trace_start"() <{level = 10 : i32, message = "bqk,bkd->bqd"}> : () -> ()
    %cst_11 = arith.constant dense<0.000000e+00> : vector<16x16x16xf32>
    %13 = tpu.matmul %10, %2, %cst_11 {dimension_numbers = #tpu.dot_dimension_numbers<[2], [1], [1], [2], [0, 0, 0, 1, 1, 2], [0], [0]>} : vector<16x16x16xf32>, vector<16x16x16xf32>, vector<16x16x16xf32> -> vector<16x16x16xf32>
    "tpu.trace_stop"() : () -> ()
    %14 = tpu.reciprocal %12 {approx = true} : vector<16x16x1xf32> -> vector<16x16x1xf32>
    %15 = vector.broadcast %14 : vector<16x16x1xf32> to vector<16x16x16xf32>
    %16 = arith.mulf %13, %15 : vector<16x16x16xf32>
    %c0_12 = arith.constant 0 : index
    %c0_13 = arith.constant 0 : index
    %c0_14 = arith.constant 0 : index
    %17 = vector.load %arg4[%c0_12, %c0_13, %c0_14] : memref<16x16x16xf32, #tpu.memory_space<vmem>>, vector<16x16x16xf32>
    tpu.vector_store %arg4[%c0_12, %c0_13, %c0_14], %16 {strides = array<i32>} : memref<16x16x16xf32, #tpu.memory_space<vmem>>, vector<16x16x16xf32>,
    return
  }
  func.func @transform_0(%arg0: i32) -> (i32, i32, i32) {
    %c0_i32 = arith.constant 0 : i32
    %c0_i32_0 = arith.constant 0 : i32
    %c0_i32_1 = arith.constant 0 : i32
    %c0_i32_2 = arith.constant 0 : i32
    return %c0_i32, %c0_i32_0, %c0_i32_1 : i32, i32, i32
  }
  func.func @transform_1(%arg0: i32) -> (i32, i32, i32) {
    %c0_i32 = arith.constant 0 : i32
    %c0_i32_0 = arith.constant 0 : i32
    %c0_i32_1 = arith.constant 0 : i32
    %c0_i32_2 = arith.constant 0 : i32
    return %c0_i32, %c0_i32_0, %c0_i32_1 : i32, i32, i32
  }
  func.func @transform_2(%arg0: i32) -> (i32, i32, i32) {
    %c0_i32 = arith.constant 0 : i32
    %c0_i32_0 = arith.constant 0 : i32
    %c0_i32_1 = arith.constant 0 : i32
    %c0_i32_2 = arith.constant 0 : i32
    return %c0_i32, %c0_i32_0, %c0_i32_1 : i32, i32, i32
  }
  func.func @transform_3(%arg0: i32) -> (i32, i32, i32) {
    %c0_i32 = arith.constant 0 : i32
    %c0_i32_0 = arith.constant 0 : i32
    %c0_i32_1 = arith.constant 0 : i32
    %c0_i32_2 = arith.constant 0 : i32
    return %c0_i32, %c0_i32_0, %c0_i32_1 : i32, i32, i32
  }
}

module attributes {stable_mosaic.version = 11 : i64} {
  func.func @_proj_add_ln_kernel(%arg0: i32, %arg1: memref<64x64xf32, #tpu.memory_space<vmem>>, %arg2: memref<64x64xf32, #tpu.memory_space<vmem>>, %arg3: memref<64x64xf32, #tpu.memory_space<vmem>>, %arg4: memref<1x64xf32, #tpu.memory_space<vmem>>, %arg5: memref<1x64xf32, #tpu.memory_space<vmem>>, %arg6: memref<1x64xf32, #tpu.memory_space<vmem>>, %arg7: memref<64x64xf32, #tpu.memory_space<vmem>>) attributes {dimension_semantics = [#tpu.dimension_semantics<arbitrary>], iteration_bounds = array<i64: 1>, scalar_prefetch = 0 : i64, scratch_operands = 0 : i64, tpu.core_type = #tpu.core_type<tc>, window_params = [{pipeline_mode = #tpu.pipeline_mode<synchronous>, transform_indices = @transform_0, window_bounds = array<i64: 64, 64>}, {pipeline_mode = #tpu.pipeline_mode<synchronous>, transform_indices = @transform_1, window_bounds = array<i64: 64, 64>}, {pipeline_mode = #tpu.pipeline_mode<synchronous>, transform_indices = @transform_2, window_bounds = array<i64: 64, 64>}, {pipeline_mode = #tpu.pipeline_mode<synchronous>, transform_indices = @transform_3, window_bounds = array<i64: 1, 64>}, {pipeline_mode = #tpu.pipeline_mode<synchronous>, transform_indices = @transform_4, window_bounds = array<i64: 1, 64>}, {pipeline_mode = #tpu.pipeline_mode<synchronous>, transform_indices = @transform_5, window_bounds = array<i64: 1, 64>}, {pipeline_mode = #tpu.pipeline_mode<synchronous>, transform_indices = @transform_6, window_bounds = array<i64: 64, 64>}]} {
    %c0 = arith.constant 0 : index
    %c0_0 = arith.constant 0 : index
    %0 = vector.load %arg1[%c0, %c0_0] : memref<64x64xf32, #tpu.memory_space<vmem>>, vector<64x64xf32>
    %c0_1 = arith.constant 0 : index
    %c0_2 = arith.constant 0 : index
    %1 = vector.load %arg3[%c0_1, %c0_2] : memref<64x64xf32, #tpu.memory_space<vmem>>, vector<64x64xf32>
    %cst = arith.constant dense<0.000000e+00> : vector<64x64xf32>
    %2 = tpu.matmul %0, %1, %cst {dimension_numbers = #tpu.dot_dimension_numbers<[1], [0], [0], [1], [0, 0, 1, 1], [], []>} : vector<64x64xf32>, vector<64x64xf32>, vector<64x64xf32> -> vector<64x64xf32>
    %c0_3 = arith.constant 0 : index
    %c0_4 = arith.constant 0 : index
    %3 = vector.load %arg4[%c0_3, %c0_4] : memref<1x64xf32, #tpu.memory_space<vmem>>, vector<1x64xf32>
    %4 = vector.broadcast %3 : vector<1x64xf32> to vector<64x64xf32>
    %5 = arith.addf %2, %4 : vector<64x64xf32>
    %c0_5 = arith.constant 0 : index
    %c0_6 = arith.constant 0 : index
    %6 = vector.load %arg2[%c0_5, %c0_6] : memref<64x64xf32, #tpu.memory_space<vmem>>, vector<64x64xf32>
    %7 = arith.addf %5, %6 : vector<64x64xf32>
    %c0_7 = arith.constant 0 : index
    %c0_8 = arith.constant 0 : index
    %8 = vector.load %arg5[%c0_7, %c0_8] : memref<1x64xf32, #tpu.memory_space<vmem>>, vector<1x64xf32>
    %c0_9 = arith.constant 0 : index
    %c0_10 = arith.constant 0 : index
    %9 = vector.load %arg6[%c0_9, %c0_10] : memref<1x64xf32, #tpu.memory_space<vmem>>, vector<1x64xf32>
    %cst_11 = arith.constant dense<0.000000e+00> : vector<64xf32>
    %10 = vector.multi_reduction <add>, %7, %cst_11 [1] : vector<64x64xf32> to vector<64xf32>
    %11 = vector.shape_cast %10 : vector<64xf32> to vector<64x1xf32>
    %cst_12 = arith.constant 6.400000e+01 : f32
    %12 = vector.broadcast %cst_12 : f32 to vector<64x1xf32>
    %13 = arith.divf %11, %12 : vector<64x1xf32>
    %14 = vector.broadcast %13 : vector<64x1xf32> to vector<64x64xf32>
    %15 = arith.subf %7, %14 : vector<64x64xf32>
    %16 = arith.mulf %15, %15 : vector<64x64xf32>
    %cst_13 = arith.constant dense<0.000000e+00> : vector<64xf32>
    %17 = vector.multi_reduction <add>, %16, %cst_13 [1] : vector<64x64xf32> to vector<64xf32>
    %18 = vector.shape_cast %17 : vector<64xf32> to vector<64x1xf32>
    %cst_14 = arith.constant 6.400000e+01 : f32
    %19 = vector.broadcast %cst_14 : f32 to vector<64x1xf32>
    %20 = arith.divf %18, %19 : vector<64x1xf32>
    %21 = vector.broadcast %13 : vector<64x1xf32> to vector<64x64xf32>
    %22 = arith.subf %7, %21 : vector<64x64xf32>
    %cst_15 = arith.constant 9.99999996E-13 : f32
    %23 = vector.broadcast %cst_15 : f32 to vector<64x1xf32>
    %24 = arith.addf %20, %23 : vector<64x1xf32>
    %25 = math.rsqrt %24 : vector<64x1xf32>
    %26 = vector.broadcast %25 : vector<64x1xf32> to vector<64x64xf32>
    %27 = arith.mulf %22, %26 : vector<64x64xf32>
    %28 = vector.broadcast %8 : vector<1x64xf32> to vector<64x64xf32>
    %29 = arith.mulf %27, %28 : vector<64x64xf32>
    %30 = vector.broadcast %9 : vector<1x64xf32> to vector<64x64xf32>
    %31 = arith.addf %29, %30 : vector<64x64xf32>
    %c0_16 = arith.constant 0 : index
    %c0_17 = arith.constant 0 : index
    %32 = vector.load %arg7[%c0_16, %c0_17] : memref<64x64xf32, #tpu.memory_space<vmem>>, vector<64x64xf32>
    tpu.vector_store %arg7[%c0_16, %c0_17], %31 {strides = array<i32>} : memref<64x64xf32, #tpu.memory_space<vmem>>, vector<64x64xf32>,
    return
  }
  func.func @transform_0(%arg0: i32) -> (i32, i32) {
    %c0_i32 = arith.constant 0 : i32
    %c0_i32_0 = arith.constant 0 : i32
    %c0_i32_1 = arith.constant 0 : i32
    return %c0_i32, %c0_i32_0 : i32, i32
  }
  func.func @transform_1(%arg0: i32) -> (i32, i32) {
    %c0_i32 = arith.constant 0 : i32
    %c0_i32_0 = arith.constant 0 : i32
    %c0_i32_1 = arith.constant 0 : i32
    return %c0_i32, %c0_i32_0 : i32, i32
  }
  func.func @transform_2(%arg0: i32) -> (i32, i32) {
    %c0_i32 = arith.constant 0 : i32
    %c0_i32_0 = arith.constant 0 : i32
    %c0_i32_1 = arith.constant 0 : i32
    return %c0_i32, %c0_i32_0 : i32, i32
  }
  func.func @transform_3(%arg0: i32) -> (i32, i32) {
    %c0_i32 = arith.constant 0 : i32
    %c0_i32_0 = arith.constant 0 : i32
    %c0_i32_1 = arith.constant 0 : i32
    return %c0_i32, %c0_i32_0 : i32, i32
  }
  func.func @transform_4(%arg0: i32) -> (i32, i32) {
    %c0_i32 = arith.constant 0 : i32
    %c0_i32_0 = arith.constant 0 : i32
    %c0_i32_1 = arith.constant 0 : i32
    return %c0_i32, %c0_i32_0 : i32, i32
  }
  func.func @transform_5(%arg0: i32) -> (i32, i32) {
    %c0_i32 = arith.constant 0 : i32
    %c0_i32_0 = arith.constant 0 : i32
    %c0_i32_1 = arith.constant 0 : i32
    return %c0_i32, %c0_i32_0 : i32, i32
  }
  func.func @transform_6(%arg0: i32) -> (i32, i32) {
    %c0_i32 = arith.constant 0 : i32
    %c0_i32_0 = arith.constant 0 : i32
    %c0_i32_1 = arith.constant 0 : i32
    return %c0_i32, %c0_i32_0 : i32, i32
  }
}

module attributes {stable_mosaic.version = 11 : i64} {
  func.func @_ffn_ln_kernel(%arg0: i32, %arg1: memref<64x64xf32, #tpu.memory_space<vmem>>, %arg2: memref<64x128xf32, #tpu.memory_space<vmem>>, %arg3: memref<1x128xf32, #tpu.memory_space<vmem>>, %arg4: memref<128x64xf32, #tpu.memory_space<vmem>>, %arg5: memref<1x64xf32, #tpu.memory_space<vmem>>, %arg6: memref<1x64xf32, #tpu.memory_space<vmem>>, %arg7: memref<1x64xf32, #tpu.memory_space<vmem>>, %arg8: memref<64x64xf32, #tpu.memory_space<vmem>>) attributes {dimension_semantics = [#tpu.dimension_semantics<arbitrary>], iteration_bounds = array<i64: 1>, scalar_prefetch = 0 : i64, scratch_operands = 0 : i64, tpu.core_type = #tpu.core_type<tc>, window_params = [{pipeline_mode = #tpu.pipeline_mode<synchronous>, transform_indices = @transform_0, window_bounds = array<i64: 64, 64>}, {pipeline_mode = #tpu.pipeline_mode<synchronous>, transform_indices = @transform_1, window_bounds = array<i64: 64, 128>}, {pipeline_mode = #tpu.pipeline_mode<synchronous>, transform_indices = @transform_2, window_bounds = array<i64: 1, 128>}, {pipeline_mode = #tpu.pipeline_mode<synchronous>, transform_indices = @transform_3, window_bounds = array<i64: 128, 64>}, {pipeline_mode = #tpu.pipeline_mode<synchronous>, transform_indices = @transform_4, window_bounds = array<i64: 1, 64>}, {pipeline_mode = #tpu.pipeline_mode<synchronous>, transform_indices = @transform_5, window_bounds = array<i64: 1, 64>}, {pipeline_mode = #tpu.pipeline_mode<synchronous>, transform_indices = @transform_6, window_bounds = array<i64: 1, 64>}, {pipeline_mode = #tpu.pipeline_mode<synchronous>, transform_indices = @transform_7, window_bounds = array<i64: 64, 64>}]} {
    %c0 = arith.constant 0 : index
    %c0_0 = arith.constant 0 : index
    %0 = vector.load %arg1[%c0, %c0_0] : memref<64x64xf32, #tpu.memory_space<vmem>>, vector<64x64xf32>
    %c0_1 = arith.constant 0 : index
    %c0_2 = arith.constant 0 : index
    %1 = vector.load %arg2[%c0_1, %c0_2] : memref<64x128xf32, #tpu.memory_space<vmem>>, vector<64x128xf32>
    %cst = arith.constant dense<0.000000e+00> : vector<64x128xf32>
    %2 = tpu.matmul %0, %1, %cst {dimension_numbers = #tpu.dot_dimension_numbers<[1], [0], [0], [1], [0, 0, 1, 1], [], []>} : vector<64x64xf32>, vector<64x128xf32>, vector<64x128xf32> -> vector<64x128xf32>
    %c0_3 = arith.constant 0 : index
    %c0_4 = arith.constant 0 : index
    %3 = vector.load %arg3[%c0_3, %c0_4] : memref<1x128xf32, #tpu.memory_space<vmem>>, vector<1x128xf32>
    %4 = vector.broadcast %3 : vector<1x128xf32> to vector<64x128xf32>
    %5 = arith.addf %2, %4 : vector<64x128xf32>
    %6 = arith.mulf %5, %5 : vector<64x128xf32>
    %7 = arith.mulf %5, %6 : vector<64x128xf32>
    %cst_5 = arith.constant 4.471500e-02 : f32
    %8 = vector.broadcast %cst_5 : f32 to vector<64x128xf32>
    %9 = arith.mulf %8, %7 : vector<64x128xf32>
    %10 = arith.addf %5, %9 : vector<64x128xf32>
    %cst_6 = arith.constant 0.797884583 : f32
    %11 = vector.broadcast %cst_6 : f32 to vector<64x128xf32>
    %12 = arith.mulf %11, %10 : vector<64x128xf32>
    %13 = math.tanh %12 : vector<64x128xf32>
    %cst_7 = arith.constant 1.000000e+00 : f32
    %14 = vector.broadcast %cst_7 : f32 to vector<64x128xf32>
    %15 = arith.addf %14, %13 : vector<64x128xf32>
    %cst_8 = arith.constant 5.000000e-01 : f32
    %16 = vector.broadcast %cst_8 : f32 to vector<64x128xf32>
    %17 = arith.mulf %16, %15 : vector<64x128xf32>
    %18 = arith.mulf %5, %17 : vector<64x128xf32>
    %c0_9 = arith.constant 0 : index
    %c0_10 = arith.constant 0 : index
    %19 = vector.load %arg4[%c0_9, %c0_10] : memref<128x64xf32, #tpu.memory_space<vmem>>, vector<128x64xf32>
    %cst_11 = arith.constant dense<0.000000e+00> : vector<64x64xf32>
    %20 = tpu.matmul %18, %19, %cst_11 {dimension_numbers = #tpu.dot_dimension_numbers<[1], [0], [0], [1], [0, 0, 1, 1], [], []>} : vector<64x128xf32>, vector<128x64xf32>, vector<64x64xf32> -> vector<64x64xf32>
    %c0_12 = arith.constant 0 : index
    %c0_13 = arith.constant 0 : index
    %21 = vector.load %arg5[%c0_12, %c0_13] : memref<1x64xf32, #tpu.memory_space<vmem>>, vector<1x64xf32>
    %22 = vector.broadcast %21 : vector<1x64xf32> to vector<64x64xf32>
    %23 = arith.addf %20, %22 : vector<64x64xf32>
    %24 = arith.addf %23, %0 : vector<64x64xf32>
    %c0_14 = arith.constant 0 : index
    %c0_15 = arith.constant 0 : index
    %25 = vector.load %arg6[%c0_14, %c0_15] : memref<1x64xf32, #tpu.memory_space<vmem>>, vector<1x64xf32>
    %c0_16 = arith.constant 0 : index
    %c0_17 = arith.constant 0 : index
    %26 = vector.load %arg7[%c0_16, %c0_17] : memref<1x64xf32, #tpu.memory_space<vmem>>, vector<1x64xf32>
    %cst_18 = arith.constant dense<0.000000e+00> : vector<64xf32>
    %27 = vector.multi_reduction <add>, %24, %cst_18 [1] : vector<64x64xf32> to vector<64xf32>
    %28 = vector.shape_cast %27 : vector<64xf32> to vector<64x1xf32>
    %cst_19 = arith.constant 6.400000e+01 : f32
    %29 = vector.broadcast %cst_19 : f32 to vector<64x1xf32>
    %30 = arith.divf %28, %29 : vector<64x1xf32>
    %31 = vector.broadcast %30 : vector<64x1xf32> to vector<64x64xf32>
    %32 = arith.subf %24, %31 : vector<64x64xf32>
    %33 = arith.mulf %32, %32 : vector<64x64xf32>
    %cst_20 = arith.constant dense<0.000000e+00> : vector<64xf32>
    %34 = vector.multi_reduction <add>, %33, %cst_20 [1] : vector<64x64xf32> to vector<64xf32>
    %35 = vector.shape_cast %34 : vector<64xf32> to vector<64x1xf32>
    %cst_21 = arith.constant 6.400000e+01 : f32
    %36 = vector.broadcast %cst_21 : f32 to vector<64x1xf32>
    %37 = arith.divf %35, %36 : vector<64x1xf32>
    %38 = vector.broadcast %30 : vector<64x1xf32> to vector<64x64xf32>
    %39 = arith.subf %24, %38 : vector<64x64xf32>
    %cst_22 = arith.constant 9.99999996E-13 : f32
    %40 = vector.broadcast %cst_22 : f32 to vector<64x1xf32>
    %41 = arith.addf %37, %40 : vector<64x1xf32>
    %42 = math.rsqrt %41 : vector<64x1xf32>
    %43 = vector.broadcast %42 : vector<64x1xf32> to vector<64x64xf32>
    %44 = arith.mulf %39, %43 : vector<64x64xf32>
    %45 = vector.broadcast %25 : vector<1x64xf32> to vector<64x64xf32>
    %46 = arith.mulf %44, %45 : vector<64x64xf32>
    %47 = vector.broadcast %26 : vector<1x64xf32> to vector<64x64xf32>
    %48 = arith.addf %46, %47 : vector<64x64xf32>
    %c0_23 = arith.constant 0 : index
    %c0_24 = arith.constant 0 : index
    %49 = vector.load %arg8[%c0_23, %c0_24] : memref<64x64xf32, #tpu.memory_space<vmem>>, vector<64x64xf32>
    tpu.vector_store %arg8[%c0_23, %c0_24], %48 {strides = array<i32>} : memref<64x64xf32, #tpu.memory_space<vmem>>, vector<64x64xf32>,
    return
  }
  func.func @transform_0(%arg0: i32) -> (i32, i32) {
    %c0_i32 = arith.constant 0 : i32
    %c0_i32_0 = arith.constant 0 : i32
    %c0_i32_1 = arith.constant 0 : i32
    return %c0_i32, %c0_i32_0 : i32, i32
  }
  func.func @transform_1(%arg0: i32) -> (i32, i32) {
    %c0_i32 = arith.constant 0 : i32
    %c0_i32_0 = arith.constant 0 : i32
    %c0_i32_1 = arith.constant 0 : i32
    return %c0_i32, %c0_i32_0 : i32, i32
  }
  func.func @transform_2(%arg0: i32) -> (i32, i32) {
    %c0_i32 = arith.constant 0 : i32
    %c0_i32_0 = arith.constant 0 : i32
    %c0_i32_1 = arith.constant 0 : i32
    return %c0_i32, %c0_i32_0 : i32, i32
  }
  func.func @transform_3(%arg0: i32) -> (i32, i32) {
    %c0_i32 = arith.constant 0 : i32
    %c0_i32_0 = arith.constant 0 : i32
    %c0_i32_1 = arith.constant 0 : i32
    return %c0_i32, %c0_i32_0 : i32, i32
  }
  func.func @transform_4(%arg0: i32) -> (i32, i32) {
    %c0_i32 = arith.constant 0 : i32
    %c0_i32_0 = arith.constant 0 : i32
    %c0_i32_1 = arith.constant 0 : i32
    return %c0_i32, %c0_i32_0 : i32, i32
  }
  func.func @transform_5(%arg0: i32) -> (i32, i32) {
    %c0_i32 = arith.constant 0 : i32
    %c0_i32_0 = arith.constant 0 : i32
    %c0_i32_1 = arith.constant 0 : i32
    return %c0_i32, %c0_i32_0 : i32, i32
  }
  func.func @transform_6(%arg0: i32) -> (i32, i32) {
    %c0_i32 = arith.constant 0 : i32
    %c0_i32_0 = arith.constant 0 : i32
    %c0_i32_1 = arith.constant 0 : i32
    return %c0_i32, %c0_i32_0 : i32, i32
  }
  func.func @transform_7(%arg0: i32) -> (i32, i32) {
    %c0_i32 = arith.constant 0 : i32
    %c0_i32_0 = arith.constant 0 : i32
    %c0_i32_1 = arith.constant 0 : i32
    return %c0_i32, %c0_i32_0 : i32, i32
  }
}

module attributes {stable_mosaic.version = 11 : i64} {
  func.func @_pool_proj_kernel(%arg0: i32, %arg1: memref<4x64xf32, #tpu.memory_space<vmem>>, %arg2: memref<64x64xf32, #tpu.memory_space<vmem>>, %arg3: memref<64x128xf32, #tpu.memory_space<vmem>>, %arg4: memref<1x128xf32, #tpu.memory_space<vmem>>, %arg5: memref<4x128xf32, #tpu.memory_space<vmem>>) attributes {dimension_semantics = [#tpu.dimension_semantics<arbitrary>], iteration_bounds = array<i64: 1>, scalar_prefetch = 0 : i64, scratch_operands = 0 : i64, tpu.core_type = #tpu.core_type<tc>, window_params = [{pipeline_mode = #tpu.pipeline_mode<synchronous>, transform_indices = @transform_0, window_bounds = array<i64: 4, 64>}, {pipeline_mode = #tpu.pipeline_mode<synchronous>, transform_indices = @transform_1, window_bounds = array<i64: 64, 64>}, {pipeline_mode = #tpu.pipeline_mode<synchronous>, transform_indices = @transform_2, window_bounds = array<i64: 64, 128>}, {pipeline_mode = #tpu.pipeline_mode<synchronous>, transform_indices = @transform_3, window_bounds = array<i64: 1, 128>}, {pipeline_mode = #tpu.pipeline_mode<synchronous>, transform_indices = @transform_4, window_bounds = array<i64: 4, 128>}]} {
    %c0 = arith.constant 0 : index
    %c0_0 = arith.constant 0 : index
    %0 = vector.load %arg1[%c0, %c0_0] : memref<4x64xf32, #tpu.memory_space<vmem>>, vector<4x64xf32>
    %c0_1 = arith.constant 0 : index
    %c0_2 = arith.constant 0 : index
    %1 = vector.load %arg2[%c0_1, %c0_2] : memref<64x64xf32, #tpu.memory_space<vmem>>, vector<64x64xf32>
    %cst = arith.constant dense<0.000000e+00> : vector<4x64xf32>
    %2 = tpu.matmul %0, %1, %cst {dimension_numbers = #tpu.dot_dimension_numbers<[1], [0], [0], [1], [0, 0, 1, 1], [], []>} : vector<4x64xf32>, vector<64x64xf32>, vector<4x64xf32> -> vector<4x64xf32>
    %c0_3 = arith.constant 0 : index
    %c0_4 = arith.constant 0 : index
    %3 = vector.load %arg3[%c0_3, %c0_4] : memref<64x128xf32, #tpu.memory_space<vmem>>, vector<64x128xf32>
    %cst_5 = arith.constant dense<0.000000e+00> : vector<4x128xf32>
    %4 = tpu.matmul %2, %3, %cst_5 {dimension_numbers = #tpu.dot_dimension_numbers<[1], [0], [0], [1], [0, 0, 1, 1], [], []>} : vector<4x64xf32>, vector<64x128xf32>, vector<4x128xf32> -> vector<4x128xf32>
    %c0_6 = arith.constant 0 : index
    %c0_7 = arith.constant 0 : index
    %5 = vector.load %arg4[%c0_6, %c0_7] : memref<1x128xf32, #tpu.memory_space<vmem>>, vector<1x128xf32>
    %6 = vector.broadcast %5 : vector<1x128xf32> to vector<4x128xf32>
    %7 = arith.addf %4, %6 : vector<4x128xf32>
    %c0_8 = arith.constant 0 : index
    %c0_9 = arith.constant 0 : index
    %8 = vector.load %arg5[%c0_8, %c0_9] : memref<4x128xf32, #tpu.memory_space<vmem>>, vector<4x128xf32>
    tpu.vector_store %arg5[%c0_8, %c0_9], %7 {strides = array<i32>} : memref<4x128xf32, #tpu.memory_space<vmem>>, vector<4x128xf32>,
    return
  }
  func.func @transform_0(%arg0: i32) -> (i32, i32) {
    %c0_i32 = arith.constant 0 : i32
    %c0_i32_0 = arith.constant 0 : i32
    %c0_i32_1 = arith.constant 0 : i32
    return %c0_i32, %c0_i32_0 : i32, i32
  }
  func.func @transform_1(%arg0: i32) -> (i32, i32) {
    %c0_i32 = arith.constant 0 : i32
    %c0_i32_0 = arith.constant 0 : i32
    %c0_i32_1 = arith.constant 0 : i32
    return %c0_i32, %c0_i32_0 : i32, i32
  }
  func.func @transform_2(%arg0: i32) -> (i32, i32) {
    %c0_i32 = arith.constant 0 : i32
    %c0_i32_0 = arith.constant 0 : i32
    %c0_i32_1 = arith.constant 0 : i32
    return %c0_i32, %c0_i32_0 : i32, i32
  }
  func.func @transform_3(%arg0: i32) -> (i32, i32) {
    %c0_i32 = arith.constant 0 : i32
    %c0_i32_0 = arith.constant 0 : i32
    %c0_i32_1 = arith.constant 0 : i32
    return %c0_i32, %c0_i32_0 : i32, i32
  }
  func.func @transform_4(%arg0: i32) -> (i32, i32) {
    %c0_i32 = arith.constant 0 : i32
    %c0_i32_0 = arith.constant 0 : i32
    %c0_i32_1 = arith.constant 0 : i32
    return %c0_i32, %c0_i32_0 : i32, i32
  }
}

module attributes {stable_mosaic.version = 11 : i64} {
  func.func @_add_ln_kernel(%arg0: i32, %arg1: memref<32x128xf32, #tpu.memory_space<vmem>>, %arg2: memref<32x128xf32, #tpu.memory_space<vmem>>, %arg3: memref<1x128xf32, #tpu.memory_space<vmem>>, %arg4: memref<1x128xf32, #tpu.memory_space<vmem>>, %arg5: memref<32x128xf32, #tpu.memory_space<vmem>>) attributes {dimension_semantics = [#tpu.dimension_semantics<arbitrary>], iteration_bounds = array<i64: 1>, scalar_prefetch = 0 : i64, scratch_operands = 0 : i64, tpu.core_type = #tpu.core_type<tc>, window_params = [{pipeline_mode = #tpu.pipeline_mode<synchronous>, transform_indices = @transform_0, window_bounds = array<i64: 32, 128>}, {pipeline_mode = #tpu.pipeline_mode<synchronous>, transform_indices = @transform_1, window_bounds = array<i64: 32, 128>}, {pipeline_mode = #tpu.pipeline_mode<synchronous>, transform_indices = @transform_2, window_bounds = array<i64: 1, 128>}, {pipeline_mode = #tpu.pipeline_mode<synchronous>, transform_indices = @transform_3, window_bounds = array<i64: 1, 128>}, {pipeline_mode = #tpu.pipeline_mode<synchronous>, transform_indices = @transform_4, window_bounds = array<i64: 32, 128>}]} {
    %c0 = arith.constant 0 : index
    %c0_0 = arith.constant 0 : index
    %0 = vector.load %arg1[%c0, %c0_0] : memref<32x128xf32, #tpu.memory_space<vmem>>, vector<32x128xf32>
    %c0_1 = arith.constant 0 : index
    %c0_2 = arith.constant 0 : index
    %1 = vector.load %arg2[%c0_1, %c0_2] : memref<32x128xf32, #tpu.memory_space<vmem>>, vector<32x128xf32>
    %2 = arith.addf %0, %1 : vector<32x128xf32>
    %c0_3 = arith.constant 0 : index
    %c0_4 = arith.constant 0 : index
    %3 = vector.load %arg3[%c0_3, %c0_4] : memref<1x128xf32, #tpu.memory_space<vmem>>, vector<1x128xf32>
    %c0_5 = arith.constant 0 : index
    %c0_6 = arith.constant 0 : index
    %4 = vector.load %arg4[%c0_5, %c0_6] : memref<1x128xf32, #tpu.memory_space<vmem>>, vector<1x128xf32>
    %cst = arith.constant dense<0.000000e+00> : vector<32xf32>
    %5 = vector.multi_reduction <add>, %2, %cst [1] : vector<32x128xf32> to vector<32xf32>
    %6 = vector.shape_cast %5 : vector<32xf32> to vector<32x1xf32>
    %cst_7 = arith.constant 1.280000e+02 : f32
    %7 = vector.broadcast %cst_7 : f32 to vector<32x1xf32>
    %8 = arith.divf %6, %7 : vector<32x1xf32>
    %9 = vector.broadcast %8 : vector<32x1xf32> to vector<32x128xf32>
    %10 = arith.subf %2, %9 : vector<32x128xf32>
    %11 = arith.mulf %10, %10 : vector<32x128xf32>
    %cst_8 = arith.constant dense<0.000000e+00> : vector<32xf32>
    %12 = vector.multi_reduction <add>, %11, %cst_8 [1] : vector<32x128xf32> to vector<32xf32>
    %13 = vector.shape_cast %12 : vector<32xf32> to vector<32x1xf32>
    %cst_9 = arith.constant 1.280000e+02 : f32
    %14 = vector.broadcast %cst_9 : f32 to vector<32x1xf32>
    %15 = arith.divf %13, %14 : vector<32x1xf32>
    %16 = vector.broadcast %8 : vector<32x1xf32> to vector<32x128xf32>
    %17 = arith.subf %2, %16 : vector<32x128xf32>
    %cst_10 = arith.constant 9.99999996E-13 : f32
    %18 = vector.broadcast %cst_10 : f32 to vector<32x1xf32>
    %19 = arith.addf %15, %18 : vector<32x1xf32>
    %20 = math.rsqrt %19 : vector<32x1xf32>
    %21 = vector.broadcast %20 : vector<32x1xf32> to vector<32x128xf32>
    %22 = arith.mulf %17, %21 : vector<32x128xf32>
    %23 = vector.broadcast %3 : vector<1x128xf32> to vector<32x128xf32>
    %24 = arith.mulf %22, %23 : vector<32x128xf32>
    %25 = vector.broadcast %4 : vector<1x128xf32> to vector<32x128xf32>
    %26 = arith.addf %24, %25 : vector<32x128xf32>
    %c0_11 = arith.constant 0 : index
    %c0_12 = arith.constant 0 : index
    %27 = vector.load %arg5[%c0_11, %c0_12] : memref<32x128xf32, #tpu.memory_space<vmem>>, vector<32x128xf32>
    tpu.vector_store %arg5[%c0_11, %c0_12], %26 {strides = array<i32>} : memref<32x128xf32, #tpu.memory_space<vmem>>, vector<32x128xf32>,
    return
  }
  func.func @transform_0(%arg0: i32) -> (i32, i32) {
    %c0_i32 = arith.constant 0 : i32
    %c0_i32_0 = arith.constant 0 : i32
    %c0_i32_1 = arith.constant 0 : i32
    return %c0_i32, %c0_i32_0 : i32, i32
  }
  func.func @transform_1(%arg0: i32) -> (i32, i32) {
    %c0_i32 = arith.constant 0 : i32
    %c0_i32_0 = arith.constant 0 : i32
    %c0_i32_1 = arith.constant 0 : i32
    return %c0_i32, %c0_i32_0 : i32, i32
  }
  func.func @transform_2(%arg0: i32) -> (i32, i32) {
    %c0_i32 = arith.constant 0 : i32
    %c0_i32_0 = arith.constant 0 : i32
    %c0_i32_1 = arith.constant 0 : i32
    return %c0_i32, %c0_i32_0 : i32, i32
  }
  func.func @transform_3(%arg0: i32) -> (i32, i32) {
    %c0_i32 = arith.constant 0 : i32
    %c0_i32_0 = arith.constant 0 : i32
    %c0_i32_1 = arith.constant 0 : i32
    return %c0_i32, %c0_i32_0 : i32, i32
  }
  func.func @transform_4(%arg0: i32) -> (i32, i32) {
    %c0_i32 = arith.constant 0 : i32
    %c0_i32_0 = arith.constant 0 : i32
    %c0_i32_1 = arith.constant 0 : i32
    return %c0_i32, %c0_i32_0 : i32, i32
  }
}

module attributes {stable_mosaic.version = 11 : i64} {
  func.func @_scatter_kernel(%arg0: i32, %arg1: memref<2x2xi32, #tpu.memory_space<smem>>, %arg2: memref<1x16x128xf32, #tpu.memory_space<vmem>>, %arg3: memref<1x2x128xf32, #tpu.memory_space<vmem>>, %arg4: memref<1x16x128xf32, #tpu.memory_space<vmem>>) attributes {dimension_semantics = [#tpu.dimension_semantics<parallel>], iteration_bounds = array<i64: 2>, scalar_prefetch = 1 : i64, scratch_operands = 0 : i64, tpu.core_type = #tpu.core_type<tc>, window_params = [{transform_indices = @transform_0, window_bounds = array<i64: 1, 16, 128>}, {transform_indices = @transform_1, window_bounds = array<i64: 1, 2, 128>}, {transform_indices = @transform_2, window_bounds = array<i64: 1, 16, 128>}]} {
    %0 = arith.index_cast %arg0 : i32 to index
    %c0 = arith.constant 0 : index
    %1 = memref.load %arg1[%0, %c0] : memref<2x2xi32, #tpu.memory_space<smem>>
    %2 = arith.index_cast %arg0 : i32 to index
    %c1 = arith.constant 1 : index
    %3 = memref.load %arg1[%2, %c1] : memref<2x2xi32, #tpu.memory_space<smem>>
    %c0_0 = arith.constant 0 : index
    %c0_1 = arith.constant 0 : index
    %c0_2 = arith.constant 0 : index
    %4 = vector.load %arg2[%c0_0, %c0_1, %c0_2] : memref<1x16x128xf32, #tpu.memory_space<vmem>>, vector<1x16x128xf32>
    %c0_3 = arith.constant 0 : index
    %c0_4 = arith.constant 0 : index
    %c0_5 = arith.constant 0 : index
    %5 = vector.load %arg3[%c0_3, %c0_4, %c0_5] : memref<1x2x128xf32, #tpu.memory_space<vmem>>, vector<1x1x128xf32>
    %c0_6 = arith.constant 0 : index
    %c1_7 = arith.constant 1 : index
    %c0_8 = arith.constant 0 : index
    %6 = vector.load %arg3[%c0_6, %c1_7, %c0_8] : memref<1x2x128xf32, #tpu.memory_space<vmem>>, vector<1x1x128xf32>
    %7 = tpu.iota {dimensions = array<i32: 1>} : vector<1x16x128xi32>
    %8 = vector.broadcast %1 : i32 to vector<1x16x128xi32>
    %9 = arith.cmpi eq, %7, %8 : vector<1x16x128xi32>
    %10 = vector.shape_cast %5 : vector<1x1x128xf32> to vector<1x1x128xf32>
    %11 = vector.broadcast %10 : vector<1x1x128xf32> to vector<1x16x128xf32>
    %12 = arith.select %9, %11, %4 : vector<1x16x128xi1>, vector<1x16x128xf32>
    %13 = vector.broadcast %3 : i32 to vector<1x16x128xi32>
    %14 = arith.cmpi eq, %7, %13 : vector<1x16x128xi32>
    %15 = vector.shape_cast %6 : vector<1x1x128xf32> to vector<1x1x128xf32>
    %16 = vector.broadcast %15 : vector<1x1x128xf32> to vector<1x16x128xf32>
    %17 = arith.select %14, %16, %12 : vector<1x16x128xi1>, vector<1x16x128xf32>
    %c0_9 = arith.constant 0 : index
    %c0_10 = arith.constant 0 : index
    %c0_11 = arith.constant 0 : index
    %18 = vector.load %arg4[%c0_9, %c0_10, %c0_11] : memref<1x16x128xf32, #tpu.memory_space<vmem>>, vector<1x16x128xf32>
    tpu.vector_store %arg4[%c0_9, %c0_10, %c0_11], %17 {strides = array<i32>} : memref<1x16x128xf32, #tpu.memory_space<vmem>>, vector<1x16x128xf32>,
    return
  }
  func.func @transform_0(%arg0: i32, %arg1: memref<2x2xi32, #tpu.memory_space<smem>>) -> (i32, i32, i32) {
    %c0_i32 = arith.constant 0 : i32
    %c0_i32_0 = arith.constant 0 : i32
    %c0_i32_1 = arith.constant 0 : i32
    return %arg0, %c0_i32, %c0_i32_0 : i32, i32, i32
  }
  func.func @transform_1(%arg0: i32, %arg1: memref<2x2xi32, #tpu.memory_space<smem>>) -> (i32, i32, i32) {
    %c0_i32 = arith.constant 0 : i32
    %c0_i32_0 = arith.constant 0 : i32
    %c0_i32_1 = arith.constant 0 : i32
    return %arg0, %c0_i32, %c0_i32_0 : i32, i32, i32
  }
  func.func @transform_2(%arg0: i32, %arg1: memref<2x2xi32, #tpu.memory_space<smem>>) -> (i32, i32, i32) {
    %c0_i32 = arith.constant 0 : i32
    %c0_i32_0 = arith.constant 0 : i32
    %c0_i32_1 = arith.constant 0 : i32
    return %arg0, %c0_i32, %c0_i32_0 : i32, i32, i32
  }
}

module attributes {stable_mosaic.version = 11 : i64} {
  func.func @_linear_kernel(%arg0: i32, %arg1: memref<32x128xf32, #tpu.memory_space<vmem>>, %arg2: memref<128x384xf32, #tpu.memory_space<vmem>>, %arg3: memref<1x384xf32, #tpu.memory_space<vmem>>, %arg4: memref<32x384xf32, #tpu.memory_space<vmem>>) attributes {dimension_semantics = [#tpu.dimension_semantics<parallel>], iteration_bounds = array<i64: 1>, scalar_prefetch = 0 : i64, scratch_operands = 0 : i64, tpu.core_type = #tpu.core_type<tc>, window_params = [{pipeline_mode = #tpu.pipeline_mode<synchronous>, transform_indices = @transform_0, window_bounds = array<i64: 32, 128>}, {transform_indices = @transform_1, window_bounds = array<i64: 128, 384>}, {transform_indices = @transform_2, window_bounds = array<i64: 1, 384>}, {transform_indices = @transform_3, window_bounds = array<i64: 32, 384>}]} {
    %c0 = arith.constant 0 : index
    %c0_0 = arith.constant 0 : index
    %0 = vector.load %arg1[%c0, %c0_0] : memref<32x128xf32, #tpu.memory_space<vmem>>, vector<32x128xf32>
    %c0_1 = arith.constant 0 : index
    %c0_2 = arith.constant 0 : index
    %1 = vector.load %arg2[%c0_1, %c0_2] : memref<128x384xf32, #tpu.memory_space<vmem>>, vector<128x384xf32>
    %cst = arith.constant dense<0.000000e+00> : vector<32x384xf32>
    %2 = tpu.matmul %0, %1, %cst {dimension_numbers = #tpu.dot_dimension_numbers<[1], [0], [0], [1], [0, 0, 1, 1], [], []>} : vector<32x128xf32>, vector<128x384xf32>, vector<32x384xf32> -> vector<32x384xf32>
    %c0_3 = arith.constant 0 : index
    %c0_4 = arith.constant 0 : index
    %3 = vector.load %arg3[%c0_3, %c0_4] : memref<1x384xf32, #tpu.memory_space<vmem>>, vector<1x384xf32>
    %4 = vector.broadcast %3 : vector<1x384xf32> to vector<32x384xf32>
    %5 = arith.addf %2, %4 : vector<32x384xf32>
    %c0_5 = arith.constant 0 : index
    %c0_6 = arith.constant 0 : index
    %6 = vector.load %arg4[%c0_5, %c0_6] : memref<32x384xf32, #tpu.memory_space<vmem>>, vector<32x384xf32>
    tpu.vector_store %arg4[%c0_5, %c0_6], %5 {strides = array<i32>} : memref<32x384xf32, #tpu.memory_space<vmem>>, vector<32x384xf32>,
    return
  }
  func.func @transform_0(%arg0: i32) -> (i32, i32) {
    %c0_i32 = arith.constant 0 : i32
    %c0_i32_0 = arith.constant 0 : i32
    %c0_i32_1 = arith.constant 0 : i32
    return %c0_i32, %c0_i32_0 : i32, i32
  }
  func.func @transform_1(%arg0: i32) -> (i32, i32) {
    %c0_i32 = arith.constant 0 : i32
    %c0_i32_0 = arith.constant 0 : i32
    return %c0_i32, %arg0 : i32, i32
  }
  func.func @transform_2(%arg0: i32) -> (i32, i32) {
    %c0_i32 = arith.constant 0 : i32
    %c0_i32_0 = arith.constant 0 : i32
    return %c0_i32, %arg0 : i32, i32
  }
  func.func @transform_3(%arg0: i32) -> (i32, i32) {
    %c0_i32 = arith.constant 0 : i32
    %c0_i32_0 = arith.constant 0 : i32
    return %c0_i32, %arg0 : i32, i32
  }
}

module attributes {stable_mosaic.version = 11 : i64} {
  func.func @_attn_kernel(%arg0: i32, %arg1: memref<8x16x32xf32, #tpu.memory_space<vmem>>, %arg2: memref<8x16x32xf32, #tpu.memory_space<vmem>>, %arg3: memref<8x16x32xf32, #tpu.memory_space<vmem>>, %arg4: memref<8x16x32xf32, #tpu.memory_space<vmem>>) attributes {dimension_semantics = [#tpu.dimension_semantics<arbitrary>], iteration_bounds = array<i64: 1>, scalar_prefetch = 0 : i64, scratch_operands = 0 : i64, tpu.core_type = #tpu.core_type<tc>, window_params = [{pipeline_mode = #tpu.pipeline_mode<synchronous>, transform_indices = @transform_0, window_bounds = array<i64: 8, 16, 32>}, {pipeline_mode = #tpu.pipeline_mode<synchronous>, transform_indices = @transform_1, window_bounds = array<i64: 8, 16, 32>}, {pipeline_mode = #tpu.pipeline_mode<synchronous>, transform_indices = @transform_2, window_bounds = array<i64: 8, 16, 32>}, {pipeline_mode = #tpu.pipeline_mode<synchronous>, transform_indices = @transform_3, window_bounds = array<i64: 8, 16, 32>}]} {
    %c0 = arith.constant 0 : index
    %c0_0 = arith.constant 0 : index
    %c0_1 = arith.constant 0 : index
    %0 = vector.load %arg1[%c0, %c0_0, %c0_1] : memref<8x16x32xf32, #tpu.memory_space<vmem>>, vector<8x16x32xf32>
    %c0_2 = arith.constant 0 : index
    %c0_3 = arith.constant 0 : index
    %c0_4 = arith.constant 0 : index
    %1 = vector.load %arg2[%c0_2, %c0_3, %c0_4] : memref<8x16x32xf32, #tpu.memory_space<vmem>>, vector<8x16x32xf32>
    %c0_5 = arith.constant 0 : index
    %c0_6 = arith.constant 0 : index
    %c0_7 = arith.constant 0 : index
    %2 = vector.load %arg3[%c0_5, %c0_6, %c0_7] : memref<8x16x32xf32, #tpu.memory_space<vmem>>, vector<8x16x32xf32>
    "tpu.trace_start"() <{level = 10 : i32, message = "bqd,bkd->bqk"}> : () -> ()
    %cst = arith.constant dense<0.000000e+00> : vector<8x16x16xf32>
    %3 = tpu.matmul %0, %1, %cst {dimension_numbers = #tpu.dot_dimension_numbers<[2], [2], [1], [1], [0, 0, 0, 1, 1, 1], [0], [0]>} : vector<8x16x32xf32>, vector<8x16x32xf32>, vector<8x16x16xf32> -> vector<8x16x16xf32>
    "tpu.trace_stop"() : () -> ()
    %cst_8 = arith.constant 0.176776692 : f32
    %4 = vector.broadcast %cst_8 : f32 to vector<8x16x16xf32>
    %5 = arith.mulf %3, %4 : vector<8x16x16xf32>
    %cst_9 = arith.constant dense<0xFF800000> : vector<8x16xf32>
    %6 = vector.multi_reduction <maximumf>, %5, %cst_9 [2] : vector<8x16x16xf32> to vector<8x16xf32>
    %7 = vector.shape_cast %6 : vector<8x16xf32> to vector<8x16x1xf32>
    %8 = vector.broadcast %7 : vector<8x16x1xf32> to vector<8x16x16xf32>
    %9 = arith.subf %5, %8 : vector<8x16x16xf32>
    %10 = math.exp %9 : vector<8x16x16xf32>
    %cst_10 = arith.constant dense<0.000000e+00> : vector<8x16xf32>
    %11 = vector.multi_reduction <add>, %10, %cst_10 [2] : vector<8x16x16xf32> to vector<8x16xf32>
    %12 = vector.shape_cast %11 : vector<8x16xf32> to vector<8x16x1xf32>
    "tpu.trace_start"() <{level = 10 : i32, message = "bqk,bkd->bqd"}> : () -> ()
    %cst_11 = arith.constant dense<0.000000e+00> : vector<8x16x32xf32>
    %13 = tpu.matmul %10, %2, %cst_11 {dimension_numbers = #tpu.dot_dimension_numbers<[2], [1], [1], [2], [0, 0, 0, 1, 1, 2], [0], [0]>} : vector<8x16x16xf32>, vector<8x16x32xf32>, vector<8x16x32xf32> -> vector<8x16x32xf32>
    "tpu.trace_stop"() : () -> ()
    %14 = tpu.reciprocal %12 {approx = true} : vector<8x16x1xf32> -> vector<8x16x1xf32>
    %15 = vector.broadcast %14 : vector<8x16x1xf32> to vector<8x16x32xf32>
    %16 = arith.mulf %13, %15 : vector<8x16x32xf32>
    %c0_12 = arith.constant 0 : index
    %c0_13 = arith.constant 0 : index
    %c0_14 = arith.constant 0 : index
    %17 = vector.load %arg4[%c0_12, %c0_13, %c0_14] : memref<8x16x32xf32, #tpu.memory_space<vmem>>, vector<8x16x32xf32>
    tpu.vector_store %arg4[%c0_12, %c0_13, %c0_14], %16 {strides = array<i32>} : memref<8x16x32xf32, #tpu.memory_space<vmem>>, vector<8x16x32xf32>,
    return
  }
  func.func @transform_0(%arg0: i32) -> (i32, i32, i32) {
    %c0_i32 = arith.constant 0 : i32
    %c0_i32_0 = arith.constant 0 : i32
    %c0_i32_1 = arith.constant 0 : i32
    %c0_i32_2 = arith.constant 0 : i32
    return %c0_i32, %c0_i32_0, %c0_i32_1 : i32, i32, i32
  }
  func.func @transform_1(%arg0: i32) -> (i32, i32, i32) {
    %c0_i32 = arith.constant 0 : i32
    %c0_i32_0 = arith.constant 0 : i32
    %c0_i32_1 = arith.constant 0 : i32
    %c0_i32_2 = arith.constant 0 : i32
    return %c0_i32, %c0_i32_0, %c0_i32_1 : i32, i32, i32
  }
  func.func @transform_2(%arg0: i32) -> (i32, i32, i32) {
    %c0_i32 = arith.constant 0 : i32
    %c0_i32_0 = arith.constant 0 : i32
    %c0_i32_1 = arith.constant 0 : i32
    %c0_i32_2 = arith.constant 0 : i32
    return %c0_i32, %c0_i32_0, %c0_i32_1 : i32, i32, i32
  }
  func.func @transform_3(%arg0: i32) -> (i32, i32, i32) {
    %c0_i32 = arith.constant 0 : i32
    %c0_i32_0 = arith.constant 0 : i32
    %c0_i32_1 = arith.constant 0 : i32
    %c0_i32_2 = arith.constant 0 : i32
    return %c0_i32, %c0_i32_0, %c0_i32_1 : i32, i32, i32
  }
}

module attributes {stable_mosaic.version = 11 : i64} {
  func.func @_mlm_head_kernel(%arg0: i32, %arg1: memref<32x128xf32, #tpu.memory_space<vmem>>, %arg2: memref<128x128xf32, #tpu.memory_space<vmem>>, %arg3: memref<1x128xf32, #tpu.memory_space<vmem>>, %arg4: memref<1x128xf32, #tpu.memory_space<vmem>>, %arg5: memref<1x128xf32, #tpu.memory_space<vmem>>, %arg6: memref<128x256xf32, #tpu.memory_space<vmem>>, %arg7: memref<1x256xf32, #tpu.memory_space<vmem>>, %arg8: memref<32x256xf32, #tpu.memory_space<vmem>>) attributes {dimension_semantics = [#tpu.dimension_semantics<arbitrary>], iteration_bounds = array<i64: 1>, scalar_prefetch = 0 : i64, scratch_operands = 0 : i64, tpu.core_type = #tpu.core_type<tc>, window_params = [{pipeline_mode = #tpu.pipeline_mode<synchronous>, transform_indices = @transform_0, window_bounds = array<i64: 32, 128>}, {pipeline_mode = #tpu.pipeline_mode<synchronous>, transform_indices = @transform_1, window_bounds = array<i64: 128, 128>}, {pipeline_mode = #tpu.pipeline_mode<synchronous>, transform_indices = @transform_2, window_bounds = array<i64: 1, 128>}, {pipeline_mode = #tpu.pipeline_mode<synchronous>, transform_indices = @transform_3, window_bounds = array<i64: 1, 128>}, {pipeline_mode = #tpu.pipeline_mode<synchronous>, transform_indices = @transform_4, window_bounds = array<i64: 1, 128>}, {pipeline_mode = #tpu.pipeline_mode<synchronous>, transform_indices = @transform_5, window_bounds = array<i64: 128, 256>}, {pipeline_mode = #tpu.pipeline_mode<synchronous>, transform_indices = @transform_6, window_bounds = array<i64: 1, 256>}, {pipeline_mode = #tpu.pipeline_mode<synchronous>, transform_indices = @transform_7, window_bounds = array<i64: 32, 256>}]} {
    %c0 = arith.constant 0 : index
    %c0_0 = arith.constant 0 : index
    %0 = vector.load %arg1[%c0, %c0_0] : memref<32x128xf32, #tpu.memory_space<vmem>>, vector<32x128xf32>
    %c0_1 = arith.constant 0 : index
    %c0_2 = arith.constant 0 : index
    %1 = vector.load %arg2[%c0_1, %c0_2] : memref<128x128xf32, #tpu.memory_space<vmem>>, vector<128x128xf32>
    %cst = arith.constant dense<0.000000e+00> : vector<32x128xf32>
    %2 = tpu.matmul %0, %1, %cst {dimension_numbers = #tpu.dot_dimension_numbers<[1], [0], [0], [1], [0, 0, 1, 1], [], []>} : vector<32x128xf32>, vector<128x128xf32>, vector<32x128xf32> -> vector<32x128xf32>
    %c0_3 = arith.constant 0 : index
    %c0_4 = arith.constant 0 : index
    %3 = vector.load %arg3[%c0_3, %c0_4] : memref<1x128xf32, #tpu.memory_space<vmem>>, vector<1x128xf32>
    %4 = vector.broadcast %3 : vector<1x128xf32> to vector<32x128xf32>
    %5 = arith.addf %2, %4 : vector<32x128xf32>
    %6 = arith.mulf %5, %5 : vector<32x128xf32>
    %7 = arith.mulf %5, %6 : vector<32x128xf32>
    %cst_5 = arith.constant 4.471500e-02 : f32
    %8 = vector.broadcast %cst_5 : f32 to vector<32x128xf32>
    %9 = arith.mulf %8, %7 : vector<32x128xf32>
    %10 = arith.addf %5, %9 : vector<32x128xf32>
    %cst_6 = arith.constant 0.797884583 : f32
    %11 = vector.broadcast %cst_6 : f32 to vector<32x128xf32>
    %12 = arith.mulf %11, %10 : vector<32x128xf32>
    %13 = math.tanh %12 : vector<32x128xf32>
    %cst_7 = arith.constant 1.000000e+00 : f32
    %14 = vector.broadcast %cst_7 : f32 to vector<32x128xf32>
    %15 = arith.addf %14, %13 : vector<32x128xf32>
    %cst_8 = arith.constant 5.000000e-01 : f32
    %16 = vector.broadcast %cst_8 : f32 to vector<32x128xf32>
    %17 = arith.mulf %16, %15 : vector<32x128xf32>
    %18 = arith.mulf %5, %17 : vector<32x128xf32>
    %c0_9 = arith.constant 0 : index
    %c0_10 = arith.constant 0 : index
    %19 = vector.load %arg4[%c0_9, %c0_10] : memref<1x128xf32, #tpu.memory_space<vmem>>, vector<1x128xf32>
    %c0_11 = arith.constant 0 : index
    %c0_12 = arith.constant 0 : index
    %20 = vector.load %arg5[%c0_11, %c0_12] : memref<1x128xf32, #tpu.memory_space<vmem>>, vector<1x128xf32>
    %cst_13 = arith.constant dense<0.000000e+00> : vector<32xf32>
    %21 = vector.multi_reduction <add>, %18, %cst_13 [1] : vector<32x128xf32> to vector<32xf32>
    %22 = vector.shape_cast %21 : vector<32xf32> to vector<32x1xf32>
    %cst_14 = arith.constant 1.280000e+02 : f32
    %23 = vector.broadcast %cst_14 : f32 to vector<32x1xf32>
    %24 = arith.divf %22, %23 : vector<32x1xf32>
    %25 = vector.broadcast %24 : vector<32x1xf32> to vector<32x128xf32>
    %26 = arith.subf %18, %25 : vector<32x128xf32>
    %27 = arith.mulf %26, %26 : vector<32x128xf32>
    %cst_15 = arith.constant dense<0.000000e+00> : vector<32xf32>
    %28 = vector.multi_reduction <add>, %27, %cst_15 [1] : vector<32x128xf32> to vector<32xf32>
    %29 = vector.shape_cast %28 : vector<32xf32> to vector<32x1xf32>
    %cst_16 = arith.constant 1.280000e+02 : f32
    %30 = vector.broadcast %cst_16 : f32 to vector<32x1xf32>
    %31 = arith.divf %29, %30 : vector<32x1xf32>
    %32 = vector.broadcast %24 : vector<32x1xf32> to vector<32x128xf32>
    %33 = arith.subf %18, %32 : vector<32x128xf32>
    %cst_17 = arith.constant 9.99999996E-13 : f32
    %34 = vector.broadcast %cst_17 : f32 to vector<32x1xf32>
    %35 = arith.addf %31, %34 : vector<32x1xf32>
    %36 = math.rsqrt %35 : vector<32x1xf32>
    %37 = vector.broadcast %36 : vector<32x1xf32> to vector<32x128xf32>
    %38 = arith.mulf %33, %37 : vector<32x128xf32>
    %39 = vector.broadcast %19 : vector<1x128xf32> to vector<32x128xf32>
    %40 = arith.mulf %38, %39 : vector<32x128xf32>
    %41 = vector.broadcast %20 : vector<1x128xf32> to vector<32x128xf32>
    %42 = arith.addf %40, %41 : vector<32x128xf32>
    %c0_18 = arith.constant 0 : index
    %c0_19 = arith.constant 0 : index
    %43 = vector.load %arg6[%c0_18, %c0_19] : memref<128x256xf32, #tpu.memory_space<vmem>>, vector<128x256xf32>
    %cst_20 = arith.constant dense<0.000000e+00> : vector<32x256xf32>
    %44 = tpu.matmul %42, %43, %cst_20 {dimension_numbers = #tpu.dot_dimension_numbers<[1], [0], [0], [1], [0, 0, 1, 1], [], []>} : vector<32x128xf32>, vector<128x256xf32>, vector<32x256xf32> -> vector<32x256xf32>
    %c0_21 = arith.constant 0 : index
    %c0_22 = arith.constant 0 : index
    %45 = vector.load %arg7[%c0_21, %c0_22] : memref<1x256xf32, #tpu.memory_space<vmem>>, vector<1x256xf32>
    %46 = vector.broadcast %45 : vector<1x256xf32> to vector<32x256xf32>
    %47 = arith.addf %44, %46 : vector<32x256xf32>
    %c0_23 = arith.constant 0 : index
    %c0_24 = arith.constant 0 : index
    %48 = vector.load %arg8[%c0_23, %c0_24] : memref<32x256xf32, #tpu.memory_space<vmem>>, vector<32x256xf32>
    tpu.vector_store %arg8[%c0_23, %c0_24], %47 {strides = array<i32>} : memref<32x256xf32, #tpu.memory_space<vmem>>, vector<32x256xf32>,
    return
  }
  func.func @transform_0(%arg0: i32) -> (i32, i32) {
    %c0_i32 = arith.constant 0 : i32
    %c0_i32_0 = arith.constant 0 : i32
    %c0_i32_1 = arith.constant 0 : i32
    return %c0_i32, %c0_i32_0 : i32, i32
  }
  func.func @transform_1(%arg0: i32) -> (i32, i32) {
    %c0_i32 = arith.constant 0 : i32
    %c0_i32_0 = arith.constant 0 : i32
    %c0_i32_1 = arith.constant 0 : i32
    return %c0_i32, %c0_i32_0 : i32, i32
  }
  func.func @transform_2(%arg0: i32) -> (i32, i32) {
    %c0_i32 = arith.constant 0 : i32
    %c0_i32_0 = arith.constant 0 : i32
    %c0_i32_1 = arith.constant 0 : i32
    return %c0_i32, %c0_i32_0 : i32, i32
  }
  func.func @transform_3(%arg0: i32) -> (i32, i32) {
    %c0_i32 = arith.constant 0 : i32
    %c0_i32_0 = arith.constant 0 : i32
    %c0_i32_1 = arith.constant 0 : i32
    return %c0_i32, %c0_i32_0 : i32, i32
  }
  func.func @transform_4(%arg0: i32) -> (i32, i32) {
    %c0_i32 = arith.constant 0 : i32
    %c0_i32_0 = arith.constant 0 : i32
    %c0_i32_1 = arith.constant 0 : i32
    return %c0_i32, %c0_i32_0 : i32, i32
  }
  func.func @transform_5(%arg0: i32) -> (i32, i32) {
    %c0_i32 = arith.constant 0 : i32
    %c0_i32_0 = arith.constant 0 : i32
    %c0_i32_1 = arith.constant 0 : i32
    return %c0_i32, %c0_i32_0 : i32, i32
  }
  func.func @transform_6(%arg0: i32) -> (i32, i32) {
    %c0_i32 = arith.constant 0 : i32
    %c0_i32_0 = arith.constant 0 : i32
    %c0_i32_1 = arith.constant 0 : i32
    return %c0_i32, %c0_i32_0 : i32, i32
  }
  func.func @transform_7(%arg0: i32) -> (i32, i32) {
    %c0_i32 = arith.constant 0 : i32
    %c0_i32_0 = arith.constant 0 : i32
    %c0_i32_1 = arith.constant 0 : i32
    return %c0_i32, %c0_i32_0 : i32, i32
  }
}

module attributes {stable_mosaic.version = 11 : i64} {
  func.func @_proj_add_ln_kernel(%arg0: i32, %arg1: memref<32x128xf32, #tpu.memory_space<vmem>>, %arg2: memref<32x128xf32, #tpu.memory_space<vmem>>, %arg3: memref<128x128xf32, #tpu.memory_space<vmem>>, %arg4: memref<1x128xf32, #tpu.memory_space<vmem>>, %arg5: memref<1x128xf32, #tpu.memory_space<vmem>>, %arg6: memref<1x128xf32, #tpu.memory_space<vmem>>, %arg7: memref<32x128xf32, #tpu.memory_space<vmem>>) attributes {dimension_semantics = [#tpu.dimension_semantics<arbitrary>], iteration_bounds = array<i64: 1>, scalar_prefetch = 0 : i64, scratch_operands = 0 : i64, tpu.core_type = #tpu.core_type<tc>, window_params = [{pipeline_mode = #tpu.pipeline_mode<synchronous>, transform_indices = @transform_0, window_bounds = array<i64: 32, 128>}, {pipeline_mode = #tpu.pipeline_mode<synchronous>, transform_indices = @transform_1, window_bounds = array<i64: 32, 128>}, {pipeline_mode = #tpu.pipeline_mode<synchronous>, transform_indices = @transform_2, window_bounds = array<i64: 128, 128>}, {pipeline_mode = #tpu.pipeline_mode<synchronous>, transform_indices = @transform_3, window_bounds = array<i64: 1, 128>}, {pipeline_mode = #tpu.pipeline_mode<synchronous>, transform_indices = @transform_4, window_bounds = array<i64: 1, 128>}, {pipeline_mode = #tpu.pipeline_mode<synchronous>, transform_indices = @transform_5, window_bounds = array<i64: 1, 128>}, {pipeline_mode = #tpu.pipeline_mode<synchronous>, transform_indices = @transform_6, window_bounds = array<i64: 32, 128>}]} {
    %c0 = arith.constant 0 : index
    %c0_0 = arith.constant 0 : index
    %0 = vector.load %arg1[%c0, %c0_0] : memref<32x128xf32, #tpu.memory_space<vmem>>, vector<32x128xf32>
    %c0_1 = arith.constant 0 : index
    %c0_2 = arith.constant 0 : index
    %1 = vector.load %arg3[%c0_1, %c0_2] : memref<128x128xf32, #tpu.memory_space<vmem>>, vector<128x128xf32>
    %cst = arith.constant dense<0.000000e+00> : vector<32x128xf32>
    %2 = tpu.matmul %0, %1, %cst {dimension_numbers = #tpu.dot_dimension_numbers<[1], [0], [0], [1], [0, 0, 1, 1], [], []>} : vector<32x128xf32>, vector<128x128xf32>, vector<32x128xf32> -> vector<32x128xf32>
    %c0_3 = arith.constant 0 : index
    %c0_4 = arith.constant 0 : index
    %3 = vector.load %arg4[%c0_3, %c0_4] : memref<1x128xf32, #tpu.memory_space<vmem>>, vector<1x128xf32>
    %4 = vector.broadcast %3 : vector<1x128xf32> to vector<32x128xf32>
    %5 = arith.addf %2, %4 : vector<32x128xf32>
    %c0_5 = arith.constant 0 : index
    %c0_6 = arith.constant 0 : index
    %6 = vector.load %arg2[%c0_5, %c0_6] : memref<32x128xf32, #tpu.memory_space<vmem>>, vector<32x128xf32>
    %7 = arith.addf %5, %6 : vector<32x128xf32>
    %c0_7 = arith.constant 0 : index
    %c0_8 = arith.constant 0 : index
    %8 = vector.load %arg5[%c0_7, %c0_8] : memref<1x128xf32, #tpu.memory_space<vmem>>, vector<1x128xf32>
    %c0_9 = arith.constant 0 : index
    %c0_10 = arith.constant 0 : index
    %9 = vector.load %arg6[%c0_9, %c0_10] : memref<1x128xf32, #tpu.memory_space<vmem>>, vector<1x128xf32>
    %cst_11 = arith.constant dense<0.000000e+00> : vector<32xf32>
    %10 = vector.multi_reduction <add>, %7, %cst_11 [1] : vector<32x128xf32> to vector<32xf32>
    %11 = vector.shape_cast %10 : vector<32xf32> to vector<32x1xf32>
    %cst_12 = arith.constant 1.280000e+02 : f32
    %12 = vector.broadcast %cst_12 : f32 to vector<32x1xf32>
    %13 = arith.divf %11, %12 : vector<32x1xf32>
    %14 = vector.broadcast %13 : vector<32x1xf32> to vector<32x128xf32>
    %15 = arith.subf %7, %14 : vector<32x128xf32>
    %16 = arith.mulf %15, %15 : vector<32x128xf32>
    %cst_13 = arith.constant dense<0.000000e+00> : vector<32xf32>
    %17 = vector.multi_reduction <add>, %16, %cst_13 [1] : vector<32x128xf32> to vector<32xf32>
    %18 = vector.shape_cast %17 : vector<32xf32> to vector<32x1xf32>
    %cst_14 = arith.constant 1.280000e+02 : f32
    %19 = vector.broadcast %cst_14 : f32 to vector<32x1xf32>
    %20 = arith.divf %18, %19 : vector<32x1xf32>
    %21 = vector.broadcast %13 : vector<32x1xf32> to vector<32x128xf32>
    %22 = arith.subf %7, %21 : vector<32x128xf32>
    %cst_15 = arith.constant 9.99999996E-13 : f32
    %23 = vector.broadcast %cst_15 : f32 to vector<32x1xf32>
    %24 = arith.addf %20, %23 : vector<32x1xf32>
    %25 = math.rsqrt %24 : vector<32x1xf32>
    %26 = vector.broadcast %25 : vector<32x1xf32> to vector<32x128xf32>
    %27 = arith.mulf %22, %26 : vector<32x128xf32>
    %28 = vector.broadcast %8 : vector<1x128xf32> to vector<32x128xf32>
    %29 = arith.mulf %27, %28 : vector<32x128xf32>
    %30 = vector.broadcast %9 : vector<1x128xf32> to vector<32x128xf32>
    %31 = arith.addf %29, %30 : vector<32x128xf32>
    %c0_16 = arith.constant 0 : index
    %c0_17 = arith.constant 0 : index
    %32 = vector.load %arg7[%c0_16, %c0_17] : memref<32x128xf32, #tpu.memory_space<vmem>>, vector<32x128xf32>
    tpu.vector_store %arg7[%c0_16, %c0_17], %31 {strides = array<i32>} : memref<32x128xf32, #tpu.memory_space<vmem>>, vector<32x128xf32>,
    return
  }
  func.func @transform_0(%arg0: i32) -> (i32, i32) {
    %c0_i32 = arith.constant 0 : i32
    %c0_i32_0 = arith.constant 0 : i32
    %c0_i32_1 = arith.constant 0 : i32
    return %c0_i32, %c0_i32_0 : i32, i32
  }
  func.func @transform_1(%arg0: i32) -> (i32, i32) {
    %c0_i32 = arith.constant 0 : i32
    %c0_i32_0 = arith.constant 0 : i32
    %c0_i32_1 = arith.constant 0 : i32
    return %c0_i32, %c0_i32_0 : i32, i32
  }
  func.func @transform_2(%arg0: i32) -> (i32, i32) {
    %c0_i32 = arith.constant 0 : i32
    %c0_i32_0 = arith.constant 0 : i32
    %c0_i32_1 = arith.constant 0 : i32
    return %c0_i32, %c0_i32_0 : i32, i32
  }
  func.func @transform_3(%arg0: i32) -> (i32, i32) {
    %c0_i32 = arith.constant 0 : i32
    %c0_i32_0 = arith.constant 0 : i32
    %c0_i32_1 = arith.constant 0 : i32
    return %c0_i32, %c0_i32_0 : i32, i32
  }
  func.func @transform_4(%arg0: i32) -> (i32, i32) {
    %c0_i32 = arith.constant 0 : i32
    %c0_i32_0 = arith.constant 0 : i32
    %c0_i32_1 = arith.constant 0 : i32
    return %c0_i32, %c0_i32_0 : i32, i32
  }
  func.func @transform_5(%arg0: i32) -> (i32, i32) {
    %c0_i32 = arith.constant 0 : i32
    %c0_i32_0 = arith.constant 0 : i32
    %c0_i32_1 = arith.constant 0 : i32
    return %c0_i32, %c0_i32_0 : i32, i32
  }
  func.func @transform_6(%arg0: i32) -> (i32, i32) {
    %c0_i32 = arith.constant 0 : i32
    %c0_i32_0 = arith.constant 0 : i32
    %c0_i32_1 = arith.constant 0 : i32
    return %c0_i32, %c0_i32_0 : i32, i32
  }
}

module attributes {stable_mosaic.version = 11 : i64} {
  func.func @_ffn_ln_kernel(%arg0: i32, %arg1: memref<32x128xf32, #tpu.memory_space<vmem>>, %arg2: memref<128x256xf32, #tpu.memory_space<vmem>>, %arg3: memref<1x256xf32, #tpu.memory_space<vmem>>, %arg4: memref<256x128xf32, #tpu.memory_space<vmem>>, %arg5: memref<1x128xf32, #tpu.memory_space<vmem>>, %arg6: memref<1x128xf32, #tpu.memory_space<vmem>>, %arg7: memref<1x128xf32, #tpu.memory_space<vmem>>, %arg8: memref<32x128xf32, #tpu.memory_space<vmem>>) attributes {dimension_semantics = [#tpu.dimension_semantics<arbitrary>], iteration_bounds = array<i64: 1>, scalar_prefetch = 0 : i64, scratch_operands = 0 : i64, tpu.core_type = #tpu.core_type<tc>, window_params = [{pipeline_mode = #tpu.pipeline_mode<synchronous>, transform_indices = @transform_0, window_bounds = array<i64: 32, 128>}, {pipeline_mode = #tpu.pipeline_mode<synchronous>, transform_indices = @transform_1, window_bounds = array<i64: 128, 256>}, {pipeline_mode = #tpu.pipeline_mode<synchronous>, transform_indices = @transform_2, window_bounds = array<i64: 1, 256>}, {pipeline_mode = #tpu.pipeline_mode<synchronous>, transform_indices = @transform_3, window_bounds = array<i64: 256, 128>}, {pipeline_mode = #tpu.pipeline_mode<synchronous>, transform_indices = @transform_4, window_bounds = array<i64: 1, 128>}, {pipeline_mode = #tpu.pipeline_mode<synchronous>, transform_indices = @transform_5, window_bounds = array<i64: 1, 128>}, {pipeline_mode = #tpu.pipeline_mode<synchronous>, transform_indices = @transform_6, window_bounds = array<i64: 1, 128>}, {pipeline_mode = #tpu.pipeline_mode<synchronous>, transform_indices = @transform_7, window_bounds = array<i64: 32, 128>}]} {
    %c0 = arith.constant 0 : index
    %c0_0 = arith.constant 0 : index
    %0 = vector.load %arg1[%c0, %c0_0] : memref<32x128xf32, #tpu.memory_space<vmem>>, vector<32x128xf32>
    %c0_1 = arith.constant 0 : index
    %c0_2 = arith.constant 0 : index
    %1 = vector.load %arg2[%c0_1, %c0_2] : memref<128x256xf32, #tpu.memory_space<vmem>>, vector<128x256xf32>
    %cst = arith.constant dense<0.000000e+00> : vector<32x256xf32>
    %2 = tpu.matmul %0, %1, %cst {dimension_numbers = #tpu.dot_dimension_numbers<[1], [0], [0], [1], [0, 0, 1, 1], [], []>} : vector<32x128xf32>, vector<128x256xf32>, vector<32x256xf32> -> vector<32x256xf32>
    %c0_3 = arith.constant 0 : index
    %c0_4 = arith.constant 0 : index
    %3 = vector.load %arg3[%c0_3, %c0_4] : memref<1x256xf32, #tpu.memory_space<vmem>>, vector<1x256xf32>
    %4 = vector.broadcast %3 : vector<1x256xf32> to vector<32x256xf32>
    %5 = arith.addf %2, %4 : vector<32x256xf32>
    %6 = arith.mulf %5, %5 : vector<32x256xf32>
    %7 = arith.mulf %5, %6 : vector<32x256xf32>
    %cst_5 = arith.constant 4.471500e-02 : f32
    %8 = vector.broadcast %cst_5 : f32 to vector<32x256xf32>
    %9 = arith.mulf %8, %7 : vector<32x256xf32>
    %10 = arith.addf %5, %9 : vector<32x256xf32>
    %cst_6 = arith.constant 0.797884583 : f32
    %11 = vector.broadcast %cst_6 : f32 to vector<32x256xf32>
    %12 = arith.mulf %11, %10 : vector<32x256xf32>
    %13 = math.tanh %12 : vector<32x256xf32>
    %cst_7 = arith.constant 1.000000e+00 : f32
    %14 = vector.broadcast %cst_7 : f32 to vector<32x256xf32>
    %15 = arith.addf %14, %13 : vector<32x256xf32>
    %cst_8 = arith.constant 5.000000e-01 : f32
    %16 = vector.broadcast %cst_8 : f32 to vector<32x256xf32>
    %17 = arith.mulf %16, %15 : vector<32x256xf32>
    %18 = arith.mulf %5, %17 : vector<32x256xf32>
    %c0_9 = arith.constant 0 : index
    %c0_10 = arith.constant 0 : index
    %19 = vector.load %arg4[%c0_9, %c0_10] : memref<256x128xf32, #tpu.memory_space<vmem>>, vector<256x128xf32>
    %cst_11 = arith.constant dense<0.000000e+00> : vector<32x128xf32>
    %20 = tpu.matmul %18, %19, %cst_11 {dimension_numbers = #tpu.dot_dimension_numbers<[1], [0], [0], [1], [0, 0, 1, 1], [], []>} : vector<32x256xf32>, vector<256x128xf32>, vector<32x128xf32> -> vector<32x128xf32>
    %c0_12 = arith.constant 0 : index
    %c0_13 = arith.constant 0 : index
    %21 = vector.load %arg5[%c0_12, %c0_13] : memref<1x128xf32, #tpu.memory_space<vmem>>, vector<1x128xf32>
    %22 = vector.broadcast %21 : vector<1x128xf32> to vector<32x128xf32>
    %23 = arith.addf %20, %22 : vector<32x128xf32>
    %24 = arith.addf %23, %0 : vector<32x128xf32>
    %c0_14 = arith.constant 0 : index
    %c0_15 = arith.constant 0 : index
    %25 = vector.load %arg6[%c0_14, %c0_15] : memref<1x128xf32, #tpu.memory_space<vmem>>, vector<1x128xf32>
    %c0_16 = arith.constant 0 : index
    %c0_17 = arith.constant 0 : index
    %26 = vector.load %arg7[%c0_16, %c0_17] : memref<1x128xf32, #tpu.memory_space<vmem>>, vector<1x128xf32>
    %cst_18 = arith.constant dense<0.000000e+00> : vector<32xf32>
    %27 = vector.multi_reduction <add>, %24, %cst_18 [1] : vector<32x128xf32> to vector<32xf32>
    %28 = vector.shape_cast %27 : vector<32xf32> to vector<32x1xf32>
    %cst_19 = arith.constant 1.280000e+02 : f32
    %29 = vector.broadcast %cst_19 : f32 to vector<32x1xf32>
    %30 = arith.divf %28, %29 : vector<32x1xf32>
    %31 = vector.broadcast %30 : vector<32x1xf32> to vector<32x128xf32>
    %32 = arith.subf %24, %31 : vector<32x128xf32>
    %33 = arith.mulf %32, %32 : vector<32x128xf32>
    %cst_20 = arith.constant dense<0.000000e+00> : vector<32xf32>
    %34 = vector.multi_reduction <add>, %33, %cst_20 [1] : vector<32x128xf32> to vector<32xf32>
    %35 = vector.shape_cast %34 : vector<32xf32> to vector<32x1xf32>
    %cst_21 = arith.constant 1.280000e+02 : f32
    %36 = vector.broadcast %cst_21 : f32 to vector<32x1xf32>
    %37 = arith.divf %35, %36 : vector<32x1xf32>
    %38 = vector.broadcast %30 : vector<32x1xf32> to vector<32x128xf32>
    %39 = arith.subf %24, %38 : vector<32x128xf32>
    %cst_22 = arith.constant 9.99999996E-13 : f32
    %40 = vector.broadcast %cst_22 : f32 to vector<32x1xf32>
    %41 = arith.addf %37, %40 : vector<32x1xf32>
    %42 = math.rsqrt %41 : vector<32x1xf32>
    %43 = vector.broadcast %42 : vector<32x1xf32> to vector<32x128xf32>
    %44 = arith.mulf %39, %43 : vector<32x128xf32>
    %45 = vector.broadcast %25 : vector<1x128xf32> to vector<32x128xf32>
    %46 = arith.mulf %44, %45 : vector<32x128xf32>
    %47 = vector.broadcast %26 : vector<1x128xf32> to vector<32x128xf32>
    %48 = arith.addf %46, %47 : vector<32x128xf32>
    %c0_23 = arith.constant 0 : index
    %c0_24 = arith.constant 0 : index
    %49 = vector.load %arg8[%c0_23, %c0_24] : memref<32x128xf32, #tpu.memory_space<vmem>>, vector<32x128xf32>
    tpu.vector_store %arg8[%c0_23, %c0_24], %48 {strides = array<i32>} : memref<32x128xf32, #tpu.memory_space<vmem>>, vector<32x128xf32>,
    return
  }
  func.func @transform_0(%arg0: i32) -> (i32, i32) {
    %c0_i32 = arith.constant 0 : i32
    %c0_i32_0 = arith.constant 0 : i32
    %c0_i32_1 = arith.constant 0 : i32
    return %c0_i32, %c0_i32_0 : i32, i32
  }
  func.func @transform_1(%arg0: i32) -> (i32, i32) {
    %c0_i32 = arith.constant 0 : i32
    %c0_i32_0 = arith.constant 0 : i32
    %c0_i32_1 = arith.constant 0 : i32
    return %c0_i32, %c0_i32_0 : i32, i32
  }
  func.func @transform_2(%arg0: i32) -> (i32, i32) {
    %c0_i32 = arith.constant 0 : i32
    %c0_i32_0 = arith.constant 0 : i32
    %c0_i32_1 = arith.constant 0 : i32
    return %c0_i32, %c0_i32_0 : i32, i32
  }
  func.func @transform_3(%arg0: i32) -> (i32, i32) {
    %c0_i32 = arith.constant 0 : i32
    %c0_i32_0 = arith.constant 0 : i32
    %c0_i32_1 = arith.constant 0 : i32
    return %c0_i32, %c0_i32_0 : i32, i32
  }
  func.func @transform_4(%arg0: i32) -> (i32, i32) {
    %c0_i32 = arith.constant 0 : i32
    %c0_i32_0 = arith.constant 0 : i32
    %c0_i32_1 = arith.constant 0 : i32
    return %c0_i32, %c0_i32_0 : i32, i32
  }
  func.func @transform_5(%arg0: i32) -> (i32, i32) {
    %c0_i32 = arith.constant 0 : i32
    %c0_i32_0 = arith.constant 0 : i32
    %c0_i32_1 = arith.constant 0 : i32
    return %c0_i32, %c0_i32_0 : i32, i32
  }
  func.func @transform_6(%arg0: i32) -> (i32, i32) {
    %c0_i32 = arith.constant 0 : i32
    %c0_i32_0 = arith.constant 0 : i32
    %c0_i32_1 = arith.constant 0 : i32
    return %c0_i32, %c0_i32_0 : i32, i32
  }
  func.func @transform_7(%arg0: i32) -> (i32, i32) {
    %c0_i32 = arith.constant 0 : i32
    %c0_i32_0 = arith.constant 0 : i32
    %c0_i32_1 = arith.constant 0 : i32
    return %c0_i32, %c0_i32_0 : i32, i32
  }
}

</mosaic_0001>

<llo_original>
// kernel: ak_bert_forward.14
$region0: #{ak_bert_forward.14}
  #allocation0 [shape = 'u32[]', space=smem, size = 0x4, offset = 0x4, fixed_abs, tag = 'smem constant byte address 0x4 - core index']
  #allocation1 [shape = 'u32[144,128]{1,0:T(1,128)}', space=vmem, size = 0x12000, scoped, tag = 'internal scratch']
  %s0 = inlined_call_operand.vmem [shape: f32[64,32], index: 0, kind: input, shape index: {}]
  %s1 = inlined_call_operand.vmem [shape: f32[64,64], index: 1, kind: input, shape index: {}]
  %s2 = inlined_call_operand.vmem [shape: f32[32,64], index: 2, kind: input, shape index: {}]
  %s3 = inlined_call_operand.vmem [shape: f32[1,64], index: 3, kind: input, shape index: {}, may-alias: {3,5}]
  %s4 = inlined_call_operand.vmem [shape: f32[1,64], index: 4, kind: input, shape index: {}]
  %s5 = inlined_call_operand.vmem [shape: f32[1,64], index: 5, kind: input, shape index: {}, may-alias: {3,5}]
  %s6 = inlined_call_operand.vmem [shape: f32[64,64], index: 6, kind: output, shape index: {}]
  %s7 = sld [smem:[#allocation0]]
  $region34: #{ak_bert_forward.14} parent=0
    _
  %s9 = ssub.s32 1, %s7
  %s10 = scalar_select 0, %s9, %s7
  // Predicated region
  $region2: #{ak_bert_forward.14} parent=0 // pred_check
    _
  $region3: #{ak_bert_forward.14} parent=0 // pred_check_branch
    %12 = sbr.rel (0) target = $region5
  $region4: #{ak_bert_forward.14} parent=0 // pred_region
    _
  $region5: #{ak_bert_forward.14} parent=0 // pred_fallthru
    _
  // Predicated region
  $region6: #{ak_bert_forward.14} parent=0 // pred_check
    _
  $region7: #{ak_bert_forward.14} parent=0 // pred_check_branch
    %14 = sbr.rel (0) target = $region9
  $region8: #{ak_bert_forward.14} parent=0 // pred_region
    _
  $region9: #{ak_bert_forward.14} parent=0 // pred_fallthru
    _
  // Predicated region
  $region10: #{ak_bert_forward.14} parent=0 // pred_check
    _
  $region11: #{ak_bert_forward.14} parent=0 // pred_check_branch
    %16 = sbr.rel (0) target = $region13
  $region12: #{ak_bert_forward.14} parent=0 // pred_region
    _
  $region13: #{ak_bert_forward.14} parent=0 // pred_fallthru
    _
  // Predicated region
  $region14: #{ak_bert_forward.14} parent=0 // pred_check
    _
  $region15: #{ak_bert_forward.14} parent=0 // pred_check_branch
    %18 = sbr.rel (0) target = $region17
  $region16: #{ak_bert_forward.14} parent=0 // pred_region
    _
  $region17: #{ak_bert_forward.14} parent=0 // pred_fallthru
    _
  // Predicated region
  $region18: #{ak_bert_forward.14} parent=0 // pred_check
    _
  $region19: #{ak_bert_forward.14} parent=0 // pred_check_branch
    %20 = sbr.rel (0) target = $region21
  $region20: #{ak_bert_forward.14} parent=0 // pred_region
    _
  $region21: #{ak_bert_forward.14} parent=0 // pred_fallthru
    _
  // Predicated region
  $region22: #{ak_bert_forward.14} parent=0 // pred_check
    _
  $region23: #{ak_bert_forward.14} parent=0 // pred_check_branch
    %22 = sbr.rel (0) target = $region25
  $region24: #{ak_bert_forward.14} parent=0 // pred_region
    _
  $region25: #{ak_bert_forward.14} parent=0 // pred_fallthru
    _
  %v23 = vld [vmem:[%s0] sm:$0xff]
  %v24 = vld [vmem:[%s0 + $0x8] sm:$0xff]
  %v25 = vld [vmem:[%s0 + $0x10] sm:$0xff]
  %v26 = vld [vmem:[%s0 + $0x18] sm:$0xff]
  %v27 = vld [vmem:[%s0 + $0x20] sm:$0xff]
  %v28 = vld [vmem:[%s0 + $0x28] sm:$0xff]
  %v29 = vld [vmem:[%s0 + $0x30] sm:$0xff]
  %v30 = vld [vmem:[%s0 + $0x38] sm:$0xff]
  %v31 = vld [vmem:[%s2] sm:$0xff]
  %v32 = vld [vmem:[%s2 + $0x8] sm:$0xff]
  %v33 = vld [vmem:[%s2 + $0x10] sm:$0xff]
  %v34 = vld [vmem:[%s2 + $0x18] sm:$0xff]
  %v35 = vld [vmem:[%s3] sm:$0x1]
  %v37 = vlaneseq
  %v38 = vshrl.u32 %v37, 7
  %v39 = vsub.s32 0, %v38
  %v40 = vrot.slane %v35, %v39
  %vm42 = vcmask 261120
  %v44 = vsel %vm42, %v23, 0
  %v47 = vsel %vm42, %v24, 0
  %v50 = vsel %vm42, %v25, 0
  %v53 = vsel %vm42, %v26, 0
  %v56 = vsel %vm42, %v27, 0
  %v59 = vsel %vm42, %v28, 0
  %v62 = vsel %vm42, %v29, 0
  %v65 = vsel %vm42, %v30, 0
  %67 = vmatprep.subr.mxu0 0.0
  %68 = vmatpush1.msra.mxu0 %v31
  %69 = vmatprep.subr.mxu0 0.0
  %70 = vmatpush1.msra.mxu0 %v32
  %71 = vmatprep.subr.mxu0 0.0
  %72 = vmatpush1.msra.mxu0 %v33
  %73 = vmatprep.subr.mxu0 0.0
  %74 = vmatpush1.msra.mxu0 %v34
  %75 = vmatprep.subr.mxu0 0.0
  %76 = vmatpush1.msra.mxu0 0.0
  %77 = vmatprep.subr.mxu0 0.0
  %78 = vmatpush1.msra.mxu0 0.0
  %79 = vmatprep.subr.mxu0 0.0
  %80 = vmatpush1.msra.mxu0 0.0
  %81 = vmatprep.subr.mxu0 0.0
  %82 = vmatpush1.msra.mxu0 0.0
  %83 = vmatprep.subr.mxu0 0.0
  %84 = vmatpush1.msra.mxu0 0.0
  %85 = vmatprep.subr.mxu0 0.0
  %86 = vmatpush1.msra.mxu0 0.0
  %87 = vmatprep.subr.mxu0 0.0
  %88 = vmatpush1.msra.mxu0 0.0
  %89 = vmatprep.subr.mxu0 0.0
  %90 = vmatpush1.msra.mxu0 0.0
  %91 = vmatprep.subr.mxu0 0.0
  %92 = vmatpush1.msra.mxu0 0.0
  %93 = vmatprep.subr.mxu0 0.0
  %94 = vmatpush1.msra.mxu0 0.0
  %95 = vmatprep.subr.mxu0 0.0
  %96 = vmatpush1.msra.mxu0 0.0
  %97 = vmatprep.subr.mxu0 0.0
  %98 = vmatpush1.msra.mxu0 0.0
  %99 = vmatprep.subr.mxu0 0.0
  %100 = vmatpush1.msra.mxu0 0.0
  %101 = vmatprep.subr.mxu0 0.0
  %102 = vmatpush1.msra.mxu0 0.0
  %103 = vmatprep.subr.mxu0 0.0
  %104 = vmatpush1.msra.mxu0 0.0
  %105 = vmatprep.subr.mxu0 0.0
  %106 = vmatpush1.msra.mxu0 0.0
  %107 = vmatprep.subr.mxu0 0.0
  %108 = vmatpush1.msra.mxu0 0.0
  %109 = vmatprep.subr.mxu0 0.0
  %110 = vmatpush1.msra.mxu0 0.0
  %111 = vmatprep.subr.mxu0 0.0
  %112 = vmatpush1.msra.mxu0 0.0
  %113 = vmatprep.subr.mxu0 0.0
  %114 = vmatpush1.msra.mxu0 0.0
  %115 = vmatprep.subr.mxu0 0.0
  %116 = vmatpush1.msra.mxu0 0.0
  %117 = vmatprep.subr.mxu0 0.0
  %118 = vmatpush1.msra.mxu0 0.0
  %119 = vmatprep.subr.mxu0 0.0
  %120 = vmatpush1.msra.mxu0 0.0
  %121 = vmatprep.subr.mxu0 0.0
  %122 = vmatpush1.msra.mxu0 0.0
  %123 = vmatprep.subr.mxu0 0.0
  %124 = vmatpush1.msra.mxu0 0.0
  %125 = vmatprep.subr.mxu0 0.0
  %126 = vmatpush1.msra.mxu0 0.0
  %127 = vmatprep.subr.mxu0 0.0
  %128 = vmatpush1.msra.mxu0 0.0
  %129 = vmatprep.subr.mxu0 0.0
  %130 = vmatpush1.msra.mxu0 0.0
  %131 = vmatprep.mubr.f32.mxu0 0.0
  %132 = vmatmul.mubr.f32.gmra.mrb[0].mxu0 %v44
  %v133 = vpop.f32.mrb[0].mxu0
  %v134 = vadd.f32 %v40, %v133
  %v135 = vpop.f32.mrb[0].mxu0
  %136 = vmatprep.mubr.f32.mxu0 0.0
  %137 = vmatmul.mubr.f32.gmra.mrb[0].mxu0 %v47
  %v138 = vpop.f32.mrb[0].mxu0
  %v139 = vadd.f32 %v40, %v138
  %v140 = vpop.f32.mrb[0].mxu0
  %141 = vmatprep.mubr.f32.mxu0 0.0
  %142 = vmatmul.mubr.f32.gmra.mrb[0].mxu0 %v50
  %v143 = vpop.f32.mrb[0].mxu0
  %v144 = vadd.f32 %v40, %v143
  %v145 = vpop.f32.mrb[0].mxu0
  %146 = vmatprep.mubr.f32.mxu0 0.0
  %147 = vmatmul.mubr.f32.gmra.mrb[0].mxu0 %v53
  %v148 = vpop.f32.mrb[0].mxu0
  %v149 = vadd.f32 %v40, %v148
  %v150 = vpop.f32.mrb[0].mxu0
  %151 = vmatprep.mubr.f32.mxu0 0.0
  %152 = vmatmul.mubr.f32.gmra.mrb[0].mxu0 %v56
  %v153 = vpop.f32.mrb[0].mxu0
  %v154 = vadd.f32 %v40, %v153
  %v155 = vpop.f32.mrb[0].mxu0
  %156 = vmatprep.mubr.f32.mxu0 0.0
  %157 = vmatmul.mubr.f32.gmra.mrb[0].mxu0 %v59
  %v158 = vpop.f32.mrb[0].mxu0
  %v159 = vadd.f32 %v40, %v158
  %v160 = vpop.f32.mrb[0].mxu0
  %161 = vmatprep.mubr.f32.mxu0 0.0
  %162 = vmatmul.mubr.f32.gmra.mrb[0].mxu0 %v62
  %v163 = vpop.f32.mrb[0].mxu0
  %v164 = vadd.f32 %v40, %v163
  %v165 = vpop.f32.mrb[0].mxu0
  %166 = vmatprep.mubr.f32.mxu0 0.0
  %167 = vmatmul.mubr.f32.gmra.mrb[0].mxu0 %v65
  %v168 = vpop.f32.mrb[0].mxu0
  %v169 = vadd.f32 %v40, %v168
  %v170 = vpop.f32.mrb[0].mxu0
  %171 = vdwg.mxu0
  %v172 = vld [vmem:[%s1] sm:$0xff]
  %v173 = vld [vmem:[%s1 + $0x8] sm:$0xff]
  %v174 = vld [vmem:[%s1 + $0x10] sm:$0xff]
  %v175 = vld [vmem:[%s1 + $0x18] sm:$0xff]
  %v176 = vld [vmem:[%s1 + $0x20] sm:$0xff]
  %v177 = vld [vmem:[%s1 + $0x28] sm:$0xff]
  %v178 = vld [vmem:[%s1 + $0x30] sm:$0xff]
  %v179 = vld [vmem:[%s1 + $0x38] sm:$0xff]
  %v180 = vadd.f32 %v134, %v172
  %v181 = vadd.f32 %v139, %v173
  %v182 = vadd.f32 %v144, %v174
  %v183 = vadd.f32 %v149, %v175
  %v184 = vadd.f32 %v154, %v176
  %v185 = vadd.f32 %v159, %v177
  %v186 = vadd.f32 %v164, %v178
  %v187 = vadd.f32 %v169, %v179
  %v188 = vld [vmem:[%s4] sm:$0x1]
  %v189 = vld [vmem:[%s5] sm:$0x1]
  %vm190 = vcmask 523264
  %v191 = vsel %vm190, %v180, 0.0
  %192 = vadd.xlane.f32.xlu0 %v191
  %v193 = vpop.xlane.xlu0 %192
  %v194 = vsel %vm190, %v181, 0.0
  %195 = vadd.xlane.f32.xlu0 %v194
  %v196 = vpop.xlane.xlu0 %195
  %v197 = vsel %vm190, %v182, 0.0
  %198 = vadd.xlane.f32.xlu0 %v197
  %v199 = vpop.xlane.xlu0 %198
  %v200 = vsel %vm190, %v183, 0.0
  %201 = vadd.xlane.f32.xlu0 %v200
  %v202 = vpop.xlane.xlu0 %201
  %v203 = vsel %vm190, %v184, 0.0
  %204 = vadd.xlane.f32.xlu0 %v203
  %v205 = vpop.xlane.xlu0 %204
  %v206 = vsel %vm190, %v185, 0.0
  %207 = vadd.xlane.f32.xlu0 %v206
  %v208 = vpop.xlane.xlu0 %207
  %v209 = vsel %vm190, %v186, 0.0
  %210 = vadd.xlane.f32.xlu0 %v209
  %v211 = vpop.xlane.xlu0 %210
  %v212 = vsel %vm190, %v187, 0.0
  %213 = vadd.xlane.f32.xlu0 %v212
  %v214 = vpop.xlane.xlu0 %213
  %v215 = vrcp.pop 64.0
  %v216 = vmul.f32 %v193, %v215
  %v217 = vmul.f32 %v196, %v215
  %v218 = vmul.f32 %v199, %v215
  %v219 = vmul.f32 %v202, %v215
  %v220 = vmul.f32 %v205, %v215
  %v221 = vmul.f32 %v208, %v215
  %v222 = vmul.f32 %v211, %v215
  %v223 = vmul.f32 %v214, %v215
  %v224 = vsub.f32 %v180, %v216
  %v225 = vsub.f32 %v181, %v217
  %v226 = vsub.f32 %v182, %v218
  %v227 = vsub.f32 %v183, %v219
  %v228 = vsub.f32 %v184, %v220
  %v229 = vsub.f32 %v185, %v221
  %v230 = vsub.f32 %v186, %v222
  %v231 = vsub.f32 %v187, %v223
  %v232 = vmul.f32 %v224, %v224
  %v233 = vmul.f32 %v225, %v225
  %v234 = vmul.f32 %v226, %v226
  %v235 = vmul.f32 %v227, %v227
  %v236 = vmul.f32 %v228, %v228
  %v237 = vmul.f32 %v229, %v229
  %v238 = vmul.f32 %v230, %v230
  %v239 = vmul.f32 %v231, %v231
  %v240 = vsel %vm190, %v232, 0.0
  %241 = vadd.xlane.f32.xlu0 %v240
  %v242 = vpop.xlane.xlu0 %241
  %v243 = vsel %vm190, %v233, 0.0
  %244 = vadd.xlane.f32.xlu0 %v243
  %v245 = vpop.xlane.xlu0 %244
  %v246 = vsel %vm190, %v234, 0.0
  %247 = vadd.xlane.f32.xlu0 %v246
  %v248 = vpop.xlane.xlu0 %247
  %v249 = vsel %vm190, %v235, 0.0
  %250 = vadd.xlane.f32.xlu0 %v249
  %v251 = vpop.xlane.xlu0 %250
  %v252 = vsel %vm190, %v236, 0.0
  %253 = vadd.xlane.f32.xlu0 %v252
  %v254 = vpop.xlane.xlu0 %253
  %v255 = vsel %vm190, %v237, 0.0
  %256 = vadd.xlane.f32.xlu0 %v255
  %v257 = vpop.xlane.xlu0 %256
  %v258 = vsel %vm190, %v238, 0.0
  %259 = vadd.xlane.f32.xlu0 %v258
  %v260 = vpop.xlane.xlu0 %259
  %v261 = vsel %vm190, %v239, 0.0
  %262 = vadd.xlane.f32.xlu0 %v261
  %v263 = vpop.xlane.xlu0 %262
  %v264 = vmul.f32 %v242, %v215
  %v265 = vmul.f32 %v245, %v215
  %v266 = vmul.f32 %v248, %v215
  %v267 = vmul.f32 %v251, %v215
  %v268 = vmul.f32 %v254, %v215
  %v269 = vmul.f32 %v257, %v215
  %v270 = vmul.f32 %v260, %v215
  %v271 = vmul.f32 %v263, %v215
  %v272 = vadd.f32 %v264, 1e-12
  %v273 = vadd.f32 %v265, 1e-12
  %v274 = vadd.f32 %v266, 1e-12
  %v275 = vadd.f32 %v267, 1e-12
  %v276 = vadd.f32 %v268, 1e-12
  %v277 = vadd.f32 %v269, 1e-12
  %v278 = vadd.f32 %v270, 1e-12
  %v279 = vadd.f32 %v271, 1e-12
  %v280 = vrsqrt.pop %v272
  %v281 = vrsqrt.pop %v273
  %v282 = vrsqrt.pop %v274
  %v283 = vrsqrt.pop %v275
  %v284 = vrsqrt.pop %v276
  %v285 = vrsqrt.pop %v277
  %v286 = vrsqrt.pop %v278
  %v287 = vrsqrt.pop %v279
  %v288 = vmul.f32 %v224, %v280
  %v289 = vmul.f32 %v225, %v281
  %v290 = vmul.f32 %v226, %v282
  %v291 = vmul.f32 %v227, %v283
  %v292 = vmul.f32 %v228, %v284
  %v293 = vmul.f32 %v229, %v285
  %v294 = vmul.f32 %v230, %v286
  %v295 = vmul.f32 %v231, %v287
  %v297 = vlaneseq
  %v298 = vshrl.u32 %v297, 7
  %v299 = vsub.s32 0, %v298
  %v300 = vrot.slane %v188, %v299
  %v302 = vmul.f32 %v288, %v300
  %v303 = vmul.f32 %v289, %v300
  %v304 = vmul.f32 %v290, %v300
  %v305 = vmul.f32 %v291, %v300
  %v306 = vmul.f32 %v292, %v300
  %v307 = vmul.f32 %v293, %v300
  %v308 = vmul.f32 %v294, %v300
  %v309 = vmul.f32 %v295, %v300
  %v311 = vlaneseq
  %v312 = vshrl.u32 %v311, 7
  %v313 = vsub.s32 0, %v312
  %v314 = vrot.slane %v189, %v313
  %v316 = vadd.f32 %v302, %v314
  %v317 = vadd.f32 %v303, %v314
  %v318 = vadd.f32 %v304, %v314
  %v319 = vadd.f32 %v305, %v314
  %v320 = vadd.f32 %v306, %v314
  %v321 = vadd.f32 %v307, %v314
  %v322 = vadd.f32 %v308, %v314
  %v323 = vadd.f32 %v309, %v314
  %324 = vst.msk [vmem:[%s6] sm:$0xff] %vm190, %v316
  %325 = vst.msk [vmem:[%s6 + $0x8] sm:$0xff] %vm190, %v317
  %326 = vst.msk [vmem:[%s6 + $0x10] sm:$0xff] %vm190, %v318
  %327 = vst.msk [vmem:[%s6 + $0x18] sm:$0xff] %vm190, %v319
  %328 = vst.msk [vmem:[%s6 + $0x20] sm:$0xff] %vm190, %v320
  %329 = vst.msk [vmem:[%s6 + $0x28] sm:$0xff] %vm190, %v321
  %330 = vst.msk [vmem:[%s6 + $0x30] sm:$0xff] %vm190, %v322
  %331 = vst.msk [vmem:[%s6 + $0x38] sm:$0xff] %vm190, %v323
  // Predicated region
  $region26: #{ak_bert_forward.14} parent=0 // pred_check
    _
  $region27: #{ak_bert_forward.14} parent=0 // pred_check_branch
    %333 = sbr.rel (0) target = $region29
  $region28: #{ak_bert_forward.14} parent=0 // pred_region
    _
  $region29: #{ak_bert_forward.14} parent=0 // pred_fallthru
    _
  // Predicated region
  $region30: #{ak_bert_forward.14} parent=0 // pred_check
    _
  $region31: #{ak_bert_forward.14} parent=0 // pred_check_branch
    %335 = sbr.rel (0) target = $region33
  $region32: #{ak_bert_forward.14} parent=0 // pred_region
    _
  $region33: #{ak_bert_forward.14} parent=0 // pred_fallthru
    _

// kernel: ak_bert_forward.15
$region0: #{ak_bert_forward.15}
  #allocation0 [shape = 'u32[]', space=smem, size = 0x4, offset = 0x4, fixed_abs, tag = 'smem constant byte address 0x4 - core index']
  #allocation1 [shape = 'u32[144,128]{1,0:T(1,128)}', space=vmem, size = 0x12000, scoped, tag = 'internal scratch']
  %s0 = inlined_call_operand.vmem [shape: f32[64,64], index: 0, kind: input, shape index: {}]
  %s1 = inlined_call_operand.vmem [shape: f32[64,192], index: 1, kind: input, shape index: {}]
  %s2 = inlined_call_operand.vmem [shape: f32[1,192], index: 2, kind: input, shape index: {}]
  %s3 = inlined_call_operand.vmem [shape: f32[64,192], index: 3, kind: output, shape index: {}]
  %s4 = sld [smem:[#allocation0]]
  $region22: #{ak_bert_forward.15} parent=0
    _
  %s6 = ssub.s32 1, %s4
  %s7 = scalar_select 0, %s6, %s4
  // Predicated region
  $region2: #{ak_bert_forward.15} parent=0 // pred_check
    _
  $region3: #{ak_bert_forward.15} parent=0 // pred_check_branch
    %9 = sbr.rel (0) target = $region5
  $region4: #{ak_bert_forward.15} parent=0 // pred_region
    _
  $region5: #{ak_bert_forward.15} parent=0 // pred_fallthru
    _
  // Predicated region
  $region6: #{ak_bert_forward.15} parent=0 // pred_check
    _
  $region7: #{ak_bert_forward.15} parent=0 // pred_check_branch
    %11 = sbr.rel (0) target = $region9
  $region8: #{ak_bert_forward.15} parent=0 // pred_region
    _
  $region9: #{ak_bert_forward.15} parent=0 // pred_fallthru
    _
  // Predicated region
  $region10: #{ak_bert_forward.15} parent=0 // pred_check
    _
  $region11: #{ak_bert_forward.15} parent=0 // pred_check_branch
    %13 = sbr.rel (0) target = $region13
  $region12: #{ak_bert_forward.15} parent=0 // pred_region
    _
  $region13: #{ak_bert_forward.15} parent=0 // pred_fallthru
    _
  %v14 = vld [vmem:[%s0] sm:$0xff]
  %v15 = vld [vmem:[%s0 + $0x8] sm:$0xff]
  %v16 = vld [vmem:[%s0 + $0x10] sm:$0xff]
  %v17 = vld [vmem:[%s0 + $0x18] sm:$0xff]
  %v18 = vld [vmem:[%s0 + $0x20] sm:$0xff]
  %v19 = vld [vmem:[%s0 + $0x28] sm:$0xff]
  %v20 = vld [vmem:[%s0 + $0x30] sm:$0xff]
  %v21 = vld [vmem:[%s0 + $0x38] sm:$0xff]
  %v22 = vld [vmem:[%s1] sm:$0xff]
  %v23 = vld [vmem:[%s1 + $0x8] sm:$0xff]
  %v24 = vld [vmem:[%s1 + $0x10] sm:$0xff]
  %v25 = vld [vmem:[%s1 + $0x18] sm:$0xff]
  %v26 = vld [vmem:[%s1 + $0x20] sm:$0xff]
  %v27 = vld [vmem:[%s1 + $0x28] sm:$0xff]
  %v28 = vld [vmem:[%s1 + $0x30] sm:$0xff]
  %v29 = vld [vmem:[%s1 + $0x38] sm:$0xff]
  %v30 = vld [vmem:[%s1 + $0x40] sm:$0xff]
  %v31 = vld [vmem:[%s1 + $0x48] sm:$0xff]
  %v32 = vld [vmem:[%s1 + $0x50] sm:$0xff]
  %v33 = vld [vmem:[%s1 + $0x58] sm:$0xff]
  %v34 = vld [vmem:[%s1 + $0x60] sm:$0xff]
  %v35 = vld [vmem:[%s1 + $0x68] sm:$0xff]
  %v36 = vld [vmem:[%s1 + $0x70] sm:$0xff]
  %v37 = vld [vmem:[%s1 + $0x78] sm:$0xff]
  %v38 = vld [vmem:[%s2] sm:$0x3]
  %v40 = vlaneseq
  %v41 = vshrl.u32 %v40, 7
  %v42 = vsub.s32 0, %v41
  %v43 = vrot.slane %v38, %v42
  %v44 = vlaneseq
  %v45 = vshrl.u32 %v44, 7
  %v46 = vsub.s32 1, %v45
  %v47 = vrot.slane %v38, %v46
  %vm50 = vcmask 523264
  %v52 = vsel %vm50, %v14, 0
  %v55 = vsel %vm50, %v15, 0
  %v58 = vsel %vm50, %v16, 0
  %v61 = vsel %vm50, %v17, 0
  %v64 = vsel %vm50, %v18, 0
  %v67 = vsel %vm50, %v19, 0
  %v70 = vsel %vm50, %v20, 0
  %v73 = vsel %vm50, %v21, 0
  %75 = vmatprep.subr.mxu0 %v23
  %76 = vmatpush1.msra.mxu0 %v22
  %77 = vmatprep.subr.mxu0 %v25
  %78 = vmatpush1.msra.mxu0 %v24
  %79 = vmatprep.subr.mxu0 %v27
  %80 = vmatpush1.msra.mxu0 %v26
  %81 = vmatprep.subr.mxu0 %v29
  %82 = vmatpush1.msra.mxu0 %v28
  %83 = vmatprep.subr.mxu0 %v31
  %84 = vmatpush1.msra.mxu0 %v30
  %85 = vmatprep.subr.mxu0 %v33
  %86 = vmatpush1.msra.mxu0 %v32
  %87 = vmatprep.subr.mxu0 %v35
  %88 = vmatpush1.msra.mxu0 %v34
  %89 = vmatprep.subr.mxu0 %v37
  %90 = vmatpush1.msra.mxu0 %v36
  %91 = vmatprep.subr.mxu0 0.0
  %92 = vmatpush1.msra.mxu0 0.0
  %93 = vmatprep.subr.mxu0 0.0
  %94 = vmatpush1.msra.mxu0 0.0
  %95 = vmatprep.subr.mxu0 0.0
  %96 = vmatpush1.msra.mxu0 0.0
  %97 = vmatprep.subr.mxu0 0.0
  %98 = vmatpush1.msra.mxu0 0.0
  %99 = vmatprep.subr.mxu0 0.0
  %100 = vmatpush1.msra.mxu0 0.0
  %101 = vmatprep.subr.mxu0 0.0
  %102 = vmatpush1.msra.mxu0 0.0
  %103 = vmatprep.subr.mxu0 0.0
  %104 = vmatpush1.msra.mxu0 0.0
  %105 = vmatprep.subr.mxu0 0.0
  %106 = vmatpush1.msra.mxu0 0.0
  %107 = vmatprep.subr.mxu0 0.0
  %108 = vmatpush1.msra.mxu0 0.0
  %109 = vmatprep.subr.mxu0 0.0
  %110 = vmatpush1.msra.mxu0 0.0
  %111 = vmatprep.subr.mxu0 0.0
  %112 = vmatpush1.msra.mxu0 0.0
  %113 = vmatprep.subr.mxu0 0.0
  %114 = vmatpush1.msra.mxu0 0.0
  %115 = vmatprep.subr.mxu0 0.0
  %116 = vmatpush1.msra.mxu0 0.0
  %117 = vmatprep.subr.mxu0 0.0
  %118 = vmatpush1.msra.mxu0 0.0
  %119 = vmatprep.subr.mxu0 0.0
  %120 = vmatpush1.msra.mxu0 0.0
  %121 = vmatprep.subr.mxu0 0.0
  %122 = vmatpush1.msra.mxu0 0.0
  %123 = vmatprep.subr.mxu0 0.0
  %124 = vmatpush1.msra.mxu0 0.0
  %125 = vmatprep.subr.mxu0 0.0
  %126 = vmatpush1.msra.mxu0 0.0
  %127 = vmatprep.subr.mxu0 0.0
  %128 = vmatpush1.msra.mxu0 0.0
  %129 = vmatprep.subr.mxu0 0.0
  %130 = vmatpush1.msra.mxu0 0.0
  %131 = vmatprep.subr.mxu0 0.0
  %132 = vmatpush1.msra.mxu0 0.0
  %133 = vmatprep.subr.mxu0 0.0
  %134 = vmatpush1.msra.mxu0 0.0
  %135 = vmatprep.subr.mxu0 0.0
  %136 = vmatpush1.msra.mxu0 0.0
  %137 = vmatprep.subr.mxu0 0.0
  %138 = vmatpush1.msra.mxu0 0.0
  %139 = vmatprep.mubr.f32.mxu0 0.0
  %140 = vmatmul.mubr.f32.gmra.mrb[0].mxu0 %v52
  %v141 = vpop.f32.mrb[0].mxu0
  %v142 = vadd.f32 %v43, %v141
  %v143 = vpop.f32.mrb[0].mxu0
  %v144 = vadd.f32 %v47, %v143
  %145 = vmatprep.mubr.f32.mxu0 0.0
  %146 = vmatmul.mubr.f32.gmra.mrb[0].mxu0 %v55
  %v147 = vpop.f32.mrb[0].mxu0
  %v148 = vadd.f32 %v43, %v147
  %v149 = vpop.f32.mrb[0].mxu0
  %v150 = vadd.f32 %v47, %v149
  %151 = vmatprep.mubr.f32.mxu0 0.0
  %152 = vmatmul.mubr.f32.gmra.mrb[0].mxu0 %v58
  %v153 = vpop.f32.mrb[0].mxu0
  %v154 = vadd.f32 %v43, %v153
  %v155 = vpop.f32.mrb[0].mxu0
  %v156 = vadd.f32 %v47, %v155
  %157 = vmatprep.mubr.f32.mxu0 0.0
  %158 = vmatmul.mubr.f32.gmra.mrb[0].mxu0 %v61
  %v159 = vpop.f32.mrb[0].mxu0
  %v160 = vadd.f32 %v43, %v159
  %v161 = vpop.f32.mrb[0].mxu0
  %v162 = vadd.f32 %v47, %v161
  %163 = vmatprep.mubr.f32.mxu0 0.0
  %164 = vmatmul.mubr.f32.gmra.mrb[0].mxu0 %v64
  %v165 = vpop.f32.mrb[0].mxu0
  %v166 = vadd.f32 %v43, %v165
  %v167 = vpop.f32.mrb[0].mxu0
  %v168 = vadd.f32 %v47, %v167
  %169 = vmatprep.mubr.f32.mxu0 0.0
  %170 = vmatmul.mubr.f32.gmra.mrb[0].mxu0 %v67
  %v171 = vpop.f32.mrb[0].mxu0
  %v172 = vadd.f32 %v43, %v171
  %v173 = vpop.f32.mrb[0].mxu0
  %v174 = vadd.f32 %v47, %v173
  %175 = vmatprep.mubr.f32.mxu0 0.0
  %176 = vmatmul.mubr.f32.gmra.mrb[0].mxu0 %v70
  %v177 = vpop.f32.mrb[0].mxu0
  %v178 = vadd.f32 %v43, %v177
  %v179 = vpop.f32.mrb[0].mxu0
  %v180 = vadd.f32 %v47, %v179
  %181 = vmatprep.mubr.f32.mxu0 0.0
  %182 = vmatmul.mubr.f32.gmra.mrb[0].mxu0 %v73
  %v183 = vpop.f32.mrb[0].mxu0
  %v184 = vadd.f32 %v43, %v183
  %v185 = vpop.f32.mrb[0].mxu0
  %v186 = vadd.f32 %v47, %v185
  %187 = vdwg.mxu0
  %188 = vst [vmem:[%s3] sm:$0xff] %v142
  %189 = vst.msk [vmem:[%s3 + $0x8] sm:$0xff] %vm50, %v144
  %190 = vst [vmem:[%s3 + $0x10] sm:$0xff] %v148
  %191 = vst.msk [vmem:[%s3 + $0x18] sm:$0xff] %vm50, %v150
  %192 = vst [vmem:[%s3 + $0x20] sm:$0xff] %v154
  %193 = vst.msk [vmem:[%s3 + $0x28] sm:$0xff] %vm50, %v156
  %194 = vst [vmem:[%s3 + $0x30] sm:$0xff] %v160
  %195 = vst.msk [vmem:[%s3 + $0x38] sm:$0xff] %vm50, %v162
  %196 = vst [vmem:[%s3 + $0x40] sm:$0xff] %v166
  %197 = vst.msk [vmem:[%s3 + $0x48] sm:$0xff] %vm50, %v168
  %198 = vst [vmem:[%s3 + $0x50] sm:$0xff] %v172
  %199 = vst.msk [vmem:[%s3 + $0x58] sm:$0xff] %vm50, %v174
  %200 = vst [vmem:[%s3 + $0x60] sm:$0xff] %v178
  %201 = vst.msk [vmem:[%s3 + $0x68] sm:$0xff] %vm50, %v180
  %202 = vst [vmem:[%s3 + $0x70] sm:$0xff] %v184
  %203 = vst.msk [vmem:[%s3 + $0x78] sm:$0xff] %vm50, %v186
  // Predicated region
  $region14: #{ak_bert_forward.15} parent=0 // pred_check
    _
  $region15: #{ak_bert_forward.15} parent=0 // pred_check_branch
    %205 = sbr.rel (0) target = $region17
  $region16: #{ak_bert_forward.15} parent=0 // pred_region
    _
  $region17: #{ak_bert_forward.15} parent=0 // pred_fallthru
    _
  // Predicated region
  $region18: #{ak_bert_forward.15} parent=0 // pred_check
    _
  $region19: #{ak_bert_forward.15} parent=0 // pred_check_branch
    %207 = sbr.rel (0) target = $region21
  $region20: #{ak_bert_forward.15} parent=0 // pred_region
    _
  $region21: #{ak_bert_forward.15} parent=0 // pred_fallthru
    _

// kernel: ak_bert_forward.17
$region0: #{ak_bert_forward.17}
  #allocation0 [shape = 'u32[]', space=smem, size = 0x4, offset = 0x4, fixed_abs, tag = 'smem constant byte address 0x4 - core index']
  #allocation1 [shape = 'u32[144,128]{1,0:T(1,128)}', space=vmem, size = 0x12000, scoped, tag = 'internal scratch']
  %s0 = inlined_call_operand.vmem [shape: f32[64,64], index: 0, kind: input, shape index: {}]
  %s1 = inlined_call_operand.vmem [shape: f32[64,64], index: 1, kind: input, shape index: {}]
  %s2 = inlined_call_operand.vmem [shape: f32[64,64], index: 2, kind: input, shape index: {}]
  %s3 = inlined_call_operand.vmem [shape: f32[1,64], index: 3, kind: input, shape index: {}, may-alias: {3,5}]
  %s4 = inlined_call_operand.vmem [shape: f32[1,64], index: 4, kind: input, shape index: {}]
  %s5 = inlined_call_operand.vmem [shape: f32[1,64], index: 5, kind: input, shape index: {}, may-alias: {3,5}]
  %s6 = inlined_call_operand.vmem [shape: f32[64,64], index: 6, kind: output, shape index: {}]
  %s7 = sld [smem:[#allocation0]]
  $region34: #{ak_bert_forward.17} parent=0
    _
  %s9 = ssub.s32 1, %s7
  %s10 = scalar_select 0, %s9, %s7
  // Predicated region
  $region2: #{ak_bert_forward.17} parent=0 // pred_check
    _
  $region3: #{ak_bert_forward.17} parent=0 // pred_check_branch
    %12 = sbr.rel (0) target = $region5
  $region4: #{ak_bert_forward.17} parent=0 // pred_region
    _
  $region5: #{ak_bert_forward.17} parent=0 // pred_fallthru
    _
  // Predicated region
  $region6: #{ak_bert_forward.17} parent=0 // pred_check
    _
  $region7: #{ak_bert_forward.17} parent=0 // pred_check_branch
    %14 = sbr.rel (0) target = $region9
  $region8: #{ak_bert_forward.17} parent=0 // pred_region
    _
  $region9: #{ak_bert_forward.17} parent=0 // pred_fallthru
    _
  // Predicated region
  $region10: #{ak_bert_forward.17} parent=0 // pred_check
    _
  $region11: #{ak_bert_forward.17} parent=0 // pred_check_branch
    %16 = sbr.rel (0) target = $region13
  $region12: #{ak_bert_forward.17} parent=0 // pred_region
    _
  $region13: #{ak_bert_forward.17} parent=0 // pred_fallthru
    _
  // Predicated region
  $region14: #{ak_bert_forward.17} parent=0 // pred_check
    _
  $region15: #{ak_bert_forward.17} parent=0 // pred_check_branch
    %18 = sbr.rel (0) target = $region17
  $region16: #{ak_bert_forward.17} parent=0 // pred_region
    _
  $region17: #{ak_bert_forward.17} parent=0 // pred_fallthru
    _
  // Predicated region
  $region18: #{ak_bert_forward.17} parent=0 // pred_check
    _
  $region19: #{ak_bert_forward.17} parent=0 // pred_check_branch
    %20 = sbr.rel (0) target = $region21
  $region20: #{ak_bert_forward.17} parent=0 // pred_region
    _
  $region21: #{ak_bert_forward.17} parent=0 // pred_fallthru
    _
  // Predicated region
  $region22: #{ak_bert_forward.17} parent=0 // pred_check
    _
  $region23: #{ak_bert_forward.17} parent=0 // pred_check_branch
    %22 = sbr.rel (0) target = $region25
  $region24: #{ak_bert_forward.17} parent=0 // pred_region
    _
  $region25: #{ak_bert_forward.17} parent=0 // pred_fallthru
    _
  %v23 = vld [vmem:[%s0] sm:$0xff]
  %v24 = vld [vmem:[%s0 + $0x8] sm:$0xff]
  %v25 = vld [vmem:[%s0 + $0x10] sm:$0xff]
  %v26 = vld [vmem:[%s0 + $0x18] sm:$0xff]
  %v27 = vld [vmem:[%s0 + $0x20] sm:$0xff]
  %v28 = vld [vmem:[%s0 + $0x28] sm:$0xff]
  %v29 = vld [vmem:[%s0 + $0x30] sm:$0xff]
  %v30 = vld [vmem:[%s0 + $0x38] sm:$0xff]
  %v31 = vld [vmem:[%s2] sm:$0xff]
  %v32 = vld [vmem:[%s2 + $0x8] sm:$0xff]
  %v33 = vld [vmem:[%s2 + $0x10] sm:$0xff]
  %v34 = vld [vmem:[%s2 + $0x18] sm:$0xff]
  %v35 = vld [vmem:[%s2 + $0x20] sm:$0xff]
  %v36 = vld [vmem:[%s2 + $0x28] sm:$0xff]
  %v37 = vld [vmem:[%s2 + $0x30] sm:$0xff]
  %v38 = vld [vmem:[%s2 + $0x38] sm:$0xff]
  %v39 = vld [vmem:[%s3] sm:$0x1]
  %v41 = vlaneseq
  %v42 = vshrl.u32 %v41, 7
  %v43 = vsub.s32 0, %v42
  %v44 = vrot.slane %v39, %v43
  %vm46 = vcmask 523264
  %v48 = vsel %vm46, %v23, 0
  %v51 = vsel %vm46, %v24, 0
  %v54 = vsel %vm46, %v25, 0
  %v57 = vsel %vm46, %v26, 0
  %v60 = vsel %vm46, %v27, 0
  %v63 = vsel %vm46, %v28, 0
  %v66 = vsel %vm46, %v29, 0
  %v69 = vsel %vm46, %v30, 0
  %71 = vmatprep.subr.mxu0 0.0
  %72 = vmatpush1.msra.mxu0 %v31
  %73 = vmatprep.subr.mxu0 0.0
  %74 = vmatpush1.msra.mxu0 %v32
  %75 = vmatprep.subr.mxu0 0.0
  %76 = vmatpush1.msra.mxu0 %v33
  %77 = vmatprep.subr.mxu0 0.0
  %78 = vmatpush1.msra.mxu0 %v34
  %79 = vmatprep.subr.mxu0 0.0
  %80 = vmatpush1.msra.mxu0 %v35
  %81 = vmatprep.subr.mxu0 0.0
  %82 = vmatpush1.msra.mxu0 %v36
  %83 = vmatprep.subr.mxu0 0.0
  %84 = vmatpush1.msra.mxu0 %v37
  %85 = vmatprep.subr.mxu0 0.0
  %86 = vmatpush1.msra.mxu0 %v38
  %87 = vmatprep.subr.mxu0 0.0
  %88 = vmatpush1.msra.mxu0 0.0
  %89 = vmatprep.subr.mxu0 0.0
  %90 = vmatpush1.msra.mxu0 0.0
  %91 = vmatprep.subr.mxu0 0.0
  %92 = vmatpush1.msra.mxu0 0.0
  %93 = vmatprep.subr.mxu0 0.0
  %94 = vmatpush1.msra.mxu0 0.0
  %95 = vmatprep.subr.mxu0 0.0
  %96 = vmatpush1.msra.mxu0 0.0
  %97 = vmatprep.subr.mxu0 0.0
  %98 = vmatpush1.msra.mxu0 0.0
  %99 = vmatprep.subr.mxu0 0.0
  %100 = vmatpush1.msra.mxu0 0.0
  %101 = vmatprep.subr.mxu0 0.0
  %102 = vmatpush1.msra.mxu0 0.0
  %103 = vmatprep.subr.mxu0 0.0
  %104 = vmatpush1.msra.mxu0 0.0
  %105 = vmatprep.subr.mxu0 0.0
  %106 = vmatpush1.msra.mxu0 0.0
  %107 = vmatprep.subr.mxu0 0.0
  %108 = vmatpush1.msra.mxu0 0.0
  %109 = vmatprep.subr.mxu0 0.0
  %110 = vmatpush1.msra.mxu0 0.0
  %111 = vmatprep.subr.mxu0 0.0
  %112 = vmatpush1.msra.mxu0 0.0
  %113 = vmatprep.subr.mxu0 0.0
  %114 = vmatpush1.msra.mxu0 0.0
  %115 = vmatprep.subr.mxu0 0.0
  %116 = vmatpush1.msra.mxu0 0.0
  %117 = vmatprep.subr.mxu0 0.0
  %118 = vmatpush1.msra.mxu0 0.0
  %119 = vmatprep.subr.mxu0 0.0
  %120 = vmatpush1.msra.mxu0 0.0
  %121 = vmatprep.subr.mxu0 0.0
  %122 = vmatpush1.msra.mxu0 0.0
  %123 = vmatprep.subr.mxu0 0.0
  %124 = vmatpush1.msra.mxu0 0.0
  %125 = vmatprep.subr.mxu0 0.0
  %126 = vmatpush1.msra.mxu0 0.0
  %127 = vmatprep.subr.mxu0 0.0
  %128 = vmatpush1.msra.mxu0 0.0
  %129 = vmatprep.subr.mxu0 0.0
  %130 = vmatpush1.msra.mxu0 0.0
  %131 = vmatprep.subr.mxu0 0.0
  %132 = vmatpush1.msra.mxu0 0.0
  %133 = vmatprep.subr.mxu0 0.0
  %134 = vmatpush1.msra.mxu0 0.0
  %135 = vmatprep.mubr.f32.mxu0 0.0
  %136 = vmatmul.mubr.f32.gmra.mrb[0].mxu0 %v48
  %v137 = vpop.f32.mrb[0].mxu0
  %v138 = vadd.f32 %v44, %v137
  %v139 = vpop.f32.mrb[0].mxu0
  %140 = vmatprep.mubr.f32.mxu0 0.0
  %141 = vmatmul.mubr.f32.gmra.mrb[0].mxu0 %v51
  %v142 = vpop.f32.mrb[0].mxu0
  %v143 = vadd.f32 %v44, %v142
  %v144 = vpop.f32.mrb[0].mxu0
  %145 = vmatprep.mubr.f32.mxu0 0.0
  %146 = vmatmul.mubr.f32.gmra.mrb[0].mxu0 %v54
  %v147 = vpop.f32.mrb[0].mxu0
  %v148 = vadd.f32 %v44, %v147
  %v149 = vpop.f32.mrb[0].mxu0
  %150 = vmatprep.mubr.f32.mxu0 0.0
  %151 = vmatmul.mubr.f32.gmra.mrb[0].mxu0 %v57
  %v152 = vpop.f32.mrb[0].mxu0
  %v153 = vadd.f32 %v44, %v152
  %v154 = vpop.f32.mrb[0].mxu0
  %155 = vmatprep.mubr.f32.mxu0 0.0
  %156 = vmatmul.mubr.f32.gmra.mrb[0].mxu0 %v60
  %v157 = vpop.f32.mrb[0].mxu0
  %v158 = vadd.f32 %v44, %v157
  %v159 = vpop.f32.mrb[0].mxu0
  %160 = vmatprep.mubr.f32.mxu0 0.0
  %161 = vmatmul.mubr.f32.gmra.mrb[0].mxu0 %v63
  %v162 = vpop.f32.mrb[0].mxu0
  %v163 = vadd.f32 %v44, %v162
  %v164 = vpop.f32.mrb[0].mxu0
  %165 = vmatprep.mubr.f32.mxu0 0.0
  %166 = vmatmul.mubr.f32.gmra.mrb[0].mxu0 %v66
  %v167 = vpop.f32.mrb[0].mxu0
  %v168 = vadd.f32 %v44, %v167
  %v169 = vpop.f32.mrb[0].mxu0
  %170 = vmatprep.mubr.f32.mxu0 0.0
  %171 = vmatmul.mubr.f32.gmra.mrb[0].mxu0 %v69
  %v172 = vpop.f32.mrb[0].mxu0
  %v173 = vadd.f32 %v44, %v172
  %v174 = vpop.f32.mrb[0].mxu0
  %175 = vdwg.mxu0
  %v176 = vld [vmem:[%s1] sm:$0xff]
  %v177 = vld [vmem:[%s1 + $0x8] sm:$0xff]
  %v178 = vld [vmem:[%s1 + $0x10] sm:$0xff]
  %v179 = vld [vmem:[%s1 + $0x18] sm:$0xff]
  %v180 = vld [vmem:[%s1 + $0x20] sm:$0xff]
  %v181 = vld [vmem:[%s1 + $0x28] sm:$0xff]
  %v182 = vld [vmem:[%s1 + $0x30] sm:$0xff]
  %v183 = vld [vmem:[%s1 + $0x38] sm:$0xff]
  %v184 = vadd.f32 %v138, %v176
  %v185 = vadd.f32 %v143, %v177
  %v186 = vadd.f32 %v148, %v178
  %v187 = vadd.f32 %v153, %v179
  %v188 = vadd.f32 %v158, %v180
  %v189 = vadd.f32 %v163, %v181
  %v190 = vadd.f32 %v168, %v182
  %v191 = vadd.f32 %v173, %v183
  %v192 = vld [vmem:[%s4] sm:$0x1]
  %v193 = vld [vmem:[%s5] sm:$0x1]
  %v194 = vsel %vm46, %v184, 0.0
  %195 = vadd.xlane.f32.xlu0 %v194
  %v196 = vpop.xlane.xlu0 %195
  %v197 = vsel %vm46, %v185, 0.0
  %198 = vadd.xlane.f32.xlu0 %v197
  %v199 = vpop.xlane.xlu0 %198
  %v200 = vsel %vm46, %v186, 0.0
  %201 = vadd.xlane.f32.xlu0 %v200
  %v202 = vpop.xlane.xlu0 %201
  %v203 = vsel %vm46, %v187, 0.0
  %204 = vadd.xlane.f32.xlu0 %v203
  %v205 = vpop.xlane.xlu0 %204
  %v206 = vsel %vm46, %v188, 0.0
  %207 = vadd.xlane.f32.xlu0 %v206
  %v208 = vpop.xlane.xlu0 %207
  %v209 = vsel %vm46, %v189, 0.0
  %210 = vadd.xlane.f32.xlu0 %v209
  %v211 = vpop.xlane.xlu0 %210
  %v212 = vsel %vm46, %v190, 0.0
  %213 = vadd.xlane.f32.xlu0 %v212
  %v214 = vpop.xlane.xlu0 %213
  %v215 = vsel %vm46, %v191, 0.0
  %216 = vadd.xlane.f32.xlu0 %v215
  %v217 = vpop.xlane.xlu0 %216
  %v218 = vrcp.pop 64.0
  %v219 = vmul.f32 %v196, %v218
  %v220 = vmul.f32 %v199, %v218
  %v221 = vmul.f32 %v202, %v218
  %v222 = vmul.f32 %v205, %v218
  %v223 = vmul.f32 %v208, %v218
  %v224 = vmul.f32 %v211, %v218
  %v225 = vmul.f32 %v214, %v218
  %v226 = vmul.f32 %v217, %v218
  %v227 = vsub.f32 %v184, %v219
  %v228 = vsub.f32 %v185, %v220
  %v229 = vsub.f32 %v186, %v221
  %v230 = vsub.f32 %v187, %v222
  %v231 = vsub.f32 %v188, %v223
  %v232 = vsub.f32 %v189, %v224
  %v233 = vsub.f32 %v190, %v225
  %v234 = vsub.f32 %v191, %v226
  %v235 = vmul.f32 %v227, %v227
  %v236 = vmul.f32 %v228, %v228
  %v237 = vmul.f32 %v229, %v229
  %v238 = vmul.f32 %v230, %v230
  %v239 = vmul.f32 %v231, %v231
  %v240 = vmul.f32 %v232, %v232
  %v241 = vmul.f32 %v233, %v233
  %v242 = vmul.f32 %v234, %v234
  %v243 = vsel %vm46, %v235, 0.0
  %244 = vadd.xlane.f32.xlu0 %v243
  %v245 = vpop.xlane.xlu0 %244
  %v246 = vsel %vm46, %v236, 0.0
  %247 = vadd.xlane.f32.xlu0 %v246
  %v248 = vpop.xlane.xlu0 %247
  %v249 = vsel %vm46, %v237, 0.0
  %250 = vadd.xlane.f32.xlu0 %v249
  %v251 = vpop.xlane.xlu0 %250
  %v252 = vsel %vm46, %v238, 0.0
  %253 = vadd.xlane.f32.xlu0 %v252
  %v254 = vpop.xlane.xlu0 %253
  %v255 = vsel %vm46, %v239, 0.0
  %256 = vadd.xlane.f32.xlu0 %v255
  %v257 = vpop.xlane.xlu0 %256
  %v258 = vsel %vm46, %v240, 0.0
  %259 = vadd.xlane.f32.xlu0 %v258
  %v260 = vpop.xlane.xlu0 %259
  %v261 = vsel %vm46, %v241, 0.0
  %262 = vadd.xlane.f32.xlu0 %v261
  %v263 = vpop.xlane.xlu0 %262
  %v264 = vsel %vm46, %v242, 0.0
  %265 = vadd.xlane.f32.xlu0 %v264
  %v266 = vpop.xlane.xlu0 %265
  %v267 = vmul.f32 %v245, %v218
  %v268 = vmul.f32 %v248, %v218
  %v269 = vmul.f32 %v251, %v218
  %v270 = vmul.f32 %v254, %v218
  %v271 = vmul.f32 %v257, %v218
  %v272 = vmul.f32 %v260, %v218
  %v273 = vmul.f32 %v263, %v218
  %v274 = vmul.f32 %v266, %v218
  %v275 = vadd.f32 %v267, 1e-12
  %v276 = vadd.f32 %v268, 1e-12
  %v277 = vadd.f32 %v269, 1e-12
  %v278 = vadd.f32 %v270, 1e-12
  %v279 = vadd.f32 %v271, 1e-12
  %v280 = vadd.f32 %v272, 1e-12
  %v281 = vadd.f32 %v273, 1e-12
  %v282 = vadd.f32 %v274, 1e-12
  %v283 = vrsqrt.pop %v275
  %v284 = vrsqrt.pop %v276
  %v285 = vrsqrt.pop %v277
  %v286 = vrsqrt.pop %v278
  %v287 = vrsqrt.pop %v279
  %v288 = vrsqrt.pop %v280
  %v289 = vrsqrt.pop %v281
  %v290 = vrsqrt.pop %v282
  %v291 = vmul.f32 %v227, %v283
  %v292 = vmul.f32 %v228, %v284
  %v293 = vmul.f32 %v229, %v285
  %v294 = vmul.f32 %v230, %v286
  %v295 = vmul.f32 %v231, %v287
  %v296 = vmul.f32 %v232, %v288
  %v297 = vmul.f32 %v233, %v289
  %v298 = vmul.f32 %v234, %v290
  %v300 = vlaneseq
  %v301 = vshrl.u32 %v300, 7
  %v302 = vsub.s32 0, %v301
  %v303 = vrot.slane %v192, %v302
  %v305 = vmul.f32 %v291, %v303
  %v306 = vmul.f32 %v292, %v303
  %v307 = vmul.f32 %v293, %v303
  %v308 = vmul.f32 %v294, %v303
  %v309 = vmul.f32 %v295, %v303
  %v310 = vmul.f32 %v296, %v303
  %v311 = vmul.f32 %v297, %v303
  %v312 = vmul.f32 %v298, %v303
  %v314 = vlaneseq
  %v315 = vshrl.u32 %v314, 7
  %v316 = vsub.s32 0, %v315
  %v317 = vrot.slane %v193, %v316
  %v319 = vadd.f32 %v305, %v317
  %v320 = vadd.f32 %v306, %v317
  %v321 = vadd.f32 %v307, %v317
  %v322 = vadd.f32 %v308, %v317
  %v323 = vadd.f32 %v309, %v317
  %v324 = vadd.f32 %v310, %v317
  %v325 = vadd.f32 %v311, %v317
  %v326 = vadd.f32 %v312, %v317
  %327 = vst.msk [vmem:[%s6] sm:$0xff] %vm46, %v319
  %328 = vst.msk [vmem:[%s6 + $0x8] sm:$0xff] %vm46, %v320
  %329 = vst.msk [vmem:[%s6 + $0x10] sm:$0xff] %vm46, %v321
  %330 = vst.msk [vmem:[%s6 + $0x18] sm:$0xff] %vm46, %v322
  %331 = vst.msk [vmem:[%s6 + $0x20] sm:$0xff] %vm46, %v323
  %332 = vst.msk [vmem:[%s6 + $0x28] sm:$0xff] %vm46, %v324
  %333 = vst.msk [vmem:[%s6 + $0x30] sm:$0xff] %vm46, %v325
  %334 = vst.msk [vmem:[%s6 + $0x38] sm:$0xff] %vm46, %v326
  // Predicated region
  $region26: #{ak_bert_forward.17} parent=0 // pred_check
    _
  $region27: #{ak_bert_forward.17} parent=0 // pred_check_branch
    %336 = sbr.rel (0) target = $region29
  $region28: #{ak_bert_forward.17} parent=0 // pred_region
    _
  $region29: #{ak_bert_forward.17} parent=0 // pred_fallthru
    _
  // Predicated region
  $region30: #{ak_bert_forward.17} parent=0 // pred_check
    _
  $region31: #{ak_bert_forward.17} parent=0 // pred_check_branch
    %338 = sbr.rel (0) target = $region33
  $region32: #{ak_bert_forward.17} parent=0 // pred_region
    _
  $region33: #{ak_bert_forward.17} parent=0 // pred_fallthru
    _

// kernel: ak_bert_forward.19
$region0: #{ak_bert_forward.19}
  #allocation0 [shape = 'u32[]', space=smem, size = 0x4, offset = 0x4, fixed_abs, tag = 'smem constant byte address 0x4 - core index']
  #allocation1 [shape = 'u32[144,128]{1,0:T(1,128)}', space=vmem, size = 0x12000, scoped, tag = 'internal scratch']
  %s0 = inlined_call_operand.vmem [shape: f32[4,64], index: 0, kind: input, shape index: {}]
  %s1 = inlined_call_operand.vmem [shape: f32[64,64], index: 1, kind: input, shape index: {}]
  %s2 = inlined_call_operand.vmem [shape: f32[64,128], index: 2, kind: input, shape index: {}]
  %s3 = inlined_call_operand.vmem [shape: f32[1,128], index: 3, kind: input, shape index: {}]
  %s4 = inlined_call_operand.vmem [shape: f32[4,128], index: 4, kind: output, shape index: {}]
  %s5 = sld [smem:[#allocation0]]
  $region26: #{ak_bert_forward.19} parent=0
    _
  %s7 = ssub.s32 1, %s5
  %s8 = scalar_select 0, %s7, %s5
  // Predicated region
  $region2: #{ak_bert_forward.19} parent=0 // pred_check
    _
  $region3: #{ak_bert_forward.19} parent=0 // pred_check_branch
    %10 = sbr.rel (0) target = $region5
  $region4: #{ak_bert_forward.19} parent=0 // pred_region
    _
  $region5: #{ak_bert_forward.19} parent=0 // pred_fallthru
    _
  // Predicated region
  $region6: #{ak_bert_forward.19} parent=0 // pred_check
    _
  $region7: #{ak_bert_forward.19} parent=0 // pred_check_branch
    %12 = sbr.rel (0) target = $region9
  $region8: #{ak_bert_forward.19} parent=0 // pred_region
    _
  $region9: #{ak_bert_forward.19} parent=0 // pred_fallthru
    _
  // Predicated region
  $region10: #{ak_bert_forward.19} parent=0 // pred_check
    _
  $region11: #{ak_bert_forward.19} parent=0 // pred_check_branch
    %14 = sbr.rel (0) target = $region13
  $region12: #{ak_bert_forward.19} parent=0 // pred_region
    _
  $region13: #{ak_bert_forward.19} parent=0 // pred_fallthru
    _
  // Predicated region
  $region14: #{ak_bert_forward.19} parent=0 // pred_check
    _
  $region15: #{ak_bert_forward.19} parent=0 // pred_check_branch
    %16 = sbr.rel (0) target = $region17
  $region16: #{ak_bert_forward.19} parent=0 // pred_region
    _
  $region17: #{ak_bert_forward.19} parent=0 // pred_fallthru
    _
  %v17 = vld [vmem:[%s0] sm:$0xf]
  %v18 = vld [vmem:[%s1] sm:$0xff]
  %v19 = vld [vmem:[%s1 + $0x8] sm:$0xff]
  %v20 = vld [vmem:[%s1 + $0x10] sm:$0xff]
  %v21 = vld [vmem:[%s1 + $0x18] sm:$0xff]
  %v22 = vld [vmem:[%s1 + $0x20] sm:$0xff]
  %v23 = vld [vmem:[%s1 + $0x28] sm:$0xff]
  %v24 = vld [vmem:[%s1 + $0x30] sm:$0xff]
  %v25 = vld [vmem:[%s1 + $0x38] sm:$0xff]
  %vm26 = vcmask 523264
  %v28 = vsel %vm26, %v17, 0
  %30 = vmatprep.subr.mxu0 0.0
  %31 = vmatpush1.msra.mxu0 %v18
  %32 = vmatprep.subr.mxu0 0.0
  %33 = vmatpush1.msra.mxu0 %v19
  %34 = vmatprep.subr.mxu0 0.0
  %35 = vmatpush1.msra.mxu0 %v20
  %36 = vmatprep.subr.mxu0 0.0
  %37 = vmatpush1.msra.mxu0 %v21
  %38 = vmatprep.subr.mxu0 0.0
  %39 = vmatpush1.msra.mxu0 %v22
  %40 = vmatprep.subr.mxu0 0.0
  %41 = vmatpush1.msra.mxu0 %v23
  %42 = vmatprep.subr.mxu0 0.0
  %43 = vmatpush1.msra.mxu0 %v24
  %44 = vmatprep.subr.mxu0 0.0
  %45 = vmatpush1.msra.mxu0 %v25
  %46 = vmatprep.subr.mxu0 0.0
  %47 = vmatpush1.msra.mxu0 0.0
  %48 = vmatprep.subr.mxu0 0.0
  %49 = vmatpush1.msra.mxu0 0.0
  %50 = vmatprep.subr.mxu0 0.0
  %51 = vmatpush1.msra.mxu0 0.0
  %52 = vmatprep.subr.mxu0 0.0
  %53 = vmatpush1.msra.mxu0 0.0
  %54 = vmatprep.subr.mxu0 0.0
  %55 = vmatpush1.msra.mxu0 0.0
  %56 = vmatprep.subr.mxu0 0.0
  %57 = vmatpush1.msra.mxu0 0.0
  %58 = vmatprep.subr.mxu0 0.0
  %59 = vmatpush1.msra.mxu0 0.0
  %60 = vmatprep.subr.mxu0 0.0
  %61 = vmatpush1.msra.mxu0 0.0
  %62 = vmatprep.subr.mxu0 0.0
  %63 = vmatpush1.msra.mxu0 0.0
  %64 = vmatprep.subr.mxu0 0.0
  %65 = vmatpush1.msra.mxu0 0.0
  %66 = vmatprep.subr.mxu0 0.0
  %67 = vmatpush1.msra.mxu0 0.0
  %68 = vmatprep.subr.mxu0 0.0
  %69 = vmatpush1.msra.mxu0 0.0
  %70 = vmatprep.subr.mxu0 0.0
  %71 = vmatpush1.msra.mxu0 0.0
  %72 = vmatprep.subr.mxu0 0.0
  %73 = vmatpush1.msra.mxu0 0.0
  %74 = vmatprep.subr.mxu0 0.0
  %75 = vmatpush1.msra.mxu0 0.0
  %76 = vmatprep.subr.mxu0 0.0
  %77 = vmatpush1.msra.mxu0 0.0
  %78 = vmatprep.subr.mxu0 0.0
  %79 = vmatpush1.msra.mxu0 0.0
  %80 = vmatprep.subr.mxu0 0.0
  %81 = vmatpush1.msra.mxu0 0.0
  %82 = vmatprep.subr.mxu0 0.0
  %83 = vmatpush1.msra.mxu0 0.0
  %84 = vmatprep.subr.mxu0 0.0
  %85 = vmatpush1.msra.mxu0 0.0
  %86 = vmatprep.subr.mxu0 0.0
  %87 = vmatpush1.msra.mxu0 0.0
  %88 = vmatprep.subr.mxu0 0.0
  %89 = vmatpush1.msra.mxu0 0.0
  %90 = vmatprep.subr.mxu0 0.0
  %91 = vmatpush1.msra.mxu0 0.0
  %92 = vmatprep.subr.mxu0 0.0
  %93 = vmatpush1.msra.mxu0 0.0
  %94 = vmatprep.mubr.f32.mxu0 0.0
  %95 = vmatmul.mubr.f32.gmra.mrb[0].mxu0 %v28
  %v96 = vpop.f32.mrb[0].mxu0
  %v97 = vadd.f32 0.0, %v96
  %v98 = vpop.f32.mrb[0].mxu0
  %99 = vdwg.mxu0
  %v100 = vld [vmem:[%s2] sm:$0xff]
  %v101 = vld [vmem:[%s2 + $0x8] sm:$0xff]
  %v102 = vld [vmem:[%s2 + $0x10] sm:$0xff]
  %v103 = vld [vmem:[%s2 + $0x18] sm:$0xff]
  %v104 = vld [vmem:[%s2 + $0x20] sm:$0xff]
  %v105 = vld [vmem:[%s2 + $0x28] sm:$0xff]
  %v106 = vld [vmem:[%s2 + $0x30] sm:$0xff]
  %v107 = vld [vmem:[%s2 + $0x38] sm:$0xff]
  %v108 = vld [vmem:[%s3] sm:$0x1]
  %v110 = vlaneseq
  %v111 = vshrl.u32 %v110, 7
  %v112 = vsub.s32 0, %v111
  %v113 = vrot.slane %v108, %v112
  %v116 = vsel %vm26, %v97, 0
  %118 = vmatprep.subr.mxu0 0.0
  %119 = vmatpush1.msra.mxu0 %v100
  %120 = vmatprep.subr.mxu0 0.0
  %121 = vmatpush1.msra.mxu0 %v101
  %122 = vmatprep.subr.mxu0 0.0
  %123 = vmatpush1.msra.mxu0 %v102
  %124 = vmatprep.subr.mxu0 0.0
  %125 = vmatpush1.msra.mxu0 %v103
  %126 = vmatprep.subr.mxu0 0.0
  %127 = vmatpush1.msra.mxu0 %v104
  %128 = vmatprep.subr.mxu0 0.0
  %129 = vmatpush1.msra.mxu0 %v105
  %130 = vmatprep.subr.mxu0 0.0
  %131 = vmatpush1.msra.mxu0 %v106
  %132 = vmatprep.subr.mxu0 0.0
  %133 = vmatpush1.msra.mxu0 %v107
  %134 = vmatprep.subr.mxu0 0.0
  %135 = vmatpush1.msra.mxu0 0.0
  %136 = vmatprep.subr.mxu0 0.0
  %137 = vmatpush1.msra.mxu0 0.0
  %138 = vmatprep.subr.mxu0 0.0
  %139 = vmatpush1.msra.mxu0 0.0
  %140 = vmatprep.subr.mxu0 0.0
  %141 = vmatpush1.msra.mxu0 0.0
  %142 = vmatprep.subr.mxu0 0.0
  %143 = vmatpush1.msra.mxu0 0.0
  %144 = vmatprep.subr.mxu0 0.0
  %145 = vmatpush1.msra.mxu0 0.0
  %146 = vmatprep.subr.mxu0 0.0
  %147 = vmatpush1.msra.mxu0 0.0
  %148 = vmatprep.subr.mxu0 0.0
  %149 = vmatpush1.msra.mxu0 0.0
  %150 = vmatprep.subr.mxu0 0.0
  %151 = vmatpush1.msra.mxu0 0.0
  %152 = vmatprep.subr.mxu0 0.0
  %153 = vmatpush1.msra.mxu0 0.0
  %154 = vmatprep.subr.mxu0 0.0
  %155 = vmatpush1.msra.mxu0 0.0
  %156 = vmatprep.subr.mxu0 0.0
  %157 = vmatpush1.msra.mxu0 0.0
  %158 = vmatprep.subr.mxu0 0.0
  %159 = vmatpush1.msra.mxu0 0.0
  %160 = vmatprep.subr.mxu0 0.0
  %161 = vmatpush1.msra.mxu0 0.0
  %162 = vmatprep.subr.mxu0 0.0
  %163 = vmatpush1.msra.mxu0 0.0
  %164 = vmatprep.subr.mxu0 0.0
  %165 = vmatpush1.msra.mxu0 0.0
  %166 = vmatprep.subr.mxu0 0.0
  %167 = vmatpush1.msra.mxu0 0.0
  %168 = vmatprep.subr.mxu0 0.0
  %169 = vmatpush1.msra.mxu0 0.0
  %170 = vmatprep.subr.mxu0 0.0
  %171 = vmatpush1.msra.mxu0 0.0
  %172 = vmatprep.subr.mxu0 0.0
  %173 = vmatpush1.msra.mxu0 0.0
  %174 = vmatprep.subr.mxu0 0.0
  %175 = vmatpush1.msra.mxu0 0.0
  %176 = vmatprep.subr.mxu0 0.0
  %177 = vmatpush1.msra.mxu0 0.0
  %178 = vmatprep.subr.mxu0 0.0
  %179 = vmatpush1.msra.mxu0 0.0
  %180 = vmatprep.subr.mxu0 0.0
  %181 = vmatpush1.msra.mxu0 0.0
  %182 = vmatprep.mubr.f32.mxu0 0.0
  %183 = vmatmul.mubr.f32.gmra.mrb[0].mxu0 %v116
  %v184 = vpop.f32.mrb[0].mxu0
  %v185 = vadd.f32 %v113, %v184
  %v186 = vpop.f32.mrb[0].mxu0
  %187 = vdwg.mxu0
  %188 = vst [vmem:[%s4] sm:$0xf] %v185
  // Predicated region
  $region18: #{ak_bert_forward.19} parent=0 // pred_check
    _
  $region19: #{ak_bert_forward.19} parent=0 // pred_check_branch
    %190 = sbr.rel (0) target = $region21
  $region20: #{ak_bert_forward.19} parent=0 // pred_region
    _
  $region21: #{ak_bert_forward.19} parent=0 // pred_fallthru
    _
  // Predicated region
  $region22: #{ak_bert_forward.19} parent=0 // pred_check
    _
  $region23: #{ak_bert_forward.19} parent=0 // pred_check_branch
    %192 = sbr.rel (0) target = $region25
  $region24: #{ak_bert_forward.19} parent=0 // pred_region
    _
  $region25: #{ak_bert_forward.19} parent=0 // pred_fallthru
    _

// kernel: ak_bert_forward.18
$region0: #{ak_bert_forward.18}
  #allocation0 [shape = 'u32[]', space=smem, size = 0x4, offset = 0x4, fixed_abs, tag = 'smem constant byte address 0x4 - core index']
  #allocation1 [shape = 'u32[144,128]{1,0:T(1,128)}', space=vmem, size = 0x12000, scoped, tag = 'internal scratch']
  %s0 = inlined_call_operand.vmem [shape: f32[64,64], index: 0, kind: input, shape index: {}]
  %s1 = inlined_call_operand.vmem [shape: f32[64,128], index: 1, kind: input, shape index: {}]
  %s2 = inlined_call_operand.vmem [shape: f32[1,128], index: 2, kind: input, shape index: {}]
  %s3 = inlined_call_operand.vmem [shape: f32[128,64], index: 3, kind: input, shape index: {}]
  %s4 = inlined_call_operand.vmem [shape: f32[1,64], index: 4, kind: input, shape index: {}, may-alias: {4,6}]
  %s5 = inlined_call_operand.vmem [shape: f32[1,64], index: 5, kind: input, shape index: {}]
  %s6 = inlined_call_operand.vmem [shape: f32[1,64], index: 6, kind: input, shape index: {}, may-alias: {4,6}]
  %s7 = inlined_call_operand.vmem [shape: f32[64,64], index: 7, kind: output, shape index: {}]
  %s8 = sld [smem:[#allocation0]]
  $region38: #{ak_bert_forward.18} parent=0
    _
  %s10 = ssub.s32 1, %s8
  %s11 = scalar_select 0, %s10, %s8
  // Predicated region
  $region2: #{ak_bert_forward.18} parent=0 // pred_check
    _
  $region3: #{ak_bert_forward.18} parent=0 // pred_check_branch
    %13 = sbr.rel (0) target = $region5
  $region4: #{ak_bert_forward.18} parent=0 // pred_region
    _
  $region5: #{ak_bert_forward.18} parent=0 // pred_fallthru
    _
  // Predicated region
  $region6: #{ak_bert_forward.18} parent=0 // pred_check
    _
  $region7: #{ak_bert_forward.18} parent=0 // pred_check_branch
    %15 = sbr.rel (0) target = $region9
  $region8: #{ak_bert_forward.18} parent=0 // pred_region
    _
  $region9: #{ak_bert_forward.18} parent=0 // pred_fallthru
    _
  // Predicated region
  $region10: #{ak_bert_forward.18} parent=0 // pred_check
    _
  $region11: #{ak_bert_forward.18} parent=0 // pred_check_branch
    %17 = sbr.rel (0) target = $region13
  $region12: #{ak_bert_forward.18} parent=0 // pred_region
    _
  $region13: #{ak_bert_forward.18} parent=0 // pred_fallthru
    _
  // Predicated region
  $region14: #{ak_bert_forward.18} parent=0 // pred_check
    _
  $region15: #{ak_bert_forward.18} parent=0 // pred_check_branch
    %19 = sbr.rel (0) target = $region17
  $region16: #{ak_bert_forward.18} parent=0 // pred_region
    _
  $region17: #{ak_bert_forward.18} parent=0 // pred_fallthru
    _
  // Predicated region
  $region18: #{ak_bert_forward.18} parent=0 // pred_check
    _
  $region19: #{ak_bert_forward.18} parent=0 // pred_check_branch
    %21 = sbr.rel (0) target = $region21
  $region20: #{ak_bert_forward.18} parent=0 // pred_region
    _
  $region21: #{ak_bert_forward.18} parent=0 // pred_fallthru
    _
  // Predicated region
  $region22: #{ak_bert_forward.18} parent=0 // pred_check
    _
  $region23: #{ak_bert_forward.18} parent=0 // pred_check_branch
    %23 = sbr.rel (0) target = $region25
  $region24: #{ak_bert_forward.18} parent=0 // pred_region
    _
  $region25: #{ak_bert_forward.18} parent=0 // pred_fallthru
    _
  // Predicated region
  $region26: #{ak_bert_forward.18} parent=0 // pred_check
    _
  $region27: #{ak_bert_forward.18} parent=0 // pred_check_branch
    %25 = sbr.rel (0) target = $region29
  $region28: #{ak_bert_forward.18} parent=0 // pred_region
    _
  $region29: #{ak_bert_forward.18} parent=0 // pred_fallthru
    _
  %v26 = vld [vmem:[%s0] sm:$0xff]
  %v27 = vld [vmem:[%s0 + $0x8] sm:$0xff]
  %v28 = vld [vmem:[%s0 + $0x10] sm:$0xff]
  %v29 = vld [vmem:[%s0 + $0x18] sm:$0xff]
  %v30 = vld [vmem:[%s0 + $0x20] sm:$0xff]
  %v31 = vld [vmem:[%s0 + $0x28] sm:$0xff]
  %v32 = vld [vmem:[%s0 + $0x30] sm:$0xff]
  %v33 = vld [vmem:[%s0 + $0x38] sm:$0xff]
  %v34 = vld [vmem:[%s1] sm:$0xff]
  %v35 = vld [vmem:[%s1 + $0x8] sm:$0xff]
  %v36 = vld [vmem:[%s1 + $0x10] sm:$0xff]
  %v37 = vld [vmem:[%s1 + $0x18] sm:$0xff]
  %v38 = vld [vmem:[%s1 + $0x20] sm:$0xff]
  %v39 = vld [vmem:[%s1 + $0x28] sm:$0xff]
  %v40 = vld [vmem:[%s1 + $0x30] sm:$0xff]
  %v41 = vld [vmem:[%s1 + $0x38] sm:$0xff]
  %v42 = vld [vmem:[%s2] sm:$0x1]
  %v44 = vlaneseq
  %v45 = vshrl.u32 %v44, 7
  %v46 = vsub.s32 0, %v45
  %v47 = vrot.slane %v42, %v46
  %vm49 = vcmask 523264
  %v51 = vsel %vm49, %v26, 0
  %v54 = vsel %vm49, %v27, 0
  %v57 = vsel %vm49, %v28, 0
  %v60 = vsel %vm49, %v29, 0
  %v63 = vsel %vm49, %v30, 0
  %v66 = vsel %vm49, %v31, 0
  %v69 = vsel %vm49, %v32, 0
  %v72 = vsel %vm49, %v33, 0
  %74 = vmatprep.subr.mxu0 0.0
  %75 = vmatpush1.msra.mxu0 %v34
  %76 = vmatprep.subr.mxu0 0.0
  %77 = vmatpush1.msra.mxu0 %v35
  %78 = vmatprep.subr.mxu0 0.0
  %79 = vmatpush1.msra.mxu0 %v36
  %80 = vmatprep.subr.mxu0 0.0
  %81 = vmatpush1.msra.mxu0 %v37
  %82 = vmatprep.subr.mxu0 0.0
  %83 = vmatpush1.msra.mxu0 %v38
  %84 = vmatprep.subr.mxu0 0.0
  %85 = vmatpush1.msra.mxu0 %v39
  %86 = vmatprep.subr.mxu0 0.0
  %87 = vmatpush1.msra.mxu0 %v40
  %88 = vmatprep.subr.mxu0 0.0
  %89 = vmatpush1.msra.mxu0 %v41
  %90 = vmatprep.subr.mxu0 0.0
  %91 = vmatpush1.msra.mxu0 0.0
  %92 = vmatprep.subr.mxu0 0.0
  %93 = vmatpush1.msra.mxu0 0.0
  %94 = vmatprep.subr.mxu0 0.0
  %95 = vmatpush1.msra.mxu0 0.0
  %96 = vmatprep.subr.mxu0 0.0
  %97 = vmatpush1.msra.mxu0 0.0
  %98 = vmatprep.subr.mxu0 0.0
  %99 = vmatpush1.msra.mxu0 0.0
  %100 = vmatprep.subr.mxu0 0.0
  %101 = vmatpush1.msra.mxu0 0.0
  %102 = vmatprep.subr.mxu0 0.0
  %103 = vmatpush1.msra.mxu0 0.0
  %104 = vmatprep.subr.mxu0 0.0
  %105 = vmatpush1.msra.mxu0 0.0
  %106 = vmatprep.subr.mxu0 0.0
  %107 = vmatpush1.msra.mxu0 0.0
  %108 = vmatprep.subr.mxu0 0.0
  %109 = vmatpush1.msra.mxu0 0.0
  %110 = vmatprep.subr.mxu0 0.0
  %111 = vmatpush1.msra.mxu0 0.0
  %112 = vmatprep.subr.mxu0 0.0
  %113 = vmatpush1.msra.mxu0 0.0
  %114 = vmatprep.subr.mxu0 0.0
  %115 = vmatpush1.msra.mxu0 0.0
  %116 = vmatprep.subr.mxu0 0.0
  %117 = vmatpush1.msra.mxu0 0.0
  %118 = vmatprep.subr.mxu0 0.0
  %119 = vmatpush1.msra.mxu0 0.0
  %120 = vmatprep.subr.mxu0 0.0
  %121 = vmatpush1.msra.mxu0 0.0
  %122 = vmatprep.subr.mxu0 0.0
  %123 = vmatpush1.msra.mxu0 0.0
  %124 = vmatprep.subr.mxu0 0.0
  %125 = vmatpush1.msra.mxu0 0.0
  %126 = vmatprep.subr.mxu0 0.0
  %127 = vmatpush1.msra.mxu0 0.0
  %128 = vmatprep.subr.mxu0 0.0
  %129 = vmatpush1.msra.mxu0 0.0
  %130 = vmatprep.subr.mxu0 0.0
  %131 = vmatpush1.msra.mxu0 0.0
  %132 = vmatprep.subr.mxu0 0.0
  %133 = vmatpush1.msra.mxu0 0.0
  %134 = vmatprep.subr.mxu0 0.0
  %135 = vmatpush1.msra.mxu0 0.0
  %136 = vmatprep.subr.mxu0 0.0
  %137 = vmatpush1.msra.mxu0 0.0
  %138 = vmatprep.mubr.f32.mxu0 0.0
  %139 = vmatmul.mubr.f32.gmra.mrb[0].mxu0 %v51
  %v140 = vpop.f32.mrb[0].mxu0
  %v141 = vadd.f32 %v47, %v140
  %v142 = vpop.f32.mrb[0].mxu0
  %143 = vmatprep.mubr.f32.mxu0 0.0
  %144 = vmatmul.mubr.f32.gmra.mrb[0].mxu0 %v54
  %v145 = vpop.f32.mrb[0].mxu0
  %v146 = vadd.f32 %v47, %v145
  %v147 = vpop.f32.mrb[0].mxu0
  %148 = vmatprep.mubr.f32.mxu0 0.0
  %149 = vmatmul.mubr.f32.gmra.mrb[0].mxu0 %v57
  %v150 = vpop.f32.mrb[0].mxu0
  %v151 = vadd.f32 %v47, %v150
  %v152 = vpop.f32.mrb[0].mxu0
  %153 = vmatprep.mubr.f32.mxu0 0.0
  %154 = vmatmul.mubr.f32.gmra.mrb[0].mxu0 %v60
  %v155 = vpop.f32.mrb[0].mxu0
  %v156 = vadd.f32 %v47, %v155
  %v157 = vpop.f32.mrb[0].mxu0
  %158 = vmatprep.mubr.f32.mxu0 0.0
  %159 = vmatmul.mubr.f32.gmra.mrb[0].mxu0 %v63
  %v160 = vpop.f32.mrb[0].mxu0
  %v161 = vadd.f32 %v47, %v160
  %v162 = vpop.f32.mrb[0].mxu0
  %163 = vmatprep.mubr.f32.mxu0 0.0
  %164 = vmatmul.mubr.f32.gmra.mrb[0].mxu0 %v66
  %v165 = vpop.f32.mrb[0].mxu0
  %v166 = vadd.f32 %v47, %v165
  %v167 = vpop.f32.mrb[0].mxu0
  %168 = vmatprep.mubr.f32.mxu0 0.0
  %169 = vmatmul.mubr.f32.gmra.mrb[0].mxu0 %v69
  %v170 = vpop.f32.mrb[0].mxu0
  %v171 = vadd.f32 %v47, %v170
  %v172 = vpop.f32.mrb[0].mxu0
  %173 = vmatprep.mubr.f32.mxu0 0.0
  %174 = vmatmul.mubr.f32.gmra.mrb[0].mxu0 %v72
  %v175 = vpop.f32.mrb[0].mxu0
  %v176 = vadd.f32 %v47, %v175
  %v177 = vpop.f32.mrb[0].mxu0
  %178 = vdwg.mxu0
  %v179 = vmul.f32 %v141, %v141
  %v180 = vmul.f32 %v146, %v146
  %v181 = vmul.f32 %v151, %v151
  %v182 = vmul.f32 %v156, %v156
  %v183 = vmul.f32 %v161, %v161
  %v184 = vmul.f32 %v166, %v166
  %v185 = vmul.f32 %v171, %v171
  %v186 = vmul.f32 %v176, %v176
  %v187 = vmul.f32 %v141, %v179
  %v188 = vmul.f32 %v146, %v180
  %v189 = vmul.f32 %v151, %v181
  %v190 = vmul.f32 %v156, %v182
  %v191 = vmul.f32 %v161, %v183
  %v192 = vmul.f32 %v166, %v184
  %v193 = vmul.f32 %v171, %v185
  %v194 = vmul.f32 %v176, %v186
  %v195 = vmul.f32 %v187, 0.044715
  %v196 = vmul.f32 %v188, 0.044715
  %v197 = vmul.f32 %v189, 0.044715
  %v198 = vmul.f32 %v190, 0.044715
  %v199 = vmul.f32 %v191, 0.044715
  %v200 = vmul.f32 %v192, 0.044715
  %v201 = vmul.f32 %v193, 0.044715
  %v202 = vmul.f32 %v194, 0.044715
  %v203 = vadd.f32 %v141, %v195
  %v204 = vadd.f32 %v146, %v196
  %v205 = vadd.f32 %v151, %v197
  %v206 = vadd.f32 %v156, %v198
  %v207 = vadd.f32 %v161, %v199
  %v208 = vadd.f32 %v166, %v200
  %v209 = vadd.f32 %v171, %v201
  %v210 = vadd.f32 %v176, %v202
  %v211 = vmul.f32 %v203, 0.7978846
  %v212 = vmul.f32 %v204, 0.7978846
  %v213 = vmul.f32 %v205, 0.7978846
  %v214 = vmul.f32 %v206, 0.7978846
  %v215 = vmul.f32 %v207, 0.7978846
  %v216 = vmul.f32 %v208, 0.7978846
  %v217 = vmul.f32 %v209, 0.7978846
  %v218 = vmul.f32 %v210, 0.7978846
  %v219 = vtanh.pop %v211
  %v220 = vtanh.pop %v212
  %v221 = vtanh.pop %v213
  %v222 = vtanh.pop %v214
  %v223 = vtanh.pop %v215
  %v224 = vtanh.pop %v216
  %v225 = vtanh.pop %v217
  %v226 = vtanh.pop %v218
  %v227 = vadd.f32 %v219, 1.0
  %v228 = vadd.f32 %v220, 1.0
  %v229 = vadd.f32 %v221, 1.0
  %v230 = vadd.f32 %v222, 1.0
  %v231 = vadd.f32 %v223, 1.0
  %v232 = vadd.f32 %v224, 1.0
  %v233 = vadd.f32 %v225, 1.0
  %v234 = vadd.f32 %v226, 1.0
  %v235 = vmul.f32 %v227, 0.5
  %v236 = vmul.f32 %v228, 0.5
  %v237 = vmul.f32 %v229, 0.5
  %v238 = vmul.f32 %v230, 0.5
  %v239 = vmul.f32 %v231, 0.5
  %v240 = vmul.f32 %v232, 0.5
  %v241 = vmul.f32 %v233, 0.5
  %v242 = vmul.f32 %v234, 0.5
  %v243 = vmul.f32 %v141, %v235
  %v244 = vmul.f32 %v146, %v236
  %v245 = vmul.f32 %v151, %v237
  %v246 = vmul.f32 %v156, %v238
  %v247 = vmul.f32 %v161, %v239
  %v248 = vmul.f32 %v166, %v240
  %v249 = vmul.f32 %v171, %v241
  %v250 = vmul.f32 %v176, %v242
  %v251 = vld [vmem:[%s3] sm:$0xff]
  %v252 = vld [vmem:[%s3 + $0x8] sm:$0xff]
  %v253 = vld [vmem:[%s3 + $0x10] sm:$0xff]
  %v254 = vld [vmem:[%s3 + $0x18] sm:$0xff]
  %v255 = vld [vmem:[%s3 + $0x20] sm:$0xff]
  %v256 = vld [vmem:[%s3 + $0x28] sm:$0xff]
  %v257 = vld [vmem:[%s3 + $0x30] sm:$0xff]
  %v258 = vld [vmem:[%s3 + $0x38] sm:$0xff]
  %v259 = vld [vmem:[%s3 + $0x40] sm:$0xff]
  %v260 = vld [vmem:[%s3 + $0x48] sm:$0xff]
  %v261 = vld [vmem:[%s3 + $0x50] sm:$0xff]
  %v262 = vld [vmem:[%s3 + $0x58] sm:$0xff]
  %v263 = vld [vmem:[%s3 + $0x60] sm:$0xff]
  %v264 = vld [vmem:[%s3 + $0x68] sm:$0xff]
  %v265 = vld [vmem:[%s3 + $0x70] sm:$0xff]
  %v266 = vld [vmem:[%s3 + $0x78] sm:$0xff]
  %v267 = vld [vmem:[%s4] sm:$0x1]
  %v269 = vlaneseq
  %v270 = vshrl.u32 %v269, 7
  %v271 = vsub.s32 0, %v270
  %v272 = vrot.slane %v267, %v271
  %274 = vmatprep.subr.mxu0 0.0
  %275 = vmatpush1.msra.mxu0 %v251
  %276 = vmatprep.subr.mxu0 0.0
  %277 = vmatpush1.msra.mxu0 %v252
  %278 = vmatprep.subr.mxu0 0.0
  %279 = vmatpush1.msra.mxu0 %v253
  %280 = vmatprep.subr.mxu0 0.0
  %281 = vmatpush1.msra.mxu0 %v254
  %282 = vmatprep.subr.mxu0 0.0
  %283 = vmatpush1.msra.mxu0 %v255
  %284 = vmatprep.subr.mxu0 0.0
  %285 = vmatpush1.msra.mxu0 %v256
  %286 = vmatprep.subr.mxu0 0.0
  %287 = vmatpush1.msra.mxu0 %v257
  %288 = vmatprep.subr.mxu0 0.0
  %289 = vmatpush1.msra.mxu0 %v258
  %290 = vmatprep.subr.mxu0 0.0
  %291 = vmatpush1.msra.mxu0 %v259
  %292 = vmatprep.subr.mxu0 0.0
  %293 = vmatpush1.msra.mxu0 %v260
  %294 = vmatprep.subr.mxu0 0.0
  %295 = vmatpush1.msra.mxu0 %v261
  %296 = vmatprep.subr.mxu0 0.0
  %297 = vmatpush1.msra.mxu0 %v262
  %298 = vmatprep.subr.mxu0 0.0
  %299 = vmatpush1.msra.mxu0 %v263
  %300 = vmatprep.subr.mxu0 0.0
  %301 = vmatpush1.msra.mxu0 %v264
  %302 = vmatprep.subr.mxu0 0.0
  %303 = vmatpush1.msra.mxu0 %v265
  %304 = vmatprep.subr.mxu0 0.0
  %305 = vmatpush1.msra.mxu0 %v266
  %306 = vmatprep.subr.mxu0 0.0
  %307 = vmatpush1.msra.mxu0 0.0
  %308 = vmatprep.subr.mxu0 0.0
  %309 = vmatpush1.msra.mxu0 0.0
  %310 = vmatprep.subr.mxu0 0.0
  %311 = vmatpush1.msra.mxu0 0.0
  %312 = vmatprep.subr.mxu0 0.0
  %313 = vmatpush1.msra.mxu0 0.0
  %314 = vmatprep.subr.mxu0 0.0
  %315 = vmatpush1.msra.mxu0 0.0
  %316 = vmatprep.subr.mxu0 0.0
  %317 = vmatpush1.msra.mxu0 0.0
  %318 = vmatprep.subr.mxu0 0.0
  %319 = vmatpush1.msra.mxu0 0.0
  %320 = vmatprep.subr.mxu0 0.0
  %321 = vmatpush1.msra.mxu0 0.0
  %322 = vmatprep.subr.mxu0 0.0
  %323 = vmatpush1.msra.mxu0 0.0
  %324 = vmatprep.subr.mxu0 0.0
  %325 = vmatpush1.msra.mxu0 0.0
  %326 = vmatprep.subr.mxu0 0.0
  %327 = vmatpush1.msra.mxu0 0.0
  %328 = vmatprep.subr.mxu0 0.0
  %329 = vmatpush1.msra.mxu0 0.0
  %330 = vmatprep.subr.mxu0 0.0
  %331 = vmatpush1.msra.mxu0 0.0
  %332 = vmatprep.subr.mxu0 0.0
  %333 = vmatpush1.msra.mxu0 0.0
  %334 = vmatprep.subr.mxu0 0.0
  %335 = vmatpush1.msra.mxu0 0.0
  %336 = vmatprep.subr.mxu0 0.0
  %337 = vmatpush1.msra.mxu0 0.0
  %338 = vmatprep.mubr.f32.mxu0 0.0
  %339 = vmatmul.mubr.f32.gmra.mrb[0].mxu0 %v243
  %v340 = vpop.f32.mrb[0].mxu0
  %v341 = vadd.f32 %v272, %v340
  %v342 = vpop.f32.mrb[0].mxu0
  %343 = vmatprep.mubr.f32.mxu0 0.0
  %344 = vmatmul.mubr.f32.gmra.mrb[0].mxu0 %v244
  %v345 = vpop.f32.mrb[0].mxu0
  %v346 = vadd.f32 %v272, %v345
  %v347 = vpop.f32.mrb[0].mxu0
  %348 = vmatprep.mubr.f32.mxu0 0.0
  %349 = vmatmul.mubr.f32.gmra.mrb[0].mxu0 %v245
  %v350 = vpop.f32.mrb[0].mxu0
  %v351 = vadd.f32 %v272, %v350
  %v352 = vpop.f32.mrb[0].mxu0
  %353 = vmatprep.mubr.f32.mxu0 0.0
  %354 = vmatmul.mubr.f32.gmra.mrb[0].mxu0 %v246
  %v355 = vpop.f32.mrb[0].mxu0
  %v356 = vadd.f32 %v272, %v355
  %v357 = vpop.f32.mrb[0].mxu0
  %358 = vmatprep.mubr.f32.mxu0 0.0
  %359 = vmatmul.mubr.f32.gmra.mrb[0].mxu0 %v247
  %v360 = vpop.f32.mrb[0].mxu0
  %v361 = vadd.f32 %v272, %v360
  %v362 = vpop.f32.mrb[0].mxu0
  %363 = vmatprep.mubr.f32.mxu0 0.0
  %364 = vmatmul.mubr.f32.gmra.mrb[0].mxu0 %v248
  %v365 = vpop.f32.mrb[0].mxu0
  %v366 = vadd.f32 %v272, %v365
  %v367 = vpop.f32.mrb[0].mxu0
  %368 = vmatprep.mubr.f32.mxu0 0.0
  %369 = vmatmul.mubr.f32.gmra.mrb[0].mxu0 %v249
  %v370 = vpop.f32.mrb[0].mxu0
  %v371 = vadd.f32 %v272, %v370
  %v372 = vpop.f32.mrb[0].mxu0
  %373 = vmatprep.mubr.f32.mxu0 0.0
  %374 = vmatmul.mubr.f32.gmra.mrb[0].mxu0 %v250
  %v375 = vpop.f32.mrb[0].mxu0
  %v376 = vadd.f32 %v272, %v375
  %v377 = vpop.f32.mrb[0].mxu0
  %378 = vdwg.mxu0
  %v379 = vadd.f32 %v341, %v26
  %v380 = vadd.f32 %v346, %v27
  %v381 = vadd.f32 %v351, %v28
  %v382 = vadd.f32 %v356, %v29
  %v383 = vadd.f32 %v361, %v30
  %v384 = vadd.f32 %v366, %v31
  %v385 = vadd.f32 %v371, %v32
  %v386 = vadd.f32 %v376, %v33
  %v387 = vld [vmem:[%s5] sm:$0x1]
  %v388 = vld [vmem:[%s6] sm:$0x1]
  %v389 = vsel %vm49, %v379, 0.0
  %390 = vadd.xlane.f32.xlu0 %v389
  %v391 = vpop.xlane.xlu0 %390
  %v392 = vsel %vm49, %v380, 0.0
  %393 = vadd.xlane.f32.xlu0 %v392
  %v394 = vpop.xlane.xlu0 %393
  %v395 = vsel %vm49, %v381, 0.0
  %396 = vadd.xlane.f32.xlu0 %v395
  %v397 = vpop.xlane.xlu0 %396
  %v398 = vsel %vm49, %v382, 0.0
  %399 = vadd.xlane.f32.xlu0 %v398
  %v400 = vpop.xlane.xlu0 %399
  %v401 = vsel %vm49, %v383, 0.0
  %402 = vadd.xlane.f32.xlu0 %v401
  %v403 = vpop.xlane.xlu0 %402
  %v404 = vsel %vm49, %v384, 0.0
  %405 = vadd.xlane.f32.xlu0 %v404
  %v406 = vpop.xlane.xlu0 %405
  %v407 = vsel %vm49, %v385, 0.0
  %408 = vadd.xlane.f32.xlu0 %v407
  %v409 = vpop.xlane.xlu0 %408
  %v410 = vsel %vm49, %v386, 0.0
  %411 = vadd.xlane.f32.xlu0 %v410
  %v412 = vpop.xlane.xlu0 %411
  %v413 = vrcp.pop 64.0
  %v414 = vmul.f32 %v391, %v413
  %v415 = vmul.f32 %v394, %v413
  %v416 = vmul.f32 %v397, %v413
  %v417 = vmul.f32 %v400, %v413
  %v418 = vmul.f32 %v403, %v413
  %v419 = vmul.f32 %v406, %v413
  %v420 = vmul.f32 %v409, %v413
  %v421 = vmul.f32 %v412, %v413
  %v422 = vsub.f32 %v379, %v414
  %v423 = vsub.f32 %v380, %v415
  %v424 = vsub.f32 %v381, %v416
  %v425 = vsub.f32 %v382, %v417
  %v426 = vsub.f32 %v383, %v418
  %v427 = vsub.f32 %v384, %v419
  %v428 = vsub.f32 %v385, %v420
  %v429 = vsub.f32 %v386, %v421
  %v430 = vmul.f32 %v422, %v422
  %v431 = vmul.f32 %v423, %v423
  %v432 = vmul.f32 %v424, %v424
  %v433 = vmul.f32 %v425, %v425
  %v434 = vmul.f32 %v426, %v426
  %v435 = vmul.f32 %v427, %v427
  %v436 = vmul.f32 %v428, %v428
  %v437 = vmul.f32 %v429, %v429
  %v438 = vsel %vm49, %v430, 0.0
  %439 = vadd.xlane.f32.xlu0 %v438
  %v440 = vpop.xlane.xlu0 %439
  %v441 = vsel %vm49, %v431, 0.0
  %442 = vadd.xlane.f32.xlu0 %v441
  %v443 = vpop.xlane.xlu0 %442
  %v444 = vsel %vm49, %v432, 0.0
  %445 = vadd.xlane.f32.xlu0 %v444
  %v446 = vpop.xlane.xlu0 %445
  %v447 = vsel %vm49, %v433, 0.0
  %448 = vadd.xlane.f32.xlu0 %v447
  %v449 = vpop.xlane.xlu0 %448
  %v450 = vsel %vm49, %v434, 0.0
  %451 = vadd.xlane.f32.xlu0 %v450
  %v452 = vpop.xlane.xlu0 %451
  %v453 = vsel %vm49, %v435, 0.0
  %454 = vadd.xlane.f32.xlu0 %v453
  %v455 = vpop.xlane.xlu0 %454
  %v456 = vsel %vm49, %v436, 0.0
  %457 = vadd.xlane.f32.xlu0 %v456
  %v458 = vpop.xlane.xlu0 %457
  %v459 = vsel %vm49, %v437, 0.0
  %460 = vadd.xlane.f32.xlu0 %v459
  %v461 = vpop.xlane.xlu0 %460
  %v462 = vmul.f32 %v440, %v413
  %v463 = vmul.f32 %v443, %v413
  %v464 = vmul.f32 %v446, %v413
  %v465 = vmul.f32 %v449, %v413
  %v466 = vmul.f32 %v452, %v413
  %v467 = vmul.f32 %v455, %v413
  %v468 = vmul.f32 %v458, %v413
  %v469 = vmul.f32 %v461, %v413
  %v470 = vadd.f32 %v462, 1e-12
  %v471 = vadd.f32 %v463, 1e-12
  %v472 = vadd.f32 %v464, 1e-12
  %v473 = vadd.f32 %v465, 1e-12
  %v474 = vadd.f32 %v466, 1e-12
  %v475 = vadd.f32 %v467, 1e-12
  %v476 = vadd.f32 %v468, 1e-12
  %v477 = vadd.f32 %v469, 1e-12
  %v478 = vrsqrt.pop %v470
  %v479 = vrsqrt.pop %v471
  %v480 = vrsqrt.pop %v472
  %v481 = vrsqrt.pop %v473
  %v482 = vrsqrt.pop %v474
  %v483 = vrsqrt.pop %v475
  %v484 = vrsqrt.pop %v476
  %v485 = vrsqrt.pop %v477
  %v486 = vmul.f32 %v422, %v478
  %v487 = vmul.f32 %v423, %v479
  %v488 = vmul.f32 %v424, %v480
  %v489 = vmul.f32 %v425, %v481
  %v490 = vmul.f32 %v426, %v482
  %v491 = vmul.f32 %v427, %v483
  %v492 = vmul.f32 %v428, %v484
  %v493 = vmul.f32 %v429, %v485
  %v495 = vlaneseq
  %v496 = vshrl.u32 %v495, 7
  %v497 = vsub.s32 0, %v496
  %v498 = vrot.slane %v387, %v497
  %v500 = vmul.f32 %v486, %v498
  %v501 = vmul.f32 %v487, %v498
  %v502 = vmul.f32 %v488, %v498
  %v503 = vmul.f32 %v489, %v498
  %v504 = vmul.f32 %v490, %v498
  %v505 = vmul.f32 %v491, %v498
  %v506 = vmul.f32 %v492, %v498
  %v507 = vmul.f32 %v493, %v498
  %v509 = vlaneseq
  %v510 = vshrl.u32 %v509, 7
  %v511 = vsub.s32 0, %v510
  %v512 = vrot.slane %v388, %v511
  %v514 = vadd.f32 %v500, %v512
  %v515 = vadd.f32 %v501, %v512
  %v516 = vadd.f32 %v502, %v512
  %v517 = vadd.f32 %v503, %v512
  %v518 = vadd.f32 %v504, %v512
  %v519 = vadd.f32 %v505, %v512
  %v520 = vadd.f32 %v506, %v512
  %v521 = vadd.f32 %v507, %v512
  %522 = vst.msk [vmem:[%s7] sm:$0xff] %vm49, %v514
  %523 = vst.msk [vmem:[%s7 + $0x8] sm:$0xff] %vm49, %v515
  %524 = vst.msk [vmem:[%s7 + $0x10] sm:$0xff] %vm49, %v516
  %525 = vst.msk [vmem:[%s7 + $0x18] sm:$0xff] %vm49, %v517
  %526 = vst.msk [vmem:[%s7 + $0x20] sm:$0xff] %vm49, %v518
  %527 = vst.msk [vmem:[%s7 + $0x28] sm:$0xff] %vm49, %v519
  %528 = vst.msk [vmem:[%s7 + $0x30] sm:$0xff] %vm49, %v520
  %529 = vst.msk [vmem:[%s7 + $0x38] sm:$0xff] %vm49, %v521
  // Predicated region
  $region30: #{ak_bert_forward.18} parent=0 // pred_check
    _
  $region31: #{ak_bert_forward.18} parent=0 // pred_check_branch
    %531 = sbr.rel (0) target = $region33
  $region32: #{ak_bert_forward.18} parent=0 // pred_region
    _
  $region33: #{ak_bert_forward.18} parent=0 // pred_fallthru
    _
  // Predicated region
  $region34: #{ak_bert_forward.18} parent=0 // pred_check
    _
  $region35: #{ak_bert_forward.18} parent=0 // pred_check_branch
    %533 = sbr.rel (0) target = $region37
  $region36: #{ak_bert_forward.18} parent=0 // pred_region
    _
  $region37: #{ak_bert_forward.18} parent=0 // pred_fallthru
    _

// kernel: ak_bert_forward.16
$region0: #{ak_bert_forward.16}
  #allocation0 [shape = 'u32[]', space=smem, size = 0x4, offset = 0x4, fixed_abs, tag = 'smem constant byte address 0x4 - core index']
  #allocation1 [shape = 'u32[144,128]{1,0:T(1,128)}', space=vmem, size = 0x12000, scoped, tag = 'internal scratch']
  %s0 = inlined_call_operand.vmem [shape: f32[16,16,16], index: 0, kind: input, shape index: {}]
  %s1 = inlined_call_operand.vmem [shape: f32[16,16,16], index: 1, kind: input, shape index: {}]
  %s2 = inlined_call_operand.vmem [shape: f32[16,16,16], index: 2, kind: input, shape index: {}]
  %s3 = inlined_call_operand.vmem [shape: f32[16,16,16], index: 3, kind: output, shape index: {}]
  %s4 = sld [smem:[#allocation0]]
  $region22: #{ak_bert_forward.16} parent=0
    _
  %s6 = ssub.s32 1, %s4
  %s7 = scalar_select 0, %s6, %s4
  // Predicated region
  $region2: #{ak_bert_forward.16} parent=0 // pred_check
    _
  $region3: #{ak_bert_forward.16} parent=0 // pred_check_branch
    %9 = sbr.rel (0) target = $region5
  $region4: #{ak_bert_forward.16} parent=0 // pred_region
    _
  $region5: #{ak_bert_forward.16} parent=0 // pred_fallthru
    _
  // Predicated region
  $region6: #{ak_bert_forward.16} parent=0 // pred_check
    _
  $region7: #{ak_bert_forward.16} parent=0 // pred_check_branch
    %11 = sbr.rel (0) target = $region9
  $region8: #{ak_bert_forward.16} parent=0 // pred_region
    _
  $region9: #{ak_bert_forward.16} parent=0 // pred_fallthru
    _
  // Predicated region
  $region10: #{ak_bert_forward.16} parent=0 // pred_check
    _
  $region11: #{ak_bert_forward.16} parent=0 // pred_check_branch
    %13 = sbr.rel (0) target = $region13
  $region12: #{ak_bert_forward.16} parent=0 // pred_region
    _
  $region13: #{ak_bert_forward.16} parent=0 // pred_fallthru
    _
  %v14 = vld [vmem:[%s0] sm:$0xff]
  %v15 = vld [vmem:[%s0 + $0x8] sm:$0xff]
  %v16 = vld [vmem:[%s0 + $0x10] sm:$0xff]
  %v17 = vld [vmem:[%s0 + $0x18] sm:$0xff]
  %v18 = vld [vmem:[%s0 + $0x20] sm:$0xff]
  %v19 = vld [vmem:[%s0 + $0x28] sm:$0xff]
  %v20 = vld [vmem:[%s0 + $0x30] sm:$0xff]
  %v21 = vld [vmem:[%s0 + $0x38] sm:$0xff]
  %v22 = vld [vmem:[%s0 + $0x40] sm:$0xff]
  %v23 = vld [vmem:[%s0 + $0x48] sm:$0xff]
  %v24 = vld [vmem:[%s0 + $0x50] sm:$0xff]
  %v25 = vld [vmem:[%s0 + $0x58] sm:$0xff]
  %v26 = vld [vmem:[%s0 + $0x60] sm:$0xff]
  %v27 = vld [vmem:[%s0 + $0x68] sm:$0xff]
  %v28 = vld [vmem:[%s0 + $0x70] sm:$0xff]
  %v29 = vld [vmem:[%s0 + $0x78] sm:$0xff]
  %v30 = vld [vmem:[%s0 + $0x80] sm:$0xff]
  %v31 = vld [vmem:[%s0 + $0x88] sm:$0xff]
  %v32 = vld [vmem:[%s0 + $0x90] sm:$0xff]
  %v33 = vld [vmem:[%s0 + $0x98] sm:$0xff]
  %v34 = vld [vmem:[%s0 + $0xa0] sm:$0xff]
  %v35 = vld [vmem:[%s0 + $0xa8] sm:$0xff]
  %v36 = vld [vmem:[%s0 + $0xb0] sm:$0xff]
  %v37 = vld [vmem:[%s0 + $0xb8] sm:$0xff]
  %v38 = vld [vmem:[%s0 + $0xc0] sm:$0xff]
  %v39 = vld [vmem:[%s0 + $0xc8] sm:$0xff]
  %v40 = vld [vmem:[%s0 + $0xd0] sm:$0xff]
  %v41 = vld [vmem:[%s0 + $0xd8] sm:$0xff]
  %v42 = vld [vmem:[%s0 + $0xe0] sm:$0xff]
  %v43 = vld [vmem:[%s0 + $0xe8] sm:$0xff]
  %v44 = vld [vmem:[%s0 + $0xf0] sm:$0xff]
  %v45 = vld [vmem:[%s0 + $0xf8] sm:$0xff]
  %v46 = vld [vmem:[%s1] sm:$0xff]
  %v47 = vld [vmem:[%s1 + $0x8] sm:$0xff]
  %v48 = vld [vmem:[%s1 + $0x10] sm:$0xff]
  %v49 = vld [vmem:[%s1 + $0x18] sm:$0xff]
  %v50 = vld [vmem:[%s1 + $0x20] sm:$0xff]
  %v51 = vld [vmem:[%s1 + $0x28] sm:$0xff]
  %v52 = vld [vmem:[%s1 + $0x30] sm:$0xff]
  %v53 = vld [vmem:[%s1 + $0x38] sm:$0xff]
  %v54 = vld [vmem:[%s1 + $0x40] sm:$0xff]
  %v55 = vld [vmem:[%s1 + $0x48] sm:$0xff]
  %v56 = vld [vmem:[%s1 + $0x50] sm:$0xff]
  %v57 = vld [vmem:[%s1 + $0x58] sm:$0xff]
  %v58 = vld [vmem:[%s1 + $0x60] sm:$0xff]
  %v59 = vld [vmem:[%s1 + $0x68] sm:$0xff]
  %v60 = vld [vmem:[%s1 + $0x70] sm:$0xff]
  %v61 = vld [vmem:[%s1 + $0x78] sm:$0xff]
  %v62 = vld [vmem:[%s1 + $0x80] sm:$0xff]
  %v63 = vld [vmem:[%s1 + $0x88] sm:$0xff]
  %v64 = vld [vmem:[%s1 + $0x90] sm:$0xff]
  %v65 = vld [vmem:[%s1 + $0x98] sm:$0xff]
  %v66 = vld [vmem:[%s1 + $0xa0] sm:$0xff]
  %v67 = vld [vmem:[%s1 + $0xa8] sm:$0xff]
  %v68 = vld [vmem:[%s1 + $0xb0] sm:$0xff]
  %v69 = vld [vmem:[%s1 + $0xb8] sm:$0xff]
  %v70 = vld [vmem:[%s1 + $0xc0] sm:$0xff]
  %v71 = vld [vmem:[%s1 + $0xc8] sm:$0xff]
  %v72 = vld [vmem:[%s1 + $0xd0] sm:$0xff]
  %v73 = vld [vmem:[%s1 + $0xd8] sm:$0xff]
  %v74 = vld [vmem:[%s1 + $0xe0] sm:$0xff]
  %v75 = vld [vmem:[%s1 + $0xe8] sm:$0xff]
  %v76 = vld [vmem:[%s1 + $0xf0] sm:$0xff]
  %v77 = vld [vmem:[%s1 + $0xf8] sm:$0xff]
  %v78 = vld [vmem:[%s2] sm:$0xff]
  %v79 = vld [vmem:[%s2 + $0x8] sm:$0xff]
  %v80 = vld [vmem:[%s2 + $0x10] sm:$0xff]
  %v81 = vld [vmem:[%s2 + $0x18] sm:$0xff]
  %v82 = vld [vmem:[%s2 + $0x20] sm:$0xff]
  %v83 = vld [vmem:[%s2 + $0x28] sm:$0xff]
  %v84 = vld [vmem:[%s2 + $0x30] sm:$0xff]
  %v85 = vld [vmem:[%s2 + $0x38] sm:$0xff]
  %v86 = vld [vmem:[%s2 + $0x40] sm:$0xff]
  %v87 = vld [vmem:[%s2 + $0x48] sm:$0xff]
  %v88 = vld [vmem:[%s2 + $0x50] sm:$0xff]
  %v89 = vld [vmem:[%s2 + $0x58] sm:$0xff]
  %v90 = vld [vmem:[%s2 + $0x60] sm:$0xff]
  %v91 = vld [vmem:[%s2 + $0x68] sm:$0xff]
  %v92 = vld [vmem:[%s2 + $0x70] sm:$0xff]
  %v93 = vld [vmem:[%s2 + $0x78] sm:$0xff]
  %v94 = vld [vmem:[%s2 + $0x80] sm:$0xff]
  %v95 = vld [vmem:[%s2 + $0x88] sm:$0xff]
  %v96 = vld [vmem:[%s2 + $0x90] sm:$0xff]
  %v97 = vld [vmem:[%s2 + $0x98] sm:$0xff]
  %v98 = vld [vmem:[%s2 + $0xa0] sm:$0xff]
  %v99 = vld [vmem:[%s2 + $0xa8] sm:$0xff]
  %v100 = vld [vmem:[%s2 + $0xb0] sm:$0xff]
  %v101 = vld [vmem:[%s2 + $0xb8] sm:$0xff]
  %v102 = vld [vmem:[%s2 + $0xc0] sm:$0xff]
  %v103 = vld [vmem:[%s2 + $0xc8] sm:$0xff]
  %v104 = vld [vmem:[%s2 + $0xd0] sm:$0xff]
  %v105 = vld [vmem:[%s2 + $0xd8] sm:$0xff]
  %v106 = vld [vmem:[%s2 + $0xe0] sm:$0xff]
  %v107 = vld [vmem:[%s2 + $0xe8] sm:$0xff]
  %v108 = vld [vmem:[%s2 + $0xf0] sm:$0xff]
  %v109 = vld [vmem:[%s2 + $0xf8] sm:$0xff]
  %vm110 = vcmask 130048
  %v112 = vsel %vm110, %v14, 0
  %v115 = vsel %vm110, %v15, 0
  %v118 = vsel %vm110, %v46, 0
  %v121 = vsel %vm110, %v47, 0
  %123 = vmatprep.subr.mxu0 0.0
  %124 = vmatpush1.xpose.msra.mxu0 %v118
  %125 = vmatprep.subr.mxu0 0.0
  %126 = vmatpush1.xpose.msra.mxu0 %v121
  %127 = vmatprep.subr.mxu0 0.0
  %128 = vmatpush1.xpose.msra.mxu0 0.0
  %129 = vmatprep.subr.mxu0 0.0
  %130 = vmatpush1.xpose.msra.mxu0 0.0
  %131 = vmatprep.subr.mxu0 0.0
  %132 = vmatpush1.xpose.msra.mxu0 0.0
  %133 = vmatprep.subr.mxu0 0.0
  %134 = vmatpush1.xpose.msra.mxu0 0.0
  %135 = vmatprep.subr.mxu0 0.0
  %136 = vmatpush1.xpose.msra.mxu0 0.0
  %137 = vmatprep.subr.mxu0 0.0
  %138 = vmatpush1.xpose.msra.mxu0 0.0
  %139 = vmatprep.subr.mxu0 0.0
  %140 = vmatpush1.xpose.msra.mxu0 0.0
  %141 = vmatprep.subr.mxu0 0.0
  %142 = vmatpush1.xpose.msra.mxu0 0.0
  %143 = vmatprep.subr.mxu0 0.0
  %144 = vmatpush1.xpose.msra.mxu0 0.0
  %145 = vmatprep.subr.mxu0 0.0
  %146 = vmatpush1.xpose.msra.mxu0 0.0
  %147 = vmatprep.subr.mxu0 0.0
  %148 = vmatpush1.xpose.msra.mxu0 0.0
  %149 = vmatprep.subr.mxu0 0.0
  %150 = vmatpush1.xpose.msra.mxu0 0.0
  %151 = vmatprep.subr.mxu0 0.0
  %152 = vmatpush1.xpose.msra.mxu0 0.0
  %153 = vmatprep.subr.mxu0 0.0
  %154 = vmatpush1.xpose.msra.mxu0 0.0
  %155 = vmatprep.subr.mxu0 0.0
  %156 = vmatpush1.xpose.msra.mxu0 0.0
  %157 = vmatprep.subr.mxu0 0.0
  %158 = vmatpush1.xpose.msra.mxu0 0.0
  %159 = vmatprep.subr.mxu0 0.0
  %160 = vmatpush1.xpose.msra.mxu0 0.0
  %161 = vmatprep.subr.mxu0 0.0
  %162 = vmatpush1.xpose.msra.mxu0 0.0
  %163 = vmatprep.subr.mxu0 0.0
  %164 = vmatpush1.xpose.msra.mxu0 0.0
  %165 = vmatprep.subr.mxu0 0.0
  %166 = vmatpush1.xpose.msra.mxu0 0.0
  %167 = vmatprep.subr.mxu0 0.0
  %168 = vmatpush1.xpose.msra.mxu0 0.0
  %169 = vmatprep.subr.mxu0 0.0
  %170 = vmatpush1.xpose.msra.mxu0 0.0
  %171 = vmatprep.subr.mxu0 0.0
  %172 = vmatpush1.xpose.msra.mxu0 0.0
  %173 = vmatprep.subr.mxu0 0.0
  %174 = vmatpush1.xpose.msra.mxu0 0.0
  %175 = vmatprep.subr.mxu0 0.0
  %176 = vmatpush1.xpose.msra.mxu0 0.0
  %177 = vmatprep.subr.mxu0 0.0
  %178 = vmatpush1.xpose.msra.mxu0 0.0
  %179 = vmatprep.subr.mxu0 0.0
  %180 = vmatpush1.xpose.msra.mxu0 0.0
  %181 = vmatprep.subr.mxu0 0.0
  %182 = vmatpush1.xpose.msra.mxu0 0.0
  %183 = vmatprep.subr.mxu0 0.0
  %184 = vmatpush1.xpose.msra.mxu0 0.0
  %185 = vmatprep.subr.mxu0 0.0
  %186 = vmatpush1.xpose.msra.mxu0 0.0
  %187 = vmatprep.mubr.f32.mxu0 0.0
  %188 = vmatmul.mubr.f32.gmra.mrb[0].mxu0 %v112
  %v189 = vpop.f32.mrb[0].mxu0
  %v190 = vadd.f32 0.0, %v189
  %v191 = vpop.f32.mrb[0].mxu0
  %192 = vmatprep.mubr.f32.mxu0 0.0
  %193 = vmatmul.mubr.f32.gmra.mrb[0].mxu0 %v115
  %v194 = vpop.f32.mrb[0].mxu0
  %v195 = vadd.f32 0.0, %v194
  %v196 = vpop.f32.mrb[0].mxu0
  %197 = vdwg.mxu0
  %v199 = vsel %vm110, %v16, 0
  %v202 = vsel %vm110, %v17, 0
  %v205 = vsel %vm110, %v48, 0
  %v208 = vsel %vm110, %v49, 0
  %210 = vmatprep.subr.mxu0 0.0
  %211 = vmatpush1.xpose.msra.mxu0 %v205
  %212 = vmatprep.subr.mxu0 0.0
  %213 = vmatpush1.xpose.msra.mxu0 %v208
  %214 = vmatprep.subr.mxu0 0.0
  %215 = vmatpush1.xpose.msra.mxu0 0.0
  %216 = vmatprep.subr.mxu0 0.0
  %217 = vmatpush1.xpose.msra.mxu0 0.0
  %218 = vmatprep.subr.mxu0 0.0
  %219 = vmatpush1.xpose.msra.mxu0 0.0
  %220 = vmatprep.subr.mxu0 0.0
  %221 = vmatpush1.xpose.msra.mxu0 0.0
  %222 = vmatprep.subr.mxu0 0.0
  %223 = vmatpush1.xpose.msra.mxu0 0.0
  %224 = vmatprep.subr.mxu0 0.0
  %225 = vmatpush1.xpose.msra.mxu0 0.0
  %226 = vmatprep.subr.mxu0 0.0
  %227 = vmatpush1.xpose.msra.mxu0 0.0
  %228 = vmatprep.subr.mxu0 0.0
  %229 = vmatpush1.xpose.msra.mxu0 0.0
  %230 = vmatprep.subr.mxu0 0.0
  %231 = vmatpush1.xpose.msra.mxu0 0.0
  %232 = vmatprep.subr.mxu0 0.0
  %233 = vmatpush1.xpose.msra.mxu0 0.0
  %234 = vmatprep.subr.mxu0 0.0
  %235 = vmatpush1.xpose.msra.mxu0 0.0
  %236 = vmatprep.subr.mxu0 0.0
  %237 = vmatpush1.xpose.msra.mxu0 0.0
  %238 = vmatprep.subr.mxu0 0.0
  %239 = vmatpush1.xpose.msra.mxu0 0.0
  %240 = vmatprep.subr.mxu0 0.0
  %241 = vmatpush1.xpose.msra.mxu0 0.0
  %242 = vmatprep.subr.mxu0 0.0
  %243 = vmatpush1.xpose.msra.mxu0 0.0
  %244 = vmatprep.subr.mxu0 0.0
  %245 = vmatpush1.xpose.msra.mxu0 0.0
  %246 = vmatprep.subr.mxu0 0.0
  %247 = vmatpush1.xpose.msra.mxu0 0.0
  %248 = vmatprep.subr.mxu0 0.0
  %249 = vmatpush1.xpose.msra.mxu0 0.0
  %250 = vmatprep.subr.mxu0 0.0
  %251 = vmatpush1.xpose.msra.mxu0 0.0
  %252 = vmatprep.subr.mxu0 0.0
  %253 = vmatpush1.xpose.msra.mxu0 0.0
  %254 = vmatprep.subr.mxu0 0.0
  %255 = vmatpush1.xpose.msra.mxu0 0.0
  %256 = vmatprep.subr.mxu0 0.0
  %257 = vmatpush1.xpose.msra.mxu0 0.0
  %258 = vmatprep.subr.mxu0 0.0
  %259 = vmatpush1.xpose.msra.mxu0 0.0
  %260 = vmatprep.subr.mxu0 0.0
  %261 = vmatpush1.xpose.msra.mxu0 0.0
  %262 = vmatprep.subr.mxu0 0.0
  %263 = vmatpush1.xpose.msra.mxu0 0.0
  %264 = vmatprep.subr.mxu0 0.0
  %265 = vmatpush1.xpose.msra.mxu0 0.0
  %266 = vmatprep.subr.mxu0 0.0
  %267 = vmatpush1.xpose.msra.mxu0 0.0
  %268 = vmatprep.subr.mxu0 0.0
  %269 = vmatpush1.xpose.msra.mxu0 0.0
  %270 = vmatprep.subr.mxu0 0.0
  %271 = vmatpush1.xpose.msra.mxu0 0.0
  %272 = vmatprep.subr.mxu0 0.0
  %273 = vmatpush1.xpose.msra.mxu0 0.0
  %274 = vmatprep.mubr.f32.mxu0 0.0
  %275 = vmatmul.mubr.f32.gmra.mrb[0].mxu0 %v199
  %v276 = vpop.f32.mrb[0].mxu0
  %v277 = vadd.f32 0.0, %v276
  %v278 = vpop.f32.mrb[0].mxu0
  %279 = vmatprep.mubr.f32.mxu0 0.0
  %280 = vmatmul.mubr.f32.gmra.mrb[0].mxu0 %v202
  %v281 = vpop.f32.mrb[0].mxu0
  %v282 = vadd.f32 0.0, %v281
  %v283 = vpop.f32.mrb[0].mxu0
  %284 = vdwg.mxu0
  %v286 = vsel %vm110, %v18, 0
  %v289 = vsel %vm110, %v19, 0
  %v292 = vsel %vm110, %v50, 0
  %v295 = vsel %vm110, %v51, 0
  %297 = vmatprep.subr.mxu0 0.0
  %298 = vmatpush1.xpose.msra.mxu0 %v292
  %299 = vmatprep.subr.mxu0 0.0
  %300 = vmatpush1.xpose.msra.mxu0 %v295
  %301 = vmatprep.subr.mxu0 0.0
  %302 = vmatpush1.xpose.msra.mxu0 0.0
  %303 = vmatprep.subr.mxu0 0.0
  %304 = vmatpush1.xpose.msra.mxu0 0.0
  %305 = vmatprep.subr.mxu0 0.0
  %306 = vmatpush1.xpose.msra.mxu0 0.0
  %307 = vmatprep.subr.mxu0 0.0
  %308 = vmatpush1.xpose.msra.mxu0 0.0
  %309 = vmatprep.subr.mxu0 0.0
  %310 = vmatpush1.xpose.msra.mxu0 0.0
  %311 = vmatprep.subr.mxu0 0.0
  %312 = vmatpush1.xpose.msra.mxu0 0.0
  %313 = vmatprep.subr.mxu0 0.0
  %314 = vmatpush1.xpose.msra.mxu0 0.0
  %315 = vmatprep.subr.mxu0 0.0
  %316 = vmatpush1.xpose.msra.mxu0 0.0
  %317 = vmatprep.subr.mxu0 0.0
  %318 = vmatpush1.xpose.msra.mxu0 0.0
  %319 = vmatprep.subr.mxu0 0.0
  %320 = vmatpush1.xpose.msra.mxu0 0.0
  %321 = vmatprep.subr.mxu0 0.0
  %322 = vmatpush1.xpose.msra.mxu0 0.0
  %323 = vmatprep.subr.mxu0 0.0
  %324 = vmatpush1.xpose.msra.mxu0 0.0
  %325 = vmatprep.subr.mxu0 0.0
  %326 = vmatpush1.xpose.msra.mxu0 0.0
  %327 = vmatprep.subr.mxu0 0.0
  %328 = vmatpush1.xpose.msra.mxu0 0.0
  %329 = vmatprep.subr.mxu0 0.0
  %330 = vmatpush1.xpose.msra.mxu0 0.0
  %331 = vmatprep.subr.mxu0 0.0
  %332 = vmatpush1.xpose.msra.mxu0 0.0
  %333 = vmatprep.subr.mxu0 0.0
  %334 = vmatpush1.xpose.msra.mxu0 0.0
  %335 = vmatprep.subr.mxu0 0.0
  %336 = vmatpush1.xpose.msra.mxu0 0.0
  %337 = vmatprep.subr.mxu0 0.0
  %338 = vmatpush1.xpose.msra.mxu0 0.0
  %339 = vmatprep.subr.mxu0 0.0
  %340 = vmatpush1.xpose.msra.mxu0 0.0
  %341 = vmatprep.subr.mxu0 0.0
  %342 = vmatpush1.xpose.msra.mxu0 0.0
  %343 = vmatprep.subr.mxu0 0.0
  %344 = vmatpush1.xpose.msra.mxu0 0.0
  %345 = vmatprep.subr.mxu0 0.0
  %346 = vmatpush1.xpose.msra.mxu0 0.0
  %347 = vmatprep.subr.mxu0 0.0
  %348 = vmatpush1.xpose.msra.mxu0 0.0
  %349 = vmatprep.subr.mxu0 0.0
  %350 = vmatpush1.xpose.msra.mxu0 0.0
  %351 = vmatprep.subr.mxu0 0.0
  %352 = vmatpush1.xpose.msra.mxu0 0.0
  %353 = vmatprep.subr.mxu0 0.0
  %354 = vmatpush1.xpose.msra.mxu0 0.0
  %355 = vmatprep.subr.mxu0 0.0
  %356 = vmatpush1.xpose.msra.mxu0 0.0
  %357 = vmatprep.subr.mxu0 0.0
  %358 = vmatpush1.xpose.msra.mxu0 0.0
  %359 = vmatprep.subr.mxu0 0.0
  %360 = vmatpush1.xpose.msra.mxu0 0.0
  %361 = vmatprep.mubr.f32.mxu0 0.0
  %362 = vmatmul.mubr.f32.gmra.mrb[0].mxu0 %v286
  %v363 = vpop.f32.mrb[0].mxu0
  %v364 = vadd.f32 0.0, %v363
  %v365 = vpop.f32.mrb[0].mxu0
  %366 = vmatprep.mubr.f32.mxu0 0.0
  %367 = vmatmul.mubr.f32.gmra.mrb[0].mxu0 %v289
  %v368 = vpop.f32.mrb[0].mxu0
  %v369 = vadd.f32 0.0, %v368
  %v370 = vpop.f32.mrb[0].mxu0
  %371 = vdwg.mxu0
  %v373 = vsel %vm110, %v20, 0
  %v376 = vsel %vm110, %v21, 0
  %v379 = vsel %vm110, %v52, 0
  %v382 = vsel %vm110, %v53, 0
  %384 = vmatprep.subr.mxu0 0.0
  %385 = vmatpush1.xpose.msra.mxu0 %v379
  %386 = vmatprep.subr.mxu0 0.0
  %387 = vmatpush1.xpose.msra.mxu0 %v382
  %388 = vmatprep.subr.mxu0 0.0
  %389 = vmatpush1.xpose.msra.mxu0 0.0
  %390 = vmatprep.subr.mxu0 0.0
  %391 = vmatpush1.xpose.msra.mxu0 0.0
  %392 = vmatprep.subr.mxu0 0.0
  %393 = vmatpush1.xpose.msra.mxu0 0.0
  %394 = vmatprep.subr.mxu0 0.0
  %395 = vmatpush1.xpose.msra.mxu0 0.0
  %396 = vmatprep.subr.mxu0 0.0
  %397 = vmatpush1.xpose.msra.mxu0 0.0
  %398 = vmatprep.subr.mxu0 0.0
  %399 = vmatpush1.xpose.msra.mxu0 0.0
  %400 = vmatprep.subr.mxu0 0.0
  %401 = vmatpush1.xpose.msra.mxu0 0.0
  %402 = vmatprep.subr.mxu0 0.0
  %403 = vmatpush1.xpose.msra.mxu0 0.0
  %404 = vmatprep.subr.mxu0 0.0
  %405 = vmatpush1.xpose.msra.mxu0 0.0
  %406 = vmatprep.subr.mxu0 0.0
  %407 = vmatpush1.xpose.msra.mxu0 0.0
  %408 = vmatprep.subr.mxu0 0.0
  %409 = vmatpush1.xpose.msra.mxu0 0.0
  %410 = vmatprep.subr.mxu0 0.0
  %411 = vmatpush1.xpose.msra.mxu0 0.0
  %412 = vmatprep.subr.mxu0 0.0
  %413 = vmatpush1.xpose.msra.mxu0 0.0
  %414 = vmatprep.subr.mxu0 0.0
  %415 = vmatpush1.xpose.msra.mxu0 0.0
  %416 = vmatprep.subr.mxu0 0.0
  %417 = vmatpush1.xpose.msra.mxu0 0.0
  %418 = vmatprep.subr.mxu0 0.0
  %419 = vmatpush1.xpose.msra.mxu0 0.0
  %420 = vmatprep.subr.mxu0 0.0
  %421 = vmatpush1.xpose.msra.mxu0 0.0
  %422 = vmatprep.subr.mxu0 0.0
  %423 = vmatpush1.xpose.msra.mxu0 0.0
  %424 = vmatprep.subr.mxu0 0.0
  %425 = vmatpush1.xpose.msra.mxu0 0.0
  %426 = vmatprep.subr.mxu0 0.0
  %427 = vmatpush1.xpose.msra.mxu0 0.0
  %428 = vmatprep.subr.mxu0 0.0
  %429 = vmatpush1.xpose.msra.mxu0 0.0
  %430 = vmatprep.subr.mxu0 0.0
  %431 = vmatpush1.xpose.msra.mxu0 0.0
  %432 = vmatprep.subr.mxu0 0.0
  %433 = vmatpush1.xpose.msra.mxu0 0.0
  %434 = vmatprep.subr.mxu0 0.0
  %435 = vmatpush1.xpose.msra.mxu0 0.0
  %436 = vmatprep.subr.mxu0 0.0
  %437 = vmatpush1.xpose.msra.mxu0 0.0
  %438 = vmatprep.subr.mxu0 0.0
  %439 = vmatpush1.xpose.msra.mxu0 0.0
  %440 = vmatprep.subr.mxu0 0.0
  %441 = vmatpush1.xpose.msra.mxu0 0.0
  %442 = vmatprep.subr.mxu0 0.0
  %443 = vmatpush1.xpose.msra.mxu0 0.0
  %444 = vmatprep.subr.mxu0 0.0
  %445 = vmatpush1.xpose.msra.mxu0 0.0
  %446 = vmatprep.subr.mxu0 0.0
  %447 = vmatpush1.xpose.msra.mxu0 0.0
  %448 = vmatprep.mubr.f32.mxu0 0.0
  %449 = vmatmul.mubr.f32.gmra.mrb[0].mxu0 %v373
  %v450 = vpop.f32.mrb[0].mxu0
  %v451 = vadd.f32 0.0, %v450
  %v452 = vpop.f32.mrb[0].mxu0
  %453 = vmatprep.mubr.f32.mxu0 0.0
  %454 = vmatmul.mubr.f32.gmra.mrb[0].mxu0 %v376
  %v455 = vpop.f32.mrb[0].mxu0
  %v456 = vadd.f32 0.0, %v455
  %v457 = vpop.f32.mrb[0].mxu0
  %458 = vdwg.mxu0
  %v460 = vsel %vm110, %v22, 0
  %v463 = vsel %vm110, %v23, 0
  %v466 = vsel %vm110, %v54, 0
  %v469 = vsel %vm110, %v55, 0
  %471 = vmatprep.subr.mxu0 0.0
  %472 = vmatpush1.xpose.msra.mxu0 %v466
  %473 = vmatprep.subr.mxu0 0.0
  %474 = vmatpush1.xpose.msra.mxu0 %v469
  %475 = vmatprep.subr.mxu0 0.0
  %476 = vmatpush1.xpose.msra.mxu0 0.0
  %477 = vmatprep.subr.mxu0 0.0
  %478 = vmatpush1.xpose.msra.mxu0 0.0
  %479 = vmatprep.subr.mxu0 0.0
  %480 = vmatpush1.xpose.msra.mxu0 0.0
  %481 = vmatprep.subr.mxu0 0.0
  %482 = vmatpush1.xpose.msra.mxu0 0.0
  %483 = vmatprep.subr.mxu0 0.0
  %484 = vmatpush1.xpose.msra.mxu0 0.0
  %485 = vmatprep.subr.mxu0 0.0
  %486 = vmatpush1.xpose.msra.mxu0 0.0
  %487 = vmatprep.subr.mxu0 0.0
  %488 = vmatpush1.xpose.msra.mxu0 0.0
  %489 = vmatprep.subr.mxu0 0.0
  %490 = vmatpush1.xpose.msra.mxu0 0.0
  %491 = vmatprep.subr.mxu0 0.0
  %492 = vmatpush1.xpose.msra.mxu0 0.0
  %493 = vmatprep.subr.mxu0 0.0
  %494 = vmatpush1.xpose.msra.mxu0 0.0
  %495 = vmatprep.subr.mxu0 0.0
  %496 = vmatpush1.xpose.msra.mxu0 0.0
  %497 = vmatprep.subr.mxu0 0.0
  %498 = vmatpush1.xpose.msra.mxu0 0.0
  %499 = vmatprep.subr.mxu0 0.0
  %500 = vmatpush1.xpose.msra.mxu0 0.0
  %501 = vmatprep.subr.mxu0 0.0
  %502 = vmatpush1.xpose.msra.mxu0 0.0
  %503 = vmatprep.subr.mxu0 0.0
  %504 = vmatpush1.xpose.msra.mxu0 0.0
  %505 = vmatprep.subr.mxu0 0.0
  %506 = vmatpush1.xpose.msra.mxu0 0.0
  %507 = vmatprep.subr.mxu0 0.0
  %508 = vmatpush1.xpose.msra.mxu0 0.0
  %509 = vmatprep.subr.mxu0 0.0
  %510 = vmatpush1.xpose.msra.mxu0 0.0
  %511 = vmatprep.subr.mxu0 0.0
  %512 = vmatpush1.xpose.msra.mxu0 0.0
  %513 = vmatprep.subr.mxu0 0.0
  %514 = vmatpush1.xpose.msra.mxu0 0.0
  %515 = vmatprep.subr.mxu0 0.0
  %516 = vmatpush1.xpose.msra.mxu0 0.0
  %517 = vmatprep.subr.mxu0 0.0
  %518 = vmatpush1.xpose.msra.mxu0 0.0
  %519 = vmatprep.subr.mxu0 0.0
  %520 = vmatpush1.xpose.msra.mxu0 0.0
  %521 = vmatprep.subr.mxu0 0.0
  %522 = vmatpush1.xpose.msra.mxu0 0.0
  %523 = vmatprep.subr.mxu0 0.0
  %524 = vmatpush1.xpose.msra.mxu0 0.0
  %525 = vmatprep.subr.mxu0 0.0
  %526 = vmatpush1.xpose.msra.mxu0 0.0
  %527 = vmatprep.subr.mxu0 0.0
  %528 = vmatpush1.xpose.msra.mxu0 0.0
  %529 = vmatprep.subr.mxu0 0.0
  %530 = vmatpush1.xpose.msra.mxu0 0.0
  %531 = vmatprep.subr.mxu0 0.0
  %532 = vmatpush1.xpose.msra.mxu0 0.0
  %533 = vmatprep.subr.mxu0 0.0
  %534 = vmatpush1.xpose.msra.mxu0 0.0
  %535 = vmatprep.mubr.f32.mxu0 0.0
  %536 = vmatmul.mubr.f32.gmra.mrb[0].mxu0 %v460
  %v537 = vpop.f32.mrb[0].mxu0
  %v538 = vadd.f32 0.0, %v537
  %v539 = vpop.f32.mrb[0].mxu0
  %540 = vmatprep.mubr.f32.mxu0 0.0
  %541 = vmatmul.mubr.f32.gmra.mrb[0].mxu0 %v463
  %v542 = vpop.f32.mrb[0].mxu0
  %v543 = vadd.f32 0.0, %v542
  %v544 = vpop.f32.mrb[0].mxu0
  %545 = vdwg.mxu0
  %v547 = vsel %vm110, %v24, 0
  %v550 = vsel %vm110, %v25, 0
  %v553 = vsel %vm110, %v56, 0
  %v556 = vsel %vm110, %v57, 0
  %558 = vmatprep.subr.mxu0 0.0
  %559 = vmatpush1.xpose.msra.mxu0 %v553
  %560 = vmatprep.subr.mxu0 0.0
  %561 = vmatpush1.xpose.msra.mxu0 %v556
  %562 = vmatprep.subr.mxu0 0.0
  %563 = vmatpush1.xpose.msra.mxu0 0.0
  %564 = vmatprep.subr.mxu0 0.0
  %565 = vmatpush1.xpose.msra.mxu0 0.0
  %566 = vmatprep.subr.mxu0 0.0
  %567 = vmatpush1.xpose.msra.mxu0 0.0
  %568 = vmatprep.subr.mxu0 0.0
  %569 = vmatpush1.xpose.msra.mxu0 0.0
  %570 = vmatprep.subr.mxu0 0.0
  %571 = vmatpush1.xpose.msra.mxu0 0.0
  %572 = vmatprep.subr.mxu0 0.0
  %573 = vmatpush1.xpose.msra.mxu0 0.0
  %574 = vmatprep.subr.mxu0 0.0
  %575 = vmatpush1.xpose.msra.mxu0 0.0
  %576 = vmatprep.subr.mxu0 0.0
  %577 = vmatpush1.xpose.msra.mxu0 0.0
  %578 = vmatprep.subr.mxu0 0.0
  %579 = vmatpush1.xpose.msra.mxu0 0.0
  %580 = vmatprep.subr.mxu0 0.0
  %581 = vmatpush1.xpose.msra.mxu0 0.0
  %582 = vmatprep.subr.mxu0 0.0
  %583 = vmatpush1.xpose.msra.mxu0 0.0
  %584 = vmatprep.subr.mxu0 0.0
  %585 = vmatpush1.xpose.msra.mxu0 0.0
  %586 = vmatprep.subr.mxu0 0.0
  %587 = vmatpush1.xpose.msra.mxu0 0.0
  %588 = vmatprep.subr.mxu0 0.0
  %589 = vmatpush1.xpose.msra.mxu0 0.0
  %590 = vmatprep.subr.mxu0 0.0
  %591 = vmatpush1.xpose.msra.mxu0 0.0
  %592 = vmatprep.subr.mxu0 0.0
  %593 = vmatpush1.xpose.msra.mxu0 0.0
  %594 = vmatprep.subr.mxu0 0.0
  %595 = vmatpush1.xpose.msra.mxu0 0.0
  %596 = vmatprep.subr.mxu0 0.0
  %597 = vmatpush1.xpose.msra.mxu0 0.0
  %598 = vmatprep.subr.mxu0 0.0
  %599 = vmatpush1.xpose.msra.mxu0 0.0
  %600 = vmatprep.subr.mxu0 0.0
  %601 = vmatpush1.xpose.msra.mxu0 0.0
  %602 = vmatprep.subr.mxu0 0.0
  %603 = vmatpush1.xpose.msra.mxu0 0.0
  %604 = vmatprep.subr.mxu0 0.0
  %605 = vmatpush1.xpose.msra.mxu0 0.0
  %606 = vmatprep.subr.mxu0 0.0
  %607 = vmatpush1.xpose.msra.mxu0 0.0
  %608 = vmatprep.subr.mxu0 0.0
  %609 = vmatpush1.xpose.msra.mxu0 0.0
  %610 = vmatprep.subr.mxu0 0.0
  %611 = vmatpush1.xpose.msra.mxu0 0.0
  %612 = vmatprep.subr.mxu0 0.0
  %613 = vmatpush1.xpose.msra.mxu0 0.0
  %614 = vmatprep.subr.mxu0 0.0
  %615 = vmatpush1.xpose.msra.mxu0 0.0
  %616 = vmatprep.subr.mxu0 0.0
  %617 = vmatpush1.xpose.msra.mxu0 0.0
  %618 = vmatprep.subr.mxu0 0.0
  %619 = vmatpush1.xpose.msra.mxu0 0.0
  %620 = vmatprep.subr.mxu0 0.0
  %621 = vmatpush1.xpose.msra.mxu0 0.0
  %622 = vmatprep.mubr.f32.mxu0 0.0
  %623 = vmatmul.mubr.f32.gmra.mrb[0].mxu0 %v547
  %v624 = vpop.f32.mrb[0].mxu0
  %v625 = vadd.f32 0.0, %v624
  %v626 = vpop.f32.mrb[0].mxu0
  %627 = vmatprep.mubr.f32.mxu0 0.0
  %628 = vmatmul.mubr.f32.gmra.mrb[0].mxu0 %v550
  %v629 = vpop.f32.mrb[0].mxu0
  %v630 = vadd.f32 0.0, %v629
  %v631 = vpop.f32.mrb[0].mxu0
  %632 = vdwg.mxu0
  %v634 = vsel %vm110, %v26, 0
  %v637 = vsel %vm110, %v27, 0
  %v640 = vsel %vm110, %v58, 0
  %v643 = vsel %vm110, %v59, 0
  %645 = vmatprep.subr.mxu0 0.0
  %646 = vmatpush1.xpose.msra.mxu0 %v640
  %647 = vmatprep.subr.mxu0 0.0
  %648 = vmatpush1.xpose.msra.mxu0 %v643
  %649 = vmatprep.subr.mxu0 0.0
  %650 = vmatpush1.xpose.msra.mxu0 0.0
  %651 = vmatprep.subr.mxu0 0.0
  %652 = vmatpush1.xpose.msra.mxu0 0.0
  %653 = vmatprep.subr.mxu0 0.0
  %654 = vmatpush1.xpose.msra.mxu0 0.0
  %655 = vmatprep.subr.mxu0 0.0
  %656 = vmatpush1.xpose.msra.mxu0 0.0
  %657 = vmatprep.subr.mxu0 0.0
  %658 = vmatpush1.xpose.msra.mxu0 0.0
  %659 = vmatprep.subr.mxu0 0.0
  %660 = vmatpush1.xpose.msra.mxu0 0.0
  %661 = vmatprep.subr.mxu0 0.0
  %662 = vmatpush1.xpose.msra.mxu0 0.0
  %663 = vmatprep.subr.mxu0 0.0
  %664 = vmatpush1.xpose.msra.mxu0 0.0
  %665 = vmatprep.subr.mxu0 0.0
  %666 = vmatpush1.xpose.msra.mxu0 0.0
  %667 = vmatprep.subr.mxu0 0.0
  %668 = vmatpush1.xpose.msra.mxu0 0.0
  %669 = vmatprep.subr.mxu0 0.0
  %670 = vmatpush1.xpose.msra.mxu0 0.0
  %671 = vmatprep.subr.mxu0 0.0
  %672 = vmatpush1.xpose.msra.mxu0 0.0
  %673 = vmatprep.subr.mxu0 0.0
  %674 = vmatpush1.xpose.msra.mxu0 0.0
  %675 = vmatprep.subr.mxu0 0.0
  %676 = vmatpush1.xpose.msra.mxu0 0.0
  %677 = vmatprep.subr.mxu0 0.0
  %678 = vmatpush1.xpose.msra.mxu0 0.0
  %679 = vmatprep.subr.mxu0 0.0
  %680 = vmatpush1.xpose.msra.mxu0 0.0
  %681 = vmatprep.subr.mxu0 0.0
  %682 = vmatpush1.xpose.msra.mxu0 0.0
  %683 = vmatprep.subr.mxu0 0.0
  %684 = vmatpush1.xpose.msra.mxu0 0.0
  %685 = vmatprep.subr.mxu0 0.0
  %686 = vmatpush1.xpose.msra.mxu0 0.0
  %687 = vmatprep.subr.mxu0 0.0
  %688 = vmatpush1.xpose.msra.mxu0 0.0
  %689 = vmatprep.subr.mxu0 0.0
  %690 = vmatpush1.xpose.msra.mxu0 0.0
  %691 = vmatprep.subr.mxu0 0.0
  %692 = vmatpush1.xpose.msra.mxu0 0.0
  %693 = vmatprep.subr.mxu0 0.0
  %694 = vmatpush1.xpose.msra.mxu0 0.0
  %695 = vmatprep.subr.mxu0 0.0
  %696 = vmatpush1.xpose.msra.mxu0 0.0
  %697 = vmatprep.subr.mxu0 0.0
  %698 = vmatpush1.xpose.msra.mxu0 0.0
  %699 = vmatprep.subr.mxu0 0.0
  %700 = vmatpush1.xpose.msra.mxu0 0.0
  %701 = vmatprep.subr.mxu0 0.0
  %702 = vmatpush1.xpose.msra.mxu0 0.0
  %703 = vmatprep.subr.mxu0 0.0
  %704 = vmatpush1.xpose.msra.mxu0 0.0
  %705 = vmatprep.subr.mxu0 0.0
  %706 = vmatpush1.xpose.msra.mxu0 0.0
  %707 = vmatprep.subr.mxu0 0.0
  %708 = vmatpush1.xpose.msra.mxu0 0.0
  %709 = vmatprep.mubr.f32.mxu0 0.0
  %710 = vmatmul.mubr.f32.gmra.mrb[0].mxu0 %v634
  %v711 = vpop.f32.mrb[0].mxu0
  %v712 = vadd.f32 0.0, %v711
  %v713 = vpop.f32.mrb[0].mxu0
  %714 = vmatprep.mubr.f32.mxu0 0.0
  %715 = vmatmul.mubr.f32.gmra.mrb[0].mxu0 %v637
  %v716 = vpop.f32.mrb[0].mxu0
  %v717 = vadd.f32 0.0, %v716
  %v718 = vpop.f32.mrb[0].mxu0
  %719 = vdwg.mxu0
  %v721 = vsel %vm110, %v28, 0
  %v724 = vsel %vm110, %v29, 0
  %v727 = vsel %vm110, %v60, 0
  %v730 = vsel %vm110, %v61, 0
  %732 = vmatprep.subr.mxu0 0.0
  %733 = vmatpush1.xpose.msra.mxu0 %v727
  %734 = vmatprep.subr.mxu0 0.0
  %735 = vmatpush1.xpose.msra.mxu0 %v730
  %736 = vmatprep.subr.mxu0 0.0
  %737 = vmatpush1.xpose.msra.mxu0 0.0
  %738 = vmatprep.subr.mxu0 0.0
  %739 = vmatpush1.xpose.msra.mxu0 0.0
  %740 = vmatprep.subr.mxu0 0.0
  %741 = vmatpush1.xpose.msra.mxu0 0.0
  %742 = vmatprep.subr.mxu0 0.0
  %743 = vmatpush1.xpose.msra.mxu0 0.0
  %744 = vmatprep.subr.mxu0 0.0
  %745 = vmatpush1.xpose.msra.mxu0 0.0
  %746 = vmatprep.subr.mxu0 0.0
  %747 = vmatpush1.xpose.msra.mxu0 0.0
  %748 = vmatprep.subr.mxu0 0.0
  %749 = vmatpush1.xpose.msra.mxu0 0.0
  %750 = vmatprep.subr.mxu0 0.0
  %751 = vmatpush1.xpose.msra.mxu0 0.0
  %752 = vmatprep.subr.mxu0 0.0
  %753 = vmatpush1.xpose.msra.mxu0 0.0
  %754 = vmatprep.subr.mxu0 0.0
  %755 = vmatpush1.xpose.msra.mxu0 0.0
  %756 = vmatprep.subr.mxu0 0.0
  %757 = vmatpush1.xpose.msra.mxu0 0.0
  %758 = vmatprep.subr.mxu0 0.0
  %759 = vmatpush1.xpose.msra.mxu0 0.0
  %760 = vmatprep.subr.mxu0 0.0
  %761 = vmatpush1.xpose.msra.mxu0 0.0
  %762 = vmatprep.subr.mxu0 0.0
  %763 = vmatpush1.xpose.msra.mxu0 0.0
  %764 = vmatprep.subr.mxu0 0.0
  %765 = vmatpush1.xpose.msra.mxu0 0.0
  %766 = vmatprep.subr.mxu0 0.0
  %767 = vmatpush1.xpose.msra.mxu0 0.0
  %768 = vmatprep.subr.mxu0 0.0
  %769 = vmatpush1.xpose.msra.mxu0 0.0
  %770 = vmatprep.subr.mxu0 0.0
  %771 = vmatpush1.xpose.msra.mxu0 0.0
  %772 = vmatprep.subr.mxu0 0.0
  %773 = vmatpush1.xpose.msra.mxu0 0.0
  %774 = vmatprep.subr.mxu0 0.0
  %775 = vmatpush1.xpose.msra.mxu0 0.0
  %776 = vmatprep.subr.mxu0 0.0
  %777 = vmatpush1.xpose.msra.mxu0 0.0
  %778 = vmatprep.subr.mxu0 0.0
  %779 = vmatpush1.xpose.msra.mxu0 0.0
  %780 = vmatprep.subr.mxu0 0.0
  %781 = vmatpush1.xpose.msra.mxu0 0.0
  %782 = vmatprep.subr.mxu0 0.0
  %783 = vmatpush1.xpose.msra.mxu0 0.0
  %784 = vmatprep.subr.mxu0 0.0
  %785 = vmatpush1.xpose.msra.mxu0 0.0
  %786 = vmatprep.subr.mxu0 0.0
  %787 = vmatpush1.xpose.msra.mxu0 0.0
  %788 = vmatprep.subr.mxu0 0.0
  %789 = vmatpush1.xpose.msra.mxu0 0.0
  %790 = vmatprep.subr.mxu0 0.0
  %791 = vmatpush1.xpose.msra.mxu0 0.0
  %792 = vmatprep.subr.mxu0 0.0
  %793 = vmatpush1.xpose.msra.mxu0 0.0
  %794 = vmatprep.subr.mxu0 0.0
  %795 = vmatpush1.xpose.msra.mxu0 0.0
  %796 = vmatprep.mubr.f32.mxu0 0.0
  %797 = vmatmul.mubr.f32.gmra.mrb[0].mxu0 %v721
  %v798 = vpop.f32.mrb[0].mxu0
  %v799 = vadd.f32 0.0, %v798
  %v800 = vpop.f32.mrb[0].mxu0
  %801 = vmatprep.mubr.f32.mxu0 0.0
  %802 = vmatmul.mubr.f32.gmra.mrb[0].mxu0 %v724
  %v803 = vpop.f32.mrb[0].mxu0
  %v804 = vadd.f32 0.0, %v803
  %v805 = vpop.f32.mrb[0].mxu0
  %806 = vdwg.mxu0
  %v808 = vsel %vm110, %v30, 0
  %v811 = vsel %vm110, %v31, 0
  %v814 = vsel %vm110, %v62, 0
  %v817 = vsel %vm110, %v63, 0
  %819 = vmatprep.subr.mxu0 0.0
  %820 = vmatpush1.xpose.msra.mxu0 %v814
  %821 = vmatprep.subr.mxu0 0.0
  %822 = vmatpush1.xpose.msra.mxu0 %v817
  %823 = vmatprep.subr.mxu0 0.0
  %824 = vmatpush1.xpose.msra.mxu0 0.0
  %825 = vmatprep.subr.mxu0 0.0
  %826 = vmatpush1.xpose.msra.mxu0 0.0
  %827 = vmatprep.subr.mxu0 0.0
  %828 = vmatpush1.xpose.msra.mxu0 0.0
  %829 = vmatprep.subr.mxu0 0.0
  %830 = vmatpush1.xpose.msra.mxu0 0.0
  %831 = vmatprep.subr.mxu0 0.0
  %832 = vmatpush1.xpose.msra.mxu0 0.0
  %833 = vmatprep.subr.mxu0 0.0
  %834 = vmatpush1.xpose.msra.mxu0 0.0
  %835 = vmatprep.subr.mxu0 0.0
  %836 = vmatpush1.xpose.msra.mxu0 0.0
  %837 = vmatprep.subr.mxu0 0.0
  %838 = vmatpush1.xpose.msra.mxu0 0.0
  %839 = vmatprep.subr.mxu0 0.0
  %840 = vmatpush1.xpose.msra.mxu0 0.0
  %841 = vmatprep.subr.mxu0 0.0
  %842 = vmatpush1.xpose.msra.mxu0 0.0
  %843 = vmatprep.subr.mxu0 0.0
  %844 = vmatpush1.xpose.msra.mxu0 0.0
  %845 = vmatprep.subr.mxu0 0.0
  %846 = vmatpush1.xpose.msra.mxu0 0.0
  %847 = vmatprep.subr.mxu0 0.0
  %848 = vmatpush1.xpose.msra.mxu0 0.0
  %849 = vmatprep.subr.mxu0 0.0
  %850 = vmatpush1.xpose.msra.mxu0 0.0
  %851 = vmatprep.subr.mxu0 0.0
  %852 = vmatpush1.xpose.msra.mxu0 0.0
  %853 = vmatprep.subr.mxu0 0.0
  %854 = vmatpush1.xpose.msra.mxu0 0.0
  %855 = vmatprep.subr.mxu0 0.0
  %856 = vmatpush1.xpose.msra.mxu0 0.0
  %857 = vmatprep.subr.mxu0 0.0
  %858 = vmatpush1.xpose.msra.mxu0 0.0
  %859 = vmatprep.subr.mxu0 0.0
  %860 = vmatpush1.xpose.msra.mxu0 0.0
  %861 = vmatprep.subr.mxu0 0.0
  %862 = vmatpush1.xpose.msra.mxu0 0.0
  %863 = vmatprep.subr.mxu0 0.0
  %864 = vmatpush1.xpose.msra.mxu0 0.0
  %865 = vmatprep.subr.mxu0 0.0
  %866 = vmatpush1.xpose.msra.mxu0 0.0
  %867 = vmatprep.subr.mxu0 0.0
  %868 = vmatpush1.xpose.msra.mxu0 0.0
  %869 = vmatprep.subr.mxu0 0.0
  %870 = vmatpush1.xpose.msra.mxu0 0.0
  %871 = vmatprep.subr.mxu0 0.0
  %872 = vmatpush1.xpose.msra.mxu0 0.0
  %873 = vmatprep.subr.mxu0 0.0
  %874 = vmatpush1.xpose.msra.mxu0 0.0
  %875 = vmatprep.subr.mxu0 0.0
  %876 = vmatpush1.xpose.msra.mxu0 0.0
  %877 = vmatprep.subr.mxu0 0.0
  %878 = vmatpush1.xpose.msra.mxu0 0.0
  %879 = vmatprep.subr.mxu0 0.0
  %880 = vmatpush1.xpose.msra.mxu0 0.0
  %881 = vmatprep.subr.mxu0 0.0
  %882 = vmatpush1.xpose.msra.mxu0 0.0
  %883 = vmatprep.mubr.f32.mxu0 0.0
  %884 = vmatmul.mubr.f32.gmra.mrb[0].mxu0 %v808
  %v885 = vpop.f32.mrb[0].mxu0
  %v886 = vadd.f32 0.0, %v885
  %v887 = vpop.f32.mrb[0].mxu0
  %888 = vmatprep.mubr.f32.mxu0 0.0
  %889 = vmatmul.mubr.f32.gmra.mrb[0].mxu0 %v811
  %v890 = vpop.f32.mrb[0].mxu0
  %v891 = vadd.f32 0.0, %v890
  %v892 = vpop.f32.mrb[0].mxu0
  %893 = vdwg.mxu0
  %v895 = vsel %vm110, %v32, 0
  %v898 = vsel %vm110, %v33, 0
  %v901 = vsel %vm110, %v64, 0
  %v904 = vsel %vm110, %v65, 0
  %906 = vmatprep.subr.mxu0 0.0
  %907 = vmatpush1.xpose.msra.mxu0 %v901
  %908 = vmatprep.subr.mxu0 0.0
  %909 = vmatpush1.xpose.msra.mxu0 %v904
  %910 = vmatprep.subr.mxu0 0.0
  %911 = vmatpush1.xpose.msra.mxu0 0.0
  %912 = vmatprep.subr.mxu0 0.0
  %913 = vmatpush1.xpose.msra.mxu0 0.0
  %914 = vmatprep.subr.mxu0 0.0
  %915 = vmatpush1.xpose.msra.mxu0 0.0
  %916 = vmatprep.subr.mxu0 0.0
  %917 = vmatpush1.xpose.msra.mxu0 0.0
  %918 = vmatprep.subr.mxu0 0.0
  %919 = vmatpush1.xpose.msra.mxu0 0.0
  %920 = vmatprep.subr.mxu0 0.0
  %921 = vmatpush1.xpose.msra.mxu0 0.0
  %922 = vmatprep.subr.mxu0 0.0
  %923 = vmatpush1.xpose.msra.mxu0 0.0
  %924 = vmatprep.subr.mxu0 0.0
  %925 = vmatpush1.xpose.msra.mxu0 0.0
  %926 = vmatprep.subr.mxu0 0.0
  %927 = vmatpush1.xpose.msra.mxu0 0.0
  %928 = vmatprep.subr.mxu0 0.0
  %929 = vmatpush1.xpose.msra.mxu0 0.0
  %930 = vmatprep.subr.mxu0 0.0
  %931 = vmatpush1.xpose.msra.mxu0 0.0
  %932 = vmatprep.subr.mxu0 0.0
  %933 = vmatpush1.xpose.msra.mxu0 0.0
  %934 = vmatprep.subr.mxu0 0.0
  %935 = vmatpush1.xpose.msra.mxu0 0.0
  %936 = vmatprep.subr.mxu0 0.0
  %937 = vmatpush1.xpose.msra.mxu0 0.0
  %938 = vmatprep.subr.mxu0 0.0
  %939 = vmatpush1.xpose.msra.mxu0 0.0
  %940 = vmatprep.subr.mxu0 0.0
  %941 = vmatpush1.xpose.msra.mxu0 0.0
  %942 = vmatprep.subr.mxu0 0.0
  %943 = vmatpush1.xpose.msra.mxu0 0.0
  %944 = vmatprep.subr.mxu0 0.0
  %945 = vmatpush1.xpose.msra.mxu0 0.0
  %946 = vmatprep.subr.mxu0 0.0
  %947 = vmatpush1.xpose.msra.mxu0 0.0
  %948 = vmatprep.subr.mxu0 0.0
  %949 = vmatpush1.xpose.msra.mxu0 0.0
  %950 = vmatprep.subr.mxu0 0.0
  %951 = vmatpush1.xpose.msra.mxu0 0.0
  %952 = vmatprep.subr.mxu0 0.0
  %953 = vmatpush1.xpose.msra.mxu0 0.0
  %954 = vmatprep.subr.mxu0 0.0
  %955 = vmatpush1.xpose.msra.mxu0 0.0
  %956 = vmatprep.subr.mxu0 0.0
  %957 = vmatpush1.xpose.msra.mxu0 0.0
  %958 = vmatprep.subr.mxu0 0.0
  %959 = vmatpush1.xpose.msra.mxu0 0.0
  %960 = vmatprep.subr.mxu0 0.0
  %961 = vmatpush1.xpose.msra.mxu0 0.0
  %962 = vmatprep.subr.mxu0 0.0
  %963 = vmatpush1.xpose.msra.mxu0 0.0
  %964 = vmatprep.subr.mxu0 0.0
  %965 = vmatpush1.xpose.msra.mxu0 0.0
  %966 = vmatprep.subr.mxu0 0.0
  %967 = vmatpush1.xpose.msra.mxu0 0.0
  %968 = vmatprep.subr.mxu0 0.0
  %969 = vmatpush1.xpose.msra.mxu0 0.0
  %970 = vmatprep.mubr.f32.mxu0 0.0
  %971 = vmatmul.mubr.f32.gmra.mrb[0].mxu0 %v895
  %v972 = vpop.f32.mrb[0].mxu0
  %v973 = vadd.f32 0.0, %v972
  %v974 = vpop.f32.mrb[0].mxu0
  %975 = vmatprep.mubr.f32.mxu0 0.0
  %976 = vmatmul.mubr.f32.gmra.mrb[0].mxu0 %v898
  %v977 = vpop.f32.mrb[0].mxu0
  %v978 = vadd.f32 0.0, %v977
  %v979 = vpop.f32.mrb[0].mxu0
  %980 = vdwg.mxu0
  %v982 = vsel %vm110, %v34, 0
  %v985 = vsel %vm110, %v35, 0
  %v988 = vsel %vm110, %v66, 0
  %v991 = vsel %vm110, %v67, 0
  %993 = vmatprep.subr.mxu0 0.0
  %994 = vmatpush1.xpose.msra.mxu0 %v988
  %995 = vmatprep.subr.mxu0 0.0
  %996 = vmatpush1.xpose.msra.mxu0 %v991
  %997 = vmatprep.subr.mxu0 0.0
  %998 = vmatpush1.xpose.msra.mxu0 0.0
  %999 = vmatprep.subr.mxu0 0.0
  %1000 = vmatpush1.xpose.msra.mxu0 0.0
  %1001 = vmatprep.subr.mxu0 0.0
  %1002 = vmatpush1.xpose.msra.mxu0 0.0
  %1003 = vmatprep.subr.mxu0 0.0
  %1004 = vmatpush1.xpose.msra.mxu0 0.0
  %1005 = vmatprep.subr.mxu0 0.0
  %1006 = vmatpush1.xpose.msra.mxu0 0.0
  %1007 = vmatprep.subr.mxu0 0.0
  %1008 = vmatpush1.xpose.msra.mxu0 0.0
  %1009 = vmatprep.subr.mxu0 0.0
  %1010 = vmatpush1.xpose.msra.mxu0 0.0
  %1011 = vmatprep.subr.mxu0 0.0
  %1012 = vmatpush1.xpose.msra.mxu0 0.0
  %1013 = vmatprep.subr.mxu0 0.0
  %1014 = vmatpush1.xpose.msra.mxu0 0.0
  %1015 = vmatprep.subr.mxu0 0.0
  %1016 = vmatpush1.xpose.msra.mxu0 0.0
  %1017 = vmatprep.subr.mxu0 0.0
  %1018 = vmatpush1.xpose.msra.mxu0 0.0
  %1019 = vmatprep.subr.mxu0 0.0
  %1020 = vmatpush1.xpose.msra.mxu0 0.0
  %1021 = vmatprep.subr.mxu0 0.0
  %1022 = vmatpush1.xpose.msra.mxu0 0.0
  %1023 = vmatprep.subr.mxu0 0.0
  %1024 = vmatpush1.xpose.msra.mxu0 0.0
  %1025 = vmatprep.subr.mxu0 0.0
  %1026 = vmatpush1.xpose.msra.mxu0 0.0
  %1027 = vmatprep.subr.mxu0 0.0
  %1028 = vmatpush1.xpose.msra.mxu0 0.0
  %1029 = vmatprep.subr.mxu0 0.0
  %1030 = vmatpush1.xpose.msra.mxu0 0.0
  %1031 = vmatprep.subr.mxu0 0.0
  %1032 = vmatpush1.xpose.msra.mxu0 0.0
  %1033 = vmatprep.subr.mxu0 0.0
  %1034 = vmatpush1.xpose.msra.mxu0 0.0
  %1035 = vmatprep.subr.mxu0 0.0
  %1036 = vmatpush1.xpose.msra.mxu0 0.0
  %1037 = vmatprep.subr.mxu0 0.0
  %1038 = vmatpush1.xpose.msra.mxu0 0.0
  %1039 = vmatprep.subr.mxu0 0.0
  %1040 = vmatpush1.xpose.msra.mxu0 0.0
  %1041 = vmatprep.subr.mxu0 0.0
  %1042 = vmatpush1.xpose.msra.mxu0 0.0
  %1043 = vmatprep.subr.mxu0 0.0
  %1044 = vmatpush1.xpose.msra.mxu0 0.0
  %1045 = vmatprep.subr.mxu0 0.0
  %1046 = vmatpush1.xpose.msra.mxu0 0.0
  %1047 = vmatprep.subr.mxu0 0.0
  %1048 = vmatpush1.xpose.msra.mxu0 0.0
  %1049 = vmatprep.subr.mxu0 0.0
  %1050 = vmatpush1.xpose.msra.mxu0 0.0
  %1051 = vmatprep.subr.mxu0 0.0
  %1052 = vmatpush1.xpose.msra.mxu0 0.0
  %1053 = vmatprep.subr.mxu0 0.0
  %1054 = vmatpush1.xpose.msra.mxu0 0.0
  %1055 = vmatprep.subr.mxu0 0.0
  %1056 = vmatpush1.xpose.msra.mxu0 0.0
  %1057 = vmatprep.mubr.f32.mxu0 0.0
  %1058 = vmatmul.mubr.f32.gmra.mrb[0].mxu0 %v982
  %v1059 = vpop.f32.mrb[0].mxu0
  %v1060 = vadd.f32 0.0, %v1059
  %v1061 = vpop.f32.mrb[0].mxu0
  %1062 = vmatprep.mubr.f32.mxu0 0.0
  %1063 = vmatmul.mubr.f32.gmra.mrb[0].mxu0 %v985
  %v1064 = vpop.f32.mrb[0].mxu0
  %v1065 = vadd.f32 0.0, %v1064
  %v1066 = vpop.f32.mrb[0].mxu0
  %1067 = vdwg.mxu0
  %v1069 = vsel %vm110, %v36, 0
  %v1072 = vsel %vm110, %v37, 0
  %v1075 = vsel %vm110, %v68, 0
  %v1078 = vsel %vm110, %v69, 0
  %1080 = vmatprep.subr.mxu0 0.0
  %1081 = vmatpush1.xpose.msra.mxu0 %v1075
  %1082 = vmatprep.subr.mxu0 0.0
  %1083 = vmatpush1.xpose.msra.mxu0 %v1078
  %1084 = vmatprep.subr.mxu0 0.0
  %1085 = vmatpush1.xpose.msra.mxu0 0.0
  %1086 = vmatprep.subr.mxu0 0.0
  %1087 = vmatpush1.xpose.msra.mxu0 0.0
  %1088 = vmatprep.subr.mxu0 0.0
  %1089 = vmatpush1.xpose.msra.mxu0 0.0
  %1090 = vmatprep.subr.mxu0 0.0
  %1091 = vmatpush1.xpose.msra.mxu0 0.0
  %1092 = vmatprep.subr.mxu0 0.0
  %1093 = vmatpush1.xpose.msra.mxu0 0.0
  %1094 = vmatprep.subr.mxu0 0.0
  %1095 = vmatpush1.xpose.msra.mxu0 0.0
  %1096 = vmatprep.subr.mxu0 0.0
  %1097 = vmatpush1.xpose.msra.mxu0 0.0
  %1098 = vmatprep.subr.mxu0 0.0
  %1099 = vmatpush1.xpose.msra.mxu0 0.0
  %1100 = vmatprep.subr.mxu0 0.0
  %1101 = vmatpush1.xpose.msra.mxu0 0.0
  %1102 = vmatprep.subr.mxu0 0.0
  %1103 = vmatpush1.xpose.msra.mxu0 0.0
  %1104 = vmatprep.subr.mxu0 0.0
  %1105 = vmatpush1.xpose.msra.mxu0 0.0
  %1106 = vmatprep.subr.mxu0 0.0
  %1107 = vmatpush1.xpose.msra.mxu0 0.0
  %1108 = vmatprep.subr.mxu0 0.0
  %1109 = vmatpush1.xpose.msra.mxu0 0.0
  %1110 = vmatprep.subr.mxu0 0.0
  %1111 = vmatpush1.xpose.msra.mxu0 0.0
  %1112 = vmatprep.subr.mxu0 0.0
  %1113 = vmatpush1.xpose.msra.mxu0 0.0
  %1114 = vmatprep.subr.mxu0 0.0
  %1115 = vmatpush1.xpose.msra.mxu0 0.0
  %1116 = vmatprep.subr.mxu0 0.0
  %1117 = vmatpush1.xpose.msra.mxu0 0.0
  %1118 = vmatprep.subr.mxu0 0.0
  %1119 = vmatpush1.xpose.msra.mxu0 0.0
  %1120 = vmatprep.subr.mxu0 0.0
  %1121 = vmatpush1.xpose.msra.mxu0 0.0
  %1122 = vmatprep.subr.mxu0 0.0
  %1123 = vmatpush1.xpose.msra.mxu0 0.0
  %1124 = vmatprep.subr.mxu0 0.0
  %1125 = vmatpush1.xpose.msra.mxu0 0.0
  %1126 = vmatprep.subr.mxu0 0.0
  %1127 = vmatpush1.xpose.msra.mxu0 0.0
  %1128 = vmatprep.subr.mxu0 0.0
  %1129 = vmatpush1.xpose.msra.mxu0 0.0
  %1130 = vmatprep.subr.mxu0 0.0
  %1131 = vmatpush1.xpose.msra.mxu0 0.0
  %1132 = vmatprep.subr.mxu0 0.0
  %1133 = vmatpush1.xpose.msra.mxu0 0.0
  %1134 = vmatprep.subr.mxu0 0.0
  %1135 = vmatpush1.xpose.msra.mxu0 0.0
  %1136 = vmatprep.subr.mxu0 0.0
  %1137 = vmatpush1.xpose.msra.mxu0 0.0
  %1138 = vmatprep.subr.mxu0 0.0
  %1139 = vmatpush1.xpose.msra.mxu0 0.0
  %1140 = vmatprep.subr.mxu0 0.0
  %1141 = vmatpush1.xpose.msra.mxu0 0.0
  %1142 = vmatprep.subr.mxu0 0.0
  %1143 = vmatpush1.xpose.msra.mxu0 0.0
  %1144 = vmatprep.mubr.f32.mxu0 0.0
  %1145 = vmatmul.mubr.f32.gmra.mrb[0].mxu0 %v1069
  %v1146 = vpop.f32.mrb[0].mxu0
  %v1147 = vadd.f32 0.0, %v1146
  %v1148 = vpop.f32.mrb[0].mxu0
  %1149 = vmatprep.mubr.f32.mxu0 0.0
  %1150 = vmatmul.mubr.f32.gmra.mrb[0].mxu0 %v1072
  %v1151 = vpop.f32.mrb[0].mxu0
  %v1152 = vadd.f32 0.0, %v1151
  %v1153 = vpop.f32.mrb[0].mxu0
  %1154 = vdwg.mxu0
  %v1156 = vsel %vm110, %v38, 0
  %v1159 = vsel %vm110, %v39, 0
  %v1162 = vsel %vm110, %v70, 0
  %v1165 = vsel %vm110, %v71, 0
  %1167 = vmatprep.subr.mxu0 0.0
  %1168 = vmatpush1.xpose.msra.mxu0 %v1162
  %1169 = vmatprep.subr.mxu0 0.0
  %1170 = vmatpush1.xpose.msra.mxu0 %v1165
  %1171 = vmatprep.subr.mxu0 0.0
  %1172 = vmatpush1.xpose.msra.mxu0 0.0
  %1173 = vmatprep.subr.mxu0 0.0
  %1174 = vmatpush1.xpose.msra.mxu0 0.0
  %1175 = vmatprep.subr.mxu0 0.0
  %1176 = vmatpush1.xpose.msra.mxu0 0.0
  %1177 = vmatprep.subr.mxu0 0.0
  %1178 = vmatpush1.xpose.msra.mxu0 0.0
  %1179 = vmatprep.subr.mxu0 0.0
  %1180 = vmatpush1.xpose.msra.mxu0 0.0
  %1181 = vmatprep.subr.mxu0 0.0
  %1182 = vmatpush1.xpose.msra.mxu0 0.0
  %1183 = vmatprep.subr.mxu0 0.0
  %1184 = vmatpush1.xpose.msra.mxu0 0.0
  %1185 = vmatprep.subr.mxu0 0.0
  %1186 = vmatpush1.xpose.msra.mxu0 0.0
  %1187 = vmatprep.subr.mxu0 0.0
  %1188 = vmatpush1.xpose.msra.mxu0 0.0
  %1189 = vmatprep.subr.mxu0 0.0
  %1190 = vmatpush1.xpose.msra.mxu0 0.0
  %1191 = vmatprep.subr.mxu0 0.0
  %1192 = vmatpush1.xpose.msra.mxu0 0.0
  %1193 = vmatprep.subr.mxu0 0.0
  %1194 = vmatpush1.xpose.msra.mxu0 0.0
  %1195 = vmatprep.subr.mxu0 0.0
  %1196 = vmatpush1.xpose.msra.mxu0 0.0
  %1197 = vmatprep.subr.mxu0 0.0
  %1198 = vmatpush1.xpose.msra.mxu0 0.0
  %1199 = vmatprep.subr.mxu0 0.0
  %1200 = vmatpush1.xpose.msra.mxu0 0.0
  %1201 = vmatprep.subr.mxu0 0.0
  %1202 = vmatpush1.xpose.msra.mxu0 0.0
  %1203 = vmatprep.subr.mxu0 0.0
  %1204 = vmatpush1.xpose.msra.mxu0 0.0
  %1205 = vmatprep.subr.mxu0 0.0
  %1206 = vmatpush1.xpose.msra.mxu0 0.0
  %1207 = vmatprep.subr.mxu0 0.0
  %1208 = vmatpush1.xpose.msra.mxu0 0.0
  %1209 = vmatprep.subr.mxu0 0.0
  %1210 = vmatpush1.xpose.msra.mxu0 0.0
  %1211 = vmatprep.subr.mxu0 0.0
  %1212 = vmatpush1.xpose.msra.mxu0 0.0
  %1213 = vmatprep.subr.mxu0 0.0
  %1214 = vmatpush1.xpose.msra.mxu0 0.0
  %1215 = vmatprep.subr.mxu0 0.0
  %1216 = vmatpush1.xpose.msra.mxu0 0.0
  %1217 = vmatprep.subr.mxu0 0.0
  %1218 = vmatpush1.xpose.msra.mxu0 0.0
  %1219 = vmatprep.subr.mxu0 0.0
  %1220 = vmatpush1.xpose.msra.mxu0 0.0
  %1221 = vmatprep.subr.mxu0 0.0
  %1222 = vmatpush1.xpose.msra.mxu0 0.0
  %1223 = vmatprep.subr.mxu0 0.0
  %1224 = vmatpush1.xpose.msra.mxu0 0.0
  %1225 = vmatprep.subr.mxu0 0.0
  %1226 = vmatpush1.xpose.msra.mxu0 0.0
  %1227 = vmatprep.subr.mxu0 0.0
  %1228 = vmatpush1.xpose.msra.mxu0 0.0
  %1229 = vmatprep.subr.mxu0 0.0
  %1230 = vmatpush1.xpose.msra.mxu0 0.0
  %1231 = vmatprep.mubr.f32.mxu0 0.0
  %1232 = vmatmul.mubr.f32.gmra.mrb[0].mxu0 %v1156
  %v1233 = vpop.f32.mrb[0].mxu0
  %v1234 = vadd.f32 0.0, %v1233
  %v1235 = vpop.f32.mrb[0].mxu0
  %1236 = vmatprep.mubr.f32.mxu0 0.0
  %1237 = vmatmul.mubr.f32.gmra.mrb[0].mxu0 %v1159
  %v1238 = vpop.f32.mrb[0].mxu0
  %v1239 = vadd.f32 0.0, %v1238
  %v1240 = vpop.f32.mrb[0].mxu0
  %1241 = vdwg.mxu0
  %v1243 = vsel %vm110, %v40, 0
  %v1246 = vsel %vm110, %v41, 0
  %v1249 = vsel %vm110, %v72, 0
  %v1252 = vsel %vm110, %v73, 0
  %1254 = vmatprep.subr.mxu0 0.0
  %1255 = vmatpush1.xpose.msra.mxu0 %v1249
  %1256 = vmatprep.subr.mxu0 0.0
  %1257 = vmatpush1.xpose.msra.mxu0 %v1252
  %1258 = vmatprep.subr.mxu0 0.0
  %1259 = vmatpush1.xpose.msra.mxu0 0.0
  %1260 = vmatprep.subr.mxu0 0.0
  %1261 = vmatpush1.xpose.msra.mxu0 0.0
  %1262 = vmatprep.subr.mxu0 0.0
  %1263 = vmatpush1.xpose.msra.mxu0 0.0
  %1264 = vmatprep.subr.mxu0 0.0
  %1265 = vmatpush1.xpose.msra.mxu0 0.0
  %1266 = vmatprep.subr.mxu0 0.0
  %1267 = vmatpush1.xpose.msra.mxu0 0.0
  %1268 = vmatprep.subr.mxu0 0.0
  %1269 = vmatpush1.xpose.msra.mxu0 0.0
  %1270 = vmatprep.subr.mxu0 0.0
  %1271 = vmatpush1.xpose.msra.mxu0 0.0
  %1272 = vmatprep.subr.mxu0 0.0
  %1273 = vmatpush1.xpose.msra.mxu0 0.0
  %1274 = vmatprep.subr.mxu0 0.0
  %1275 = vmatpush1.xpose.msra.mxu0 0.0
  %1276 = vmatprep.subr.mxu0 0.0
  %1277 = vmatpush1.xpose.msra.mxu0 0.0
  %1278 = vmatprep.subr.mxu0 0.0
  %1279 = vmatpush1.xpose.msra.mxu0 0.0
  %1280 = vmatprep.subr.mxu0 0.0
  %1281 = vmatpush1.xpose.msra.mxu0 0.0
  %1282 = vmatprep.subr.mxu0 0.0
  %1283 = vmatpush1.xpose.msra.mxu0 0.0
  %1284 = vmatprep.subr.mxu0 0.0
  %1285 = vmatpush1.xpose.msra.mxu0 0.0
  %1286 = vmatprep.subr.mxu0 0.0
  %1287 = vmatpush1.xpose.msra.mxu0 0.0
  %1288 = vmatprep.subr.mxu0 0.0
  %1289 = vmatpush1.xpose.msra.mxu0 0.0
  %1290 = vmatprep.subr.mxu0 0.0
  %1291 = vmatpush1.xpose.msra.mxu0 0.0
  %1292 = vmatprep.subr.mxu0 0.0
  %1293 = vmatpush1.xpose.msra.mxu0 0.0
  %1294 = vmatprep.subr.mxu0 0.0
  %1295 = vmatpush1.xpose.msra.mxu0 0.0
  %1296 = vmatprep.subr.mxu0 0.0
  %1297 = vmatpush1.xpose.msra.mxu0 0.0
  %1298 = vmatprep.subr.mxu0 0.0
  %1299 = vmatpush1.xpose.msra.mxu0 0.0
  %1300 = vmatprep.subr.mxu0 0.0
  %1301 = vmatpush1.xpose.msra.mxu0 0.0
  %1302 = vmatprep.subr.mxu0 0.0
  %1303 = vmatpush1.xpose.msra.mxu0 0.0
  %1304 = vmatprep.subr.mxu0 0.0
  %1305 = vmatpush1.xpose.msra.mxu0 0.0
  %1306 = vmatprep.subr.mxu0 0.0
  %1307 = vmatpush1.xpose.msra.mxu0 0.0
  %1308 = vmatprep.subr.mxu0 0.0
  %1309 = vmatpush1.xpose.msra.mxu0 0.0
  %1310 = vmatprep.subr.mxu0 0.0
  %1311 = vmatpush1.xpose.msra.mxu0 0.0
  %1312 = vmatprep.subr.mxu0 0.0
  %1313 = vmatpush1.xpose.msra.mxu0 0.0
  %1314 = vmatprep.subr.mxu0 0.0
  %1315 = vmatpush1.xpose.msra.mxu0 0.0
  %1316 = vmatprep.subr.mxu0 0.0
  %1317 = vmatpush1.xpose.msra.mxu0 0.0
  %1318 = vmatprep.mubr.f32.mxu0 0.0
  %1319 = vmatmul.mubr.f32.gmra.mrb[0].mxu0 %v1243
  %v1320 = vpop.f32.mrb[0].mxu0
  %v1321 = vadd.f32 0.0, %v1320
  %v1322 = vpop.f32.mrb[0].mxu0
  %1323 = vmatprep.mubr.f32.mxu0 0.0
  %1324 = vmatmul.mubr.f32.gmra.mrb[0].mxu0 %v1246
  %v1325 = vpop.f32.mrb[0].mxu0
  %v1326 = vadd.f32 0.0, %v1325
  %v1327 = vpop.f32.mrb[0].mxu0
  %1328 = vdwg.mxu0
  %v1330 = vsel %vm110, %v42, 0
  %v1333 = vsel %vm110, %v43, 0
  %v1336 = vsel %vm110, %v74, 0
  %v1339 = vsel %vm110, %v75, 0
  %1341 = vmatprep.subr.mxu0 0.0
  %1342 = vmatpush1.xpose.msra.mxu0 %v1336
  %1343 = vmatprep.subr.mxu0 0.0
  %1344 = vmatpush1.xpose.msra.mxu0 %v1339
  %1345 = vmatprep.subr.mxu0 0.0
  %1346 = vmatpush1.xpose.msra.mxu0 0.0
  %1347 = vmatprep.subr.mxu0 0.0
  %1348 = vmatpush1.xpose.msra.mxu0 0.0
  %1349 = vmatprep.subr.mxu0 0.0
  %1350 = vmatpush1.xpose.msra.mxu0 0.0
  %1351 = vmatprep.subr.mxu0 0.0
  %1352 = vmatpush1.xpose.msra.mxu0 0.0
  %1353 = vmatprep.subr.mxu0 0.0
  %1354 = vmatpush1.xpose.msra.mxu0 0.0
  %1355 = vmatprep.subr.mxu0 0.0
  %1356 = vmatpush1.xpose.msra.mxu0 0.0
  %1357 = vmatprep.subr.mxu0 0.0
  %1358 = vmatpush1.xpose.msra.mxu0 0.0
  %1359 = vmatprep.subr.mxu0 0.0
  %1360 = vmatpush1.xpose.msra.mxu0 0.0
  %1361 = vmatprep.subr.mxu0 0.0
  %1362 = vmatpush1.xpose.msra.mxu0 0.0
  %1363 = vmatprep.subr.mxu0 0.0
  %1364 = vmatpush1.xpose.msra.mxu0 0.0
  %1365 = vmatprep.subr.mxu0 0.0
  %1366 = vmatpush1.xpose.msra.mxu0 0.0
  %1367 = vmatprep.subr.mxu0 0.0
  %1368 = vmatpush1.xpose.msra.mxu0 0.0
  %1369 = vmatprep.subr.mxu0 0.0
  %1370 = vmatpush1.xpose.msra.mxu0 0.0
  %1371 = vmatprep.subr.mxu0 0.0
  %1372 = vmatpush1.xpose.msra.mxu0 0.0
  %1373 = vmatprep.subr.mxu0 0.0
  %1374 = vmatpush1.xpose.msra.mxu0 0.0
  %1375 = vmatprep.subr.mxu0 0.0
  %1376 = vmatpush1.xpose.msra.mxu0 0.0
  %1377 = vmatprep.subr.mxu0 0.0
  %1378 = vmatpush1.xpose.msra.mxu0 0.0
  %1379 = vmatprep.subr.mxu0 0.0
  %1380 = vmatpush1.xpose.msra.mxu0 0.0
  %1381 = vmatprep.subr.mxu0 0.0
  %1382 = vmatpush1.xpose.msra.mxu0 0.0
  %1383 = vmatprep.subr.mxu0 0.0
  %1384 = vmatpush1.xpose.msra.mxu0 0.0
  %1385 = vmatprep.subr.mxu0 0.0
  %1386 = vmatpush1.xpose.msra.mxu0 0.0
  %1387 = vmatprep.subr.mxu0 0.0
  %1388 = vmatpush1.xpose.msra.mxu0 0.0
  %1389 = vmatprep.subr.mxu0 0.0
  %1390 = vmatpush1.xpose.msra.mxu0 0.0
  %1391 = vmatprep.subr.mxu0 0.0
  %1392 = vmatpush1.xpose.msra.mxu0 0.0
  %1393 = vmatprep.subr.mxu0 0.0
  %1394 = vmatpush1.xpose.msra.mxu0 0.0
  %1395 = vmatprep.subr.mxu0 0.0
  %1396 = vmatpush1.xpose.msra.mxu0 0.0
  %1397 = vmatprep.subr.mxu0 0.0
  %1398 = vmatpush1.xpose.msra.mxu0 0.0
  %1399 = vmatprep.subr.mxu0 0.0
  %1400 = vmatpush1.xpose.msra.mxu0 0.0
  %1401 = vmatprep.subr.mxu0 0.0
  %1402 = vmatpush1.xpose.msra.mxu0 0.0
  %1403 = vmatprep.subr.mxu0 0.0
  %1404 = vmatpush1.xpose.msra.mxu0 0.0
  %1405 = vmatprep.mubr.f32.mxu0 0.0
  %1406 = vmatmul.mubr.f32.gmra.mrb[0].mxu0 %v1330
  %v1407 = vpop.f32.mrb[0].mxu0
  %v1408 = vadd.f32 0.0, %v1407
  %v1409 = vpop.f32.mrb[0].mxu0
  %1410 = vmatprep.mubr.f32.mxu0 0.0
  %1411 = vmatmul.mubr.f32.gmra.mrb[0].mxu0 %v1333
  %v1412 = vpop.f32.mrb[0].mxu0
  %v1413 = vadd.f32 0.0, %v1412
  %v1414 = vpop.f32.mrb[0].mxu0
  %1415 = vdwg.mxu0
  %v1417 = vsel %vm110, %v44, 0
  %v1420 = vsel %vm110, %v45, 0
  %v1423 = vsel %vm110, %v76, 0
  %v1426 = vsel %vm110, %v77, 0
  %1428 = vmatprep.subr.mxu0 0.0
  %1429 = vmatpush1.xpose.msra.mxu0 %v1423
  %1430 = vmatprep.subr.mxu0 0.0
  %1431 = vmatpush1.xpose.msra.mxu0 %v1426
  %1432 = vmatprep.subr.mxu0 0.0
  %1433 = vmatpush1.xpose.msra.mxu0 0.0
  %1434 = vmatprep.subr.mxu0 0.0
  %1435 = vmatpush1.xpose.msra.mxu0 0.0
  %1436 = vmatprep.subr.mxu0 0.0
  %1437 = vmatpush1.xpose.msra.mxu0 0.0
  %1438 = vmatprep.subr.mxu0 0.0
  %1439 = vmatpush1.xpose.msra.mxu0 0.0
  %1440 = vmatprep.subr.mxu0 0.0
  %1441 = vmatpush1.xpose.msra.mxu0 0.0
  %1442 = vmatprep.subr.mxu0 0.0
  %1443 = vmatpush1.xpose.msra.mxu0 0.0
  %1444 = vmatprep.subr.mxu0 0.0
  %1445 = vmatpush1.xpose.msra.mxu0 0.0
  %1446 = vmatprep.subr.mxu0 0.0
  %1447 = vmatpush1.xpose.msra.mxu0 0.0
  %1448 = vmatprep.subr.mxu0 0.0
  %1449 = vmatpush1.xpose.msra.mxu0 0.0
  %1450 = vmatprep.subr.mxu0 0.0
  %1451 = vmatpush1.xpose.msra.mxu0 0.0
  %1452 = vmatprep.subr.mxu0 0.0
  %1453 = vmatpush1.xpose.msra.mxu0 0.0
  %1454 = vmatprep.subr.mxu0 0.0
  %1455 = vmatpush1.xpose.msra.mxu0 0.0
  %1456 = vmatprep.subr.mxu0 0.0
  %1457 = vmatpush1.xpose.msra.mxu0 0.0
  %1458 = vmatprep.subr.mxu0 0.0
  %1459 = vmatpush1.xpose.msra.mxu0 0.0
  %1460 = vmatprep.subr.mxu0 0.0
  %1461 = vmatpush1.xpose.msra.mxu0 0.0
  %1462 = vmatprep.subr.mxu0 0.0
  %1463 = vmatpush1.xpose.msra.mxu0 0.0
  %1464 = vmatprep.subr.mxu0 0.0
  %1465 = vmatpush1.xpose.msra.mxu0 0.0
  %1466 = vmatprep.subr.mxu0 0.0
  %1467 = vmatpush1.xpose.msra.mxu0 0.0
  %1468 = vmatprep.subr.mxu0 0.0
  %1469 = vmatpush1.xpose.msra.mxu0 0.0
  %1470 = vmatprep.subr.mxu0 0.0
  %1471 = vmatpush1.xpose.msra.mxu0 0.0
  %1472 = vmatprep.subr.mxu0 0.0
  %1473 = vmatpush1.xpose.msra.mxu0 0.0
  %1474 = vmatprep.subr.mxu0 0.0
  %1475 = vmatpush1.xpose.msra.mxu0 0.0
  %1476 = vmatprep.subr.mxu0 0.0
  %1477 = vmatpush1.xpose.msra.mxu0 0.0
  %1478 = vmatprep.subr.mxu0 0.0
  %1479 = vmatpush1.xpose.msra.mxu0 0.0
  %1480 = vmatprep.subr.mxu0 0.0
  %1481 = vmatpush1.xpose.msra.mxu0 0.0
  %1482 = vmatprep.subr.mxu0 0.0
  %1483 = vmatpush1.xpose.msra.mxu0 0.0
  %1484 = vmatprep.subr.mxu0 0.0
  %1485 = vmatpush1.xpose.msra.mxu0 0.0
  %1486 = vmatprep.subr.mxu0 0.0
  %1487 = vmatpush1.xpose.msra.mxu0 0.0
  %1488 = vmatprep.subr.mxu0 0.0
  %1489 = vmatpush1.xpose.msra.mxu0 0.0
  %1490 = vmatprep.subr.mxu0 0.0
  %1491 = vmatpush1.xpose.msra.mxu0 0.0
  %1492 = vmatprep.mubr.f32.mxu0 0.0
  %1493 = vmatmul.mubr.f32.gmra.mrb[0].mxu0 %v1417
  %v1494 = vpop.f32.mrb[0].mxu0
  %v1495 = vadd.f32 0.0, %v1494
  %v1496 = vpop.f32.mrb[0].mxu0
  %1497 = vmatprep.mubr.f32.mxu0 0.0
  %1498 = vmatmul.mubr.f32.gmra.mrb[0].mxu0 %v1420
  %v1499 = vpop.f32.mrb[0].mxu0
  %v1500 = vadd.f32 0.0, %v1499
  %v1501 = vpop.f32.mrb[0].mxu0
  %1502 = vdwg.mxu0
  %v1503 = vmul.f32 %v190, 0.25
  %v1504 = vmul.f32 %v195, 0.25
  %v1505 = vmul.f32 %v277, 0.25
  %v1506 = vmul.f32 %v282, 0.25
  %v1507 = vmul.f32 %v364, 0.25
  %v1508 = vmul.f32 %v369, 0.25
  %v1509 = vmul.f32 %v451, 0.25
  %v1510 = vmul.f32 %v456, 0.25
  %v1511 = vmul.f32 %v538, 0.25
  %v1512 = vmul.f32 %v543, 0.25
  %v1513 = vmul.f32 %v625, 0.25
  %v1514 = vmul.f32 %v630, 0.25
  %v1515 = vmul.f32 %v712, 0.25
  %v1516 = vmul.f32 %v717, 0.25
  %v1517 = vmul.f32 %v799, 0.25
  %v1518 = vmul.f32 %v804, 0.25
  %v1519 = vmul.f32 %v886, 0.25
  %v1520 = vmul.f32 %v891, 0.25
  %v1521 = vmul.f32 %v973, 0.25
  %v1522 = vmul.f32 %v978, 0.25
  %v1523 = vmul.f32 %v1060, 0.25
  %v1524 = vmul.f32 %v1065, 0.25
  %v1525 = vmul.f32 %v1147, 0.25
  %v1526 = vmul.f32 %v1152, 0.25
  %v1527 = vmul.f32 %v1234, 0.25
  %v1528 = vmul.f32 %v1239, 0.25
  %v1529 = vmul.f32 %v1321, 0.25
  %v1530 = vmul.f32 %v1326, 0.25
  %v1531 = vmul.f32 %v1408, 0.25
  %v1532 = vmul.f32 %v1413, 0.25
  %v1533 = vmul.f32 %v1495, 0.25
  %v1534 = vmul.f32 %v1500, 0.25
  %v1535 = vsel %vm110, %v1503, -inf
  %1536 = vmax.xlane.f32.xlu0 %v1535
  %v1537 = vpop.xlane.xlu0 %1536
  %v1538 = vsel %vm110, %v1504, -inf
  %1539 = vmax.xlane.f32.xlu0 %v1538
  %v1540 = vpop.xlane.xlu0 %1539
  %v1541 = vsel %vm110, %v1505, -inf
  %1542 = vmax.xlane.f32.xlu0 %v1541
  %v1543 = vpop.xlane.xlu0 %1542
  %v1544 = vsel %vm110, %v1506, -inf
  %1545 = vmax.xlane.f32.xlu0 %v1544
  %v1546 = vpop.xlane.xlu0 %1545
  %v1547 = vsel %vm110, %v1507, -inf
  %1548 = vmax.xlane.f32.xlu0 %v1547
  %v1549 = vpop.xlane.xlu0 %1548
  %v1550 = vsel %vm110, %v1508, -inf
  %1551 = vmax.xlane.f32.xlu0 %v1550
  %v1552 = vpop.xlane.xlu0 %1551
  %v1553 = vsel %vm110, %v1509, -inf
  %1554 = vmax.xlane.f32.xlu0 %v1553
  %v1555 = vpop.xlane.xlu0 %1554
  %v1556 = vsel %vm110, %v1510, -inf
  %1557 = vmax.xlane.f32.xlu0 %v1556
  %v1558 = vpop.xlane.xlu0 %1557
  %v1559 = vsel %vm110, %v1511, -inf
  %1560 = vmax.xlane.f32.xlu0 %v1559
  %v1561 = vpop.xlane.xlu0 %1560
  %v1562 = vsel %vm110, %v1512, -inf
  %1563 = vmax.xlane.f32.xlu0 %v1562
  %v1564 = vpop.xlane.xlu0 %1563
  %v1565 = vsel %vm110, %v1513, -inf
  %1566 = vmax.xlane.f32.xlu0 %v1565
  %v1567 = vpop.xlane.xlu0 %1566
  %v1568 = vsel %vm110, %v1514, -inf
  %1569 = vmax.xlane.f32.xlu0 %v1568
  %v1570 = vpop.xlane.xlu0 %1569
  %v1571 = vsel %vm110, %v1515, -inf
  %1572 = vmax.xlane.f32.xlu0 %v1571
  %v1573 = vpop.xlane.xlu0 %1572
  %v1574 = vsel %vm110, %v1516, -inf
  %1575 = vmax.xlane.f32.xlu0 %v1574
  %v1576 = vpop.xlane.xlu0 %1575
  %v1577 = vsel %vm110, %v1517, -inf
  %1578 = vmax.xlane.f32.xlu0 %v1577
  %v1579 = vpop.xlane.xlu0 %1578
  %v1580 = vsel %vm110, %v1518, -inf
  %1581 = vmax.xlane.f32.xlu0 %v1580
  %v1582 = vpop.xlane.xlu0 %1581
  %v1583 = vsel %vm110, %v1519, -inf
  %1584 = vmax.xlane.f32.xlu0 %v1583
  %v1585 = vpop.xlane.xlu0 %1584
  %v1586 = vsel %vm110, %v1520, -inf
  %1587 = vmax.xlane.f32.xlu0 %v1586
  %v1588 = vpop.xlane.xlu0 %1587
  %v1589 = vsel %vm110, %v1521, -inf
  %1590 = vmax.xlane.f32.xlu0 %v1589
  %v1591 = vpop.xlane.xlu0 %1590
  %v1592 = vsel %vm110, %v1522, -inf
  %1593 = vmax.xlane.f32.xlu0 %v1592
  %v1594 = vpop.xlane.xlu0 %1593
  %v1595 = vsel %vm110, %v1523, -inf
  %1596 = vmax.xlane.f32.xlu0 %v1595
  %v1597 = vpop.xlane.xlu0 %1596
  %v1598 = vsel %vm110, %v1524, -inf
  %1599 = vmax.xlane.f32.xlu0 %v1598
  %v1600 = vpop.xlane.xlu0 %1599
  %v1601 = vsel %vm110, %v1525, -inf
  %1602 = vmax.xlane.f32.xlu0 %v1601
  %v1603 = vpop.xlane.xlu0 %1602
  %v1604 = vsel %vm110, %v1526, -inf
  %1605 = vmax.xlane.f32.xlu0 %v1604
  %v1606 = vpop.xlane.xlu0 %1605
  %v1607 = vsel %vm110, %v1527, -inf
  %1608 = vmax.xlane.f32.xlu0 %v1607
  %v1609 = vpop.xlane.xlu0 %1608
  %v1610 = vsel %vm110, %v1528, -inf
  %1611 = vmax.xlane.f32.xlu0 %v1610
  %v1612 = vpop.xlane.xlu0 %1611
  %v1613 = vsel %vm110, %v1529, -inf
  %1614 = vmax.xlane.f32.xlu0 %v1613
  %v1615 = vpop.xlane.xlu0 %1614
  %v1616 = vsel %vm110, %v1530, -inf
  %1617 = vmax.xlane.f32.xlu0 %v1616
  %v1618 = vpop.xlane.xlu0 %1617
  %v1619 = vsel %vm110, %v1531, -inf
  %1620 = vmax.xlane.f32.xlu0 %v1619
  %v1621 = vpop.xlane.xlu0 %1620
  %v1622 = vsel %vm110, %v1532, -inf
  %1623 = vmax.xlane.f32.xlu0 %v1622
  %v1624 = vpop.xlane.xlu0 %1623
  %v1625 = vsel %vm110, %v1533, -inf
  %1626 = vmax.xlane.f32.xlu0 %v1625
  %v1627 = vpop.xlane.xlu0 %1626
  %v1628 = vsel %vm110, %v1534, -inf
  %1629 = vmax.xlane.f32.xlu0 %v1628
  %v1630 = vpop.xlane.xlu0 %1629
  %v1631 = vsub.f32 %v1503, %v1537
  %v1632 = vsub.f32 %v1504, %v1540
  %v1633 = vsub.f32 %v1505, %v1543
  %v1634 = vsub.f32 %v1506, %v1546
  %v1635 = vsub.f32 %v1507, %v1549
  %v1636 = vsub.f32 %v1508, %v1552
  %v1637 = vsub.f32 %v1509, %v1555
  %v1638 = vsub.f32 %v1510, %v1558
  %v1639 = vsub.f32 %v1511, %v1561
  %v1640 = vsub.f32 %v1512, %v1564
  %v1641 = vsub.f32 %v1513, %v1567
  %v1642 = vsub.f32 %v1514, %v1570
  %v1643 = vsub.f32 %v1515, %v1573
  %v1644 = vsub.f32 %v1516, %v1576
  %v1645 = vsub.f32 %v1517, %v1579
  %v1646 = vsub.f32 %v1518, %v1582
  %v1647 = vsub.f32 %v1519, %v1585
  %v1648 = vsub.f32 %v1520, %v1588
  %v1649 = vsub.f32 %v1521, %v1591
  %v1650 = vsub.f32 %v1522, %v1594
  %v1651 = vsub.f32 %v1523, %v1597
  %v1652 = vsub.f32 %v1524, %v1600
  %v1653 = vsub.f32 %v1525, %v1603
  %v1654 = vsub.f32 %v1526, %v1606
  %v1655 = vsub.f32 %v1527, %v1609
  %v1656 = vsub.f32 %v1528, %v1612
  %v1657 = vsub.f32 %v1529, %v1615
  %v1658 = vsub.f32 %v1530, %v1618
  %v1659 = vsub.f32 %v1531, %v1621
  %v1660 = vsub.f32 %v1532, %v1624
  %v1661 = vsub.f32 %v1533, %v1627
  %v1662 = vsub.f32 %v1534, %v1630
  %v1663 = vmul.f32 %v1631, 1.442695
  %v1664 = vpow.pop %v1663
  %v1665 = vmul.f32 %v1632, 1.442695
  %v1666 = vpow.pop %v1665
  %v1667 = vmul.f32 %v1633, 1.442695
  %v1668 = vpow.pop %v1667
  %v1669 = vmul.f32 %v1634, 1.442695
  %v1670 = vpow.pop %v1669
  %v1671 = vmul.f32 %v1635, 1.442695
  %v1672 = vpow.pop %v1671
  %v1673 = vmul.f32 %v1636, 1.442695
  %v1674 = vpow.pop %v1673
  %v1675 = vmul.f32 %v1637, 1.442695
  %v1676 = vpow.pop %v1675
  %v1677 = vmul.f32 %v1638, 1.442695
  %v1678 = vpow.pop %v1677
  %v1679 = vmul.f32 %v1639, 1.442695
  %v1680 = vpow.pop %v1679
  %v1681 = vmul.f32 %v1640, 1.442695
  %v1682 = vpow.pop %v1681
  %v1683 = vmul.f32 %v1641, 1.442695
  %v1684 = vpow.pop %v1683
  %v1685 = vmul.f32 %v1642, 1.442695
  %v1686 = vpow.pop %v1685
  %v1687 = vmul.f32 %v1643, 1.442695
  %v1688 = vpow.pop %v1687
  %v1689 = vmul.f32 %v1644, 1.442695
  %v1690 = vpow.pop %v1689
  %v1691 = vmul.f32 %v1645, 1.442695
  %v1692 = vpow.pop %v1691
  %v1693 = vmul.f32 %v1646, 1.442695
  %v1694 = vpow.pop %v1693
  %v1695 = vmul.f32 %v1647, 1.442695
  %v1696 = vpow.pop %v1695
  %v1697 = vmul.f32 %v1648, 1.442695
  %v1698 = vpow.pop %v1697
  %v1699 = vmul.f32 %v1649, 1.442695
  %v1700 = vpow.pop %v1699
  %v1701 = vmul.f32 %v1650, 1.442695
  %v1702 = vpow.pop %v1701
  %v1703 = vmul.f32 %v1651, 1.442695
  %v1704 = vpow.pop %v1703
  %v1705 = vmul.f32 %v1652, 1.442695
  %v1706 = vpow.pop %v1705
  %v1707 = vmul.f32 %v1653, 1.442695
  %v1708 = vpow.pop %v1707
  %v1709 = vmul.f32 %v1654, 1.442695
  %v1710 = vpow.pop %v1709
  %v1711 = vmul.f32 %v1655, 1.442695
  %v1712 = vpow.pop %v1711
  %v1713 = vmul.f32 %v1656, 1.442695
  %v1714 = vpow.pop %v1713
  %v1715 = vmul.f32 %v1657, 1.442695
  %v1716 = vpow.pop %v1715
  %v1717 = vmul.f32 %v1658, 1.442695
  %v1718 = vpow.pop %v1717
  %v1719 = vmul.f32 %v1659, 1.442695
  %v1720 = vpow.pop %v1719
  %v1721 = vmul.f32 %v1660, 1.442695
  %v1722 = vpow.pop %v1721
  %v1723 = vmul.f32 %v1661, 1.442695
  %v1724 = vpow.pop %v1723
  %v1725 = vmul.f32 %v1662, 1.442695
  %v1726 = vpow.pop %v1725
  %v1727 = vsel %vm110, %v1664, 0.0
  %1728 = vadd.xlane.f32.xlu0 %v1727
  %v1729 = vpop.xlane.xlu0 %1728
  %v1730 = vsel %vm110, %v1666, 0.0
  %1731 = vadd.xlane.f32.xlu0 %v1730
  %v1732 = vpop.xlane.xlu0 %1731
  %v1733 = vsel %vm110, %v1668, 0.0
  %1734 = vadd.xlane.f32.xlu0 %v1733
  %v1735 = vpop.xlane.xlu0 %1734
  %v1736 = vsel %vm110, %v1670, 0.0
  %1737 = vadd.xlane.f32.xlu0 %v1736
  %v1738 = vpop.xlane.xlu0 %1737
  %v1739 = vsel %vm110, %v1672, 0.0
  %1740 = vadd.xlane.f32.xlu0 %v1739
  %v1741 = vpop.xlane.xlu0 %1740
  %v1742 = vsel %vm110, %v1674, 0.0
  %1743 = vadd.xlane.f32.xlu0 %v1742
  %v1744 = vpop.xlane.xlu0 %1743
  %v1745 = vsel %vm110, %v1676, 0.0
  %1746 = vadd.xlane.f32.xlu0 %v1745
  %v1747 = vpop.xlane.xlu0 %1746
  %v1748 = vsel %vm110, %v1678, 0.0
  %1749 = vadd.xlane.f32.xlu0 %v1748
  %v1750 = vpop.xlane.xlu0 %1749
  %v1751 = vsel %vm110, %v1680, 0.0
  %1752 = vadd.xlane.f32.xlu0 %v1751
  %v1753 = vpop.xlane.xlu0 %1752
  %v1754 = vsel %vm110, %v1682, 0.0
  %1755 = vadd.xlane.f32.xlu0 %v1754
  %v1756 = vpop.xlane.xlu0 %1755
  %v1757 = vsel %vm110, %v1684, 0.0
  %1758 = vadd.xlane.f32.xlu0 %v1757
  %v1759 = vpop.xlane.xlu0 %1758
  %v1760 = vsel %vm110, %v1686, 0.0
  %1761 = vadd.xlane.f32.xlu0 %v1760
  %v1762 = vpop.xlane.xlu0 %1761
  %v1763 = vsel %vm110, %v1688, 0.0
  %1764 = vadd.xlane.f32.xlu0 %v1763
  %v1765 = vpop.xlane.xlu0 %1764
  %v1766 = vsel %vm110, %v1690, 0.0
  %1767 = vadd.xlane.f32.xlu0 %v1766
  %v1768 = vpop.xlane.xlu0 %1767
  %v1769 = vsel %vm110, %v1692, 0.0
  %1770 = vadd.xlane.f32.xlu0 %v1769
  %v1771 = vpop.xlane.xlu0 %1770
  %v1772 = vsel %vm110, %v1694, 0.0
  %1773 = vadd.xlane.f32.xlu0 %v1772
  %v1774 = vpop.xlane.xlu0 %1773
  %v1775 = vsel %vm110, %v1696, 0.0
  %1776 = vadd.xlane.f32.xlu0 %v1775
  %v1777 = vpop.xlane.xlu0 %1776
  %v1778 = vsel %vm110, %v1698, 0.0
  %1779 = vadd.xlane.f32.xlu0 %v1778
  %v1780 = vpop.xlane.xlu0 %1779
  %v1781 = vsel %vm110, %v1700, 0.0
  %1782 = vadd.xlane.f32.xlu0 %v1781
  %v1783 = vpop.xlane.xlu0 %1782
  %v1784 = vsel %vm110, %v1702, 0.0
  %1785 = vadd.xlane.f32.xlu0 %v1784
  %v1786 = vpop.xlane.xlu0 %1785
  %v1787 = vsel %vm110, %v1704, 0.0
  %1788 = vadd.xlane.f32.xlu0 %v1787
  %v1789 = vpop.xlane.xlu0 %1788
  %v1790 = vsel %vm110, %v1706, 0.0
  %1791 = vadd.xlane.f32.xlu0 %v1790
  %v1792 = vpop.xlane.xlu0 %1791
  %v1793 = vsel %vm110, %v1708, 0.0
  %1794 = vadd.xlane.f32.xlu0 %v1793
  %v1795 = vpop.xlane.xlu0 %1794
  %v1796 = vsel %vm110, %v1710, 0.0
  %1797 = vadd.xlane.f32.xlu0 %v1796
  %v1798 = vpop.xlane.xlu0 %1797
  %v1799 = vsel %vm110, %v1712, 0.0
  %1800 = vadd.xlane.f32.xlu0 %v1799
  %v1801 = vpop.xlane.xlu0 %1800
  %v1802 = vsel %vm110, %v1714, 0.0
  %1803 = vadd.xlane.f32.xlu0 %v1802
  %v1804 = vpop.xlane.xlu0 %1803
  %v1805 = vsel %vm110, %v1716, 0.0
  %1806 = vadd.xlane.f32.xlu0 %v1805
  %v1807 = vpop.xlane.xlu0 %1806
  %v1808 = vsel %vm110, %v1718, 0.0
  %1809 = vadd.xlane.f32.xlu0 %v1808
  %v1810 = vpop.xlane.xlu0 %1809
  %v1811 = vsel %vm110, %v1720, 0.0
  %1812 = vadd.xlane.f32.xlu0 %v1811
  %v1813 = vpop.xlane.xlu0 %1812
  %v1814 = vsel %vm110, %v1722, 0.0
  %1815 = vadd.xlane.f32.xlu0 %v1814
  %v1816 = vpop.xlane.xlu0 %1815
  %v1817 = vsel %vm110, %v1724, 0.0
  %1818 = vadd.xlane.f32.xlu0 %v1817
  %v1819 = vpop.xlane.xlu0 %1818
  %v1820 = vsel %vm110, %v1726, 0.0
  %1821 = vadd.xlane.f32.xlu0 %v1820
  %v1822 = vpop.xlane.xlu0 %1821
  %v1824 = vsel %vm110, %v1664, 0
  %v1827 = vsel %vm110, %v1666, 0
  %1829 = vmatprep.subr.mxu0 0.0
  %1830 = vmatpush1.msra.mxu0 %v78
  %1831 = vmatprep.subr.mxu0 0.0
  %1832 = vmatpush1.msra.mxu0 %v79
  %1833 = vmatprep.subr.mxu0 0.0
  %1834 = vmatpush1.msra.mxu0 0.0
  %1835 = vmatprep.subr.mxu0 0.0
  %1836 = vmatpush1.msra.mxu0 0.0
  %1837 = vmatprep.subr.mxu0 0.0
  %1838 = vmatpush1.msra.mxu0 0.0
  %1839 = vmatprep.subr.mxu0 0.0
  %1840 = vmatpush1.msra.mxu0 0.0
  %1841 = vmatprep.subr.mxu0 0.0
  %1842 = vmatpush1.msra.mxu0 0.0
  %1843 = vmatprep.subr.mxu0 0.0
  %1844 = vmatpush1.msra.mxu0 0.0
  %1845 = vmatprep.subr.mxu0 0.0
  %1846 = vmatpush1.msra.mxu0 0.0
  %1847 = vmatprep.subr.mxu0 0.0
  %1848 = vmatpush1.msra.mxu0 0.0
  %1849 = vmatprep.subr.mxu0 0.0
  %1850 = vmatpush1.msra.mxu0 0.0
  %1851 = vmatprep.subr.mxu0 0.0
  %1852 = vmatpush1.msra.mxu0 0.0
  %1853 = vmatprep.subr.mxu0 0.0
  %1854 = vmatpush1.msra.mxu0 0.0
  %1855 = vmatprep.subr.mxu0 0.0
  %1856 = vmatpush1.msra.mxu0 0.0
  %1857 = vmatprep.subr.mxu0 0.0
  %1858 = vmatpush1.msra.mxu0 0.0
  %1859 = vmatprep.subr.mxu0 0.0
  %1860 = vmatpush1.msra.mxu0 0.0
  %1861 = vmatprep.subr.mxu0 0.0
  %1862 = vmatpush1.msra.mxu0 0.0
  %1863 = vmatprep.subr.mxu0 0.0
  %1864 = vmatpush1.msra.mxu0 0.0
  %1865 = vmatprep.subr.mxu0 0.0
  %1866 = vmatpush1.msra.mxu0 0.0
  %1867 = vmatprep.subr.mxu0 0.0
  %1868 = vmatpush1.msra.mxu0 0.0
  %1869 = vmatprep.subr.mxu0 0.0
  %1870 = vmatpush1.msra.mxu0 0.0
  %1871 = vmatprep.subr.mxu0 0.0
  %1872 = vmatpush1.msra.mxu0 0.0
  %1873 = vmatprep.subr.mxu0 0.0
  %1874 = vmatpush1.msra.mxu0 0.0
  %1875 = vmatprep.subr.mxu0 0.0
  %1876 = vmatpush1.msra.mxu0 0.0
  %1877 = vmatprep.subr.mxu0 0.0
  %1878 = vmatpush1.msra.mxu0 0.0
  %1879 = vmatprep.subr.mxu0 0.0
  %1880 = vmatpush1.msra.mxu0 0.0
  %1881 = vmatprep.subr.mxu0 0.0
  %1882 = vmatpush1.msra.mxu0 0.0
  %1883 = vmatprep.subr.mxu0 0.0
  %1884 = vmatpush1.msra.mxu0 0.0
  %1885 = vmatprep.subr.mxu0 0.0
  %1886 = vmatpush1.msra.mxu0 0.0
  %1887 = vmatprep.subr.mxu0 0.0
  %1888 = vmatpush1.msra.mxu0 0.0
  %1889 = vmatprep.subr.mxu0 0.0
  %1890 = vmatpush1.msra.mxu0 0.0
  %1891 = vmatprep.subr.mxu0 0.0
  %1892 = vmatpush1.msra.mxu0 0.0
  %1893 = vmatprep.mubr.f32.mxu0 0.0
  %1894 = vmatmul.mubr.f32.gmra.mrb[0].mxu0 %v1824
  %v1895 = vpop.f32.mrb[0].mxu0
  %v1896 = vadd.f32 0.0, %v1895
  %v1897 = vpop.f32.mrb[0].mxu0
  %1898 = vmatprep.mubr.f32.mxu0 0.0
  %1899 = vmatmul.mubr.f32.gmra.mrb[0].mxu0 %v1827
  %v1900 = vpop.f32.mrb[0].mxu0
  %v1901 = vadd.f32 0.0, %v1900
  %v1902 = vpop.f32.mrb[0].mxu0
  %1903 = vdwg.mxu0
  %v1905 = vsel %vm110, %v1668, 0
  %v1908 = vsel %vm110, %v1670, 0
  %1910 = vmatprep.subr.mxu0 0.0
  %1911 = vmatpush1.msra.mxu0 %v80
  %1912 = vmatprep.subr.mxu0 0.0
  %1913 = vmatpush1.msra.mxu0 %v81
  %1914 = vmatprep.subr.mxu0 0.0
  %1915 = vmatpush1.msra.mxu0 0.0
  %1916 = vmatprep.subr.mxu0 0.0
  %1917 = vmatpush1.msra.mxu0 0.0
  %1918 = vmatprep.subr.mxu0 0.0
  %1919 = vmatpush1.msra.mxu0 0.0
  %1920 = vmatprep.subr.mxu0 0.0
  %1921 = vmatpush1.msra.mxu0 0.0
  %1922 = vmatprep.subr.mxu0 0.0
  %1923 = vmatpush1.msra.mxu0 0.0
  %1924 = vmatprep.subr.mxu0 0.0
  %1925 = vmatpush1.msra.mxu0 0.0
  %1926 = vmatprep.subr.mxu0 0.0
  %1927 = vmatpush1.msra.mxu0 0.0
  %1928 = vmatprep.subr.mxu0 0.0
  %1929 = vmatpush1.msra.mxu0 0.0
  %1930 = vmatprep.subr.mxu0 0.0
  %1931 = vmatpush1.msra.mxu0 0.0
  %1932 = vmatprep.subr.mxu0 0.0
  %1933 = vmatpush1.msra.mxu0 0.0
  %1934 = vmatprep.subr.mxu0 0.0
  %1935 = vmatpush1.msra.mxu0 0.0
  %1936 = vmatprep.subr.mxu0 0.0
  %1937 = vmatpush1.msra.mxu0 0.0
  %1938 = vmatprep.subr.mxu0 0.0
  %1939 = vmatpush1.msra.mxu0 0.0
  %1940 = vmatprep.subr.mxu0 0.0
  %1941 = vmatpush1.msra.mxu0 0.0
  %1942 = vmatprep.subr.mxu0 0.0
  %1943 = vmatpush1.msra.mxu0 0.0
  %1944 = vmatprep.subr.mxu0 0.0
  %1945 = vmatpush1.msra.mxu0 0.0
  %1946 = vmatprep.subr.mxu0 0.0
  %1947 = vmatpush1.msra.mxu0 0.0
  %1948 = vmatprep.subr.mxu0 0.0
  %1949 = vmatpush1.msra.mxu0 0.0
  %1950 = vmatprep.subr.mxu0 0.0
  %1951 = vmatpush1.msra.mxu0 0.0
  %1952 = vmatprep.subr.mxu0 0.0
  %1953 = vmatpush1.msra.mxu0 0.0
  %1954 = vmatprep.subr.mxu0 0.0
  %1955 = vmatpush1.msra.mxu0 0.0
  %1956 = vmatprep.subr.mxu0 0.0
  %1957 = vmatpush1.msra.mxu0 0.0
  %1958 = vmatprep.subr.mxu0 0.0
  %1959 = vmatpush1.msra.mxu0 0.0
  %1960 = vmatprep.subr.mxu0 0.0
  %1961 = vmatpush1.msra.mxu0 0.0
  %1962 = vmatprep.subr.mxu0 0.0
  %1963 = vmatpush1.msra.mxu0 0.0
  %1964 = vmatprep.subr.mxu0 0.0
  %1965 = vmatpush1.msra.mxu0 0.0
  %1966 = vmatprep.subr.mxu0 0.0
  %1967 = vmatpush1.msra.mxu0 0.0
  %1968 = vmatprep.subr.mxu0 0.0
  %1969 = vmatpush1.msra.mxu0 0.0
  %1970 = vmatprep.subr.mxu0 0.0
  %1971 = vmatpush1.msra.mxu0 0.0
  %1972 = vmatprep.subr.mxu0 0.0
  %1973 = vmatpush1.msra.mxu0 0.0
  %1974 = vmatprep.mubr.f32.mxu0 0.0
  %1975 = vmatmul.mubr.f32.gmra.mrb[0].mxu0 %v1905
  %v1976 = vpop.f32.mrb[0].mxu0
  %v1977 = vadd.f32 0.0, %v1976
  %v1978 = vpop.f32.mrb[0].mxu0
  %1979 = vmatprep.mubr.f32.mxu0 0.0
  %1980 = vmatmul.mubr.f32.gmra.mrb[0].mxu0 %v1908
  %v1981 = vpop.f32.mrb[0].mxu0
  %v1982 = vadd.f32 0.0, %v1981
  %v1983 = vpop.f32.mrb[0].mxu0
  %1984 = vdwg.mxu0
  %v1986 = vsel %vm110, %v1672, 0
  %v1989 = vsel %vm110, %v1674, 0
  %1991 = vmatprep.subr.mxu0 0.0
  %1992 = vmatpush1.msra.mxu0 %v82
  %1993 = vmatprep.subr.mxu0 0.0
  %1994 = vmatpush1.msra.mxu0 %v83
  %1995 = vmatprep.subr.mxu0 0.0
  %1996 = vmatpush1.msra.mxu0 0.0
  %1997 = vmatprep.subr.mxu0 0.0
  %1998 = vmatpush1.msra.mxu0 0.0
  %1999 = vmatprep.subr.mxu0 0.0
  %2000 = vmatpush1.msra.mxu0 0.0
  %2001 = vmatprep.subr.mxu0 0.0
  %2002 = vmatpush1.msra.mxu0 0.0
  %2003 = vmatprep.subr.mxu0 0.0
  %2004 = vmatpush1.msra.mxu0 0.0
  %2005 = vmatprep.subr.mxu0 0.0
  %2006 = vmatpush1.msra.mxu0 0.0
  %2007 = vmatprep.subr.mxu0 0.0
  %2008 = vmatpush1.msra.mxu0 0.0
  %2009 = vmatprep.subr.mxu0 0.0
  %2010 = vmatpush1.msra.mxu0 0.0
  %2011 = vmatprep.subr.mxu0 0.0
  %2012 = vmatpush1.msra.mxu0 0.0
  %2013 = vmatprep.subr.mxu0 0.0
  %2014 = vmatpush1.msra.mxu0 0.0
  %2015 = vmatprep.subr.mxu0 0.0
  %2016 = vmatpush1.msra.mxu0 0.0
  %2017 = vmatprep.subr.mxu0 0.0
  %2018 = vmatpush1.msra.mxu0 0.0
  %2019 = vmatprep.subr.mxu0 0.0
  %2020 = vmatpush1.msra.mxu0 0.0
  %2021 = vmatprep.subr.mxu0 0.0
  %2022 = vmatpush1.msra.mxu0 0.0
  %2023 = vmatprep.subr.mxu0 0.0
  %2024 = vmatpush1.msra.mxu0 0.0
  %2025 = vmatprep.subr.mxu0 0.0
  %2026 = vmatpush1.msra.mxu0 0.0
  %2027 = vmatprep.subr.mxu0 0.0
  %2028 = vmatpush1.msra.mxu0 0.0
  %2029 = vmatprep.subr.mxu0 0.0
  %2030 = vmatpush1.msra.mxu0 0.0
  %2031 = vmatprep.subr.mxu0 0.0
  %2032 = vmatpush1.msra.mxu0 0.0
  %2033 = vmatprep.subr.mxu0 0.0
  %2034 = vmatpush1.msra.mxu0 0.0
  %2035 = vmatprep.subr.mxu0 0.0
  %2036 = vmatpush1.msra.mxu0 0.0
  %2037 = vmatprep.subr.mxu0 0.0
  %2038 = vmatpush1.msra.mxu0 0.0
  %2039 = vmatprep.subr.mxu0 0.0
  %2040 = vmatpush1.msra.mxu0 0.0
  %2041 = vmatprep.subr.mxu0 0.0
  %2042 = vmatpush1.msra.mxu0 0.0
  %2043 = vmatprep.subr.mxu0 0.0
  %2044 = vmatpush1.msra.mxu0 0.0
  %2045 = vmatprep.subr.mxu0 0.0
  %2046 = vmatpush1.msra.mxu0 0.0
  %2047 = vmatprep.subr.mxu0 0.0
  %2048 = vmatpush1.msra.mxu0 0.0
  %2049 = vmatprep.subr.mxu0 0.0
  %2050 = vmatpush1.msra.mxu0 0.0
  %2051 = vmatprep.subr.mxu0 0.0
  %2052 = vmatpush1.msra.mxu0 0.0
  %2053 = vmatprep.subr.mxu0 0.0
  %2054 = vmatpush1.msra.mxu0 0.0
  %2055 = vmatprep.mubr.f32.mxu0 0.0
  %2056 = vmatmul.mubr.f32.gmra.mrb[0].mxu0 %v1986
  %v2057 = vpop.f32.mrb[0].mxu0
  %v2058 = vadd.f32 0.0, %v2057
  %v2059 = vpop.f32.mrb[0].mxu0
  %2060 = vmatprep.mubr.f32.mxu0 0.0
  %2061 = vmatmul.mubr.f32.gmra.mrb[0].mxu0 %v1989
  %v2062 = vpop.f32.mrb[0].mxu0
  %v2063 = vadd.f32 0.0, %v2062
  %v2064 = vpop.f32.mrb[0].mxu0
  %2065 = vdwg.mxu0
  %v2067 = vsel %vm110, %v1676, 0
  %v2070 = vsel %vm110, %v1678, 0
  %2072 = vmatprep.subr.mxu0 0.0
  %2073 = vmatpush1.msra.mxu0 %v84
  %2074 = vmatprep.subr.mxu0 0.0
  %2075 = vmatpush1.msra.mxu0 %v85
  %2076 = vmatprep.subr.mxu0 0.0
  %2077 = vmatpush1.msra.mxu0 0.0
  %2078 = vmatprep.subr.mxu0 0.0
  %2079 = vmatpush1.msra.mxu0 0.0
  %2080 = vmatprep.subr.mxu0 0.0
  %2081 = vmatpush1.msra.mxu0 0.0
  %2082 = vmatprep.subr.mxu0 0.0
  %2083 = vmatpush1.msra.mxu0 0.0
  %2084 = vmatprep.subr.mxu0 0.0
  %2085 = vmatpush1.msra.mxu0 0.0
  %2086 = vmatprep.subr.mxu0 0.0
  %2087 = vmatpush1.msra.mxu0 0.0
  %2088 = vmatprep.subr.mxu0 0.0
  %2089 = vmatpush1.msra.mxu0 0.0
  %2090 = vmatprep.subr.mxu0 0.0
  %2091 = vmatpush1.msra.mxu0 0.0
  %2092 = vmatprep.subr.mxu0 0.0
  %2093 = vmatpush1.msra.mxu0 0.0
  %2094 = vmatprep.subr.mxu0 0.0
  %2095 = vmatpush1.msra.mxu0 0.0
  %2096 = vmatprep.subr.mxu0 0.0
  %2097 = vmatpush1.msra.mxu0 0.0
  %2098 = vmatprep.subr.mxu0 0.0
  %2099 = vmatpush1.msra.mxu0 0.0
  %2100 = vmatprep.subr.mxu0 0.0
  %2101 = vmatpush1.msra.mxu0 0.0
  %2102 = vmatprep.subr.mxu0 0.0
  %2103 = vmatpush1.msra.mxu0 0.0
  %2104 = vmatprep.subr.mxu0 0.0
  %2105 = vmatpush1.msra.mxu0 0.0
  %2106 = vmatprep.subr.mxu0 0.0
  %2107 = vmatpush1.msra.mxu0 0.0
  %2108 = vmatprep.subr.mxu0 0.0
  %2109 = vmatpush1.msra.mxu0 0.0
  %2110 = vmatprep.subr.mxu0 0.0
  %2111 = vmatpush1.msra.mxu0 0.0
  %2112 = vmatprep.subr.mxu0 0.0
  %2113 = vmatpush1.msra.mxu0 0.0
  %2114 = vmatprep.subr.mxu0 0.0
  %2115 = vmatpush1.msra.mxu0 0.0
  %2116 = vmatprep.subr.mxu0 0.0
  %2117 = vmatpush1.msra.mxu0 0.0
  %2118 = vmatprep.subr.mxu0 0.0
  %2119 = vmatpush1.msra.mxu0 0.0
  %2120 = vmatprep.subr.mxu0 0.0
  %2121 = vmatpush1.msra.mxu0 0.0
  %2122 = vmatprep.subr.mxu0 0.0
  %2123 = vmatpush1.msra.mxu0 0.0
  %2124 = vmatprep.subr.mxu0 0.0
  %2125 = vmatpush1.msra.mxu0 0.0
  %2126 = vmatprep.subr.mxu0 0.0
  %2127 = vmatpush1.msra.mxu0 0.0
  %2128 = vmatprep.subr.mxu0 0.0
  %2129 = vmatpush1.msra.mxu0 0.0
  %2130 = vmatprep.subr.mxu0 0.0
  %2131 = vmatpush1.msra.mxu0 0.0
  %2132 = vmatprep.subr.mxu0 0.0
  %2133 = vmatpush1.msra.mxu0 0.0
  %2134 = vmatprep.subr.mxu0 0.0
  %2135 = vmatpush1.msra.mxu0 0.0
  %2136 = vmatprep.mubr.f32.mxu0 0.0
  %2137 = vmatmul.mubr.f32.gmra.mrb[0].mxu0 %v2067
  %v2138 = vpop.f32.mrb[0].mxu0
  %v2139 = vadd.f32 0.0, %v2138
  %v2140 = vpop.f32.mrb[0].mxu0
  %2141 = vmatprep.mubr.f32.mxu0 0.0
  %2142 = vmatmul.mubr.f32.gmra.mrb[0].mxu0 %v2070
  %v2143 = vpop.f32.mrb[0].mxu0
  %v2144 = vadd.f32 0.0, %v2143
  %v2145 = vpop.f32.mrb[0].mxu0
  %2146 = vdwg.mxu0
  %v2148 = vsel %vm110, %v1680, 0
  %v2151 = vsel %vm110, %v1682, 0
  %2153 = vmatprep.subr.mxu0 0.0
  %2154 = vmatpush1.msra.mxu0 %v86
  %2155 = vmatprep.subr.mxu0 0.0
  %2156 = vmatpush1.msra.mxu0 %v87
  %2157 = vmatprep.subr.mxu0 0.0
  %2158 = vmatpush1.msra.mxu0 0.0
  %2159 = vmatprep.subr.mxu0 0.0
  %2160 = vmatpush1.msra.mxu0 0.0
  %2161 = vmatprep.subr.mxu0 0.0
  %2162 = vmatpush1.msra.mxu0 0.0
  %2163 = vmatprep.subr.mxu0 0.0
  %2164 = vmatpush1.msra.mxu0 0.0
  %2165 = vmatprep.subr.mxu0 0.0
  %2166 = vmatpush1.msra.mxu0 0.0
  %2167 = vmatprep.subr.mxu0 0.0
  %2168 = vmatpush1.msra.mxu0 0.0
  %2169 = vmatprep.subr.mxu0 0.0
  %2170 = vmatpush1.msra.mxu0 0.0
  %2171 = vmatprep.subr.mxu0 0.0
  %2172 = vmatpush1.msra.mxu0 0.0
  %2173 = vmatprep.subr.mxu0 0.0
  %2174 = vmatpush1.msra.mxu0 0.0
  %2175 = vmatprep.subr.mxu0 0.0
  %2176 = vmatpush1.msra.mxu0 0.0
  %2177 = vmatprep.subr.mxu0 0.0
  %2178 = vmatpush1.msra.mxu0 0.0
  %2179 = vmatprep.subr.mxu0 0.0
  %2180 = vmatpush1.msra.mxu0 0.0
  %2181 = vmatprep.subr.mxu0 0.0
  %2182 = vmatpush1.msra.mxu0 0.0
  %2183 = vmatprep.subr.mxu0 0.0
  %2184 = vmatpush1.msra.mxu0 0.0
  %2185 = vmatprep.subr.mxu0 0.0
  %2186 = vmatpush1.msra.mxu0 0.0
  %2187 = vmatprep.subr.mxu0 0.0
  %2188 = vmatpush1.msra.mxu0 0.0
  %2189 = vmatprep.subr.mxu0 0.0
  %2190 = vmatpush1.msra.mxu0 0.0
  %2191 = vmatprep.subr.mxu0 0.0
  %2192 = vmatpush1.msra.mxu0 0.0
  %2193 = vmatprep.subr.mxu0 0.0
  %2194 = vmatpush1.msra.mxu0 0.0
  %2195 = vmatprep.subr.mxu0 0.0
  %2196 = vmatpush1.msra.mxu0 0.0
  %2197 = vmatprep.subr.mxu0 0.0
  %2198 = vmatpush1.msra.mxu0 0.0
  %2199 = vmatprep.subr.mxu0 0.0
  %2200 = vmatpush1.msra.mxu0 0.0
  %2201 = vmatprep.subr.mxu0 0.0
  %2202 = vmatpush1.msra.mxu0 0.0
  %2203 = vmatprep.subr.mxu0 0.0
  %2204 = vmatpush1.msra.mxu0 0.0
  %2205 = vmatprep.subr.mxu0 0.0
  %2206 = vmatpush1.msra.mxu0 0.0
  %2207 = vmatprep.subr.mxu0 0.0
  %2208 = vmatpush1.msra.mxu0 0.0
  %2209 = vmatprep.subr.mxu0 0.0
  %2210 = vmatpush1.msra.mxu0 0.0
  %2211 = vmatprep.subr.mxu0 0.0
  %2212 = vmatpush1.msra.mxu0 0.0
  %2213 = vmatprep.subr.mxu0 0.0
  %2214 = vmatpush1.msra.mxu0 0.0
  %2215 = vmatprep.subr.mxu0 0.0
  %2216 = vmatpush1.msra.mxu0 0.0
  %2217 = vmatprep.mubr.f32.mxu0 0.0
  %2218 = vmatmul.mubr.f32.gmra.mrb[0].mxu0 %v2148
  %v2219 = vpop.f32.mrb[0].mxu0
  %v2220 = vadd.f32 0.0, %v2219
  %v2221 = vpop.f32.mrb[0].mxu0
  %2222 = vmatprep.mubr.f32.mxu0 0.0
  %2223 = vmatmul.mubr.f32.gmra.mrb[0].mxu0 %v2151
  %v2224 = vpop.f32.mrb[0].mxu0
  %v2225 = vadd.f32 0.0, %v2224
  %v2226 = vpop.f32.mrb[0].mxu0
  %2227 = vdwg.mxu0
  %v2229 = vsel %vm110, %v1684, 0
  %v2232 = vsel %vm110, %v1686, 0
  %2234 = vmatprep.subr.mxu0 0.0
  %2235 = vmatpush1.msra.mxu0 %v88
  %2236 = vmatprep.subr.mxu0 0.0
  %2237 = vmatpush1.msra.mxu0 %v89
  %2238 = vmatprep.subr.mxu0 0.0
  %2239 = vmatpush1.msra.mxu0 0.0
  %2240 = vmatprep.subr.mxu0 0.0
  %2241 = vmatpush1.msra.mxu0 0.0
  %2242 = vmatprep.subr.mxu0 0.0
  %2243 = vmatpush1.msra.mxu0 0.0
  %2244 = vmatprep.subr.mxu0 0.0
  %2245 = vmatpush1.msra.mxu0 0.0
  %2246 = vmatprep.subr.mxu0 0.0
  %2247 = vmatpush1.msra.mxu0 0.0
  %2248 = vmatprep.subr.mxu0 0.0
  %2249 = vmatpush1.msra.mxu0 0.0
  %2250 = vmatprep.subr.mxu0 0.0
  %2251 = vmatpush1.msra.mxu0 0.0
  %2252 = vmatprep.subr.mxu0 0.0
  %2253 = vmatpush1.msra.mxu0 0.0
  %2254 = vmatprep.subr.mxu0 0.0
  %2255 = vmatpush1.msra.mxu0 0.0
  %2256 = vmatprep.subr.mxu0 0.0
  %2257 = vmatpush1.msra.mxu0 0.0
  %2258 = vmatprep.subr.mxu0 0.0
  %2259 = vmatpush1.msra.mxu0 0.0
  %2260 = vmatprep.subr.mxu0 0.0
  %2261 = vmatpush1.msra.mxu0 0.0
  %2262 = vmatprep.subr.mxu0 0.0
  %2263 = vmatpush1.msra.mxu0 0.0
  %2264 = vmatprep.subr.mxu0 0.0
  %2265 = vmatpush1.msra.mxu0 0.0
  %2266 = vmatprep.subr.mxu0 0.0
  %2267 = vmatpush1.msra.mxu0 0.0
  %2268 = vmatprep.subr.mxu0 0.0
  %2269 = vmatpush1.msra.mxu0 0.0
  %2270 = vmatprep.subr.mxu0 0.0
  %2271 = vmatpush1.msra.mxu0 0.0
  %2272 = vmatprep.subr.mxu0 0.0
  %2273 = vmatpush1.msra.mxu0 0.0
  %2274 = vmatprep.subr.mxu0 0.0
  %2275 = vmatpush1.msra.mxu0 0.0
  %2276 = vmatprep.subr.mxu0 0.0
  %2277 = vmatpush1.msra.mxu0 0.0
  %2278 = vmatprep.subr.mxu0 0.0
  %2279 = vmatpush1.msra.mxu0 0.0
  %2280 = vmatprep.subr.mxu0 0.0
  %2281 = vmatpush1.msra.mxu0 0.0
  %2282 = vmatprep.subr.mxu0 0.0
  %2283 = vmatpush1.msra.mxu0 0.0
  %2284 = vmatprep.subr.mxu0 0.0
  %2285 = vmatpush1.msra.mxu0 0.0
  %2286 = vmatprep.subr.mxu0 0.0
  %2287 = vmatpush1.msra.mxu0 0.0
  %2288 = vmatprep.subr.mxu0 0.0
  %2289 = vmatpush1.msra.mxu0 0.0
  %2290 = vmatprep.subr.mxu0 0.0
  %2291 = vmatpush1.msra.mxu0 0.0
  %2292 = vmatprep.subr.mxu0 0.0
  %2293 = vmatpush1.msra.mxu0 0.0
  %2294 = vmatprep.subr.mxu0 0.0
  %2295 = vmatpush1.msra.mxu0 0.0
  %2296 = vmatprep.subr.mxu0 0.0
  %2297 = vmatpush1.msra.mxu0 0.0
  %2298 = vmatprep.mubr.f32.mxu0 0.0
  %2299 = vmatmul.mubr.f32.gmra.mrb[0].mxu0 %v2229
  %v2300 = vpop.f32.mrb[0].mxu0
  %v2301 = vadd.f32 0.0, %v2300
  %v2302 = vpop.f32.mrb[0].mxu0
  %2303 = vmatprep.mubr.f32.mxu0 0.0
  %2304 = vmatmul.mubr.f32.gmra.mrb[0].mxu0 %v2232
  %v2305 = vpop.f32.mrb[0].mxu0
  %v2306 = vadd.f32 0.0, %v2305
  %v2307 = vpop.f32.mrb[0].mxu0
  %2308 = vdwg.mxu0
  %v2310 = vsel %vm110, %v1688, 0
  %v2313 = vsel %vm110, %v1690, 0
  %2315 = vmatprep.subr.mxu0 0.0
  %2316 = vmatpush1.msra.mxu0 %v90
  %2317 = vmatprep.subr.mxu0 0.0
  %2318 = vmatpush1.msra.mxu0 %v91
  %2319 = vmatprep.subr.mxu0 0.0
  %2320 = vmatpush1.msra.mxu0 0.0
  %2321 = vmatprep.subr.mxu0 0.0
  %2322 = vmatpush1.msra.mxu0 0.0
  %2323 = vmatprep.subr.mxu0 0.0
  %2324 = vmatpush1.msra.mxu0 0.0
  %2325 = vmatprep.subr.mxu0 0.0
  %2326 = vmatpush1.msra.mxu0 0.0
  %2327 = vmatprep.subr.mxu0 0.0
  %2328 = vmatpush1.msra.mxu0 0.0
  %2329 = vmatprep.subr.mxu0 0.0
  %2330 = vmatpush1.msra.mxu0 0.0
  %2331 = vmatprep.subr.mxu0 0.0
  %2332 = vmatpush1.msra.mxu0 0.0
  %2333 = vmatprep.subr.mxu0 0.0
  %2334 = vmatpush1.msra.mxu0 0.0
  %2335 = vmatprep.subr.mxu0 0.0
  %2336 = vmatpush1.msra.mxu0 0.0
  %2337 = vmatprep.subr.mxu0 0.0
  %2338 = vmatpush1.msra.mxu0 0.0
  %2339 = vmatprep.subr.mxu0 0.0
  %2340 = vmatpush1.msra.mxu0 0.0
  %2341 = vmatprep.subr.mxu0 0.0
  %2342 = vmatpush1.msra.mxu0 0.0
  %2343 = vmatprep.subr.mxu0 0.0
  %2344 = vmatpush1.msra.mxu0 0.0
  %2345 = vmatprep.subr.mxu0 0.0
  %2346 = vmatpush1.msra.mxu0 0.0
  %2347 = vmatprep.subr.mxu0 0.0
  %2348 = vmatpush1.msra.mxu0 0.0
  %2349 = vmatprep.subr.mxu0 0.0
  %2350 = vmatpush1.msra.mxu0 0.0
  %2351 = vmatprep.subr.mxu0 0.0
  %2352 = vmatpush1.msra.mxu0 0.0
  %2353 = vmatprep.subr.mxu0 0.0
  %2354 = vmatpush1.msra.mxu0 0.0
  %2355 = vmatprep.subr.mxu0 0.0
  %2356 = vmatpush1.msra.mxu0 0.0
  %2357 = vmatprep.subr.mxu0 0.0
  %2358 = vmatpush1.msra.mxu0 0.0
  %2359 = vmatprep.subr.mxu0 0.0
  %2360 = vmatpush1.msra.mxu0 0.0
  %2361 = vmatprep.subr.mxu0 0.0
  %2362 = vmatpush1.msra.mxu0 0.0
  %2363 = vmatprep.subr.mxu0 0.0
  %2364 = vmatpush1.msra.mxu0 0.0
  %2365 = vmatprep.subr.mxu0 0.0
  %2366 = vmatpush1.msra.mxu0 0.0
  %2367 = vmatprep.subr.mxu0 0.0
  %2368 = vmatpush1.msra.mxu0 0.0
  %2369 = vmatprep.subr.mxu0 0.0
  %2370 = vmatpush1.msra.mxu0 0.0
  %2371 = vmatprep.subr.mxu0 0.0
  %2372 = vmatpush1.msra.mxu0 0.0
  %2373 = vmatprep.subr.mxu0 0.0
  %2374 = vmatpush1.msra.mxu0 0.0
  %2375 = vmatprep.subr.mxu0 0.0
  %2376 = vmatpush1.msra.mxu0 0.0
  %2377 = vmatprep.subr.mxu0 0.0
  %2378 = vmatpush1.msra.mxu0 0.0
  %2379 = vmatprep.mubr.f32.mxu0 0.0
  %2380 = vmatmul.mubr.f32.gmra.mrb[0].mxu0 %v2310
  %v2381 = vpop.f32.mrb[0].mxu0
  %v2382 = vadd.f32 0.0, %v2381
  %v2383 = vpop.f32.mrb[0].mxu0
  %2384 = vmatprep.mubr.f32.mxu0 0.0
  %2385 = vmatmul.mubr.f32.gmra.mrb[0].mxu0 %v2313
  %v2386 = vpop.f32.mrb[0].mxu0
  %v2387 = vadd.f32 0.0, %v2386
  %v2388 = vpop.f32.mrb[0].mxu0
  %2389 = vdwg.mxu0
  %v2391 = vsel %vm110, %v1692, 0
  %v2394 = vsel %vm110, %v1694, 0
  %2396 = vmatprep.subr.mxu0 0.0
  %2397 = vmatpush1.msra.mxu0 %v92
  %2398 = vmatprep.subr.mxu0 0.0
  %2399 = vmatpush1.msra.mxu0 %v93
  %2400 = vmatprep.subr.mxu0 0.0
  %2401 = vmatpush1.msra.mxu0 0.0
  %2402 = vmatprep.subr.mxu0 0.0
  %2403 = vmatpush1.msra.mxu0 0.0
  %2404 = vmatprep.subr.mxu0 0.0
  %2405 = vmatpush1.msra.mxu0 0.0
  %2406 = vmatprep.subr.mxu0 0.0
  %2407 = vmatpush1.msra.mxu0 0.0
  %2408 = vmatprep.subr.mxu0 0.0
  %2409 = vmatpush1.msra.mxu0 0.0
  %2410 = vmatprep.subr.mxu0 0.0
  %2411 = vmatpush1.msra.mxu0 0.0
  %2412 = vmatprep.subr.mxu0 0.0
  %2413 = vmatpush1.msra.mxu0 0.0
  %2414 = vmatprep.subr.mxu0 0.0
  %2415 = vmatpush1.msra.mxu0 0.0
  %2416 = vmatprep.subr.mxu0 0.0
  %2417 = vmatpush1.msra.mxu0 0.0
  %2418 = vmatprep.subr.mxu0 0.0
  %2419 = vmatpush1.msra.mxu0 0.0
  %2420 = vmatprep.subr.mxu0 0.0
  %2421 = vmatpush1.msra.mxu0 0.0
  %2422 = vmatprep.subr.mxu0 0.0
  %2423 = vmatpush1.msra.mxu0 0.0
  %2424 = vmatprep.subr.mxu0 0.0
  %2425 = vmatpush1.msra.mxu0 0.0
  %2426 = vmatprep.subr.mxu0 0.0
  %2427 = vmatpush1.msra.mxu0 0.0
  %2428 = vmatprep.subr.mxu0 0.0
  %2429 = vmatpush1.msra.mxu0 0.0
  %2430 = vmatprep.subr.mxu0 0.0
  %2431 = vmatpush1.msra.mxu0 0.0
  %2432 = vmatprep.subr.mxu0 0.0
  %2433 = vmatpush1.msra.mxu0 0.0
  %2434 = vmatprep.subr.mxu0 0.0
  %2435 = vmatpush1.msra.mxu0 0.0
  %2436 = vmatprep.subr.mxu0 0.0
  %2437 = vmatpush1.msra.mxu0 0.0
  %2438 = vmatprep.subr.mxu0 0.0
  %2439 = vmatpush1.msra.mxu0 0.0
  %2440 = vmatprep.subr.mxu0 0.0
  %2441 = vmatpush1.msra.mxu0 0.0
  %2442 = vmatprep.subr.mxu0 0.0
  %2443 = vmatpush1.msra.mxu0 0.0
  %2444 = vmatprep.subr.mxu0 0.0
  %2445 = vmatpush1.msra.mxu0 0.0
  %2446 = vmatprep.subr.mxu0 0.0
  %2447 = vmatpush1.msra.mxu0 0.0
  %2448 = vmatprep.subr.mxu0 0.0
  %2449 = vmatpush1.msra.mxu0 0.0
  %2450 = vmatprep.subr.mxu0 0.0
  %2451 = vmatpush1.msra.mxu0 0.0
  %2452 = vmatprep.subr.mxu0 0.0
  %2453 = vmatpush1.msra.mxu0 0.0
  %2454 = vmatprep.subr.mxu0 0.0
  %2455 = vmatpush1.msra.mxu0 0.0
  %2456 = vmatprep.subr.mxu0 0.0
  %2457 = vmatpush1.msra.mxu0 0.0
  %2458 = vmatprep.subr.mxu0 0.0
  %2459 = vmatpush1.msra.mxu0 0.0
  %2460 = vmatprep.mubr.f32.mxu0 0.0
  %2461 = vmatmul.mubr.f32.gmra.mrb[0].mxu0 %v2391
  %v2462 = vpop.f32.mrb[0].mxu0
  %v2463 = vadd.f32 0.0, %v2462
  %v2464 = vpop.f32.mrb[0].mxu0
  %2465 = vmatprep.mubr.f32.mxu0 0.0
  %2466 = vmatmul.mubr.f32.gmra.mrb[0].mxu0 %v2394
  %v2467 = vpop.f32.mrb[0].mxu0
  %v2468 = vadd.f32 0.0, %v2467
  %v2469 = vpop.f32.mrb[0].mxu0
  %2470 = vdwg.mxu0
  %v2472 = vsel %vm110, %v1696, 0
  %v2475 = vsel %vm110, %v1698, 0
  %2477 = vmatprep.subr.mxu0 0.0
  %2478 = vmatpush1.msra.mxu0 %v94
  %2479 = vmatprep.subr.mxu0 0.0
  %2480 = vmatpush1.msra.mxu0 %v95
  %2481 = vmatprep.subr.mxu0 0.0
  %2482 = vmatpush1.msra.mxu0 0.0
  %2483 = vmatprep.subr.mxu0 0.0
  %2484 = vmatpush1.msra.mxu0 0.0
  %2485 = vmatprep.subr.mxu0 0.0
  %2486 = vmatpush1.msra.mxu0 0.0
  %2487 = vmatprep.subr.mxu0 0.0
  %2488 = vmatpush1.msra.mxu0 0.0
  %2489 = vmatprep.subr.mxu0 0.0
  %2490 = vmatpush1.msra.mxu0 0.0
  %2491 = vmatprep.subr.mxu0 0.0
  %2492 = vmatpush1.msra.mxu0 0.0
  %2493 = vmatprep.subr.mxu0 0.0
  %2494 = vmatpush1.msra.mxu0 0.0
  %2495 = vmatprep.subr.mxu0 0.0
  %2496 = vmatpush1.msra.mxu0 0.0
  %2497 = vmatprep.subr.mxu0 0.0
  %2498 = vmatpush1.msra.mxu0 0.0
  %2499 = vmatprep.subr.mxu0 0.0
  %2500 = vmatpush1.msra.mxu0 0.0
  %2501 = vmatprep.subr.mxu0 0.0
  %2502 = vmatpush1.msra.mxu0 0.0
  %2503 = vmatprep.subr.mxu0 0.0
  %2504 = vmatpush1.msra.mxu0 0.0
  %2505 = vmatprep.subr.mxu0 0.0
  %2506 = vmatpush1.msra.mxu0 0.0
  %2507 = vmatprep.subr.mxu0 0.0
  %2508 = vmatpush1.msra.mxu0 0.0
  %2509 = vmatprep.subr.mxu0 0.0
  %2510 = vmatpush1.msra.mxu0 0.0
  %2511 = vmatprep.subr.mxu0 0.0
  %2512 = vmatpush1.msra.mxu0 0.0
  %2513 = vmatprep.subr.mxu0 0.0
  %2514 = vmatpush1.msra.mxu0 0.0
  %2515 = vmatprep.subr.mxu0 0.0
  %2516 = vmatpush1.msra.mxu0 0.0
  %2517 = vmatprep.subr.mxu0 0.0
  %2518 = vmatpush1.msra.mxu0 0.0
  %2519 = vmatprep.subr.mxu0 0.0
  %2520 = vmatpush1.msra.mxu0 0.0
  %2521 = vmatprep.subr.mxu0 0.0
  %2522 = vmatpush1.msra.mxu0 0.0
  %2523 = vmatprep.subr.mxu0 0.0
  %2524 = vmatpush1.msra.mxu0 0.0
  %2525 = vmatprep.subr.mxu0 0.0
  %2526 = vmatpush1.msra.mxu0 0.0
  %2527 = vmatprep.subr.mxu0 0.0
  %2528 = vmatpush1.msra.mxu0 0.0
  %2529 = vmatprep.subr.mxu0 0.0
  %2530 = vmatpush1.msra.mxu0 0.0
  %2531 = vmatprep.subr.mxu0 0.0
  %2532 = vmatpush1.msra.mxu0 0.0
  %2533 = vmatprep.subr.mxu0 0.0
  %2534 = vmatpush1.msra.mxu0 0.0
  %2535 = vmatprep.subr.mxu0 0.0
  %2536 = vmatpush1.msra.mxu0 0.0
  %2537 = vmatprep.subr.mxu0 0.0
  %2538 = vmatpush1.msra.mxu0 0.0
  %2539 = vmatprep.subr.mxu0 0.0
  %2540 = vmatpush1.msra.mxu0 0.0
  %2541 = vmatprep.mubr.f32.mxu0 0.0
  %2542 = vmatmul.mubr.f32.gmra.mrb[0].mxu0 %v2472
  %v2543 = vpop.f32.mrb[0].mxu0
  %v2544 = vadd.f32 0.0, %v2543
  %v2545 = vpop.f32.mrb[0].mxu0
  %2546 = vmatprep.mubr.f32.mxu0 0.0
  %2547 = vmatmul.mubr.f32.gmra.mrb[0].mxu0 %v2475
  %v2548 = vpop.f32.mrb[0].mxu0
  %v2549 = vadd.f32 0.0, %v2548
  %v2550 = vpop.f32.mrb[0].mxu0
  %2551 = vdwg.mxu0
  %v2553 = vsel %vm110, %v1700, 0
  %v2556 = vsel %vm110, %v1702, 0
  %2558 = vmatprep.subr.mxu0 0.0
  %2559 = vmatpush1.msra.mxu0 %v96
  %2560 = vmatprep.subr.mxu0 0.0
  %2561 = vmatpush1.msra.mxu0 %v97
  %2562 = vmatprep.subr.mxu0 0.0
  %2563 = vmatpush1.msra.mxu0 0.0
  %2564 = vmatprep.subr.mxu0 0.0
  %2565 = vmatpush1.msra.mxu0 0.0
  %2566 = vmatprep.subr.mxu0 0.0
  %2567 = vmatpush1.msra.mxu0 0.0
  %2568 = vmatprep.subr.mxu0 0.0
  %2569 = vmatpush1.msra.mxu0 0.0
  %2570 = vmatprep.subr.mxu0 0.0
  %2571 = vmatpush1.msra.mxu0 0.0
  %2572 = vmatprep.subr.mxu0 0.0
  %2573 = vmatpush1.msra.mxu0 0.0
  %2574 = vmatprep.subr.mxu0 0.0
  %2575 = vmatpush1.msra.mxu0 0.0
  %2576 = vmatprep.subr.mxu0 0.0
  %2577 = vmatpush1.msra.mxu0 0.0
  %2578 = vmatprep.subr.mxu0 0.0
  %2579 = vmatpush1.msra.mxu0 0.0
  %2580 = vmatprep.subr.mxu0 0.0
  %2581 = vmatpush1.msra.mxu0 0.0
  %2582 = vmatprep.subr.mxu0 0.0
  %2583 = vmatpush1.msra.mxu0 0.0
  %2584 = vmatprep.subr.mxu0 0.0
  %2585 = vmatpush1.msra.mxu0 0.0
  %2586 = vmatprep.subr.mxu0 0.0
  %2587 = vmatpush1.msra.mxu0 0.0
  %2588 = vmatprep.subr.mxu0 0.0
  %2589 = vmatpush1.msra.mxu0 0.0
  %2590 = vmatprep.subr.mxu0 0.0
  %2591 = vmatpush1.msra.mxu0 0.0
  %2592 = vmatprep.subr.mxu0 0.0
  %2593 = vmatpush1.msra.mxu0 0.0
  %2594 = vmatprep.subr.mxu0 0.0
  %2595 = vmatpush1.msra.mxu0 0.0
  %2596 = vmatprep.subr.mxu0 0.0
  %2597 = vmatpush1.msra.mxu0 0.0
  %2598 = vmatprep.subr.mxu0 0.0
  %2599 = vmatpush1.msra.mxu0 0.0
  %2600 = vmatprep.subr.mxu0 0.0
  %2601 = vmatpush1.msra.mxu0 0.0
  %2602 = vmatprep.subr.mxu0 0.0
  %2603 = vmatpush1.msra.mxu0 0.0
  %2604 = vmatprep.subr.mxu0 0.0
  %2605 = vmatpush1.msra.mxu0 0.0
  %2606 = vmatprep.subr.mxu0 0.0
  %2607 = vmatpush1.msra.mxu0 0.0
  %2608 = vmatprep.subr.mxu0 0.0
  %2609 = vmatpush1.msra.mxu0 0.0
  %2610 = vmatprep.subr.mxu0 0.0
  %2611 = vmatpush1.msra.mxu0 0.0
  %2612 = vmatprep.subr.mxu0 0.0
  %2613 = vmatpush1.msra.mxu0 0.0
  %2614 = vmatprep.subr.mxu0 0.0
  %2615 = vmatpush1.msra.mxu0 0.0
  %2616 = vmatprep.subr.mxu0 0.0
  %2617 = vmatpush1.msra.mxu0 0.0
  %2618 = vmatprep.subr.mxu0 0.0
  %2619 = vmatpush1.msra.mxu0 0.0
  %2620 = vmatprep.subr.mxu0 0.0
  %2621 = vmatpush1.msra.mxu0 0.0
  %2622 = vmatprep.mubr.f32.mxu0 0.0
  %2623 = vmatmul.mubr.f32.gmra.mrb[0].mxu0 %v2553
  %v2624 = vpop.f32.mrb[0].mxu0
  %v2625 = vadd.f32 0.0, %v2624
  %v2626 = vpop.f32.mrb[0].mxu0
  %2627 = vmatprep.mubr.f32.mxu0 0.0
  %2628 = vmatmul.mubr.f32.gmra.mrb[0].mxu0 %v2556
  %v2629 = vpop.f32.mrb[0].mxu0
  %v2630 = vadd.f32 0.0, %v2629
  %v2631 = vpop.f32.mrb[0].mxu0
  %2632 = vdwg.mxu0
  %v2634 = vsel %vm110, %v1704, 0
  %v2637 = vsel %vm110, %v1706, 0
  %2639 = vmatprep.subr.mxu0 0.0
  %2640 = vmatpush1.msra.mxu0 %v98
  %2641 = vmatprep.subr.mxu0 0.0
  %2642 = vmatpush1.msra.mxu0 %v99
  %2643 = vmatprep.subr.mxu0 0.0
  %2644 = vmatpush1.msra.mxu0 0.0
  %2645 = vmatprep.subr.mxu0 0.0
  %2646 = vmatpush1.msra.mxu0 0.0
  %2647 = vmatprep.subr.mxu0 0.0
  %2648 = vmatpush1.msra.mxu0 0.0
  %2649 = vmatprep.subr.mxu0 0.0
  %2650 = vmatpush1.msra.mxu0 0.0
  %2651 = vmatprep.subr.mxu0 0.0
  %2652 = vmatpush1.msra.mxu0 0.0
  %2653 = vmatprep.subr.mxu0 0.0
  %2654 = vmatpush1.msra.mxu0 0.0
  %2655 = vmatprep.subr.mxu0 0.0
  %2656 = vmatpush1.msra.mxu0 0.0
  %2657 = vmatprep.subr.mxu0 0.0
  %2658 = vmatpush1.msra.mxu0 0.0
  %2659 = vmatprep.subr.mxu0 0.0
  %2660 = vmatpush1.msra.mxu0 0.0
  %2661 = vmatprep.subr.mxu0 0.0
  %2662 = vmatpush1.msra.mxu0 0.0
  %2663 = vmatprep.subr.mxu0 0.0
  %2664 = vmatpush1.msra.mxu0 0.0
  %2665 = vmatprep.subr.mxu0 0.0
  %2666 = vmatpush1.msra.mxu0 0.0
  %2667 = vmatprep.subr.mxu0 0.0
  %2668 = vmatpush1.msra.mxu0 0.0
  %2669 = vmatprep.subr.mxu0 0.0
  %2670 = vmatpush1.msra.mxu0 0.0
  %2671 = vmatprep.subr.mxu0 0.0
  %2672 = vmatpush1.msra.mxu0 0.0
  %2673 = vmatprep.subr.mxu0 0.0
  %2674 = vmatpush1.msra.mxu0 0.0
  %2675 = vmatprep.subr.mxu0 0.0
  %2676 = vmatpush1.msra.mxu0 0.0
  %2677 = vmatprep.subr.mxu0 0.0
  %2678 = vmatpush1.msra.mxu0 0.0
  %2679 = vmatprep.subr.mxu0 0.0
  %2680 = vmatpush1.msra.mxu0 0.0
  %2681 = vmatprep.subr.mxu0 0.0
  %2682 = vmatpush1.msra.mxu0 0.0
  %2683 = vmatprep.subr.mxu0 0.0
  %2684 = vmatpush1.msra.mxu0 0.0
  %2685 = vmatprep.subr.mxu0 0.0
  %2686 = vmatpush1.msra.mxu0 0.0
  %2687 = vmatprep.subr.mxu0 0.0
  %2688 = vmatpush1.msra.mxu0 0.0
  %2689 = vmatprep.subr.mxu0 0.0
  %2690 = vmatpush1.msra.mxu0 0.0
  %2691 = vmatprep.subr.mxu0 0.0
  %2692 = vmatpush1.msra.mxu0 0.0
  %2693 = vmatprep.subr.mxu0 0.0
  %2694 = vmatpush1.msra.mxu0 0.0
  %2695 = vmatprep.subr.mxu0 0.0
  %2696 = vmatpush1.msra.mxu0 0.0
  %2697 = vmatprep.subr.mxu0 0.0
  %2698 = vmatpush1.msra.mxu0 0.0
  %2699 = vmatprep.subr.mxu0 0.0
  %2700 = vmatpush1.msra.mxu0 0.0
  %2701 = vmatprep.subr.mxu0 0.0
  %2702 = vmatpush1.msra.mxu0 0.0
  %2703 = vmatprep.mubr.f32.mxu0 0.0
  %2704 = vmatmul.mubr.f32.gmra.mrb[0].mxu0 %v2634
  %v2705 = vpop.f32.mrb[0].mxu0
  %v2706 = vadd.f32 0.0, %v2705
  %v2707 = vpop.f32.mrb[0].mxu0
  %2708 = vmatprep.mubr.f32.mxu0 0.0
  %2709 = vmatmul.mubr.f32.gmra.mrb[0].mxu0 %v2637
  %v2710 = vpop.f32.mrb[0].mxu0
  %v2711 = vadd.f32 0.0, %v2710
  %v2712 = vpop.f32.mrb[0].mxu0
  %2713 = vdwg.mxu0
  %v2715 = vsel %vm110, %v1708, 0
  %v2718 = vsel %vm110, %v1710, 0
  %2720 = vmatprep.subr.mxu0 0.0
  %2721 = vmatpush1.msra.mxu0 %v100
  %2722 = vmatprep.subr.mxu0 0.0
  %2723 = vmatpush1.msra.mxu0 %v101
  %2724 = vmatprep.subr.mxu0 0.0
  %2725 = vmatpush1.msra.mxu0 0.0
  %2726 = vmatprep.subr.mxu0 0.0
  %2727 = vmatpush1.msra.mxu0 0.0
  %2728 = vmatprep.subr.mxu0 0.0
  %2729 = vmatpush1.msra.mxu0 0.0
  %2730 = vmatprep.subr.mxu0 0.0
  %2731 = vmatpush1.msra.mxu0 0.0
  %2732 = vmatprep.subr.mxu0 0.0
  %2733 = vmatpush1.msra.mxu0 0.0
  %2734 = vmatprep.subr.mxu0 0.0
  %2735 = vmatpush1.msra.mxu0 0.0
  %2736 = vmatprep.subr.mxu0 0.0
  %2737 = vmatpush1.msra.mxu0 0.0
  %2738 = vmatprep.subr.mxu0 0.0
  %2739 = vmatpush1.msra.mxu0 0.0
  %2740 = vmatprep.subr.mxu0 0.0
  %2741 = vmatpush1.msra.mxu0 0.0
  %2742 = vmatprep.subr.mxu0 0.0
  %2743 = vmatpush1.msra.mxu0 0.0
  %2744 = vmatprep.subr.mxu0 0.0
  %2745 = vmatpush1.msra.mxu0 0.0
  %2746 = vmatprep.subr.mxu0 0.0
  %2747 = vmatpush1.msra.mxu0 0.0
  %2748 = vmatprep.subr.mxu0 0.0
  %2749 = vmatpush1.msra.mxu0 0.0
  %2750 = vmatprep.subr.mxu0 0.0
  %2751 = vmatpush1.msra.mxu0 0.0
  %2752 = vmatprep.subr.mxu0 0.0
  %2753 = vmatpush1.msra.mxu0 0.0
  %2754 = vmatprep.subr.mxu0 0.0
  %2755 = vmatpush1.msra.mxu0 0.0
  %2756 = vmatprep.subr.mxu0 0.0
  %2757 = vmatpush1.msra.mxu0 0.0
  %2758 = vmatprep.subr.mxu0 0.0
  %2759 = vmatpush1.msra.mxu0 0.0
  %2760 = vmatprep.subr.mxu0 0.0
  %2761 = vmatpush1.msra.mxu0 0.0
  %2762 = vmatprep.subr.mxu0 0.0
  %2763 = vmatpush1.msra.mxu0 0.0
  %2764 = vmatprep.subr.mxu0 0.0
  %2765 = vmatpush1.msra.mxu0 0.0
  %2766 = vmatprep.subr.mxu0 0.0
  %2767 = vmatpush1.msra.mxu0 0.0
  %2768 = vmatprep.subr.mxu0 0.0
  %2769 = vmatpush1.msra.mxu0 0.0
  %2770 = vmatprep.subr.mxu0 0.0
  %2771 = vmatpush1.msra.mxu0 0.0
  %2772 = vmatprep.subr.mxu0 0.0
  %2773 = vmatpush1.msra.mxu0 0.0
  %2774 = vmatprep.subr.mxu0 0.0
  %2775 = vmatpush1.msra.mxu0 0.0
  %2776 = vmatprep.subr.mxu0 0.0
  %2777 = vmatpush1.msra.mxu0 0.0
  %2778 = vmatprep.subr.mxu0 0.0
  %2779 = vmatpush1.msra.mxu0 0.0
  %2780 = vmatprep.subr.mxu0 0.0
  %2781 = vmatpush1.msra.mxu0 0.0
  %2782 = vmatprep.subr.mxu0 0.0
  %2783 = vmatpush1.msra.mxu0 0.0
  %2784 = vmatprep.mubr.f32.mxu0 0.0
  %2785 = vmatmul.mubr.f32.gmra.mrb[0].mxu0 %v2715
  %v2786 = vpop.f32.mrb[0].mxu0
  %v2787 = vadd.f32 0.0, %v2786
  %v2788 = vpop.f32.mrb[0].mxu0
  %2789 = vmatprep.mubr.f32.mxu0 0.0
  %2790 = vmatmul.mubr.f32.gmra.mrb[0].mxu0 %v2718
  %v2791 = vpop.f32.mrb[0].mxu0
  %v2792 = vadd.f32 0.0, %v2791
  %v2793 = vpop.f32.mrb[0].mxu0
  %2794 = vdwg.mxu0
  %v2796 = vsel %vm110, %v1712, 0
  %v2799 = vsel %vm110, %v1714, 0
  %2801 = vmatprep.subr.mxu0 0.0
  %2802 = vmatpush1.msra.mxu0 %v102
  %2803 = vmatprep.subr.mxu0 0.0
  %2804 = vmatpush1.msra.mxu0 %v103
  %2805 = vmatprep.subr.mxu0 0.0
  %2806 = vmatpush1.msra.mxu0 0.0
  %2807 = vmatprep.subr.mxu0 0.0
  %2808 = vmatpush1.msra.mxu0 0.0
  %2809 = vmatprep.subr.mxu0 0.0
  %2810 = vmatpush1.msra.mxu0 0.0
  %2811 = vmatprep.subr.mxu0 0.0
  %2812 = vmatpush1.msra.mxu0 0.0
  %2813 = vmatprep.subr.mxu0 0.0
  %2814 = vmatpush1.msra.mxu0 0.0
  %2815 = vmatprep.subr.mxu0 0.0
  %2816 = vmatpush1.msra.mxu0 0.0
  %2817 = vmatprep.subr.mxu0 0.0
  %2818 = vmatpush1.msra.mxu0 0.0
  %2819 = vmatprep.subr.mxu0 0.0
  %2820 = vmatpush1.msra.mxu0 0.0
  %2821 = vmatprep.subr.mxu0 0.0
  %2822 = vmatpush1.msra.mxu0 0.0
  %2823 = vmatprep.subr.mxu0 0.0
  %2824 = vmatpush1.msra.mxu0 0.0
  %2825 = vmatprep.subr.mxu0 0.0
  %2826 = vmatpush1.msra.mxu0 0.0
  %2827 = vmatprep.subr.mxu0 0.0
  %2828 = vmatpush1.msra.mxu0 0.0
  %2829 = vmatprep.subr.mxu0 0.0
  %2830 = vmatpush1.msra.mxu0 0.0
  %2831 = vmatprep.subr.mxu0 0.0
  %2832 = vmatpush1.msra.mxu0 0.0
  %2833 = vmatprep.subr.mxu0 0.0
  %2834 = vmatpush1.msra.mxu0 0.0
  %2835 = vmatprep.subr.mxu0 0.0
  %2836 = vmatpush1.msra.mxu0 0.0
  %2837 = vmatprep.subr.mxu0 0.0
  %2838 = vmatpush1.msra.mxu0 0.0
  %2839 = vmatprep.subr.mxu0 0.0
  %2840 = vmatpush1.msra.mxu0 0.0
  %2841 = vmatprep.subr.mxu0 0.0
  %2842 = vmatpush1.msra.mxu0 0.0
  %2843 = vmatprep.subr.mxu0 0.0
  %2844 = vmatpush1.msra.mxu0 0.0
  %2845 = vmatprep.subr.mxu0 0.0
  %2846 = vmatpush1.msra.mxu0 0.0
  %2847 = vmatprep.subr.mxu0 0.0
  %2848 = vmatpush1.msra.mxu0 0.0
  %2849 = vmatprep.subr.mxu0 0.0
  %2850 = vmatpush1.msra.mxu0 0.0
  %2851 = vmatprep.subr.mxu0 0.0
  %2852 = vmatpush1.msra.mxu0 0.0
  %2853 = vmatprep.subr.mxu0 0.0
  %2854 = vmatpush1.msra.mxu0 0.0
  %2855 = vmatprep.subr.mxu0 0.0
  %2856 = vmatpush1.msra.mxu0 0.0
  %2857 = vmatprep.subr.mxu0 0.0
  %2858 = vmatpush1.msra.mxu0 0.0
  %2859 = vmatprep.subr.mxu0 0.0
  %2860 = vmatpush1.msra.mxu0 0.0
  %2861 = vmatprep.subr.mxu0 0.0
  %2862 = vmatpush1.msra.mxu0 0.0
  %2863 = vmatprep.subr.mxu0 0.0
  %2864 = vmatpush1.msra.mxu0 0.0
  %2865 = vmatprep.mubr.f32.mxu0 0.0
  %2866 = vmatmul.mubr.f32.gmra.mrb[0].mxu0 %v2796
  %v2867 = vpop.f32.mrb[0].mxu0
  %v2868 = vadd.f32 0.0, %v2867
  %v2869 = vpop.f32.mrb[0].mxu0
  %2870 = vmatprep.mubr.f32.mxu0 0.0
  %2871 = vmatmul.mubr.f32.gmra.mrb[0].mxu0 %v2799
  %v2872 = vpop.f32.mrb[0].mxu0
  %v2873 = vadd.f32 0.0, %v2872
  %v2874 = vpop.f32.mrb[0].mxu0
  %2875 = vdwg.mxu0
  %v2877 = vsel %vm110, %v1716, 0
  %v2880 = vsel %vm110, %v1718, 0
  %2882 = vmatprep.subr.mxu0 0.0
  %2883 = vmatpush1.msra.mxu0 %v104
  %2884 = vmatprep.subr.mxu0 0.0
  %2885 = vmatpush1.msra.mxu0 %v105
  %2886 = vmatprep.subr.mxu0 0.0
  %2887 = vmatpush1.msra.mxu0 0.0
  %2888 = vmatprep.subr.mxu0 0.0
  %2889 = vmatpush1.msra.mxu0 0.0
  %2890 = vmatprep.subr.mxu0 0.0
  %2891 = vmatpush1.msra.mxu0 0.0
  %2892 = vmatprep.subr.mxu0 0.0
  %2893 = vmatpush1.msra.mxu0 0.0
  %2894 = vmatprep.subr.mxu0 0.0
  %2895 = vmatpush1.msra.mxu0 0.0
  %2896 = vmatprep.subr.mxu0 0.0
  %2897 = vmatpush1.msra.mxu0 0.0
  %2898 = vmatprep.subr.mxu0 0.0
  %2899 = vmatpush1.msra.mxu0 0.0
  %2900 = vmatprep.subr.mxu0 0.0
  %2901 = vmatpush1.msra.mxu0 0.0
  %2902 = vmatprep.subr.mxu0 0.0
  %2903 = vmatpush1.msra.mxu0 0.0
  %2904 = vmatprep.subr.mxu0 0.0
  %2905 = vmatpush1.msra.mxu0 0.0
  %2906 = vmatprep.subr.mxu0 0.0
  %2907 = vmatpush1.msra.mxu0 0.0
  %2908 = vmatprep.subr.mxu0 0.0
  %2909 = vmatpush1.msra.mxu0 0.0
  %2910 = vmatprep.subr.mxu0 0.0
  %2911 = vmatpush1.msra.mxu0 0.0
  %2912 = vmatprep.subr.mxu0 0.0
  %2913 = vmatpush1.msra.mxu0 0.0
  %2914 = vmatprep.subr.mxu0 0.0
  %2915 = vmatpush1.msra.mxu0 0.0
  %2916 = vmatprep.subr.mxu0 0.0
  %2917 = vmatpush1.msra.mxu0 0.0
  %2918 = vmatprep.subr.mxu0 0.0
  %2919 = vmatpush1.msra.mxu0 0.0
  %2920 = vmatprep.subr.mxu0 0.0
  %2921 = vmatpush1.msra.mxu0 0.0
  %2922 = vmatprep.subr.mxu0 0.0
  %2923 = vmatpush1.msra.mxu0 0.0
  %2924 = vmatprep.subr.mxu0 0.0
  %2925 = vmatpush1.msra.mxu0 0.0
  %2926 = vmatprep.subr.mxu0 0.0
  %2927 = vmatpush1.msra.mxu0 0.0
  %2928 = vmatprep.subr.mxu0 0.0
  %2929 = vmatpush1.msra.mxu0 0.0
  %2930 = vmatprep.subr.mxu0 0.0
  %2931 = vmatpush1.msra.mxu0 0.0
  %2932 = vmatprep.subr.mxu0 0.0
  %2933 = vmatpush1.msra.mxu0 0.0
  %2934 = vmatprep.subr.mxu0 0.0
  %2935 = vmatpush1.msra.mxu0 0.0
  %2936 = vmatprep.subr.mxu0 0.0
  %2937 = vmatpush1.msra.mxu0 0.0
  %2938 = vmatprep.subr.mxu0 0.0
  %2939 = vmatpush1.msra.mxu0 0.0
  %2940 = vmatprep.subr.mxu0 0.0
  %2941 = vmatpush1.msra.mxu0 0.0
  %2942 = vmatprep.subr.mxu0 0.0
  %2943 = vmatpush1.msra.mxu0 0.0
  %2944 = vmatprep.subr.mxu0 0.0
  %2945 = vmatpush1.msra.mxu0 0.0
  %2946 = vmatprep.mubr.f32.mxu0 0.0
  %2947 = vmatmul.mubr.f32.gmra.mrb[0].mxu0 %v2877
  %v2948 = vpop.f32.mrb[0].mxu0
  %v2949 = vadd.f32 0.0, %v2948
  %v2950 = vpop.f32.mrb[0].mxu0
  %2951 = vmatprep.mubr.f32.mxu0 0.0
  %2952 = vmatmul.mubr.f32.gmra.mrb[0].mxu0 %v2880
  %v2953 = vpop.f32.mrb[0].mxu0
  %v2954 = vadd.f32 0.0, %v2953
  %v2955 = vpop.f32.mrb[0].mxu0
  %2956 = vdwg.mxu0
  %v2958 = vsel %vm110, %v1720, 0
  %v2961 = vsel %vm110, %v1722, 0
  %2963 = vmatprep.subr.mxu0 0.0
  %2964 = vmatpush1.msra.mxu0 %v106
  %2965 = vmatprep.subr.mxu0 0.0
  %2966 = vmatpush1.msra.mxu0 %v107
  %2967 = vmatprep.subr.mxu0 0.0
  %2968 = vmatpush1.msra.mxu0 0.0
  %2969 = vmatprep.subr.mxu0 0.0
  %2970 = vmatpush1.msra.mxu0 0.0
  %2971 = vmatprep.subr.mxu0 0.0
  %2972 = vmatpush1.msra.mxu0 0.0
  %2973 = vmatprep.subr.mxu0 0.0
  %2974 = vmatpush1.msra.mxu0 0.0
  %2975 = vmatprep.subr.mxu0 0.0
  %2976 = vmatpush1.msra.mxu0 0.0
  %2977 = vmatprep.subr.mxu0 0.0
  %2978 = vmatpush1.msra.mxu0 0.0
  %2979 = vmatprep.subr.mxu0 0.0
  %2980 = vmatpush1.msra.mxu0 0.0
  %2981 = vmatprep.subr.mxu0 0.0
  %2982 = vmatpush1.msra.mxu0 0.0
  %2983 = vmatprep.subr.mxu0 0.0
  %2984 = vmatpush1.msra.mxu0 0.0
  %2985 = vmatprep.subr.mxu0 0.0
  %2986 = vmatpush1.msra.mxu0 0.0
  %2987 = vmatprep.subr.mxu0 0.0
  %2988 = vmatpush1.msra.mxu0 0.0
  %2989 = vmatprep.subr.mxu0 0.0
  %2990 = vmatpush1.msra.mxu0 0.0
  %2991 = vmatprep.subr.mxu0 0.0
  %2992 = vmatpush1.msra.mxu0 0.0
  %2993 = vmatprep.subr.mxu0 0.0
  %2994 = vmatpush1.msra.mxu0 0.0
  %2995 = vmatprep.subr.mxu0 0.0
  %2996 = vmatpush1.msra.mxu0 0.0
  %2997 = vmatprep.subr.mxu0 0.0
  %2998 = vmatpush1.msra.mxu0 0.0
  %2999 = vmatprep.subr.mxu0 0.0
  %3000 = vmatpush1.msra.mxu0 0.0
  %3001 = vmatprep.subr.mxu0 0.0
  %3002 = vmatpush1.msra.mxu0 0.0
  %3003 = vmatprep.subr.mxu0 0.0
  %3004 = vmatpush1.msra.mxu0 0.0
  %3005 = vmatprep.subr.mxu0 0.0
  %3006 = vmatpush1.msra.mxu0 0.0
  %3007 = vmatprep.subr.mxu0 0.0
  %3008 = vmatpush1.msra.mxu0 0.0
  %3009 = vmatprep.subr.mxu0 0.0
  %3010 = vmatpush1.msra.mxu0 0.0
  %3011 = vmatprep.subr.mxu0 0.0
  %3012 = vmatpush1.msra.mxu0 0.0
  %3013 = vmatprep.subr.mxu0 0.0
  %3014 = vmatpush1.msra.mxu0 0.0
  %3015 = vmatprep.subr.mxu0 0.0
  %3016 = vmatpush1.msra.mxu0 0.0
  %3017 = vmatprep.subr.mxu0 0.0
  %3018 = vmatpush1.msra.mxu0 0.0
  %3019 = vmatprep.subr.mxu0 0.0
  %3020 = vmatpush1.msra.mxu0 0.0
  %3021 = vmatprep.subr.mxu0 0.0
  %3022 = vmatpush1.msra.mxu0 0.0
  %3023 = vmatprep.subr.mxu0 0.0
  %3024 = vmatpush1.msra.mxu0 0.0
  %3025 = vmatprep.subr.mxu0 0.0
  %3026 = vmatpush1.msra.mxu0 0.0
  %3027 = vmatprep.mubr.f32.mxu0 0.0
  %3028 = vmatmul.mubr.f32.gmra.mrb[0].mxu0 %v2958
  %v3029 = vpop.f32.mrb[0].mxu0
  %v3030 = vadd.f32 0.0, %v3029
  %v3031 = vpop.f32.mrb[0].mxu0
  %3032 = vmatprep.mubr.f32.mxu0 0.0
  %3033 = vmatmul.mubr.f32.gmra.mrb[0].mxu0 %v2961
  %v3034 = vpop.f32.mrb[0].mxu0
  %v3035 = vadd.f32 0.0, %v3034
  %v3036 = vpop.f32.mrb[0].mxu0
  %3037 = vdwg.mxu0
  %v3039 = vsel %vm110, %v1724, 0
  %v3042 = vsel %vm110, %v1726, 0
  %3044 = vmatprep.subr.mxu0 0.0
  %3045 = vmatpush1.msra.mxu0 %v108
  %3046 = vmatprep.subr.mxu0 0.0
  %3047 = vmatpush1.msra.mxu0 %v109
  %3048 = vmatprep.subr.mxu0 0.0
  %3049 = vmatpush1.msra.mxu0 0.0
  %3050 = vmatprep.subr.mxu0 0.0
  %3051 = vmatpush1.msra.mxu0 0.0
  %3052 = vmatprep.subr.mxu0 0.0
  %3053 = vmatpush1.msra.mxu0 0.0
  %3054 = vmatprep.subr.mxu0 0.0
  %3055 = vmatpush1.msra.mxu0 0.0
  %3056 = vmatprep.subr.mxu0 0.0
  %3057 = vmatpush1.msra.mxu0 0.0
  %3058 = vmatprep.subr.mxu0 0.0
  %3059 = vmatpush1.msra.mxu0 0.0
  %3060 = vmatprep.subr.mxu0 0.0
  %3061 = vmatpush1.msra.mxu0 0.0
  %3062 = vmatprep.subr.mxu0 0.0
  %3063 = vmatpush1.msra.mxu0 0.0
  %3064 = vmatprep.subr.mxu0 0.0
  %3065 = vmatpush1.msra.mxu0 0.0
  %3066 = vmatprep.subr.mxu0 0.0
  %3067 = vmatpush1.msra.mxu0 0.0
  %3068 = vmatprep.subr.mxu0 0.0
  %3069 = vmatpush1.msra.mxu0 0.0
  %3070 = vmatprep.subr.mxu0 0.0
  %3071 = vmatpush1.msra.mxu0 0.0
  %3072 = vmatprep.subr.mxu0 0.0
  %3073 = vmatpush1.msra.mxu0 0.0
  %3074 = vmatprep.subr.mxu0 0.0
  %3075 = vmatpush1.msra.mxu0 0.0
  %3076 = vmatprep.subr.mxu0 0.0
  %3077 = vmatpush1.msra.mxu0 0.0
  %3078 = vmatprep.subr.mxu0 0.0
  %3079 = vmatpush1.msra.mxu0 0.0
  %3080 = vmatprep.subr.mxu0 0.0
  %3081 = vmatpush1.msra.mxu0 0.0
  %3082 = vmatprep.subr.mxu0 0.0
  %3083 = vmatpush1.msra.mxu0 0.0
  %3084 = vmatprep.subr.mxu0 0.0
  %3085 = vmatpush1.msra.mxu0 0.0
  %3086 = vmatprep.subr.mxu0 0.0
  %3087 = vmatpush1.msra.mxu0 0.0
  %3088 = vmatprep.subr.mxu0 0.0
  %3089 = vmatpush1.msra.mxu0 0.0
  %3090 = vmatprep.subr.mxu0 0.0
  %3091 = vmatpush1.msra.mxu0 0.0
  %3092 = vmatprep.subr.mxu0 0.0
  %3093 = vmatpush1.msra.mxu0 0.0
  %3094 = vmatprep.subr.mxu0 0.0
  %3095 = vmatpush1.msra.mxu0 0.0
  %3096 = vmatprep.subr.mxu0 0.0
  %3097 = vmatpush1.msra.mxu0 0.0
  %3098 = vmatprep.subr.mxu0 0.0
  %3099 = vmatpush1.msra.mxu0 0.0
  %3100 = vmatprep.subr.mxu0 0.0
  %3101 = vmatpush1.msra.mxu0 0.0
  %3102 = vmatprep.subr.mxu0 0.0
  %3103 = vmatpush1.msra.mxu0 0.0
  %3104 = vmatprep.subr.mxu0 0.0
  %3105 = vmatpush1.msra.mxu0 0.0
  %3106 = vmatprep.subr.mxu0 0.0
  %3107 = vmatpush1.msra.mxu0 0.0
  %3108 = vmatprep.mubr.f32.mxu0 0.0
  %3109 = vmatmul.mubr.f32.gmra.mrb[0].mxu0 %v3039
  %v3110 = vpop.f32.mrb[0].mxu0
  %v3111 = vadd.f32 0.0, %v3110
  %v3112 = vpop.f32.mrb[0].mxu0
  %3113 = vmatprep.mubr.f32.mxu0 0.0
  %3114 = vmatmul.mubr.f32.gmra.mrb[0].mxu0 %v3042
  %v3115 = vpop.f32.mrb[0].mxu0
  %v3116 = vadd.f32 0.0, %v3115
  %v3117 = vpop.f32.mrb[0].mxu0
  %3118 = vdwg.mxu0
  %v3119 = vrcp.pop %v1729
  %v3120 = vrcp.pop %v1732
  %v3121 = vrcp.pop %v1735
  %v3122 = vrcp.pop %v1738
  %v3123 = vrcp.pop %v1741
  %v3124 = vrcp.pop %v1744
  %v3125 = vrcp.pop %v1747
  %v3126 = vrcp.pop %v1750
  %v3127 = vrcp.pop %v1753
  %v3128 = vrcp.pop %v1756
  %v3129 = vrcp.pop %v1759
  %v3130 = vrcp.pop %v1762
  %v3131 = vrcp.pop %v1765
  %v3132 = vrcp.pop %v1768
  %v3133 = vrcp.pop %v1771
  %v3134 = vrcp.pop %v1774
  %v3135 = vrcp.pop %v1777
  %v3136 = vrcp.pop %v1780
  %v3137 = vrcp.pop %v1783
  %v3138 = vrcp.pop %v1786
  %v3139 = vrcp.pop %v1789
  %v3140 = vrcp.pop %v1792
  %v3141 = vrcp.pop %v1795
  %v3142 = vrcp.pop %v1798
  %v3143 = vrcp.pop %v1801
  %v3144 = vrcp.pop %v1804
  %v3145 = vrcp.pop %v1807
  %v3146 = vrcp.pop %v1810
  %v3147 = vrcp.pop %v1813
  %v3148 = vrcp.pop %v1816
  %v3149 = vrcp.pop %v1819
  %v3150 = vrcp.pop %v1822
  %v3151 = vmul.f32 %v1896, %v3119
  %v3152 = vmul.f32 %v1901, %v3120
  %v3153 = vmul.f32 %v1977, %v3121
  %v3154 = vmul.f32 %v1982, %v3122
  %v3155 = vmul.f32 %v2058, %v3123
  %v3156 = vmul.f32 %v2063, %v3124
  %v3157 = vmul.f32 %v2139, %v3125
  %v3158 = vmul.f32 %v2144, %v3126
  %v3159 = vmul.f32 %v2220, %v3127
  %v3160 = vmul.f32 %v2225, %v3128
  %v3161 = vmul.f32 %v2301, %v3129
  %v3162 = vmul.f32 %v2306, %v3130
  %v3163 = vmul.f32 %v2382, %v3131
  %v3164 = vmul.f32 %v2387, %v3132
  %v3165 = vmul.f32 %v2463, %v3133
  %v3166 = vmul.f32 %v2468, %v3134
  %v3167 = vmul.f32 %v2544, %v3135
  %v3168 = vmul.f32 %v2549, %v3136
  %v3169 = vmul.f32 %v2625, %v3137
  %v3170 = vmul.f32 %v2630, %v3138
  %v3171 = vmul.f32 %v2706, %v3139
  %v3172 = vmul.f32 %v2711, %v3140
  %v3173 = vmul.f32 %v2787, %v3141
  %v3174 = vmul.f32 %v2792, %v3142
  %v3175 = vmul.f32 %v2868, %v3143
  %v3176 = vmul.f32 %v2873, %v3144
  %v3177 = vmul.f32 %v2949, %v3145
  %v3178 = vmul.f32 %v2954, %v3146
  %v3179 = vmul.f32 %v3030, %v3147
  %v3180 = vmul.f32 %v3035, %v3148
  %v3181 = vmul.f32 %v3111, %v3149
  %v3182 = vmul.f32 %v3116, %v3150
  %3183 = vst.msk [vmem:[%s3] sm:$0xff] %vm110, %v3151
  %3184 = vst.msk [vmem:[%s3 + $0x8] sm:$0xff] %vm110, %v3152
  %3185 = vst.msk [vmem:[%s3 + $0x10] sm:$0xff] %vm110, %v3153
  %3186 = vst.msk [vmem:[%s3 + $0x18] sm:$0xff] %vm110, %v3154
  %3187 = vst.msk [vmem:[%s3 + $0x20] sm:$0xff] %vm110, %v3155
  %3188 = vst.msk [vmem:[%s3 + $0x28] sm:$0xff] %vm110, %v3156
  %3189 = vst.msk [vmem:[%s3 + $0x30] sm:$0xff] %vm110, %v3157
  %3190 = vst.msk [vmem:[%s3 + $0x38] sm:$0xff] %vm110, %v3158
  %3191 = vst.msk [vmem:[%s3 + $0x40] sm:$0xff] %vm110, %v3159
  %3192 = vst.msk [vmem:[%s3 + $0x48] sm:$0xff] %vm110, %v3160
  %3193 = vst.msk [vmem:[%s3 + $0x50] sm:$0xff] %vm110, %v3161
  %3194 = vst.msk [vmem:[%s3 + $0x58] sm:$0xff] %vm110, %v3162
  %3195 = vst.msk [vmem:[%s3 + $0x60] sm:$0xff] %vm110, %v3163
  %3196 = vst.msk [vmem:[%s3 + $0x68] sm:$0xff] %vm110, %v3164
  %3197 = vst.msk [vmem:[%s3 + $0x70] sm:$0xff] %vm110, %v3165
  %3198 = vst.msk [vmem:[%s3 + $0x78] sm:$0xff] %vm110, %v3166
  %3199 = vst.msk [vmem:[%s3 + $0x80] sm:$0xff] %vm110, %v3167
  %3200 = vst.msk [vmem:[%s3 + $0x88] sm:$0xff] %vm110, %v3168
  %3201 = vst.msk [vmem:[%s3 + $0x90] sm:$0xff] %vm110, %v3169
  %3202 = vst.msk [vmem:[%s3 + $0x98] sm:$0xff] %vm110, %v3170
  %3203 = vst.msk [vmem:[%s3 + $0xa0] sm:$0xff] %vm110, %v3171
  %3204 = vst.msk [vmem:[%s3 + $0xa8] sm:$0xff] %vm110, %v3172
  %3205 = vst.msk [vmem:[%s3 + $0xb0] sm:$0xff] %vm110, %v3173
  %3206 = vst.msk [vmem:[%s3 + $0xb8] sm:$0xff] %vm110, %v3174
  %3207 = vst.msk [vmem:[%s3 + $0xc0] sm:$0xff] %vm110, %v3175
  %3208 = vst.msk [vmem:[%s3 + $0xc8] sm:$0xff] %vm110, %v3176
  %3209 = vst.msk [vmem:[%s3 + $0xd0] sm:$0xff] %vm110, %v3177
  %3210 = vst.msk [vmem:[%s3 + $0xd8] sm:$0xff] %vm110, %v3178
  %3211 = vst.msk [vmem:[%s3 + $0xe0] sm:$0xff] %vm110, %v3179
  %3212 = vst.msk [vmem:[%s3 + $0xe8] sm:$0xff] %vm110, %v3180
  %3213 = vst.msk [vmem:[%s3 + $0xf0] sm:$0xff] %vm110, %v3181
  %3214 = vst.msk [vmem:[%s3 + $0xf8] sm:$0xff] %vm110, %v3182
  // Predicated region
  $region14: #{ak_bert_forward.16} parent=0 // pred_check
    _
  $region15: #{ak_bert_forward.16} parent=0 // pred_check_branch
    %3216 = sbr.rel (0) target = $region17
  $region16: #{ak_bert_forward.16} parent=0 // pred_region
    _
  $region17: #{ak_bert_forward.16} parent=0 // pred_fallthru
    _
  // Predicated region
  $region18: #{ak_bert_forward.16} parent=0 // pred_check
    _
  $region19: #{ak_bert_forward.16} parent=0 // pred_check_branch
    %3218 = sbr.rel (0) target = $region21
  $region20: #{ak_bert_forward.16} parent=0 // pred_region
    _
  $region21: #{ak_bert_forward.16} parent=0 // pred_fallthru
    _

// kernel: ak_bert_forward.13
$region0: #{ak_bert_forward.13}
  #allocation0 [shape = 'u32[]', space=smem, size = 0x4, offset = 0x4, fixed_abs, tag = 'smem constant byte address 0x4 - core index']
  #allocation1 [shape = 'u32[144,128]{1,0:T(1,128)}', space=vmem, size = 0x12000, scoped, tag = 'internal scratch']
  %s0 = inlined_call_operand.vmem [shape: f32[32,128], index: 0, kind: input, shape index: {}]
  %s1 = inlined_call_operand.vmem [shape: f32[32,128], index: 1, kind: input, shape index: {}]
  %s2 = inlined_call_operand.vmem [shape: f32[1,128], index: 2, kind: input, shape index: {}]
  %s3 = inlined_call_operand.vmem [shape: f32[1,128], index: 3, kind: input, shape index: {}]
  %s4 = inlined_call_operand.vmem [shape: f32[32,128], index: 4, kind: output, shape index: {}]
  %s5 = sld [smem:[#allocation0]]
  $region26: #{ak_bert_forward.13} parent=0
    _
  %s7 = ssub.s32 1, %s5
  %s8 = scalar_select 0, %s7, %s5
  // Predicated region
  $region2: #{ak_bert_forward.13} parent=0 // pred_check
    _
  $region3: #{ak_bert_forward.13} parent=0 // pred_check_branch
    %10 = sbr.rel (0) target = $region5
  $region4: #{ak_bert_forward.13} parent=0 // pred_region
    _
  $region5: #{ak_bert_forward.13} parent=0 // pred_fallthru
    _
  // Predicated region
  $region6: #{ak_bert_forward.13} parent=0 // pred_check
    _
  $region7: #{ak_bert_forward.13} parent=0 // pred_check_branch
    %12 = sbr.rel (0) target = $region9
  $region8: #{ak_bert_forward.13} parent=0 // pred_region
    _
  $region9: #{ak_bert_forward.13} parent=0 // pred_fallthru
    _
  // Predicated region
  $region10: #{ak_bert_forward.13} parent=0 // pred_check
    _
  $region11: #{ak_bert_forward.13} parent=0 // pred_check_branch
    %14 = sbr.rel (0) target = $region13
  $region12: #{ak_bert_forward.13} parent=0 // pred_region
    _
  $region13: #{ak_bert_forward.13} parent=0 // pred_fallthru
    _
  // Predicated region
  $region14: #{ak_bert_forward.13} parent=0 // pred_check
    _
  $region15: #{ak_bert_forward.13} parent=0 // pred_check_branch
    %16 = sbr.rel (0) target = $region17
  $region16: #{ak_bert_forward.13} parent=0 // pred_region
    _
  $region17: #{ak_bert_forward.13} parent=0 // pred_fallthru
    _
  %v17 = vld [vmem:[%s0] sm:$0xff]
  %v18 = vld [vmem:[%s0 + $0x8] sm:$0xff]
  %v19 = vld [vmem:[%s0 + $0x10] sm:$0xff]
  %v20 = vld [vmem:[%s0 + $0x18] sm:$0xff]
  %v21 = vld [vmem:[%s1] sm:$0xff]
  %v22 = vld [vmem:[%s1 + $0x8] sm:$0xff]
  %v23 = vld [vmem:[%s1 + $0x10] sm:$0xff]
  %v24 = vld [vmem:[%s1 + $0x18] sm:$0xff]
  %v25 = vadd.f32 %v17, %v21
  %v26 = vadd.f32 %v18, %v22
  %v27 = vadd.f32 %v19, %v23
  %v28 = vadd.f32 %v20, %v24
  %v29 = vld [vmem:[%s2] sm:$0x1]
  %v30 = vld [vmem:[%s3] sm:$0x1]
  %31 = vadd.xlane.f32.xlu0 %v25
  %v32 = vpop.xlane.xlu0 %31
  %33 = vadd.xlane.f32.xlu0 %v26
  %v34 = vpop.xlane.xlu0 %33
  %35 = vadd.xlane.f32.xlu0 %v27
  %v36 = vpop.xlane.xlu0 %35
  %37 = vadd.xlane.f32.xlu0 %v28
  %v38 = vpop.xlane.xlu0 %37
  %v39 = vrcp.pop 128.0
  %v40 = vmul.f32 %v32, %v39
  %v41 = vmul.f32 %v34, %v39
  %v42 = vmul.f32 %v36, %v39
  %v43 = vmul.f32 %v38, %v39
  %v44 = vsub.f32 %v25, %v40
  %v45 = vsub.f32 %v26, %v41
  %v46 = vsub.f32 %v27, %v42
  %v47 = vsub.f32 %v28, %v43
  %v48 = vmul.f32 %v44, %v44
  %v49 = vmul.f32 %v45, %v45
  %v50 = vmul.f32 %v46, %v46
  %v51 = vmul.f32 %v47, %v47
  %52 = vadd.xlane.f32.xlu0 %v48
  %v53 = vpop.xlane.xlu0 %52
  %54 = vadd.xlane.f32.xlu0 %v49
  %v55 = vpop.xlane.xlu0 %54
  %56 = vadd.xlane.f32.xlu0 %v50
  %v57 = vpop.xlane.xlu0 %56
  %58 = vadd.xlane.f32.xlu0 %v51
  %v59 = vpop.xlane.xlu0 %58
  %v60 = vmul.f32 %v53, %v39
  %v61 = vmul.f32 %v55, %v39
  %v62 = vmul.f32 %v57, %v39
  %v63 = vmul.f32 %v59, %v39
  %v64 = vadd.f32 %v60, 1e-12
  %v65 = vadd.f32 %v61, 1e-12
  %v66 = vadd.f32 %v62, 1e-12
  %v67 = vadd.f32 %v63, 1e-12
  %v68 = vrsqrt.pop %v64
  %v69 = vrsqrt.pop %v65
  %v70 = vrsqrt.pop %v66
  %v71 = vrsqrt.pop %v67
  %v72 = vmul.f32 %v44, %v68
  %v73 = vmul.f32 %v45, %v69
  %v74 = vmul.f32 %v46, %v70
  %v75 = vmul.f32 %v47, %v71
  %v77 = vlaneseq
  %v78 = vshrl.u32 %v77, 7
  %v79 = vsub.s32 0, %v78
  %v80 = vrot.slane %v29, %v79
  %v82 = vmul.f32 %v72, %v80
  %v83 = vmul.f32 %v73, %v80
  %v84 = vmul.f32 %v74, %v80
  %v85 = vmul.f32 %v75, %v80
  %v87 = vlaneseq
  %v88 = vshrl.u32 %v87, 7
  %v89 = vsub.s32 0, %v88
  %v90 = vrot.slane %v30, %v89
  %v92 = vadd.f32 %v82, %v90
  %v93 = vadd.f32 %v83, %v90
  %v94 = vadd.f32 %v84, %v90
  %v95 = vadd.f32 %v85, %v90
  %96 = vst [vmem:[%s4] sm:$0xff] %v92
  %97 = vst [vmem:[%s4 + $0x8] sm:$0xff] %v93
  %98 = vst [vmem:[%s4 + $0x10] sm:$0xff] %v94
  %99 = vst [vmem:[%s4 + $0x18] sm:$0xff] %v95
  // Predicated region
  $region18: #{ak_bert_forward.13} parent=0 // pred_check
    _
  $region19: #{ak_bert_forward.13} parent=0 // pred_check_branch
    %101 = sbr.rel (0) target = $region21
  $region20: #{ak_bert_forward.13} parent=0 // pred_region
    _
  $region21: #{ak_bert_forward.13} parent=0 // pred_fallthru
    _
  // Predicated region
  $region22: #{ak_bert_forward.13} parent=0 // pred_check
    _
  $region23: #{ak_bert_forward.13} parent=0 // pred_check_branch
    %103 = sbr.rel (0) target = $region25
  $region24: #{ak_bert_forward.13} parent=0 // pred_region
    _
  $region25: #{ak_bert_forward.13} parent=0 // pred_fallthru
    _

// kernel: ak_bert_forward.20
$region0: #{ak_bert_forward.20}
  #allocation0 [shape = 'u32[]', space=smem, size = 0x4, offset = 0x4, fixed_abs, tag = 'smem constant byte address 0x4 - core index']
  #allocation1 [shape = 'u32[144,128]{1,0:T(1,128)}', space=vmem, size = 0x12000, scoped, tag = 'internal scratch']
  #allocation2 [shape = 's32[1]{0}', space=sflag, size = 0x4, scoped, tag = 'scoped memory for ak_bert_forward.20']
  #allocation3 [shape = 'u8[1024]{0}', space=smem, size = 0x400, scoped, tag = 'prefetched SMEM operand 0']
  %s0 = inlined_call_operand.vmem [shape: s32[2,2], index: 0, kind: input, shape index: {}]
  %s1 = inlined_call_operand.vmem [shape: f32[2,16,128], index: 1, kind: input, shape index: {}]
  %s2 = inlined_call_operand.vmem [shape: f32[2,2,128], index: 2, kind: input, shape index: {}]
  %s3 = inlined_call_operand.vmem [shape: f32[2,16,128], index: 3, kind: output, shape index: {}]
  %s4 = sld [smem:[#allocation0]]
  $region41: #{ak_bert_forward.20} parent=0
    _
  %s6 = ssub.s32 1, %s4
  %s7 = scalar_select 0, %s6, %s4
  %s8 = sshll.u32 %s0, 4
  %s9 = int_to_ptr.vmem [resolvable:$true] %s8
  %11 = dma.vmem_to_smem %s9, 32, [#allocation3], [#allocation2]
  %12 = dma.done [#allocation2], 32
  %13 = sfence
  loop: start=0, step=1, limit=4
  $region2: #{ak_bert_forward.20} parent=0 // loop_pre_header
    _
  $region3: #{ak_bert_forward.20} parent=0 // loop_header
    %s15 = sphi 0, %s19
    %p16 = scmp.ge.s32.totalorder %s15, 4
    %s25 = sphi 0, %s27
    %s28 = sphi 0, %s25
    %s29 = sphi 0, %s28
    %s45 = sphi 0, %s29
    %s51 = sphi 0, %s53
    %s54 = sphi 0, %s51
    %s55 = sphi 0, %s54
    %s71 = sphi 0, %s55
    %s77 = sphi 0, %s79
    %s80 = sphi 0, %s77
    %s81 = sphi 0, %s80
    %s97 = sphi 0, %s81
  $region4: #{ak_bert_forward.20} parent=0 // loop_header_branch
    %18 = sbr.rel (%p16) target = $region8
  $region5: #{ak_bert_forward.20} parent=0 // loop_body
    %s20 = ssub.s32 %s15, 1
    %s21 = ssub.s32 %s15, 2
    %s22 = sadd.s32 %s15, 1
    %s23 = ssub.s32 %s15, %s22
    %p24 = scmp.eq.s32.totalorder %s23, 0
    %s26 = sadd.s32 %s25, 1
    %s27 = scalar_select %p24, %s25, %s26
    %p30 = pneg %p24
    %p31 = scmp.eq.s32.totalorder %s15, 1
    %p32 = por %p30, %p31
    %p33 = scmp.ne.s32.totalorder %s25, %s28
    %p34 = scmp.eq.s32.totalorder %s15, 0
    %p35 = por %p33, %p34
    %p36 = scmp.ne.s32.totalorder %s25, %s28
    %p37 = scmp.eq.s32.totalorder %s20, 1
    %p38 = por %p36, %p37
    %p39 = scmp.ne.s32.totalorder %s28, %s29
    %p40 = scmp.eq.s32.totalorder %s20, 0
    %p41 = por %p39, %p40
    %p42 = scmp.ne.s32.totalorder %s28, %s29
    %p43 = scmp.eq.s32.totalorder %s21, 1
    %p44 = por %p42, %p43
    %p46 = scmp.ne.s32.totalorder %s29, %s45
    %p47 = scmp.eq.s32.totalorder %s21, 0
    %p48 = por %p46, %p47
    %s49 = ssub.s32 %s15, %s22
    %p50 = scmp.eq.s32.totalorder %s49, 0
    %s52 = sadd.s32 %s51, 1
    %s53 = scalar_select %p50, %s51, %s52
    %p56 = pneg %p50
    %p57 = scmp.eq.s32.totalorder %s15, 1
    %p58 = por %p56, %p57
    %p59 = scmp.ne.s32.totalorder %s51, %s54
    %p60 = scmp.eq.s32.totalorder %s15, 0
    %p61 = por %p59, %p60
    %p62 = scmp.ne.s32.totalorder %s51, %s54
    %p63 = scmp.eq.s32.totalorder %s20, 1
    %p64 = por %p62, %p63
    %p65 = scmp.ne.s32.totalorder %s54, %s55
    %p66 = scmp.eq.s32.totalorder %s20, 0
    %p67 = por %p65, %p66
    %p68 = scmp.ne.s32.totalorder %s54, %s55
    %p69 = scmp.eq.s32.totalorder %s21, 1
    %p70 = por %p68, %p69
    %p72 = scmp.ne.s32.totalorder %s55, %s71
    %p73 = scmp.eq.s32.totalorder %s21, 0
    %p74 = por %p72, %p73
    %s75 = ssub.s32 %s15, %s22
    %p76 = scmp.eq.s32.totalorder %s75, 0
    %s78 = sadd.s32 %s77, 1
    %s79 = scalar_select %p76, %s77, %s78
    %p82 = pneg %p76
    %p83 = scmp.eq.s32.totalorder %s15, 1
    %p84 = por %p82, %p83
    %p85 = scmp.ne.s32.totalorder %s77, %s80
    %p86 = scmp.eq.s32.totalorder %s15, 0
    %p87 = por %p85, %p86
    %p88 = scmp.ne.s32.totalorder %s77, %s80
    %p89 = scmp.eq.s32.totalorder %s20, 1
    %p90 = por %p88, %p89
    %p91 = scmp.ne.s32.totalorder %s80, %s81
    %p92 = scmp.eq.s32.totalorder %s20, 0
    %p93 = por %p91, %p92
    %p94 = scmp.ne.s32.totalorder %s80, %s81
    %p95 = scmp.eq.s32.totalorder %s21, 1
    %p96 = por %p94, %p95
    %p98 = scmp.ne.s32.totalorder %s81, %s97
    %p99 = scmp.eq.s32.totalorder %s21, 0
    %p100 = por %p98, %p99
    %p101 = scmp.le.s32.totalorder 1, %s15
    %p102 = scmp.lt.s32.totalorder %s15, 3
    %p103 = pnand %p101, %p102
    %p104 = pneg %p103
    // Predicated region
    $region9: #{ak_bert_forward.20} parent=5 // pred_check
      _
    $region10: #{ak_bert_forward.20} parent=5 // pred_check_branch
      %106 = sbr.rel (%p103) target = $region12
    $region11: #{ak_bert_forward.20} parent=5 // pred_region
      %s107 = ssub.s32 %s15, 1
    $region12: #{ak_bert_forward.20} parent=5 // pred_fallthru
      _
    %p108 = scmp.lt.s32.totalorder %s15, 2
    // Predicated region
    $region13: #{ak_bert_forward.20} parent=5 // pred_check
      %p109 = pneg %p108
    $region14: #{ak_bert_forward.20} parent=5 // pred_check_branch
      %111 = sbr.rel (%p109) target = $region16
    $region15: #{ak_bert_forward.20} parent=5 // pred_region
      // Predicated region
      $region17: #{ak_bert_forward.20} parent=15 // pred_check
        %p112 = pneg %p35
      $region18: #{ak_bert_forward.20} parent=15 // pred_check_branch
        %114 = sbr.rel (%p112) target = $region20
      $region19: #{ak_bert_forward.20} parent=15 // pred_region
        %p115 = scmp.lt.s32.totalorder %s15, 1
        %s116 = scalar_select %p115, %s15, 1
        %s117 = smul.addr %s116, 2
        %s118 = smul.addr %s117, 8
        %s119 = scalar_lea.vmem %s1, %s118
      $region20: #{ak_bert_forward.20} parent=15 // pred_fallthru
        _
      // Predicated region
      $region21: #{ak_bert_forward.20} parent=15 // pred_check
        %p120 = pneg %p61
      $region22: #{ak_bert_forward.20} parent=15 // pred_check_branch
        %122 = sbr.rel (%p120) target = $region24
      $region23: #{ak_bert_forward.20} parent=15 // pred_region
        %p123 = scmp.lt.s32.totalorder %s15, 1
        %s124 = scalar_select %p123, %s15, 1
        %s125 = smul.addr %s124, 2
        %s126 = scalar_lea.vmem %s2, %s125
      $region24: #{ak_bert_forward.20} parent=15 // pred_fallthru
        _
    $region16: #{ak_bert_forward.20} parent=5 // pred_fallthru
      _
    %p127 = scmp.le.s32.totalorder 1, %s15
    %p128 = scmp.lt.s32.totalorder %s15, 3
    %p129 = pnand %p127, %p128
    %p130 = pneg %p129
    // Predicated region
    $region25: #{ak_bert_forward.20} parent=5 // pred_check
      _
    $region26: #{ak_bert_forward.20} parent=5 // pred_check_branch
      %132 = sbr.rel (%p129) target = $region28
    $region27: #{ak_bert_forward.20} parent=5 // pred_region
      %s133 = ssub.s32 %s15, 1
      %p134 = scmp.lt.s32.totalorder %s20, 1
      %s135 = scalar_select %p134, %s20, 1
      %s136 = smul.addr %s135, 2
      %s137 = smul.addr %s136, 8
      %s138 = scalar_lea.vmem %s1, %s137
      %p139 = pneg %p41
      %p140 = pneg %p38
      %p141 = scmp.lt.s32.totalorder %s20, 1
      %s142 = scalar_select %p141, %s20, 1
      %s143 = smul.addr %s142, 2
      %s144 = scalar_lea.vmem %s2, %s143
      %p145 = pneg %p67
      %p146 = pneg %p64
      %p147 = pneg %p93
      %p148 = pneg %p90
      %p149 = scmp.lt.s32.totalorder %s20, 1
      %s150 = scalar_select %p149, %s20, 1
      %s151 = smul.addr %s150, 2
      %s152 = smul.addr %s151, 8
      %s153 = scalar_lea.vmem %s3, %s152
      %p154 = scmp.lt.s32.totalorder %s20, 1
      %s155 = scalar_select %p154, %s20, 1
      %s156 = smul.addr %s155, 2
      %s157 = smul.addr %s156, 8
      %s158 = scalar_lea.vmem %s1, %s157
      %p159 = scmp.lt.s32.totalorder %s20, 1
      %s160 = scalar_select %p159, %s20, 1
      %s161 = smul.addr %s160, 2
      %s162 = scalar_lea.vmem %s2, %s161
      %p163 = scmp.lt.s32.totalorder %s20, 1
      %s164 = scalar_select %p163, %s20, 1
      %s165 = smul.addr %s164, 2
      %s166 = smul.addr %s165, 8
      %s167 = scalar_lea.vmem %s3, %s166
      %s168 = smul.u32 %s20, 128
      %s169 = sld [smem:[#allocation3 + %s168]]
      %s170 = sadd.s32 %s168, 1
      %s171 = sld [smem:[#allocation3 + %s170]]
      %v172 = vld [vmem:[%s158] sm:$0xff]
      %v173 = vld [vmem:[%s158 + $0x8] sm:$0xff]
      %v174 = vld [vmem:[%s162] sm:$0x1]
      %v175 = vld [vmem:[%s162 + $0x1] sm:$0x1]
      %v176 = vlaneseq
      %v177 = vshrl.u32 %v176, 7
      %v178 = vadd.s32 %v177, 8
      %v179 = vstv %s169
      %vm180 = vcmp.eq.s32.totalorder %v177, %v179
      %vm181 = vcmp.eq.s32.totalorder %v178, %v179
      %v182 = vlaneseq
      %v183 = vshrl.u32 %v182, 7
      %v184 = vsub.s32 0, %v183
      %v185 = vrot.slane %v174, %v184
      %v186 = vsel %vm180, %v185, %v172
      %v187 = vsel %vm181, %v185, %v173
      %v188 = vstv %s171
      %vm189 = vcmp.eq.s32.totalorder %v177, %v188
      %vm190 = vcmp.eq.s32.totalorder %v178, %v188
      %v191 = vlaneseq
      %v192 = vshrl.u32 %v191, 7
      %v193 = vsub.s32 0, %v192
      %v194 = vrot.slane %v175, %v193
      %v195 = vsel %vm189, %v194, %v186
      %v196 = vsel %vm190, %v194, %v187
      %197 = vst [vmem:[%s167] sm:$0xff] %v195
      %198 = vst [vmem:[%s167 + $0x8] sm:$0xff] %v196
      %p199 = scmp.lt.s32.totalorder %s20, 1
      %s200 = scalar_select %p199, %s20, 1
      %s201 = smul.addr %s200, 2
      %s202 = smul.addr %s201, 8
      %s203 = scalar_lea.vmem %s3, %s202
      // Predicated region
      $region29: #{ak_bert_forward.20} parent=27 // pred_check
        %p204 = pneg %p90
      $region30: #{ak_bert_forward.20} parent=27 // pred_check_branch
        %206 = sbr.rel (%p204) target = $region32
      $region31: #{ak_bert_forward.20} parent=27 // pred_region
        _
      $region32: #{ak_bert_forward.20} parent=27 // pred_fallthru
        _
    $region28: #{ak_bert_forward.20} parent=5 // pred_fallthru
      _
    %p207 = scmp.le.s32.totalorder 2, %s15
    // Predicated region
    $region33: #{ak_bert_forward.20} parent=5 // pred_check
      %p208 = pneg %p207
    $region34: #{ak_bert_forward.20} parent=5 // pred_check_branch
      %210 = sbr.rel (%p208) target = $region36
    $region35: #{ak_bert_forward.20} parent=5 // pred_region
      %s211 = ssub.s32 %s15, 2
      // Predicated region
      $region37: #{ak_bert_forward.20} parent=35 // pred_check
        %p212 = pneg %p96
      $region38: #{ak_bert_forward.20} parent=35 // pred_check_branch
        %214 = sbr.rel (%p212) target = $region40
      $region39: #{ak_bert_forward.20} parent=35 // pred_region
        %p215 = scmp.lt.s32.totalorder %s21, 1
        %s216 = scalar_select %p215, %s21, 1
        %s217 = smul.addr %s216, 2
        %s218 = smul.addr %s217, 8
        %s219 = scalar_lea.vmem %s3, %s218
      $region40: #{ak_bert_forward.20} parent=35 // pred_fallthru
        _
    $region36: #{ak_bert_forward.20} parent=5 // pred_fallthru
      _
  $region6: #{ak_bert_forward.20} parent=0 // loop_footer
    %s19 = sadd.s32 1, %s15
  $region7: #{ak_bert_forward.20} parent=0 // loop_footer_branch
    %14 = sbr.rel target = $region3
  $region8: #{ak_bert_forward.20} parent=0 // loop_exit
    _

// kernel: ak_bert_forward.21
$region0: #{ak_bert_forward.21}
  #allocation0 [shape = 'u32[]', space=smem, size = 0x4, offset = 0x4, fixed_abs, tag = 'smem constant byte address 0x4 - core index']
  #allocation1 [shape = 'u32[144,128]{1,0:T(1,128)}', space=vmem, size = 0x12000, scoped, tag = 'internal scratch']
  %s0 = inlined_call_operand.vmem [shape: f32[32,128], index: 0, kind: input, shape index: {}]
  %s1 = inlined_call_operand.vmem [shape: f32[128,384], index: 1, kind: input, shape index: {}]
  %s2 = inlined_call_operand.vmem [shape: f32[1,384], index: 2, kind: input, shape index: {}]
  %s3 = inlined_call_operand.vmem [shape: f32[32,384], index: 3, kind: output, shape index: {}]
  %s4 = sld [smem:[#allocation0]]
  $region22: #{ak_bert_forward.21} parent=0
    _
  %s6 = ssub.s32 1, %s4
  %s7 = scalar_select 0, %s6, %s4
  // Predicated region
  $region2: #{ak_bert_forward.21} parent=0 // pred_check
    _
  $region3: #{ak_bert_forward.21} parent=0 // pred_check_branch
    %9 = sbr.rel (0) target = $region5
  $region4: #{ak_bert_forward.21} parent=0 // pred_region
    _
  $region5: #{ak_bert_forward.21} parent=0 // pred_fallthru
    _
  // Predicated region
  $region6: #{ak_bert_forward.21} parent=0 // pred_check
    _
  $region7: #{ak_bert_forward.21} parent=0 // pred_check_branch
    %11 = sbr.rel (0) target = $region9
  $region8: #{ak_bert_forward.21} parent=0 // pred_region
    _
  $region9: #{ak_bert_forward.21} parent=0 // pred_fallthru
    _
  // Predicated region
  $region10: #{ak_bert_forward.21} parent=0 // pred_check
    _
  $region11: #{ak_bert_forward.21} parent=0 // pred_check_branch
    %13 = sbr.rel (0) target = $region13
  $region12: #{ak_bert_forward.21} parent=0 // pred_region
    _
  $region13: #{ak_bert_forward.21} parent=0 // pred_fallthru
    _
  %v14 = vld [vmem:[%s0] sm:$0xff]
  %v15 = vld [vmem:[%s0 + $0x8] sm:$0xff]
  %v16 = vld [vmem:[%s0 + $0x10] sm:$0xff]
  %v17 = vld [vmem:[%s0 + $0x18] sm:$0xff]
  %v18 = vld [vmem:[%s1] sm:$0xff]
  %v19 = vld [vmem:[%s1 + $0x8] sm:$0xff]
  %v20 = vld [vmem:[%s1 + $0x10] sm:$0xff]
  %v21 = vld [vmem:[%s1 + $0x18] sm:$0xff]
  %v22 = vld [vmem:[%s1 + $0x20] sm:$0xff]
  %v23 = vld [vmem:[%s1 + $0x28] sm:$0xff]
  %v24 = vld [vmem:[%s1 + $0x30] sm:$0xff]
  %v25 = vld [vmem:[%s1 + $0x38] sm:$0xff]
  %v26 = vld [vmem:[%s1 + $0x40] sm:$0xff]
  %v27 = vld [vmem:[%s1 + $0x48] sm:$0xff]
  %v28 = vld [vmem:[%s1 + $0x50] sm:$0xff]
  %v29 = vld [vmem:[%s1 + $0x58] sm:$0xff]
  %v30 = vld [vmem:[%s1 + $0x60] sm:$0xff]
  %v31 = vld [vmem:[%s1 + $0x68] sm:$0xff]
  %v32 = vld [vmem:[%s1 + $0x70] sm:$0xff]
  %v33 = vld [vmem:[%s1 + $0x78] sm:$0xff]
  %v34 = vld [vmem:[%s1 + $0x80] sm:$0xff]
  %v35 = vld [vmem:[%s1 + $0x88] sm:$0xff]
  %v36 = vld [vmem:[%s1 + $0x90] sm:$0xff]
  %v37 = vld [vmem:[%s1 + $0x98] sm:$0xff]
  %v38 = vld [vmem:[%s1 + $0xa0] sm:$0xff]
  %v39 = vld [vmem:[%s1 + $0xa8] sm:$0xff]
  %v40 = vld [vmem:[%s1 + $0xb0] sm:$0xff]
  %v41 = vld [vmem:[%s1 + $0xb8] sm:$0xff]
  %v42 = vld [vmem:[%s1 + $0xc0] sm:$0xff]
  %v43 = vld [vmem:[%s1 + $0xc8] sm:$0xff]
  %v44 = vld [vmem:[%s1 + $0xd0] sm:$0xff]
  %v45 = vld [vmem:[%s1 + $0xd8] sm:$0xff]
  %v46 = vld [vmem:[%s1 + $0xe0] sm:$0xff]
  %v47 = vld [vmem:[%s1 + $0xe8] sm:$0xff]
  %v48 = vld [vmem:[%s1 + $0xf0] sm:$0xff]
  %v49 = vld [vmem:[%s1 + $0xf8] sm:$0xff]
  %v50 = vld [vmem:[%s1 + $0x100] sm:$0xff]
  %v51 = vld [vmem:[%s1 + $0x108] sm:$0xff]
  %v52 = vld [vmem:[%s1 + $0x110] sm:$0xff]
  %v53 = vld [vmem:[%s1 + $0x118] sm:$0xff]
  %v54 = vld [vmem:[%s1 + $0x120] sm:$0xff]
  %v55 = vld [vmem:[%s1 + $0x128] sm:$0xff]
  %v56 = vld [vmem:[%s1 + $0x130] sm:$0xff]
  %v57 = vld [vmem:[%s1 + $0x138] sm:$0xff]
  %v58 = vld [vmem:[%s1 + $0x140] sm:$0xff]
  %v59 = vld [vmem:[%s1 + $0x148] sm:$0xff]
  %v60 = vld [vmem:[%s1 + $0x150] sm:$0xff]
  %v61 = vld [vmem:[%s1 + $0x158] sm:$0xff]
  %v62 = vld [vmem:[%s1 + $0x160] sm:$0xff]
  %v63 = vld [vmem:[%s1 + $0x168] sm:$0xff]
  %v64 = vld [vmem:[%s1 + $0x170] sm:$0xff]
  %v65 = vld [vmem:[%s1 + $0x178] sm:$0xff]
  %v66 = vld [vmem:[%s2] sm:$0x7]
  %v68 = vlaneseq
  %v69 = vshrl.u32 %v68, 7
  %v70 = vsub.s32 0, %v69
  %v71 = vrot.slane %v66, %v70
  %v72 = vlaneseq
  %v73 = vshrl.u32 %v72, 7
  %v74 = vsub.s32 1, %v73
  %v75 = vrot.slane %v66, %v74
  %v76 = vlaneseq
  %v77 = vshrl.u32 %v76, 7
  %v78 = vsub.s32 2, %v77
  %v79 = vrot.slane %v66, %v78
  %83 = vmatprep.subr.mxu0 %v19
  %84 = vmatpush1.msra.mxu0 %v18
  %85 = vmatprep.subr.mxu0 %v22
  %86 = vmatpush1.msra.mxu0 %v21
  %87 = vmatprep.subr.mxu0 %v25
  %88 = vmatpush1.msra.mxu0 %v24
  %89 = vmatprep.subr.mxu0 %v28
  %90 = vmatpush1.msra.mxu0 %v27
  %91 = vmatprep.subr.mxu0 %v31
  %92 = vmatpush1.msra.mxu0 %v30
  %93 = vmatprep.subr.mxu0 %v34
  %94 = vmatpush1.msra.mxu0 %v33
  %95 = vmatprep.subr.mxu0 %v37
  %96 = vmatpush1.msra.mxu0 %v36
  %97 = vmatprep.subr.mxu0 %v40
  %98 = vmatpush1.msra.mxu0 %v39
  %99 = vmatprep.subr.mxu0 %v43
  %100 = vmatpush1.msra.mxu0 %v42
  %101 = vmatprep.subr.mxu0 %v46
  %102 = vmatpush1.msra.mxu0 %v45
  %103 = vmatprep.subr.mxu0 %v49
  %104 = vmatpush1.msra.mxu0 %v48
  %105 = vmatprep.subr.mxu0 %v52
  %106 = vmatpush1.msra.mxu0 %v51
  %107 = vmatprep.subr.mxu0 %v55
  %108 = vmatpush1.msra.mxu0 %v54
  %109 = vmatprep.subr.mxu0 %v58
  %110 = vmatpush1.msra.mxu0 %v57
  %111 = vmatprep.subr.mxu0 %v61
  %112 = vmatpush1.msra.mxu0 %v60
  %113 = vmatprep.subr.mxu0 %v64
  %114 = vmatpush1.msra.mxu0 %v63
  %115 = vmatprep.subr.mxu0 0.0
  %116 = vmatpush1.msra.mxu0 0.0
  %117 = vmatprep.subr.mxu0 0.0
  %118 = vmatpush1.msra.mxu0 0.0
  %119 = vmatprep.subr.mxu0 0.0
  %120 = vmatpush1.msra.mxu0 0.0
  %121 = vmatprep.subr.mxu0 0.0
  %122 = vmatpush1.msra.mxu0 0.0
  %123 = vmatprep.subr.mxu0 0.0
  %124 = vmatpush1.msra.mxu0 0.0
  %125 = vmatprep.subr.mxu0 0.0
  %126 = vmatpush1.msra.mxu0 0.0
  %127 = vmatprep.subr.mxu0 0.0
  %128 = vmatpush1.msra.mxu0 0.0
  %129 = vmatprep.subr.mxu0 0.0
  %130 = vmatpush1.msra.mxu0 0.0
  %131 = vmatprep.subr.mxu0 0.0
  %132 = vmatpush1.msra.mxu0 0.0
  %133 = vmatprep.subr.mxu0 0.0
  %134 = vmatpush1.msra.mxu0 0.0
  %135 = vmatprep.subr.mxu0 0.0
  %136 = vmatpush1.msra.mxu0 0.0
  %137 = vmatprep.subr.mxu0 0.0
  %138 = vmatpush1.msra.mxu0 0.0
  %139 = vmatprep.subr.mxu0 0.0
  %140 = vmatpush1.msra.mxu0 0.0
  %141 = vmatprep.subr.mxu0 0.0
  %142 = vmatpush1.msra.mxu0 0.0
  %143 = vmatprep.subr.mxu0 0.0
  %144 = vmatpush1.msra.mxu0 0.0
  %145 = vmatprep.subr.mxu0 0.0
  %146 = vmatpush1.msra.mxu0 0.0
  %147 = vmatprep.mubr.f32.mxu0 0.0
  %148 = vmatmul.mubr.f32.gmra.mrb[0].mxu0 %v14
  %v149 = vpop.f32.mrb[0].mxu0
  %v150 = vadd.f32 %v71, %v149
  %v151 = vpop.f32.mrb[0].mxu0
  %v152 = vadd.f32 %v75, %v151
  %153 = vmatprep.mubr.f32.mxu0 0.0
  %154 = vmatmul.mubr.f32.gmra.mrb[0].mxu0 %v15
  %v155 = vpop.f32.mrb[0].mxu0
  %v156 = vadd.f32 %v71, %v155
  %v157 = vpop.f32.mrb[0].mxu0
  %v158 = vadd.f32 %v75, %v157
  %159 = vmatprep.mubr.f32.mxu0 0.0
  %160 = vmatmul.mubr.f32.gmra.mrb[0].mxu0 %v16
  %v161 = vpop.f32.mrb[0].mxu0
  %v162 = vadd.f32 %v71, %v161
  %v163 = vpop.f32.mrb[0].mxu0
  %v164 = vadd.f32 %v75, %v163
  %165 = vmatprep.mubr.f32.mxu0 0.0
  %166 = vmatmul.mubr.f32.gmra.mrb[0].mxu0 %v17
  %v167 = vpop.f32.mrb[0].mxu0
  %v168 = vadd.f32 %v71, %v167
  %v169 = vpop.f32.mrb[0].mxu0
  %v170 = vadd.f32 %v75, %v169
  %171 = vdwg.mxu0
  %172 = vmatprep.subr.mxu0 0.0
  %173 = vmatpush1.msra.mxu0 %v20
  %174 = vmatprep.subr.mxu0 0.0
  %175 = vmatpush1.msra.mxu0 %v23
  %176 = vmatprep.subr.mxu0 0.0
  %177 = vmatpush1.msra.mxu0 %v26
  %178 = vmatprep.subr.mxu0 0.0
  %179 = vmatpush1.msra.mxu0 %v29
  %180 = vmatprep.subr.mxu0 0.0
  %181 = vmatpush1.msra.mxu0 %v32
  %182 = vmatprep.subr.mxu0 0.0
  %183 = vmatpush1.msra.mxu0 %v35
  %184 = vmatprep.subr.mxu0 0.0
  %185 = vmatpush1.msra.mxu0 %v38
  %186 = vmatprep.subr.mxu0 0.0
  %187 = vmatpush1.msra.mxu0 %v41
  %188 = vmatprep.subr.mxu0 0.0
  %189 = vmatpush1.msra.mxu0 %v44
  %190 = vmatprep.subr.mxu0 0.0
  %191 = vmatpush1.msra.mxu0 %v47
  %192 = vmatprep.subr.mxu0 0.0
  %193 = vmatpush1.msra.mxu0 %v50
  %194 = vmatprep.subr.mxu0 0.0
  %195 = vmatpush1.msra.mxu0 %v53
  %196 = vmatprep.subr.mxu0 0.0
  %197 = vmatpush1.msra.mxu0 %v56
  %198 = vmatprep.subr.mxu0 0.0
  %199 = vmatpush1.msra.mxu0 %v59
  %200 = vmatprep.subr.mxu0 0.0
  %201 = vmatpush1.msra.mxu0 %v62
  %202 = vmatprep.subr.mxu0 0.0
  %203 = vmatpush1.msra.mxu0 %v65
  %204 = vmatprep.subr.mxu0 0.0
  %205 = vmatpush1.msra.mxu0 0.0
  %206 = vmatprep.subr.mxu0 0.0
  %207 = vmatpush1.msra.mxu0 0.0
  %208 = vmatprep.subr.mxu0 0.0
  %209 = vmatpush1.msra.mxu0 0.0
  %210 = vmatprep.subr.mxu0 0.0
  %211 = vmatpush1.msra.mxu0 0.0
  %212 = vmatprep.subr.mxu0 0.0
  %213 = vmatpush1.msra.mxu0 0.0
  %214 = vmatprep.subr.mxu0 0.0
  %215 = vmatpush1.msra.mxu0 0.0
  %216 = vmatprep.subr.mxu0 0.0
  %217 = vmatpush1.msra.mxu0 0.0
  %218 = vmatprep.subr.mxu0 0.0
  %219 = vmatpush1.msra.mxu0 0.0
  %220 = vmatprep.subr.mxu0 0.0
  %221 = vmatpush1.msra.mxu0 0.0
  %222 = vmatprep.subr.mxu0 0.0
  %223 = vmatpush1.msra.mxu0 0.0
  %224 = vmatprep.subr.mxu0 0.0
  %225 = vmatpush1.msra.mxu0 0.0
  %226 = vmatprep.subr.mxu0 0.0
  %227 = vmatpush1.msra.mxu0 0.0
  %228 = vmatprep.subr.mxu0 0.0
  %229 = vmatpush1.msra.mxu0 0.0
  %230 = vmatprep.subr.mxu0 0.0
  %231 = vmatpush1.msra.mxu0 0.0
  %232 = vmatprep.subr.mxu0 0.0
  %233 = vmatpush1.msra.mxu0 0.0
  %234 = vmatprep.subr.mxu0 0.0
  %235 = vmatpush1.msra.mxu0 0.0
  %236 = vmatprep.mubr.f32.mxu0 0.0
  %237 = vmatmul.mubr.f32.gmra.mrb[0].mxu0 %v14
  %v238 = vpop.f32.mrb[0].mxu0
  %v239 = vadd.f32 %v79, %v238
  %v240 = vpop.f32.mrb[0].mxu0
  %241 = vmatprep.mubr.f32.mxu0 0.0
  %242 = vmatmul.mubr.f32.gmra.mrb[0].mxu0 %v15
  %v243 = vpop.f32.mrb[0].mxu0
  %v244 = vadd.f32 %v79, %v243
  %v245 = vpop.f32.mrb[0].mxu0
  %246 = vmatprep.mubr.f32.mxu0 0.0
  %247 = vmatmul.mubr.f32.gmra.mrb[0].mxu0 %v16
  %v248 = vpop.f32.mrb[0].mxu0
  %v249 = vadd.f32 %v79, %v248
  %v250 = vpop.f32.mrb[0].mxu0
  %251 = vmatprep.mubr.f32.mxu0 0.0
  %252 = vmatmul.mubr.f32.gmra.mrb[0].mxu0 %v17
  %v253 = vpop.f32.mrb[0].mxu0
  %v254 = vadd.f32 %v79, %v253
  %v255 = vpop.f32.mrb[0].mxu0
  %256 = vdwg.mxu0
  %257 = vst [vmem:[%s3] sm:$0xff] %v150
  %258 = vst [vmem:[%s3 + $0x8] sm:$0xff] %v152
  %259 = vst [vmem:[%s3 + $0x10] sm:$0xff] %v239
  %260 = vst [vmem:[%s3 + $0x18] sm:$0xff] %v156
  %261 = vst [vmem:[%s3 + $0x20] sm:$0xff] %v158
  %262 = vst [vmem:[%s3 + $0x28] sm:$0xff] %v244
  %263 = vst [vmem:[%s3 + $0x30] sm:$0xff] %v162
  %264 = vst [vmem:[%s3 + $0x38] sm:$0xff] %v164
  %265 = vst [vmem:[%s3 + $0x40] sm:$0xff] %v249
  %266 = vst [vmem:[%s3 + $0x48] sm:$0xff] %v168
  %267 = vst [vmem:[%s3 + $0x50] sm:$0xff] %v170
  %268 = vst [vmem:[%s3 + $0x58] sm:$0xff] %v254
  // Predicated region
  $region14: #{ak_bert_forward.21} parent=0 // pred_check
    _
  $region15: #{ak_bert_forward.21} parent=0 // pred_check_branch
    %270 = sbr.rel (0) target = $region17
  $region16: #{ak_bert_forward.21} parent=0 // pred_region
    _
  $region17: #{ak_bert_forward.21} parent=0 // pred_fallthru
    _
  // Predicated region
  $region18: #{ak_bert_forward.21} parent=0 // pred_check
    _
  $region19: #{ak_bert_forward.21} parent=0 // pred_check_branch
    %272 = sbr.rel (0) target = $region21
  $region20: #{ak_bert_forward.21} parent=0 // pred_region
    _
  $region21: #{ak_bert_forward.21} parent=0 // pred_fallthru
    _

// kernel: ak_bert_forward.23
$region0: #{ak_bert_forward.23}
  #allocation0 [shape = 'u32[]', space=smem, size = 0x4, offset = 0x4, fixed_abs, tag = 'smem constant byte address 0x4 - core index']
  #allocation1 [shape = 'u32[144,128]{1,0:T(1,128)}', space=vmem, size = 0x12000, scoped, tag = 'internal scratch']
  %s0 = inlined_call_operand.vmem [shape: f32[32,128], index: 0, kind: input, shape index: {}]
  %s1 = inlined_call_operand.vmem [shape: f32[32,128], index: 1, kind: input, shape index: {}]
  %s2 = inlined_call_operand.vmem [shape: f32[128,128], index: 2, kind: input, shape index: {}]
  %s3 = inlined_call_operand.vmem [shape: f32[1,128], index: 3, kind: input, shape index: {}, may-alias: {3,5}]
  %s4 = inlined_call_operand.vmem [shape: f32[1,128], index: 4, kind: input, shape index: {}]
  %s5 = inlined_call_operand.vmem [shape: f32[1,128], index: 5, kind: input, shape index: {}, may-alias: {3,5}]
  %s6 = inlined_call_operand.vmem [shape: f32[32,128], index: 6, kind: output, shape index: {}]
  %s7 = sld [smem:[#allocation0]]
  $region34: #{ak_bert_forward.23} parent=0
    _
  %s9 = ssub.s32 1, %s7
  %s10 = scalar_select 0, %s9, %s7
  // Predicated region
  $region2: #{ak_bert_forward.23} parent=0 // pred_check
    _
  $region3: #{ak_bert_forward.23} parent=0 // pred_check_branch
    %12 = sbr.rel (0) target = $region5
  $region4: #{ak_bert_forward.23} parent=0 // pred_region
    _
  $region5: #{ak_bert_forward.23} parent=0 // pred_fallthru
    _
  // Predicated region
  $region6: #{ak_bert_forward.23} parent=0 // pred_check
    _
  $region7: #{ak_bert_forward.23} parent=0 // pred_check_branch
    %14 = sbr.rel (0) target = $region9
  $region8: #{ak_bert_forward.23} parent=0 // pred_region
    _
  $region9: #{ak_bert_forward.23} parent=0 // pred_fallthru
    _
  // Predicated region
  $region10: #{ak_bert_forward.23} parent=0 // pred_check
    _
  $region11: #{ak_bert_forward.23} parent=0 // pred_check_branch
    %16 = sbr.rel (0) target = $region13
  $region12: #{ak_bert_forward.23} parent=0 // pred_region
    _
  $region13: #{ak_bert_forward.23} parent=0 // pred_fallthru
    _
  // Predicated region
  $region14: #{ak_bert_forward.23} parent=0 // pred_check
    _
  $region15: #{ak_bert_forward.23} parent=0 // pred_check_branch
    %18 = sbr.rel (0) target = $region17
  $region16: #{ak_bert_forward.23} parent=0 // pred_region
    _
  $region17: #{ak_bert_forward.23} parent=0 // pred_fallthru
    _
  // Predicated region
  $region18: #{ak_bert_forward.23} parent=0 // pred_check
    _
  $region19: #{ak_bert_forward.23} parent=0 // pred_check_branch
    %20 = sbr.rel (0) target = $region21
  $region20: #{ak_bert_forward.23} parent=0 // pred_region
    _
  $region21: #{ak_bert_forward.23} parent=0 // pred_fallthru
    _
  // Predicated region
  $region22: #{ak_bert_forward.23} parent=0 // pred_check
    _
  $region23: #{ak_bert_forward.23} parent=0 // pred_check_branch
    %22 = sbr.rel (0) target = $region25
  $region24: #{ak_bert_forward.23} parent=0 // pred_region
    _
  $region25: #{ak_bert_forward.23} parent=0 // pred_fallthru
    _
  %v23 = vld [vmem:[%s0] sm:$0xff]
  %v24 = vld [vmem:[%s0 + $0x8] sm:$0xff]
  %v25 = vld [vmem:[%s0 + $0x10] sm:$0xff]
  %v26 = vld [vmem:[%s0 + $0x18] sm:$0xff]
  %v27 = vld [vmem:[%s2] sm:$0xff]
  %v28 = vld [vmem:[%s2 + $0x8] sm:$0xff]
  %v29 = vld [vmem:[%s2 + $0x10] sm:$0xff]
  %v30 = vld [vmem:[%s2 + $0x18] sm:$0xff]
  %v31 = vld [vmem:[%s2 + $0x20] sm:$0xff]
  %v32 = vld [vmem:[%s2 + $0x28] sm:$0xff]
  %v33 = vld [vmem:[%s2 + $0x30] sm:$0xff]
  %v34 = vld [vmem:[%s2 + $0x38] sm:$0xff]
  %v35 = vld [vmem:[%s2 + $0x40] sm:$0xff]
  %v36 = vld [vmem:[%s2 + $0x48] sm:$0xff]
  %v37 = vld [vmem:[%s2 + $0x50] sm:$0xff]
  %v38 = vld [vmem:[%s2 + $0x58] sm:$0xff]
  %v39 = vld [vmem:[%s2 + $0x60] sm:$0xff]
  %v40 = vld [vmem:[%s2 + $0x68] sm:$0xff]
  %v41 = vld [vmem:[%s2 + $0x70] sm:$0xff]
  %v42 = vld [vmem:[%s2 + $0x78] sm:$0xff]
  %v43 = vld [vmem:[%s3] sm:$0x1]
  %v45 = vlaneseq
  %v46 = vshrl.u32 %v45, 7
  %v47 = vsub.s32 0, %v46
  %v48 = vrot.slane %v43, %v47
  %50 = vmatprep.subr.mxu0 0.0
  %51 = vmatpush1.msra.mxu0 %v27
  %52 = vmatprep.subr.mxu0 0.0
  %53 = vmatpush1.msra.mxu0 %v28
  %54 = vmatprep.subr.mxu0 0.0
  %55 = vmatpush1.msra.mxu0 %v29
  %56 = vmatprep.subr.mxu0 0.0
  %57 = vmatpush1.msra.mxu0 %v30
  %58 = vmatprep.subr.mxu0 0.0
  %59 = vmatpush1.msra.mxu0 %v31
  %60 = vmatprep.subr.mxu0 0.0
  %61 = vmatpush1.msra.mxu0 %v32
  %62 = vmatprep.subr.mxu0 0.0
  %63 = vmatpush1.msra.mxu0 %v33
  %64 = vmatprep.subr.mxu0 0.0
  %65 = vmatpush1.msra.mxu0 %v34
  %66 = vmatprep.subr.mxu0 0.0
  %67 = vmatpush1.msra.mxu0 %v35
  %68 = vmatprep.subr.mxu0 0.0
  %69 = vmatpush1.msra.mxu0 %v36
  %70 = vmatprep.subr.mxu0 0.0
  %71 = vmatpush1.msra.mxu0 %v37
  %72 = vmatprep.subr.mxu0 0.0
  %73 = vmatpush1.msra.mxu0 %v38
  %74 = vmatprep.subr.mxu0 0.0
  %75 = vmatpush1.msra.mxu0 %v39
  %76 = vmatprep.subr.mxu0 0.0
  %77 = vmatpush1.msra.mxu0 %v40
  %78 = vmatprep.subr.mxu0 0.0
  %79 = vmatpush1.msra.mxu0 %v41
  %80 = vmatprep.subr.mxu0 0.0
  %81 = vmatpush1.msra.mxu0 %v42
  %82 = vmatprep.subr.mxu0 0.0
  %83 = vmatpush1.msra.mxu0 0.0
  %84 = vmatprep.subr.mxu0 0.0
  %85 = vmatpush1.msra.mxu0 0.0
  %86 = vmatprep.subr.mxu0 0.0
  %87 = vmatpush1.msra.mxu0 0.0
  %88 = vmatprep.subr.mxu0 0.0
  %89 = vmatpush1.msra.mxu0 0.0
  %90 = vmatprep.subr.mxu0 0.0
  %91 = vmatpush1.msra.mxu0 0.0
  %92 = vmatprep.subr.mxu0 0.0
  %93 = vmatpush1.msra.mxu0 0.0
  %94 = vmatprep.subr.mxu0 0.0
  %95 = vmatpush1.msra.mxu0 0.0
  %96 = vmatprep.subr.mxu0 0.0
  %97 = vmatpush1.msra.mxu0 0.0
  %98 = vmatprep.subr.mxu0 0.0
  %99 = vmatpush1.msra.mxu0 0.0
  %100 = vmatprep.subr.mxu0 0.0
  %101 = vmatpush1.msra.mxu0 0.0
  %102 = vmatprep.subr.mxu0 0.0
  %103 = vmatpush1.msra.mxu0 0.0
  %104 = vmatprep.subr.mxu0 0.0
  %105 = vmatpush1.msra.mxu0 0.0
  %106 = vmatprep.subr.mxu0 0.0
  %107 = vmatpush1.msra.mxu0 0.0
  %108 = vmatprep.subr.mxu0 0.0
  %109 = vmatpush1.msra.mxu0 0.0
  %110 = vmatprep.subr.mxu0 0.0
  %111 = vmatpush1.msra.mxu0 0.0
  %112 = vmatprep.subr.mxu0 0.0
  %113 = vmatpush1.msra.mxu0 0.0
  %114 = vmatprep.mubr.f32.mxu0 0.0
  %115 = vmatmul.mubr.f32.gmra.mrb[0].mxu0 %v23
  %v116 = vpop.f32.mrb[0].mxu0
  %v117 = vadd.f32 %v48, %v116
  %v118 = vpop.f32.mrb[0].mxu0
  %119 = vmatprep.mubr.f32.mxu0 0.0
  %120 = vmatmul.mubr.f32.gmra.mrb[0].mxu0 %v24
  %v121 = vpop.f32.mrb[0].mxu0
  %v122 = vadd.f32 %v48, %v121
  %v123 = vpop.f32.mrb[0].mxu0
  %124 = vmatprep.mubr.f32.mxu0 0.0
  %125 = vmatmul.mubr.f32.gmra.mrb[0].mxu0 %v25
  %v126 = vpop.f32.mrb[0].mxu0
  %v127 = vadd.f32 %v48, %v126
  %v128 = vpop.f32.mrb[0].mxu0
  %129 = vmatprep.mubr.f32.mxu0 0.0
  %130 = vmatmul.mubr.f32.gmra.mrb[0].mxu0 %v26
  %v131 = vpop.f32.mrb[0].mxu0
  %v132 = vadd.f32 %v48, %v131
  %v133 = vpop.f32.mrb[0].mxu0
  %134 = vdwg.mxu0
  %v135 = vld [vmem:[%s1] sm:$0xff]
  %v136 = vld [vmem:[%s1 + $0x8] sm:$0xff]
  %v137 = vld [vmem:[%s1 + $0x10] sm:$0xff]
  %v138 = vld [vmem:[%s1 + $0x18] sm:$0xff]
  %v139 = vadd.f32 %v117, %v135
  %v140 = vadd.f32 %v122, %v136
  %v141 = vadd.f32 %v127, %v137
  %v142 = vadd.f32 %v132, %v138
  %v143 = vld [vmem:[%s4] sm:$0x1]
  %v144 = vld [vmem:[%s5] sm:$0x1]
  %145 = vadd.xlane.f32.xlu0 %v139
  %v146 = vpop.xlane.xlu0 %145
  %147 = vadd.xlane.f32.xlu0 %v140
  %v148 = vpop.xlane.xlu0 %147
  %149 = vadd.xlane.f32.xlu0 %v141
  %v150 = vpop.xlane.xlu0 %149
  %151 = vadd.xlane.f32.xlu0 %v142
  %v152 = vpop.xlane.xlu0 %151
  %v153 = vrcp.pop 128.0
  %v154 = vmul.f32 %v146, %v153
  %v155 = vmul.f32 %v148, %v153
  %v156 = vmul.f32 %v150, %v153
  %v157 = vmul.f32 %v152, %v153
  %v158 = vsub.f32 %v139, %v154
  %v159 = vsub.f32 %v140, %v155
  %v160 = vsub.f32 %v141, %v156
  %v161 = vsub.f32 %v142, %v157
  %v162 = vmul.f32 %v158, %v158
  %v163 = vmul.f32 %v159, %v159
  %v164 = vmul.f32 %v160, %v160
  %v165 = vmul.f32 %v161, %v161
  %166 = vadd.xlane.f32.xlu0 %v162
  %v167 = vpop.xlane.xlu0 %166
  %168 = vadd.xlane.f32.xlu0 %v163
  %v169 = vpop.xlane.xlu0 %168
  %170 = vadd.xlane.f32.xlu0 %v164
  %v171 = vpop.xlane.xlu0 %170
  %172 = vadd.xlane.f32.xlu0 %v165
  %v173 = vpop.xlane.xlu0 %172
  %v174 = vmul.f32 %v167, %v153
  %v175 = vmul.f32 %v169, %v153
  %v176 = vmul.f32 %v171, %v153
  %v177 = vmul.f32 %v173, %v153
  %v178 = vadd.f32 %v174, 1e-12
  %v179 = vadd.f32 %v175, 1e-12
  %v180 = vadd.f32 %v176, 1e-12
  %v181 = vadd.f32 %v177, 1e-12
  %v182 = vrsqrt.pop %v178
  %v183 = vrsqrt.pop %v179
  %v184 = vrsqrt.pop %v180
  %v185 = vrsqrt.pop %v181
  %v186 = vmul.f32 %v158, %v182
  %v187 = vmul.f32 %v159, %v183
  %v188 = vmul.f32 %v160, %v184
  %v189 = vmul.f32 %v161, %v185
  %v191 = vlaneseq
  %v192 = vshrl.u32 %v191, 7
  %v193 = vsub.s32 0, %v192
  %v194 = vrot.slane %v143, %v193
  %v196 = vmul.f32 %v186, %v194
  %v197 = vmul.f32 %v187, %v194
  %v198 = vmul.f32 %v188, %v194
  %v199 = vmul.f32 %v189, %v194
  %v201 = vlaneseq
  %v202 = vshrl.u32 %v201, 7
  %v203 = vsub.s32 0, %v202
  %v204 = vrot.slane %v144, %v203
  %v206 = vadd.f32 %v196, %v204
  %v207 = vadd.f32 %v197, %v204
  %v208 = vadd.f32 %v198, %v204
  %v209 = vadd.f32 %v199, %v204
  %210 = vst [vmem:[%s6] sm:$0xff] %v206
  %211 = vst [vmem:[%s6 + $0x8] sm:$0xff] %v207
  %212 = vst [vmem:[%s6 + $0x10] sm:$0xff] %v208
  %213 = vst [vmem:[%s6 + $0x18] sm:$0xff] %v209
  // Predicated region
  $region26: #{ak_bert_forward.23} parent=0 // pred_check
    _
  $region27: #{ak_bert_forward.23} parent=0 // pred_check_branch
    %215 = sbr.rel (0) target = $region29
  $region28: #{ak_bert_forward.23} parent=0 // pred_region
    _
  $region29: #{ak_bert_forward.23} parent=0 // pred_fallthru
    _
  // Predicated region
  $region30: #{ak_bert_forward.23} parent=0 // pred_check
    _
  $region31: #{ak_bert_forward.23} parent=0 // pred_check_branch
    %217 = sbr.rel (0) target = $region33
  $region32: #{ak_bert_forward.23} parent=0 // pred_region
    _
  $region33: #{ak_bert_forward.23} parent=0 // pred_fallthru
    _

// kernel: ak_bert_forward.25
$region0: #{ak_bert_forward.25}
  #allocation0 [shape = 'u32[]', space=smem, size = 0x4, offset = 0x4, fixed_abs, tag = 'smem constant byte address 0x4 - core index']
  #allocation1 [shape = 'u32[144,128]{1,0:T(1,128)}', space=vmem, size = 0x12000, scoped, tag = 'internal scratch']
  %s0 = inlined_call_operand.vmem [shape: f32[32,128], index: 0, kind: input, shape index: {}]
  %s1 = inlined_call_operand.vmem [shape: f32[128,128], index: 1, kind: input, shape index: {}]
  %s2 = inlined_call_operand.vmem [shape: f32[1,128], index: 2, kind: input, shape index: {}, may-alias: {2,4}]
  %s3 = inlined_call_operand.vmem [shape: f32[1,128], index: 3, kind: input, shape index: {}]
  %s4 = inlined_call_operand.vmem [shape: f32[1,128], index: 4, kind: input, shape index: {}, may-alias: {2,4}]
  %s5 = inlined_call_operand.vmem [shape: f32[128,256], index: 5, kind: input, shape index: {}]
  %s6 = inlined_call_operand.vmem [shape: f32[1,256], index: 6, kind: input, shape index: {}]
  %s7 = inlined_call_operand.vmem [shape: f32[32,256], index: 7, kind: output, shape index: {}]
  %s8 = sld [smem:[#allocation0]]
  $region38: #{ak_bert_forward.25} parent=0
    _
  %s10 = ssub.s32 1, %s8
  %s11 = scalar_select 0, %s10, %s8
  // Predicated region
  $region2: #{ak_bert_forward.25} parent=0 // pred_check
    _
  $region3: #{ak_bert_forward.25} parent=0 // pred_check_branch
    %13 = sbr.rel (0) target = $region5
  $region4: #{ak_bert_forward.25} parent=0 // pred_region
    _
  $region5: #{ak_bert_forward.25} parent=0 // pred_fallthru
    _
  // Predicated region
  $region6: #{ak_bert_forward.25} parent=0 // pred_check
    _
  $region7: #{ak_bert_forward.25} parent=0 // pred_check_branch
    %15 = sbr.rel (0) target = $region9
  $region8: #{ak_bert_forward.25} parent=0 // pred_region
    _
  $region9: #{ak_bert_forward.25} parent=0 // pred_fallthru
    _
  // Predicated region
  $region10: #{ak_bert_forward.25} parent=0 // pred_check
    _
  $region11: #{ak_bert_forward.25} parent=0 // pred_check_branch
    %17 = sbr.rel (0) target = $region13
  $region12: #{ak_bert_forward.25} parent=0 // pred_region
    _
  $region13: #{ak_bert_forward.25} parent=0 // pred_fallthru
    _
  // Predicated region
  $region14: #{ak_bert_forward.25} parent=0 // pred_check
    _
  $region15: #{ak_bert_forward.25} parent=0 // pred_check_branch
    %19 = sbr.rel (0) target = $region17
  $region16: #{ak_bert_forward.25} parent=0 // pred_region
    _
  $region17: #{ak_bert_forward.25} parent=0 // pred_fallthru
    _
  // Predicated region
  $region18: #{ak_bert_forward.25} parent=0 // pred_check
    _
  $region19: #{ak_bert_forward.25} parent=0 // pred_check_branch
    %21 = sbr.rel (0) target = $region21
  $region20: #{ak_bert_forward.25} parent=0 // pred_region
    _
  $region21: #{ak_bert_forward.25} parent=0 // pred_fallthru
    _
  // Predicated region
  $region22: #{ak_bert_forward.25} parent=0 // pred_check
    _
  $region23: #{ak_bert_forward.25} parent=0 // pred_check_branch
    %23 = sbr.rel (0) target = $region25
  $region24: #{ak_bert_forward.25} parent=0 // pred_region
    _
  $region25: #{ak_bert_forward.25} parent=0 // pred_fallthru
    _
  // Predicated region
  $region26: #{ak_bert_forward.25} parent=0 // pred_check
    _
  $region27: #{ak_bert_forward.25} parent=0 // pred_check_branch
    %25 = sbr.rel (0) target = $region29
  $region28: #{ak_bert_forward.25} parent=0 // pred_region
    _
  $region29: #{ak_bert_forward.25} parent=0 // pred_fallthru
    _
  %v26 = vld [vmem:[%s0] sm:$0xff]
  %v27 = vld [vmem:[%s0 + $0x8] sm:$0xff]
  %v28 = vld [vmem:[%s0 + $0x10] sm:$0xff]
  %v29 = vld [vmem:[%s0 + $0x18] sm:$0xff]
  %v30 = vld [vmem:[%s1] sm:$0xff]
  %v31 = vld [vmem:[%s1 + $0x8] sm:$0xff]
  %v32 = vld [vmem:[%s1 + $0x10] sm:$0xff]
  %v33 = vld [vmem:[%s1 + $0x18] sm:$0xff]
  %v34 = vld [vmem:[%s1 + $0x20] sm:$0xff]
  %v35 = vld [vmem:[%s1 + $0x28] sm:$0xff]
  %v36 = vld [vmem:[%s1 + $0x30] sm:$0xff]
  %v37 = vld [vmem:[%s1 + $0x38] sm:$0xff]
  %v38 = vld [vmem:[%s1 + $0x40] sm:$0xff]
  %v39 = vld [vmem:[%s1 + $0x48] sm:$0xff]
  %v40 = vld [vmem:[%s1 + $0x50] sm:$0xff]
  %v41 = vld [vmem:[%s1 + $0x58] sm:$0xff]
  %v42 = vld [vmem:[%s1 + $0x60] sm:$0xff]
  %v43 = vld [vmem:[%s1 + $0x68] sm:$0xff]
  %v44 = vld [vmem:[%s1 + $0x70] sm:$0xff]
  %v45 = vld [vmem:[%s1 + $0x78] sm:$0xff]
  %v46 = vld [vmem:[%s2] sm:$0x1]
  %v48 = vlaneseq
  %v49 = vshrl.u32 %v48, 7
  %v50 = vsub.s32 0, %v49
  %v51 = vrot.slane %v46, %v50
  %53 = vmatprep.subr.mxu0 0.0
  %54 = vmatpush1.msra.mxu0 %v30
  %55 = vmatprep.subr.mxu0 0.0
  %56 = vmatpush1.msra.mxu0 %v31
  %57 = vmatprep.subr.mxu0 0.0
  %58 = vmatpush1.msra.mxu0 %v32
  %59 = vmatprep.subr.mxu0 0.0
  %60 = vmatpush1.msra.mxu0 %v33
  %61 = vmatprep.subr.mxu0 0.0
  %62 = vmatpush1.msra.mxu0 %v34
  %63 = vmatprep.subr.mxu0 0.0
  %64 = vmatpush1.msra.mxu0 %v35
  %65 = vmatprep.subr.mxu0 0.0
  %66 = vmatpush1.msra.mxu0 %v36
  %67 = vmatprep.subr.mxu0 0.0
  %68 = vmatpush1.msra.mxu0 %v37
  %69 = vmatprep.subr.mxu0 0.0
  %70 = vmatpush1.msra.mxu0 %v38
  %71 = vmatprep.subr.mxu0 0.0
  %72 = vmatpush1.msra.mxu0 %v39
  %73 = vmatprep.subr.mxu0 0.0
  %74 = vmatpush1.msra.mxu0 %v40
  %75 = vmatprep.subr.mxu0 0.0
  %76 = vmatpush1.msra.mxu0 %v41
  %77 = vmatprep.subr.mxu0 0.0
  %78 = vmatpush1.msra.mxu0 %v42
  %79 = vmatprep.subr.mxu0 0.0
  %80 = vmatpush1.msra.mxu0 %v43
  %81 = vmatprep.subr.mxu0 0.0
  %82 = vmatpush1.msra.mxu0 %v44
  %83 = vmatprep.subr.mxu0 0.0
  %84 = vmatpush1.msra.mxu0 %v45
  %85 = vmatprep.subr.mxu0 0.0
  %86 = vmatpush1.msra.mxu0 0.0
  %87 = vmatprep.subr.mxu0 0.0
  %88 = vmatpush1.msra.mxu0 0.0
  %89 = vmatprep.subr.mxu0 0.0
  %90 = vmatpush1.msra.mxu0 0.0
  %91 = vmatprep.subr.mxu0 0.0
  %92 = vmatpush1.msra.mxu0 0.0
  %93 = vmatprep.subr.mxu0 0.0
  %94 = vmatpush1.msra.mxu0 0.0
  %95 = vmatprep.subr.mxu0 0.0
  %96 = vmatpush1.msra.mxu0 0.0
  %97 = vmatprep.subr.mxu0 0.0
  %98 = vmatpush1.msra.mxu0 0.0
  %99 = vmatprep.subr.mxu0 0.0
  %100 = vmatpush1.msra.mxu0 0.0
  %101 = vmatprep.subr.mxu0 0.0
  %102 = vmatpush1.msra.mxu0 0.0
  %103 = vmatprep.subr.mxu0 0.0
  %104 = vmatpush1.msra.mxu0 0.0
  %105 = vmatprep.subr.mxu0 0.0
  %106 = vmatpush1.msra.mxu0 0.0
  %107 = vmatprep.subr.mxu0 0.0
  %108 = vmatpush1.msra.mxu0 0.0
  %109 = vmatprep.subr.mxu0 0.0
  %110 = vmatpush1.msra.mxu0 0.0
  %111 = vmatprep.subr.mxu0 0.0
  %112 = vmatpush1.msra.mxu0 0.0
  %113 = vmatprep.subr.mxu0 0.0
  %114 = vmatpush1.msra.mxu0 0.0
  %115 = vmatprep.subr.mxu0 0.0
  %116 = vmatpush1.msra.mxu0 0.0
  %117 = vmatprep.mubr.f32.mxu0 0.0
  %118 = vmatmul.mubr.f32.gmra.mrb[0].mxu0 %v26
  %v119 = vpop.f32.mrb[0].mxu0
  %v120 = vadd.f32 %v51, %v119
  %v121 = vpop.f32.mrb[0].mxu0
  %122 = vmatprep.mubr.f32.mxu0 0.0
  %123 = vmatmul.mubr.f32.gmra.mrb[0].mxu0 %v27
  %v124 = vpop.f32.mrb[0].mxu0
  %v125 = vadd.f32 %v51, %v124
  %v126 = vpop.f32.mrb[0].mxu0
  %127 = vmatprep.mubr.f32.mxu0 0.0
  %128 = vmatmul.mubr.f32.gmra.mrb[0].mxu0 %v28
  %v129 = vpop.f32.mrb[0].mxu0
  %v130 = vadd.f32 %v51, %v129
  %v131 = vpop.f32.mrb[0].mxu0
  %132 = vmatprep.mubr.f32.mxu0 0.0
  %133 = vmatmul.mubr.f32.gmra.mrb[0].mxu0 %v29
  %v134 = vpop.f32.mrb[0].mxu0
  %v135 = vadd.f32 %v51, %v134
  %v136 = vpop.f32.mrb[0].mxu0
  %137 = vdwg.mxu0
  %v138 = vmul.f32 %v120, %v120
  %v139 = vmul.f32 %v125, %v125
  %v140 = vmul.f32 %v130, %v130
  %v141 = vmul.f32 %v135, %v135
  %v142 = vmul.f32 %v120, %v138
  %v143 = vmul.f32 %v125, %v139
  %v144 = vmul.f32 %v130, %v140
  %v145 = vmul.f32 %v135, %v141
  %v146 = vmul.f32 %v142, 0.044715
  %v147 = vmul.f32 %v143, 0.044715
  %v148 = vmul.f32 %v144, 0.044715
  %v149 = vmul.f32 %v145, 0.044715
  %v150 = vadd.f32 %v120, %v146
  %v151 = vadd.f32 %v125, %v147
  %v152 = vadd.f32 %v130, %v148
  %v153 = vadd.f32 %v135, %v149
  %v154 = vmul.f32 %v150, 0.7978846
  %v155 = vmul.f32 %v151, 0.7978846
  %v156 = vmul.f32 %v152, 0.7978846
  %v157 = vmul.f32 %v153, 0.7978846
  %v158 = vtanh.pop %v154
  %v159 = vtanh.pop %v155
  %v160 = vtanh.pop %v156
  %v161 = vtanh.pop %v157
  %v162 = vadd.f32 %v158, 1.0
  %v163 = vadd.f32 %v159, 1.0
  %v164 = vadd.f32 %v160, 1.0
  %v165 = vadd.f32 %v161, 1.0
  %v166 = vmul.f32 %v162, 0.5
  %v167 = vmul.f32 %v163, 0.5
  %v168 = vmul.f32 %v164, 0.5
  %v169 = vmul.f32 %v165, 0.5
  %v170 = vmul.f32 %v120, %v166
  %v171 = vmul.f32 %v125, %v167
  %v172 = vmul.f32 %v130, %v168
  %v173 = vmul.f32 %v135, %v169
  %v174 = vld [vmem:[%s3] sm:$0x1]
  %v175 = vld [vmem:[%s4] sm:$0x1]
  %176 = vadd.xlane.f32.xlu0 %v170
  %v177 = vpop.xlane.xlu0 %176
  %178 = vadd.xlane.f32.xlu0 %v171
  %v179 = vpop.xlane.xlu0 %178
  %180 = vadd.xlane.f32.xlu0 %v172
  %v181 = vpop.xlane.xlu0 %180
  %182 = vadd.xlane.f32.xlu0 %v173
  %v183 = vpop.xlane.xlu0 %182
  %v184 = vrcp.pop 128.0
  %v185 = vmul.f32 %v177, %v184
  %v186 = vmul.f32 %v179, %v184
  %v187 = vmul.f32 %v181, %v184
  %v188 = vmul.f32 %v183, %v184
  %v189 = vsub.f32 %v170, %v185
  %v190 = vsub.f32 %v171, %v186
  %v191 = vsub.f32 %v172, %v187
  %v192 = vsub.f32 %v173, %v188
  %v193 = vmul.f32 %v189, %v189
  %v194 = vmul.f32 %v190, %v190
  %v195 = vmul.f32 %v191, %v191
  %v196 = vmul.f32 %v192, %v192
  %197 = vadd.xlane.f32.xlu0 %v193
  %v198 = vpop.xlane.xlu0 %197
  %199 = vadd.xlane.f32.xlu0 %v194
  %v200 = vpop.xlane.xlu0 %199
  %201 = vadd.xlane.f32.xlu0 %v195
  %v202 = vpop.xlane.xlu0 %201
  %203 = vadd.xlane.f32.xlu0 %v196
  %v204 = vpop.xlane.xlu0 %203
  %v205 = vmul.f32 %v198, %v184
  %v206 = vmul.f32 %v200, %v184
  %v207 = vmul.f32 %v202, %v184
  %v208 = vmul.f32 %v204, %v184
  %v209 = vadd.f32 %v205, 1e-12
  %v210 = vadd.f32 %v206, 1e-12
  %v211 = vadd.f32 %v207, 1e-12
  %v212 = vadd.f32 %v208, 1e-12
  %v213 = vrsqrt.pop %v209
  %v214 = vrsqrt.pop %v210
  %v215 = vrsqrt.pop %v211
  %v216 = vrsqrt.pop %v212
  %v217 = vmul.f32 %v189, %v213
  %v218 = vmul.f32 %v190, %v214
  %v219 = vmul.f32 %v191, %v215
  %v220 = vmul.f32 %v192, %v216
  %v222 = vlaneseq
  %v223 = vshrl.u32 %v222, 7
  %v224 = vsub.s32 0, %v223
  %v225 = vrot.slane %v174, %v224
  %v227 = vmul.f32 %v217, %v225
  %v228 = vmul.f32 %v218, %v225
  %v229 = vmul.f32 %v219, %v225
  %v230 = vmul.f32 %v220, %v225
  %v232 = vlaneseq
  %v233 = vshrl.u32 %v232, 7
  %v234 = vsub.s32 0, %v233
  %v235 = vrot.slane %v175, %v234
  %v237 = vadd.f32 %v227, %v235
  %v238 = vadd.f32 %v228, %v235
  %v239 = vadd.f32 %v229, %v235
  %v240 = vadd.f32 %v230, %v235
  %v241 = vld [vmem:[%s5] sm:$0xff]
  %v242 = vld [vmem:[%s5 + $0x8] sm:$0xff]
  %v243 = vld [vmem:[%s5 + $0x10] sm:$0xff]
  %v244 = vld [vmem:[%s5 + $0x18] sm:$0xff]
  %v245 = vld [vmem:[%s5 + $0x20] sm:$0xff]
  %v246 = vld [vmem:[%s5 + $0x28] sm:$0xff]
  %v247 = vld [vmem:[%s5 + $0x30] sm:$0xff]
  %v248 = vld [vmem:[%s5 + $0x38] sm:$0xff]
  %v249 = vld [vmem:[%s5 + $0x40] sm:$0xff]
  %v250 = vld [vmem:[%s5 + $0x48] sm:$0xff]
  %v251 = vld [vmem:[%s5 + $0x50] sm:$0xff]
  %v252 = vld [vmem:[%s5 + $0x58] sm:$0xff]
  %v253 = vld [vmem:[%s5 + $0x60] sm:$0xff]
  %v254 = vld [vmem:[%s5 + $0x68] sm:$0xff]
  %v255 = vld [vmem:[%s5 + $0x70] sm:$0xff]
  %v256 = vld [vmem:[%s5 + $0x78] sm:$0xff]
  %v257 = vld [vmem:[%s5 + $0x80] sm:$0xff]
  %v258 = vld [vmem:[%s5 + $0x88] sm:$0xff]
  %v259 = vld [vmem:[%s5 + $0x90] sm:$0xff]
  %v260 = vld [vmem:[%s5 + $0x98] sm:$0xff]
  %v261 = vld [vmem:[%s5 + $0xa0] sm:$0xff]
  %v262 = vld [vmem:[%s5 + $0xa8] sm:$0xff]
  %v263 = vld [vmem:[%s5 + $0xb0] sm:$0xff]
  %v264 = vld [vmem:[%s5 + $0xb8] sm:$0xff]
  %v265 = vld [vmem:[%s5 + $0xc0] sm:$0xff]
  %v266 = vld [vmem:[%s5 + $0xc8] sm:$0xff]
  %v267 = vld [vmem:[%s5 + $0xd0] sm:$0xff]
  %v268 = vld [vmem:[%s5 + $0xd8] sm:$0xff]
  %v269 = vld [vmem:[%s5 + $0xe0] sm:$0xff]
  %v270 = vld [vmem:[%s5 + $0xe8] sm:$0xff]
  %v271 = vld [vmem:[%s5 + $0xf0] sm:$0xff]
  %v272 = vld [vmem:[%s5 + $0xf8] sm:$0xff]
  %v273 = vld [vmem:[%s6] sm:$0x3]
  %v275 = vlaneseq
  %v276 = vshrl.u32 %v275, 7
  %v277 = vsub.s32 0, %v276
  %v278 = vrot.slane %v273, %v277
  %v279 = vlaneseq
  %v280 = vshrl.u32 %v279, 7
  %v281 = vsub.s32 1, %v280
  %v282 = vrot.slane %v273, %v281
  %285 = vmatprep.subr.mxu0 %v242
  %286 = vmatpush1.msra.mxu0 %v241
  %287 = vmatprep.subr.mxu0 %v244
  %288 = vmatpush1.msra.mxu0 %v243
  %289 = vmatprep.subr.mxu0 %v246
  %290 = vmatpush1.msra.mxu0 %v245
  %291 = vmatprep.subr.mxu0 %v248
  %292 = vmatpush1.msra.mxu0 %v247
  %293 = vmatprep.subr.mxu0 %v250
  %294 = vmatpush1.msra.mxu0 %v249
  %295 = vmatprep.subr.mxu0 %v252
  %296 = vmatpush1.msra.mxu0 %v251
  %297 = vmatprep.subr.mxu0 %v254
  %298 = vmatpush1.msra.mxu0 %v253
  %299 = vmatprep.subr.mxu0 %v256
  %300 = vmatpush1.msra.mxu0 %v255
  %301 = vmatprep.subr.mxu0 %v258
  %302 = vmatpush1.msra.mxu0 %v257
  %303 = vmatprep.subr.mxu0 %v260
  %304 = vmatpush1.msra.mxu0 %v259
  %305 = vmatprep.subr.mxu0 %v262
  %306 = vmatpush1.msra.mxu0 %v261
  %307 = vmatprep.subr.mxu0 %v264
  %308 = vmatpush1.msra.mxu0 %v263
  %309 = vmatprep.subr.mxu0 %v266
  %310 = vmatpush1.msra.mxu0 %v265
  %311 = vmatprep.subr.mxu0 %v268
  %312 = vmatpush1.msra.mxu0 %v267
  %313 = vmatprep.subr.mxu0 %v270
  %314 = vmatpush1.msra.mxu0 %v269
  %315 = vmatprep.subr.mxu0 %v272
  %316 = vmatpush1.msra.mxu0 %v271
  %317 = vmatprep.subr.mxu0 0.0
  %318 = vmatpush1.msra.mxu0 0.0
  %319 = vmatprep.subr.mxu0 0.0
  %320 = vmatpush1.msra.mxu0 0.0
  %321 = vmatprep.subr.mxu0 0.0
  %322 = vmatpush1.msra.mxu0 0.0
  %323 = vmatprep.subr.mxu0 0.0
  %324 = vmatpush1.msra.mxu0 0.0
  %325 = vmatprep.subr.mxu0 0.0
  %326 = vmatpush1.msra.mxu0 0.0
  %327 = vmatprep.subr.mxu0 0.0
  %328 = vmatpush1.msra.mxu0 0.0
  %329 = vmatprep.subr.mxu0 0.0
  %330 = vmatpush1.msra.mxu0 0.0
  %331 = vmatprep.subr.mxu0 0.0
  %332 = vmatpush1.msra.mxu0 0.0
  %333 = vmatprep.subr.mxu0 0.0
  %334 = vmatpush1.msra.mxu0 0.0
  %335 = vmatprep.subr.mxu0 0.0
  %336 = vmatpush1.msra.mxu0 0.0
  %337 = vmatprep.subr.mxu0 0.0
  %338 = vmatpush1.msra.mxu0 0.0
  %339 = vmatprep.subr.mxu0 0.0
  %340 = vmatpush1.msra.mxu0 0.0
  %341 = vmatprep.subr.mxu0 0.0
  %342 = vmatpush1.msra.mxu0 0.0
  %343 = vmatprep.subr.mxu0 0.0
  %344 = vmatpush1.msra.mxu0 0.0
  %345 = vmatprep.subr.mxu0 0.0
  %346 = vmatpush1.msra.mxu0 0.0
  %347 = vmatprep.subr.mxu0 0.0
  %348 = vmatpush1.msra.mxu0 0.0
  %349 = vmatprep.mubr.f32.mxu0 0.0
  %350 = vmatmul.mubr.f32.gmra.mrb[0].mxu0 %v237
  %v351 = vpop.f32.mrb[0].mxu0
  %v352 = vadd.f32 %v278, %v351
  %v353 = vpop.f32.mrb[0].mxu0
  %v354 = vadd.f32 %v282, %v353
  %355 = vmatprep.mubr.f32.mxu0 0.0
  %356 = vmatmul.mubr.f32.gmra.mrb[0].mxu0 %v238
  %v357 = vpop.f32.mrb[0].mxu0
  %v358 = vadd.f32 %v278, %v357
  %v359 = vpop.f32.mrb[0].mxu0
  %v360 = vadd.f32 %v282, %v359
  %361 = vmatprep.mubr.f32.mxu0 0.0
  %362 = vmatmul.mubr.f32.gmra.mrb[0].mxu0 %v239
  %v363 = vpop.f32.mrb[0].mxu0
  %v364 = vadd.f32 %v278, %v363
  %v365 = vpop.f32.mrb[0].mxu0
  %v366 = vadd.f32 %v282, %v365
  %367 = vmatprep.mubr.f32.mxu0 0.0
  %368 = vmatmul.mubr.f32.gmra.mrb[0].mxu0 %v240
  %v369 = vpop.f32.mrb[0].mxu0
  %v370 = vadd.f32 %v278, %v369
  %v371 = vpop.f32.mrb[0].mxu0
  %v372 = vadd.f32 %v282, %v371
  %373 = vdwg.mxu0
  %374 = vst [vmem:[%s7] sm:$0xff] %v352
  %375 = vst [vmem:[%s7 + $0x8] sm:$0xff] %v354
  %376 = vst [vmem:[%s7 + $0x10] sm:$0xff] %v358
  %377 = vst [vmem:[%s7 + $0x18] sm:$0xff] %v360
  %378 = vst [vmem:[%s7 + $0x20] sm:$0xff] %v364
  %379 = vst [vmem:[%s7 + $0x28] sm:$0xff] %v366
  %380 = vst [vmem:[%s7 + $0x30] sm:$0xff] %v370
  %381 = vst [vmem:[%s7 + $0x38] sm:$0xff] %v372
  // Predicated region
  $region30: #{ak_bert_forward.25} parent=0 // pred_check
    _
  $region31: #{ak_bert_forward.25} parent=0 // pred_check_branch
    %383 = sbr.rel (0) target = $region33
  $region32: #{ak_bert_forward.25} parent=0 // pred_region
    _
  $region33: #{ak_bert_forward.25} parent=0 // pred_fallthru
    _
  // Predicated region
  $region34: #{ak_bert_forward.25} parent=0 // pred_check
    _
  $region35: #{ak_bert_forward.25} parent=0 // pred_check_branch
    %385 = sbr.rel (0) target = $region37
  $region36: #{ak_bert_forward.25} parent=0 // pred_region
    _
  $region37: #{ak_bert_forward.25} parent=0 // pred_fallthru
    _

// kernel: ak_bert_forward.22
$region0: #{ak_bert_forward.22}
  #allocation0 [shape = 'u32[]', space=smem, size = 0x4, offset = 0x4, fixed_abs, tag = 'smem constant byte address 0x4 - core index']
  #allocation1 [shape = 'u32[144,128]{1,0:T(1,128)}', space=vmem, size = 0x12000, scoped, tag = 'internal scratch']
  %s0 = inlined_call_operand.vmem [shape: f32[8,16,32], index: 0, kind: input, shape index: {}]
  %s1 = inlined_call_operand.vmem [shape: f32[8,16,32], index: 1, kind: input, shape index: {}]
  %s2 = inlined_call_operand.vmem [shape: f32[8,16,32], index: 2, kind: input, shape index: {}]
  %s3 = inlined_call_operand.vmem [shape: f32[8,16,32], index: 3, kind: output, shape index: {}]
  %s4 = sld [smem:[#allocation0]]
  $region22: #{ak_bert_forward.22} parent=0
    _
  %s6 = ssub.s32 1, %s4
  %s7 = scalar_select 0, %s6, %s4
  // Predicated region
  $region2: #{ak_bert_forward.22} parent=0 // pred_check
    _
  $region3: #{ak_bert_forward.22} parent=0 // pred_check_branch
    %9 = sbr.rel (0) target = $region5
  $region4: #{ak_bert_forward.22} parent=0 // pred_region
    _
  $region5: #{ak_bert_forward.22} parent=0 // pred_fallthru
    _
  // Predicated region
  $region6: #{ak_bert_forward.22} parent=0 // pred_check
    _
  $region7: #{ak_bert_forward.22} parent=0 // pred_check_branch
    %11 = sbr.rel (0) target = $region9
  $region8: #{ak_bert_forward.22} parent=0 // pred_region
    _
  $region9: #{ak_bert_forward.22} parent=0 // pred_fallthru
    _
  // Predicated region
  $region10: #{ak_bert_forward.22} parent=0 // pred_check
    _
  $region11: #{ak_bert_forward.22} parent=0 // pred_check_branch
    %13 = sbr.rel (0) target = $region13
  $region12: #{ak_bert_forward.22} parent=0 // pred_region
    _
  $region13: #{ak_bert_forward.22} parent=0 // pred_fallthru
    _
  %v14 = vld [vmem:[%s0] sm:$0xff]
  %v15 = vld [vmem:[%s0 + $0x8] sm:$0xff]
  %v16 = vld [vmem:[%s0 + $0x10] sm:$0xff]
  %v17 = vld [vmem:[%s0 + $0x18] sm:$0xff]
  %v18 = vld [vmem:[%s0 + $0x20] sm:$0xff]
  %v19 = vld [vmem:[%s0 + $0x28] sm:$0xff]
  %v20 = vld [vmem:[%s0 + $0x30] sm:$0xff]
  %v21 = vld [vmem:[%s0 + $0x38] sm:$0xff]
  %v22 = vld [vmem:[%s0 + $0x40] sm:$0xff]
  %v23 = vld [vmem:[%s0 + $0x48] sm:$0xff]
  %v24 = vld [vmem:[%s0 + $0x50] sm:$0xff]
  %v25 = vld [vmem:[%s0 + $0x58] sm:$0xff]
  %v26 = vld [vmem:[%s0 + $0x60] sm:$0xff]
  %v27 = vld [vmem:[%s0 + $0x68] sm:$0xff]
  %v28 = vld [vmem:[%s0 + $0x70] sm:$0xff]
  %v29 = vld [vmem:[%s0 + $0x78] sm:$0xff]
  %v30 = vld [vmem:[%s1] sm:$0xff]
  %v31 = vld [vmem:[%s1 + $0x8] sm:$0xff]
  %v32 = vld [vmem:[%s1 + $0x10] sm:$0xff]
  %v33 = vld [vmem:[%s1 + $0x18] sm:$0xff]
  %v34 = vld [vmem:[%s1 + $0x20] sm:$0xff]
  %v35 = vld [vmem:[%s1 + $0x28] sm:$0xff]
  %v36 = vld [vmem:[%s1 + $0x30] sm:$0xff]
  %v37 = vld [vmem:[%s1 + $0x38] sm:$0xff]
  %v38 = vld [vmem:[%s1 + $0x40] sm:$0xff]
  %v39 = vld [vmem:[%s1 + $0x48] sm:$0xff]
  %v40 = vld [vmem:[%s1 + $0x50] sm:$0xff]
  %v41 = vld [vmem:[%s1 + $0x58] sm:$0xff]
  %v42 = vld [vmem:[%s1 + $0x60] sm:$0xff]
  %v43 = vld [vmem:[%s1 + $0x68] sm:$0xff]
  %v44 = vld [vmem:[%s1 + $0x70] sm:$0xff]
  %v45 = vld [vmem:[%s1 + $0x78] sm:$0xff]
  %v46 = vld [vmem:[%s2] sm:$0xff]
  %v47 = vld [vmem:[%s2 + $0x8] sm:$0xff]
  %v48 = vld [vmem:[%s2 + $0x10] sm:$0xff]
  %v49 = vld [vmem:[%s2 + $0x18] sm:$0xff]
  %v50 = vld [vmem:[%s2 + $0x20] sm:$0xff]
  %v51 = vld [vmem:[%s2 + $0x28] sm:$0xff]
  %v52 = vld [vmem:[%s2 + $0x30] sm:$0xff]
  %v53 = vld [vmem:[%s2 + $0x38] sm:$0xff]
  %v54 = vld [vmem:[%s2 + $0x40] sm:$0xff]
  %v55 = vld [vmem:[%s2 + $0x48] sm:$0xff]
  %v56 = vld [vmem:[%s2 + $0x50] sm:$0xff]
  %v57 = vld [vmem:[%s2 + $0x58] sm:$0xff]
  %v58 = vld [vmem:[%s2 + $0x60] sm:$0xff]
  %v59 = vld [vmem:[%s2 + $0x68] sm:$0xff]
  %v60 = vld [vmem:[%s2 + $0x70] sm:$0xff]
  %v61 = vld [vmem:[%s2 + $0x78] sm:$0xff]
  %vm62 = vcmask 261120
  %v64 = vsel %vm62, %v14, 0
  %v67 = vsel %vm62, %v15, 0
  %v70 = vsel %vm62, %v30, 0
  %v73 = vsel %vm62, %v31, 0
  %75 = vmatprep.subr.mxu0 0.0
  %76 = vmatpush1.xpose.msra.mxu0 %v70
  %77 = vmatprep.subr.mxu0 0.0
  %78 = vmatpush1.xpose.msra.mxu0 %v73
  %79 = vmatprep.subr.mxu0 0.0
  %80 = vmatpush1.xpose.msra.mxu0 0.0
  %81 = vmatprep.subr.mxu0 0.0
  %82 = vmatpush1.xpose.msra.mxu0 0.0
  %83 = vmatprep.subr.mxu0 0.0
  %84 = vmatpush1.xpose.msra.mxu0 0.0
  %85 = vmatprep.subr.mxu0 0.0
  %86 = vmatpush1.xpose.msra.mxu0 0.0
  %87 = vmatprep.subr.mxu0 0.0
  %88 = vmatpush1.xpose.msra.mxu0 0.0
  %89 = vmatprep.subr.mxu0 0.0
  %90 = vmatpush1.xpose.msra.mxu0 0.0
  %91 = vmatprep.subr.mxu0 0.0
  %92 = vmatpush1.xpose.msra.mxu0 0.0
  %93 = vmatprep.subr.mxu0 0.0
  %94 = vmatpush1.xpose.msra.mxu0 0.0
  %95 = vmatprep.subr.mxu0 0.0
  %96 = vmatpush1.xpose.msra.mxu0 0.0
  %97 = vmatprep.subr.mxu0 0.0
  %98 = vmatpush1.xpose.msra.mxu0 0.0
  %99 = vmatprep.subr.mxu0 0.0
  %100 = vmatpush1.xpose.msra.mxu0 0.0
  %101 = vmatprep.subr.mxu0 0.0
  %102 = vmatpush1.xpose.msra.mxu0 0.0
  %103 = vmatprep.subr.mxu0 0.0
  %104 = vmatpush1.xpose.msra.mxu0 0.0
  %105 = vmatprep.subr.mxu0 0.0
  %106 = vmatpush1.xpose.msra.mxu0 0.0
  %107 = vmatprep.subr.mxu0 0.0
  %108 = vmatpush1.xpose.msra.mxu0 0.0
  %109 = vmatprep.subr.mxu0 0.0
  %110 = vmatpush1.xpose.msra.mxu0 0.0
  %111 = vmatprep.subr.mxu0 0.0
  %112 = vmatpush1.xpose.msra.mxu0 0.0
  %113 = vmatprep.subr.mxu0 0.0
  %114 = vmatpush1.xpose.msra.mxu0 0.0
  %115 = vmatprep.subr.mxu0 0.0
  %116 = vmatpush1.xpose.msra.mxu0 0.0
  %117 = vmatprep.subr.mxu0 0.0
  %118 = vmatpush1.xpose.msra.mxu0 0.0
  %119 = vmatprep.subr.mxu0 0.0
  %120 = vmatpush1.xpose.msra.mxu0 0.0
  %121 = vmatprep.subr.mxu0 0.0
  %122 = vmatpush1.xpose.msra.mxu0 0.0
  %123 = vmatprep.subr.mxu0 0.0
  %124 = vmatpush1.xpose.msra.mxu0 0.0
  %125 = vmatprep.subr.mxu0 0.0
  %126 = vmatpush1.xpose.msra.mxu0 0.0
  %127 = vmatprep.subr.mxu0 0.0
  %128 = vmatpush1.xpose.msra.mxu0 0.0
  %129 = vmatprep.subr.mxu0 0.0
  %130 = vmatpush1.xpose.msra.mxu0 0.0
  %131 = vmatprep.subr.mxu0 0.0
  %132 = vmatpush1.xpose.msra.mxu0 0.0
  %133 = vmatprep.subr.mxu0 0.0
  %134 = vmatpush1.xpose.msra.mxu0 0.0
  %135 = vmatprep.subr.mxu0 0.0
  %136 = vmatpush1.xpose.msra.mxu0 0.0
  %137 = vmatprep.subr.mxu0 0.0
  %138 = vmatpush1.xpose.msra.mxu0 0.0
  %139 = vmatprep.mubr.f32.mxu0 0.0
  %140 = vmatmul.mubr.f32.gmra.mrb[0].mxu0 %v64
  %v141 = vpop.f32.mrb[0].mxu0
  %v142 = vadd.f32 0.0, %v141
  %v143 = vpop.f32.mrb[0].mxu0
  %144 = vmatprep.mubr.f32.mxu0 0.0
  %145 = vmatmul.mubr.f32.gmra.mrb[0].mxu0 %v67
  %v146 = vpop.f32.mrb[0].mxu0
  %v147 = vadd.f32 0.0, %v146
  %v148 = vpop.f32.mrb[0].mxu0
  %149 = vdwg.mxu0
  %v151 = vsel %vm62, %v16, 0
  %v154 = vsel %vm62, %v17, 0
  %v157 = vsel %vm62, %v32, 0
  %v160 = vsel %vm62, %v33, 0
  %162 = vmatprep.subr.mxu0 0.0
  %163 = vmatpush1.xpose.msra.mxu0 %v157
  %164 = vmatprep.subr.mxu0 0.0
  %165 = vmatpush1.xpose.msra.mxu0 %v160
  %166 = vmatprep.subr.mxu0 0.0
  %167 = vmatpush1.xpose.msra.mxu0 0.0
  %168 = vmatprep.subr.mxu0 0.0
  %169 = vmatpush1.xpose.msra.mxu0 0.0
  %170 = vmatprep.subr.mxu0 0.0
  %171 = vmatpush1.xpose.msra.mxu0 0.0
  %172 = vmatprep.subr.mxu0 0.0
  %173 = vmatpush1.xpose.msra.mxu0 0.0
  %174 = vmatprep.subr.mxu0 0.0
  %175 = vmatpush1.xpose.msra.mxu0 0.0
  %176 = vmatprep.subr.mxu0 0.0
  %177 = vmatpush1.xpose.msra.mxu0 0.0
  %178 = vmatprep.subr.mxu0 0.0
  %179 = vmatpush1.xpose.msra.mxu0 0.0
  %180 = vmatprep.subr.mxu0 0.0
  %181 = vmatpush1.xpose.msra.mxu0 0.0
  %182 = vmatprep.subr.mxu0 0.0
  %183 = vmatpush1.xpose.msra.mxu0 0.0
  %184 = vmatprep.subr.mxu0 0.0
  %185 = vmatpush1.xpose.msra.mxu0 0.0
  %186 = vmatprep.subr.mxu0 0.0
  %187 = vmatpush1.xpose.msra.mxu0 0.0
  %188 = vmatprep.subr.mxu0 0.0
  %189 = vmatpush1.xpose.msra.mxu0 0.0
  %190 = vmatprep.subr.mxu0 0.0
  %191 = vmatpush1.xpose.msra.mxu0 0.0
  %192 = vmatprep.subr.mxu0 0.0
  %193 = vmatpush1.xpose.msra.mxu0 0.0
  %194 = vmatprep.subr.mxu0 0.0
  %195 = vmatpush1.xpose.msra.mxu0 0.0
  %196 = vmatprep.subr.mxu0 0.0
  %197 = vmatpush1.xpose.msra.mxu0 0.0
  %198 = vmatprep.subr.mxu0 0.0
  %199 = vmatpush1.xpose.msra.mxu0 0.0
  %200 = vmatprep.subr.mxu0 0.0
  %201 = vmatpush1.xpose.msra.mxu0 0.0
  %202 = vmatprep.subr.mxu0 0.0
  %203 = vmatpush1.xpose.msra.mxu0 0.0
  %204 = vmatprep.subr.mxu0 0.0
  %205 = vmatpush1.xpose.msra.mxu0 0.0
  %206 = vmatprep.subr.mxu0 0.0
  %207 = vmatpush1.xpose.msra.mxu0 0.0
  %208 = vmatprep.subr.mxu0 0.0
  %209 = vmatpush1.xpose.msra.mxu0 0.0
  %210 = vmatprep.subr.mxu0 0.0
  %211 = vmatpush1.xpose.msra.mxu0 0.0
  %212 = vmatprep.subr.mxu0 0.0
  %213 = vmatpush1.xpose.msra.mxu0 0.0
  %214 = vmatprep.subr.mxu0 0.0
  %215 = vmatpush1.xpose.msra.mxu0 0.0
  %216 = vmatprep.subr.mxu0 0.0
  %217 = vmatpush1.xpose.msra.mxu0 0.0
  %218 = vmatprep.subr.mxu0 0.0
  %219 = vmatpush1.xpose.msra.mxu0 0.0
  %220 = vmatprep.subr.mxu0 0.0
  %221 = vmatpush1.xpose.msra.mxu0 0.0
  %222 = vmatprep.subr.mxu0 0.0
  %223 = vmatpush1.xpose.msra.mxu0 0.0
  %224 = vmatprep.subr.mxu0 0.0
  %225 = vmatpush1.xpose.msra.mxu0 0.0
  %226 = vmatprep.mubr.f32.mxu0 0.0
  %227 = vmatmul.mubr.f32.gmra.mrb[0].mxu0 %v151
  %v228 = vpop.f32.mrb[0].mxu0
  %v229 = vadd.f32 0.0, %v228
  %v230 = vpop.f32.mrb[0].mxu0
  %231 = vmatprep.mubr.f32.mxu0 0.0
  %232 = vmatmul.mubr.f32.gmra.mrb[0].mxu0 %v154
  %v233 = vpop.f32.mrb[0].mxu0
  %v234 = vadd.f32 0.0, %v233
  %v235 = vpop.f32.mrb[0].mxu0
  %236 = vdwg.mxu0
  %v238 = vsel %vm62, %v18, 0
  %v241 = vsel %vm62, %v19, 0
  %v244 = vsel %vm62, %v34, 0
  %v247 = vsel %vm62, %v35, 0
  %249 = vmatprep.subr.mxu0 0.0
  %250 = vmatpush1.xpose.msra.mxu0 %v244
  %251 = vmatprep.subr.mxu0 0.0
  %252 = vmatpush1.xpose.msra.mxu0 %v247
  %253 = vmatprep.subr.mxu0 0.0
  %254 = vmatpush1.xpose.msra.mxu0 0.0
  %255 = vmatprep.subr.mxu0 0.0
  %256 = vmatpush1.xpose.msra.mxu0 0.0
  %257 = vmatprep.subr.mxu0 0.0
  %258 = vmatpush1.xpose.msra.mxu0 0.0
  %259 = vmatprep.subr.mxu0 0.0
  %260 = vmatpush1.xpose.msra.mxu0 0.0
  %261 = vmatprep.subr.mxu0 0.0
  %262 = vmatpush1.xpose.msra.mxu0 0.0
  %263 = vmatprep.subr.mxu0 0.0
  %264 = vmatpush1.xpose.msra.mxu0 0.0
  %265 = vmatprep.subr.mxu0 0.0
  %266 = vmatpush1.xpose.msra.mxu0 0.0
  %267 = vmatprep.subr.mxu0 0.0
  %268 = vmatpush1.xpose.msra.mxu0 0.0
  %269 = vmatprep.subr.mxu0 0.0
  %270 = vmatpush1.xpose.msra.mxu0 0.0
  %271 = vmatprep.subr.mxu0 0.0
  %272 = vmatpush1.xpose.msra.mxu0 0.0
  %273 = vmatprep.subr.mxu0 0.0
  %274 = vmatpush1.xpose.msra.mxu0 0.0
  %275 = vmatprep.subr.mxu0 0.0
  %276 = vmatpush1.xpose.msra.mxu0 0.0
  %277 = vmatprep.subr.mxu0 0.0
  %278 = vmatpush1.xpose.msra.mxu0 0.0
  %279 = vmatprep.subr.mxu0 0.0
  %280 = vmatpush1.xpose.msra.mxu0 0.0
  %281 = vmatprep.subr.mxu0 0.0
  %282 = vmatpush1.xpose.msra.mxu0 0.0
  %283 = vmatprep.subr.mxu0 0.0
  %284 = vmatpush1.xpose.msra.mxu0 0.0
  %285 = vmatprep.subr.mxu0 0.0
  %286 = vmatpush1.xpose.msra.mxu0 0.0
  %287 = vmatprep.subr.mxu0 0.0
  %288 = vmatpush1.xpose.msra.mxu0 0.0
  %289 = vmatprep.subr.mxu0 0.0
  %290 = vmatpush1.xpose.msra.mxu0 0.0
  %291 = vmatprep.subr.mxu0 0.0
  %292 = vmatpush1.xpose.msra.mxu0 0.0
  %293 = vmatprep.subr.mxu0 0.0
  %294 = vmatpush1.xpose.msra.mxu0 0.0
  %295 = vmatprep.subr.mxu0 0.0
  %296 = vmatpush1.xpose.msra.mxu0 0.0
  %297 = vmatprep.subr.mxu0 0.0
  %298 = vmatpush1.xpose.msra.mxu0 0.0
  %299 = vmatprep.subr.mxu0 0.0
  %300 = vmatpush1.xpose.msra.mxu0 0.0
  %301 = vmatprep.subr.mxu0 0.0
  %302 = vmatpush1.xpose.msra.mxu0 0.0
  %303 = vmatprep.subr.mxu0 0.0
  %304 = vmatpush1.xpose.msra.mxu0 0.0
  %305 = vmatprep.subr.mxu0 0.0
  %306 = vmatpush1.xpose.msra.mxu0 0.0
  %307 = vmatprep.subr.mxu0 0.0
  %308 = vmatpush1.xpose.msra.mxu0 0.0
  %309 = vmatprep.subr.mxu0 0.0
  %310 = vmatpush1.xpose.msra.mxu0 0.0
  %311 = vmatprep.subr.mxu0 0.0
  %312 = vmatpush1.xpose.msra.mxu0 0.0
  %313 = vmatprep.mubr.f32.mxu0 0.0
  %314 = vmatmul.mubr.f32.gmra.mrb[0].mxu0 %v238
  %v315 = vpop.f32.mrb[0].mxu0
  %v316 = vadd.f32 0.0, %v315
  %v317 = vpop.f32.mrb[0].mxu0
  %318 = vmatprep.mubr.f32.mxu0 0.0
  %319 = vmatmul.mubr.f32.gmra.mrb[0].mxu0 %v241
  %v320 = vpop.f32.mrb[0].mxu0
  %v321 = vadd.f32 0.0, %v320
  %v322 = vpop.f32.mrb[0].mxu0
  %323 = vdwg.mxu0
  %v325 = vsel %vm62, %v20, 0
  %v328 = vsel %vm62, %v21, 0
  %v331 = vsel %vm62, %v36, 0
  %v334 = vsel %vm62, %v37, 0
  %336 = vmatprep.subr.mxu0 0.0
  %337 = vmatpush1.xpose.msra.mxu0 %v331
  %338 = vmatprep.subr.mxu0 0.0
  %339 = vmatpush1.xpose.msra.mxu0 %v334
  %340 = vmatprep.subr.mxu0 0.0
  %341 = vmatpush1.xpose.msra.mxu0 0.0
  %342 = vmatprep.subr.mxu0 0.0
  %343 = vmatpush1.xpose.msra.mxu0 0.0
  %344 = vmatprep.subr.mxu0 0.0
  %345 = vmatpush1.xpose.msra.mxu0 0.0
  %346 = vmatprep.subr.mxu0 0.0
  %347 = vmatpush1.xpose.msra.mxu0 0.0
  %348 = vmatprep.subr.mxu0 0.0
  %349 = vmatpush1.xpose.msra.mxu0 0.0
  %350 = vmatprep.subr.mxu0 0.0
  %351 = vmatpush1.xpose.msra.mxu0 0.0
  %352 = vmatprep.subr.mxu0 0.0
  %353 = vmatpush1.xpose.msra.mxu0 0.0
  %354 = vmatprep.subr.mxu0 0.0
  %355 = vmatpush1.xpose.msra.mxu0 0.0
  %356 = vmatprep.subr.mxu0 0.0
  %357 = vmatpush1.xpose.msra.mxu0 0.0
  %358 = vmatprep.subr.mxu0 0.0
  %359 = vmatpush1.xpose.msra.mxu0 0.0
  %360 = vmatprep.subr.mxu0 0.0
  %361 = vmatpush1.xpose.msra.mxu0 0.0
  %362 = vmatprep.subr.mxu0 0.0
  %363 = vmatpush1.xpose.msra.mxu0 0.0
  %364 = vmatprep.subr.mxu0 0.0
  %365 = vmatpush1.xpose.msra.mxu0 0.0
  %366 = vmatprep.subr.mxu0 0.0
  %367 = vmatpush1.xpose.msra.mxu0 0.0
  %368 = vmatprep.subr.mxu0 0.0
  %369 = vmatpush1.xpose.msra.mxu0 0.0
  %370 = vmatprep.subr.mxu0 0.0
  %371 = vmatpush1.xpose.msra.mxu0 0.0
  %372 = vmatprep.subr.mxu0 0.0
  %373 = vmatpush1.xpose.msra.mxu0 0.0
  %374 = vmatprep.subr.mxu0 0.0
  %375 = vmatpush1.xpose.msra.mxu0 0.0
  %376 = vmatprep.subr.mxu0 0.0
  %377 = vmatpush1.xpose.msra.mxu0 0.0
  %378 = vmatprep.subr.mxu0 0.0
  %379 = vmatpush1.xpose.msra.mxu0 0.0
  %380 = vmatprep.subr.mxu0 0.0
  %381 = vmatpush1.xpose.msra.mxu0 0.0
  %382 = vmatprep.subr.mxu0 0.0
  %383 = vmatpush1.xpose.msra.mxu0 0.0
  %384 = vmatprep.subr.mxu0 0.0
  %385 = vmatpush1.xpose.msra.mxu0 0.0
  %386 = vmatprep.subr.mxu0 0.0
  %387 = vmatpush1.xpose.msra.mxu0 0.0
  %388 = vmatprep.subr.mxu0 0.0
  %389 = vmatpush1.xpose.msra.mxu0 0.0
  %390 = vmatprep.subr.mxu0 0.0
  %391 = vmatpush1.xpose.msra.mxu0 0.0
  %392 = vmatprep.subr.mxu0 0.0
  %393 = vmatpush1.xpose.msra.mxu0 0.0
  %394 = vmatprep.subr.mxu0 0.0
  %395 = vmatpush1.xpose.msra.mxu0 0.0
  %396 = vmatprep.subr.mxu0 0.0
  %397 = vmatpush1.xpose.msra.mxu0 0.0
  %398 = vmatprep.subr.mxu0 0.0
  %399 = vmatpush1.xpose.msra.mxu0 0.0
  %400 = vmatprep.mubr.f32.mxu0 0.0
  %401 = vmatmul.mubr.f32.gmra.mrb[0].mxu0 %v325
  %v402 = vpop.f32.mrb[0].mxu0
  %v403 = vadd.f32 0.0, %v402
  %v404 = vpop.f32.mrb[0].mxu0
  %405 = vmatprep.mubr.f32.mxu0 0.0
  %406 = vmatmul.mubr.f32.gmra.mrb[0].mxu0 %v328
  %v407 = vpop.f32.mrb[0].mxu0
  %v408 = vadd.f32 0.0, %v407
  %v409 = vpop.f32.mrb[0].mxu0
  %410 = vdwg.mxu0
  %v412 = vsel %vm62, %v22, 0
  %v415 = vsel %vm62, %v23, 0
  %v418 = vsel %vm62, %v38, 0
  %v421 = vsel %vm62, %v39, 0
  %423 = vmatprep.subr.mxu0 0.0
  %424 = vmatpush1.xpose.msra.mxu0 %v418
  %425 = vmatprep.subr.mxu0 0.0
  %426 = vmatpush1.xpose.msra.mxu0 %v421
  %427 = vmatprep.subr.mxu0 0.0
  %428 = vmatpush1.xpose.msra.mxu0 0.0
  %429 = vmatprep.subr.mxu0 0.0
  %430 = vmatpush1.xpose.msra.mxu0 0.0
  %431 = vmatprep.subr.mxu0 0.0
  %432 = vmatpush1.xpose.msra.mxu0 0.0
  %433 = vmatprep.subr.mxu0 0.0
  %434 = vmatpush1.xpose.msra.mxu0 0.0
  %435 = vmatprep.subr.mxu0 0.0
  %436 = vmatpush1.xpose.msra.mxu0 0.0
  %437 = vmatprep.subr.mxu0 0.0
  %438 = vmatpush1.xpose.msra.mxu0 0.0
  %439 = vmatprep.subr.mxu0 0.0
  %440 = vmatpush1.xpose.msra.mxu0 0.0
  %441 = vmatprep.subr.mxu0 0.0
  %442 = vmatpush1.xpose.msra.mxu0 0.0
  %443 = vmatprep.subr.mxu0 0.0
  %444 = vmatpush1.xpose.msra.mxu0 0.0
  %445 = vmatprep.subr.mxu0 0.0
  %446 = vmatpush1.xpose.msra.mxu0 0.0
  %447 = vmatprep.subr.mxu0 0.0
  %448 = vmatpush1.xpose.msra.mxu0 0.0
  %449 = vmatprep.subr.mxu0 0.0
  %450 = vmatpush1.xpose.msra.mxu0 0.0
  %451 = vmatprep.subr.mxu0 0.0
  %452 = vmatpush1.xpose.msra.mxu0 0.0
  %453 = vmatprep.subr.mxu0 0.0
  %454 = vmatpush1.xpose.msra.mxu0 0.0
  %455 = vmatprep.subr.mxu0 0.0
  %456 = vmatpush1.xpose.msra.mxu0 0.0
  %457 = vmatprep.subr.mxu0 0.0
  %458 = vmatpush1.xpose.msra.mxu0 0.0
  %459 = vmatprep.subr.mxu0 0.0
  %460 = vmatpush1.xpose.msra.mxu0 0.0
  %461 = vmatprep.subr.mxu0 0.0
  %462 = vmatpush1.xpose.msra.mxu0 0.0
  %463 = vmatprep.subr.mxu0 0.0
  %464 = vmatpush1.xpose.msra.mxu0 0.0
  %465 = vmatprep.subr.mxu0 0.0
  %466 = vmatpush1.xpose.msra.mxu0 0.0
  %467 = vmatprep.subr.mxu0 0.0
  %468 = vmatpush1.xpose.msra.mxu0 0.0
  %469 = vmatprep.subr.mxu0 0.0
  %470 = vmatpush1.xpose.msra.mxu0 0.0
  %471 = vmatprep.subr.mxu0 0.0
  %472 = vmatpush1.xpose.msra.mxu0 0.0
  %473 = vmatprep.subr.mxu0 0.0
  %474 = vmatpush1.xpose.msra.mxu0 0.0
  %475 = vmatprep.subr.mxu0 0.0
  %476 = vmatpush1.xpose.msra.mxu0 0.0
  %477 = vmatprep.subr.mxu0 0.0
  %478 = vmatpush1.xpose.msra.mxu0 0.0
  %479 = vmatprep.subr.mxu0 0.0
  %480 = vmatpush1.xpose.msra.mxu0 0.0
  %481 = vmatprep.subr.mxu0 0.0
  %482 = vmatpush1.xpose.msra.mxu0 0.0
  %483 = vmatprep.subr.mxu0 0.0
  %484 = vmatpush1.xpose.msra.mxu0 0.0
  %485 = vmatprep.subr.mxu0 0.0
  %486 = vmatpush1.xpose.msra.mxu0 0.0
  %487 = vmatprep.mubr.f32.mxu0 0.0
  %488 = vmatmul.mubr.f32.gmra.mrb[0].mxu0 %v412
  %v489 = vpop.f32.mrb[0].mxu0
  %v490 = vadd.f32 0.0, %v489
  %v491 = vpop.f32.mrb[0].mxu0
  %492 = vmatprep.mubr.f32.mxu0 0.0
  %493 = vmatmul.mubr.f32.gmra.mrb[0].mxu0 %v415
  %v494 = vpop.f32.mrb[0].mxu0
  %v495 = vadd.f32 0.0, %v494
  %v496 = vpop.f32.mrb[0].mxu0
  %497 = vdwg.mxu0
  %v499 = vsel %vm62, %v24, 0
  %v502 = vsel %vm62, %v25, 0
  %v505 = vsel %vm62, %v40, 0
  %v508 = vsel %vm62, %v41, 0
  %510 = vmatprep.subr.mxu0 0.0
  %511 = vmatpush1.xpose.msra.mxu0 %v505
  %512 = vmatprep.subr.mxu0 0.0
  %513 = vmatpush1.xpose.msra.mxu0 %v508
  %514 = vmatprep.subr.mxu0 0.0
  %515 = vmatpush1.xpose.msra.mxu0 0.0
  %516 = vmatprep.subr.mxu0 0.0
  %517 = vmatpush1.xpose.msra.mxu0 0.0
  %518 = vmatprep.subr.mxu0 0.0
  %519 = vmatpush1.xpose.msra.mxu0 0.0
  %520 = vmatprep.subr.mxu0 0.0
  %521 = vmatpush1.xpose.msra.mxu0 0.0
  %522 = vmatprep.subr.mxu0 0.0
  %523 = vmatpush1.xpose.msra.mxu0 0.0
  %524 = vmatprep.subr.mxu0 0.0
  %525 = vmatpush1.xpose.msra.mxu0 0.0
  %526 = vmatprep.subr.mxu0 0.0
  %527 = vmatpush1.xpose.msra.mxu0 0.0
  %528 = vmatprep.subr.mxu0 0.0
  %529 = vmatpush1.xpose.msra.mxu0 0.0
  %530 = vmatprep.subr.mxu0 0.0
  %531 = vmatpush1.xpose.msra.mxu0 0.0
  %532 = vmatprep.subr.mxu0 0.0
  %533 = vmatpush1.xpose.msra.mxu0 0.0
  %534 = vmatprep.subr.mxu0 0.0
  %535 = vmatpush1.xpose.msra.mxu0 0.0
  %536 = vmatprep.subr.mxu0 0.0
  %537 = vmatpush1.xpose.msra.mxu0 0.0
  %538 = vmatprep.subr.mxu0 0.0
  %539 = vmatpush1.xpose.msra.mxu0 0.0
  %540 = vmatprep.subr.mxu0 0.0
  %541 = vmatpush1.xpose.msra.mxu0 0.0
  %542 = vmatprep.subr.mxu0 0.0
  %543 = vmatpush1.xpose.msra.mxu0 0.0
  %544 = vmatprep.subr.mxu0 0.0
  %545 = vmatpush1.xpose.msra.mxu0 0.0
  %546 = vmatprep.subr.mxu0 0.0
  %547 = vmatpush1.xpose.msra.mxu0 0.0
  %548 = vmatprep.subr.mxu0 0.0
  %549 = vmatpush1.xpose.msra.mxu0 0.0
  %550 = vmatprep.subr.mxu0 0.0
  %551 = vmatpush1.xpose.msra.mxu0 0.0
  %552 = vmatprep.subr.mxu0 0.0
  %553 = vmatpush1.xpose.msra.mxu0 0.0
  %554 = vmatprep.subr.mxu0 0.0
  %555 = vmatpush1.xpose.msra.mxu0 0.0
  %556 = vmatprep.subr.mxu0 0.0
  %557 = vmatpush1.xpose.msra.mxu0 0.0
  %558 = vmatprep.subr.mxu0 0.0
  %559 = vmatpush1.xpose.msra.mxu0 0.0
  %560 = vmatprep.subr.mxu0 0.0
  %561 = vmatpush1.xpose.msra.mxu0 0.0
  %562 = vmatprep.subr.mxu0 0.0
  %563 = vmatpush1.xpose.msra.mxu0 0.0
  %564 = vmatprep.subr.mxu0 0.0
  %565 = vmatpush1.xpose.msra.mxu0 0.0
  %566 = vmatprep.subr.mxu0 0.0
  %567 = vmatpush1.xpose.msra.mxu0 0.0
  %568 = vmatprep.subr.mxu0 0.0
  %569 = vmatpush1.xpose.msra.mxu0 0.0
  %570 = vmatprep.subr.mxu0 0.0
  %571 = vmatpush1.xpose.msra.mxu0 0.0
  %572 = vmatprep.subr.mxu0 0.0
  %573 = vmatpush1.xpose.msra.mxu0 0.0
  %574 = vmatprep.mubr.f32.mxu0 0.0
  %575 = vmatmul.mubr.f32.gmra.mrb[0].mxu0 %v499
  %v576 = vpop.f32.mrb[0].mxu0
  %v577 = vadd.f32 0.0, %v576
  %v578 = vpop.f32.mrb[0].mxu0
  %579 = vmatprep.mubr.f32.mxu0 0.0
  %580 = vmatmul.mubr.f32.gmra.mrb[0].mxu0 %v502
  %v581 = vpop.f32.mrb[0].mxu0
  %v582 = vadd.f32 0.0, %v581
  %v583 = vpop.f32.mrb[0].mxu0
  %584 = vdwg.mxu0
  %v586 = vsel %vm62, %v26, 0
  %v589 = vsel %vm62, %v27, 0
  %v592 = vsel %vm62, %v42, 0
  %v595 = vsel %vm62, %v43, 0
  %597 = vmatprep.subr.mxu0 0.0
  %598 = vmatpush1.xpose.msra.mxu0 %v592
  %599 = vmatprep.subr.mxu0 0.0
  %600 = vmatpush1.xpose.msra.mxu0 %v595
  %601 = vmatprep.subr.mxu0 0.0
  %602 = vmatpush1.xpose.msra.mxu0 0.0
  %603 = vmatprep.subr.mxu0 0.0
  %604 = vmatpush1.xpose.msra.mxu0 0.0
  %605 = vmatprep.subr.mxu0 0.0
  %606 = vmatpush1.xpose.msra.mxu0 0.0
  %607 = vmatprep.subr.mxu0 0.0
  %608 = vmatpush1.xpose.msra.mxu0 0.0
  %609 = vmatprep.subr.mxu0 0.0
  %610 = vmatpush1.xpose.msra.mxu0 0.0
  %611 = vmatprep.subr.mxu0 0.0
  %612 = vmatpush1.xpose.msra.mxu0 0.0
  %613 = vmatprep.subr.mxu0 0.0
  %614 = vmatpush1.xpose.msra.mxu0 0.0
  %615 = vmatprep.subr.mxu0 0.0
  %616 = vmatpush1.xpose.msra.mxu0 0.0
  %617 = vmatprep.subr.mxu0 0.0
  %618 = vmatpush1.xpose.msra.mxu0 0.0
  %619 = vmatprep.subr.mxu0 0.0
  %620 = vmatpush1.xpose.msra.mxu0 0.0
  %621 = vmatprep.subr.mxu0 0.0
  %622 = vmatpush1.xpose.msra.mxu0 0.0
  %623 = vmatprep.subr.mxu0 0.0
  %624 = vmatpush1.xpose.msra.mxu0 0.0
  %625 = vmatprep.subr.mxu0 0.0
  %626 = vmatpush1.xpose.msra.mxu0 0.0
  %627 = vmatprep.subr.mxu0 0.0
  %628 = vmatpush1.xpose.msra.mxu0 0.0
  %629 = vmatprep.subr.mxu0 0.0
  %630 = vmatpush1.xpose.msra.mxu0 0.0
  %631 = vmatprep.subr.mxu0 0.0
  %632 = vmatpush1.xpose.msra.mxu0 0.0
  %633 = vmatprep.subr.mxu0 0.0
  %634 = vmatpush1.xpose.msra.mxu0 0.0
  %635 = vmatprep.subr.mxu0 0.0
  %636 = vmatpush1.xpose.msra.mxu0 0.0
  %637 = vmatprep.subr.mxu0 0.0
  %638 = vmatpush1.xpose.msra.mxu0 0.0
  %639 = vmatprep.subr.mxu0 0.0
  %640 = vmatpush1.xpose.msra.mxu0 0.0
  %641 = vmatprep.subr.mxu0 0.0
  %642 = vmatpush1.xpose.msra.mxu0 0.0
  %643 = vmatprep.subr.mxu0 0.0
  %644 = vmatpush1.xpose.msra.mxu0 0.0
  %645 = vmatprep.subr.mxu0 0.0
  %646 = vmatpush1.xpose.msra.mxu0 0.0
  %647 = vmatprep.subr.mxu0 0.0
  %648 = vmatpush1.xpose.msra.mxu0 0.0
  %649 = vmatprep.subr.mxu0 0.0
  %650 = vmatpush1.xpose.msra.mxu0 0.0
  %651 = vmatprep.subr.mxu0 0.0
  %652 = vmatpush1.xpose.msra.mxu0 0.0
  %653 = vmatprep.subr.mxu0 0.0
  %654 = vmatpush1.xpose.msra.mxu0 0.0
  %655 = vmatprep.subr.mxu0 0.0
  %656 = vmatpush1.xpose.msra.mxu0 0.0
  %657 = vmatprep.subr.mxu0 0.0
  %658 = vmatpush1.xpose.msra.mxu0 0.0
  %659 = vmatprep.subr.mxu0 0.0
  %660 = vmatpush1.xpose.msra.mxu0 0.0
  %661 = vmatprep.mubr.f32.mxu0 0.0
  %662 = vmatmul.mubr.f32.gmra.mrb[0].mxu0 %v586
  %v663 = vpop.f32.mrb[0].mxu0
  %v664 = vadd.f32 0.0, %v663
  %v665 = vpop.f32.mrb[0].mxu0
  %666 = vmatprep.mubr.f32.mxu0 0.0
  %667 = vmatmul.mubr.f32.gmra.mrb[0].mxu0 %v589
  %v668 = vpop.f32.mrb[0].mxu0
  %v669 = vadd.f32 0.0, %v668
  %v670 = vpop.f32.mrb[0].mxu0
  %671 = vdwg.mxu0
  %v673 = vsel %vm62, %v28, 0
  %v676 = vsel %vm62, %v29, 0
  %v679 = vsel %vm62, %v44, 0
  %v682 = vsel %vm62, %v45, 0
  %684 = vmatprep.subr.mxu0 0.0
  %685 = vmatpush1.xpose.msra.mxu0 %v679
  %686 = vmatprep.subr.mxu0 0.0
  %687 = vmatpush1.xpose.msra.mxu0 %v682
  %688 = vmatprep.subr.mxu0 0.0
  %689 = vmatpush1.xpose.msra.mxu0 0.0
  %690 = vmatprep.subr.mxu0 0.0
  %691 = vmatpush1.xpose.msra.mxu0 0.0
  %692 = vmatprep.subr.mxu0 0.0
  %693 = vmatpush1.xpose.msra.mxu0 0.0
  %694 = vmatprep.subr.mxu0 0.0
  %695 = vmatpush1.xpose.msra.mxu0 0.0
  %696 = vmatprep.subr.mxu0 0.0
  %697 = vmatpush1.xpose.msra.mxu0 0.0
  %698 = vmatprep.subr.mxu0 0.0
  %699 = vmatpush1.xpose.msra.mxu0 0.0
  %700 = vmatprep.subr.mxu0 0.0
  %701 = vmatpush1.xpose.msra.mxu0 0.0
  %702 = vmatprep.subr.mxu0 0.0
  %703 = vmatpush1.xpose.msra.mxu0 0.0
  %704 = vmatprep.subr.mxu0 0.0
  %705 = vmatpush1.xpose.msra.mxu0 0.0
  %706 = vmatprep.subr.mxu0 0.0
  %707 = vmatpush1.xpose.msra.mxu0 0.0
  %708 = vmatprep.subr.mxu0 0.0
  %709 = vmatpush1.xpose.msra.mxu0 0.0
  %710 = vmatprep.subr.mxu0 0.0
  %711 = vmatpush1.xpose.msra.mxu0 0.0
  %712 = vmatprep.subr.mxu0 0.0
  %713 = vmatpush1.xpose.msra.mxu0 0.0
  %714 = vmatprep.subr.mxu0 0.0
  %715 = vmatpush1.xpose.msra.mxu0 0.0
  %716 = vmatprep.subr.mxu0 0.0
  %717 = vmatpush1.xpose.msra.mxu0 0.0
  %718 = vmatprep.subr.mxu0 0.0
  %719 = vmatpush1.xpose.msra.mxu0 0.0
  %720 = vmatprep.subr.mxu0 0.0
  %721 = vmatpush1.xpose.msra.mxu0 0.0
  %722 = vmatprep.subr.mxu0 0.0
  %723 = vmatpush1.xpose.msra.mxu0 0.0
  %724 = vmatprep.subr.mxu0 0.0
  %725 = vmatpush1.xpose.msra.mxu0 0.0
  %726 = vmatprep.subr.mxu0 0.0
  %727 = vmatpush1.xpose.msra.mxu0 0.0
  %728 = vmatprep.subr.mxu0 0.0
  %729 = vmatpush1.xpose.msra.mxu0 0.0
  %730 = vmatprep.subr.mxu0 0.0
  %731 = vmatpush1.xpose.msra.mxu0 0.0
  %732 = vmatprep.subr.mxu0 0.0
  %733 = vmatpush1.xpose.msra.mxu0 0.0
  %734 = vmatprep.subr.mxu0 0.0
  %735 = vmatpush1.xpose.msra.mxu0 0.0
  %736 = vmatprep.subr.mxu0 0.0
  %737 = vmatpush1.xpose.msra.mxu0 0.0
  %738 = vmatprep.subr.mxu0 0.0
  %739 = vmatpush1.xpose.msra.mxu0 0.0
  %740 = vmatprep.subr.mxu0 0.0
  %741 = vmatpush1.xpose.msra.mxu0 0.0
  %742 = vmatprep.subr.mxu0 0.0
  %743 = vmatpush1.xpose.msra.mxu0 0.0
  %744 = vmatprep.subr.mxu0 0.0
  %745 = vmatpush1.xpose.msra.mxu0 0.0
  %746 = vmatprep.subr.mxu0 0.0
  %747 = vmatpush1.xpose.msra.mxu0 0.0
  %748 = vmatprep.mubr.f32.mxu0 0.0
  %749 = vmatmul.mubr.f32.gmra.mrb[0].mxu0 %v673
  %v750 = vpop.f32.mrb[0].mxu0
  %v751 = vadd.f32 0.0, %v750
  %v752 = vpop.f32.mrb[0].mxu0
  %753 = vmatprep.mubr.f32.mxu0 0.0
  %754 = vmatmul.mubr.f32.gmra.mrb[0].mxu0 %v676
  %v755 = vpop.f32.mrb[0].mxu0
  %v756 = vadd.f32 0.0, %v755
  %v757 = vpop.f32.mrb[0].mxu0
  %758 = vdwg.mxu0
  %v759 = vmul.f32 %v142, 0.17677669
  %v760 = vmul.f32 %v147, 0.17677669
  %v761 = vmul.f32 %v229, 0.17677669
  %v762 = vmul.f32 %v234, 0.17677669
  %v763 = vmul.f32 %v316, 0.17677669
  %v764 = vmul.f32 %v321, 0.17677669
  %v765 = vmul.f32 %v403, 0.17677669
  %v766 = vmul.f32 %v408, 0.17677669
  %v767 = vmul.f32 %v490, 0.17677669
  %v768 = vmul.f32 %v495, 0.17677669
  %v769 = vmul.f32 %v577, 0.17677669
  %v770 = vmul.f32 %v582, 0.17677669
  %v771 = vmul.f32 %v664, 0.17677669
  %v772 = vmul.f32 %v669, 0.17677669
  %v773 = vmul.f32 %v751, 0.17677669
  %v774 = vmul.f32 %v756, 0.17677669
  %vm775 = vcmask 130048
  %v776 = vsel %vm775, %v759, -inf
  %777 = vmax.xlane.f32.xlu0 %v776
  %v778 = vpop.xlane.xlu0 %777
  %v779 = vsel %vm775, %v760, -inf
  %780 = vmax.xlane.f32.xlu0 %v779
  %v781 = vpop.xlane.xlu0 %780
  %v782 = vsel %vm775, %v761, -inf
  %783 = vmax.xlane.f32.xlu0 %v782
  %v784 = vpop.xlane.xlu0 %783
  %v785 = vsel %vm775, %v762, -inf
  %786 = vmax.xlane.f32.xlu0 %v785
  %v787 = vpop.xlane.xlu0 %786
  %v788 = vsel %vm775, %v763, -inf
  %789 = vmax.xlane.f32.xlu0 %v788
  %v790 = vpop.xlane.xlu0 %789
  %v791 = vsel %vm775, %v764, -inf
  %792 = vmax.xlane.f32.xlu0 %v791
  %v793 = vpop.xlane.xlu0 %792
  %v794 = vsel %vm775, %v765, -inf
  %795 = vmax.xlane.f32.xlu0 %v794
  %v796 = vpop.xlane.xlu0 %795
  %v797 = vsel %vm775, %v766, -inf
  %798 = vmax.xlane.f32.xlu0 %v797
  %v799 = vpop.xlane.xlu0 %798
  %v800 = vsel %vm775, %v767, -inf
  %801 = vmax.xlane.f32.xlu0 %v800
  %v802 = vpop.xlane.xlu0 %801
  %v803 = vsel %vm775, %v768, -inf
  %804 = vmax.xlane.f32.xlu0 %v803
  %v805 = vpop.xlane.xlu0 %804
  %v806 = vsel %vm775, %v769, -inf
  %807 = vmax.xlane.f32.xlu0 %v806
  %v808 = vpop.xlane.xlu0 %807
  %v809 = vsel %vm775, %v770, -inf
  %810 = vmax.xlane.f32.xlu0 %v809
  %v811 = vpop.xlane.xlu0 %810
  %v812 = vsel %vm775, %v771, -inf
  %813 = vmax.xlane.f32.xlu0 %v812
  %v814 = vpop.xlane.xlu0 %813
  %v815 = vsel %vm775, %v772, -inf
  %816 = vmax.xlane.f32.xlu0 %v815
  %v817 = vpop.xlane.xlu0 %816
  %v818 = vsel %vm775, %v773, -inf
  %819 = vmax.xlane.f32.xlu0 %v818
  %v820 = vpop.xlane.xlu0 %819
  %v821 = vsel %vm775, %v774, -inf
  %822 = vmax.xlane.f32.xlu0 %v821
  %v823 = vpop.xlane.xlu0 %822
  %v824 = vsub.f32 %v759, %v778
  %v825 = vsub.f32 %v760, %v781
  %v826 = vsub.f32 %v761, %v784
  %v827 = vsub.f32 %v762, %v787
  %v828 = vsub.f32 %v763, %v790
  %v829 = vsub.f32 %v764, %v793
  %v830 = vsub.f32 %v765, %v796
  %v831 = vsub.f32 %v766, %v799
  %v832 = vsub.f32 %v767, %v802
  %v833 = vsub.f32 %v768, %v805
  %v834 = vsub.f32 %v769, %v808
  %v835 = vsub.f32 %v770, %v811
  %v836 = vsub.f32 %v771, %v814
  %v837 = vsub.f32 %v772, %v817
  %v838 = vsub.f32 %v773, %v820
  %v839 = vsub.f32 %v774, %v823
  %v840 = vmul.f32 %v824, 1.442695
  %v841 = vpow.pop %v840
  %v842 = vmul.f32 %v825, 1.442695
  %v843 = vpow.pop %v842
  %v844 = vmul.f32 %v826, 1.442695
  %v845 = vpow.pop %v844
  %v846 = vmul.f32 %v827, 1.442695
  %v847 = vpow.pop %v846
  %v848 = vmul.f32 %v828, 1.442695
  %v849 = vpow.pop %v848
  %v850 = vmul.f32 %v829, 1.442695
  %v851 = vpow.pop %v850
  %v852 = vmul.f32 %v830, 1.442695
  %v853 = vpow.pop %v852
  %v854 = vmul.f32 %v831, 1.442695
  %v855 = vpow.pop %v854
  %v856 = vmul.f32 %v832, 1.442695
  %v857 = vpow.pop %v856
  %v858 = vmul.f32 %v833, 1.442695
  %v859 = vpow.pop %v858
  %v860 = vmul.f32 %v834, 1.442695
  %v861 = vpow.pop %v860
  %v862 = vmul.f32 %v835, 1.442695
  %v863 = vpow.pop %v862
  %v864 = vmul.f32 %v836, 1.442695
  %v865 = vpow.pop %v864
  %v866 = vmul.f32 %v837, 1.442695
  %v867 = vpow.pop %v866
  %v868 = vmul.f32 %v838, 1.442695
  %v869 = vpow.pop %v868
  %v870 = vmul.f32 %v839, 1.442695
  %v871 = vpow.pop %v870
  %v872 = vsel %vm775, %v841, 0.0
  %873 = vadd.xlane.f32.xlu0 %v872
  %v874 = vpop.xlane.xlu0 %873
  %v875 = vsel %vm775, %v843, 0.0
  %876 = vadd.xlane.f32.xlu0 %v875
  %v877 = vpop.xlane.xlu0 %876
  %v878 = vsel %vm775, %v845, 0.0
  %879 = vadd.xlane.f32.xlu0 %v878
  %v880 = vpop.xlane.xlu0 %879
  %v881 = vsel %vm775, %v847, 0.0
  %882 = vadd.xlane.f32.xlu0 %v881
  %v883 = vpop.xlane.xlu0 %882
  %v884 = vsel %vm775, %v849, 0.0
  %885 = vadd.xlane.f32.xlu0 %v884
  %v886 = vpop.xlane.xlu0 %885
  %v887 = vsel %vm775, %v851, 0.0
  %888 = vadd.xlane.f32.xlu0 %v887
  %v889 = vpop.xlane.xlu0 %888
  %v890 = vsel %vm775, %v853, 0.0
  %891 = vadd.xlane.f32.xlu0 %v890
  %v892 = vpop.xlane.xlu0 %891
  %v893 = vsel %vm775, %v855, 0.0
  %894 = vadd.xlane.f32.xlu0 %v893
  %v895 = vpop.xlane.xlu0 %894
  %v896 = vsel %vm775, %v857, 0.0
  %897 = vadd.xlane.f32.xlu0 %v896
  %v898 = vpop.xlane.xlu0 %897
  %v899 = vsel %vm775, %v859, 0.0
  %900 = vadd.xlane.f32.xlu0 %v899
  %v901 = vpop.xlane.xlu0 %900
  %v902 = vsel %vm775, %v861, 0.0
  %903 = vadd.xlane.f32.xlu0 %v902
  %v904 = vpop.xlane.xlu0 %903
  %v905 = vsel %vm775, %v863, 0.0
  %906 = vadd.xlane.f32.xlu0 %v905
  %v907 = vpop.xlane.xlu0 %906
  %v908 = vsel %vm775, %v865, 0.0
  %909 = vadd.xlane.f32.xlu0 %v908
  %v910 = vpop.xlane.xlu0 %909
  %v911 = vsel %vm775, %v867, 0.0
  %912 = vadd.xlane.f32.xlu0 %v911
  %v913 = vpop.xlane.xlu0 %912
  %v914 = vsel %vm775, %v869, 0.0
  %915 = vadd.xlane.f32.xlu0 %v914
  %v916 = vpop.xlane.xlu0 %915
  %v917 = vsel %vm775, %v871, 0.0
  %918 = vadd.xlane.f32.xlu0 %v917
  %v919 = vpop.xlane.xlu0 %918
  %v921 = vsel %vm775, %v841, 0
  %v924 = vsel %vm775, %v843, 0
  %926 = vmatprep.subr.mxu0 0.0
  %927 = vmatpush1.msra.mxu0 %v46
  %928 = vmatprep.subr.mxu0 0.0
  %929 = vmatpush1.msra.mxu0 %v47
  %930 = vmatprep.subr.mxu0 0.0
  %931 = vmatpush1.msra.mxu0 0.0
  %932 = vmatprep.subr.mxu0 0.0
  %933 = vmatpush1.msra.mxu0 0.0
  %934 = vmatprep.subr.mxu0 0.0
  %935 = vmatpush1.msra.mxu0 0.0
  %936 = vmatprep.subr.mxu0 0.0
  %937 = vmatpush1.msra.mxu0 0.0
  %938 = vmatprep.subr.mxu0 0.0
  %939 = vmatpush1.msra.mxu0 0.0
  %940 = vmatprep.subr.mxu0 0.0
  %941 = vmatpush1.msra.mxu0 0.0
  %942 = vmatprep.subr.mxu0 0.0
  %943 = vmatpush1.msra.mxu0 0.0
  %944 = vmatprep.subr.mxu0 0.0
  %945 = vmatpush1.msra.mxu0 0.0
  %946 = vmatprep.subr.mxu0 0.0
  %947 = vmatpush1.msra.mxu0 0.0
  %948 = vmatprep.subr.mxu0 0.0
  %949 = vmatpush1.msra.mxu0 0.0
  %950 = vmatprep.subr.mxu0 0.0
  %951 = vmatpush1.msra.mxu0 0.0
  %952 = vmatprep.subr.mxu0 0.0
  %953 = vmatpush1.msra.mxu0 0.0
  %954 = vmatprep.subr.mxu0 0.0
  %955 = vmatpush1.msra.mxu0 0.0
  %956 = vmatprep.subr.mxu0 0.0
  %957 = vmatpush1.msra.mxu0 0.0
  %958 = vmatprep.subr.mxu0 0.0
  %959 = vmatpush1.msra.mxu0 0.0
  %960 = vmatprep.subr.mxu0 0.0
  %961 = vmatpush1.msra.mxu0 0.0
  %962 = vmatprep.subr.mxu0 0.0
  %963 = vmatpush1.msra.mxu0 0.0
  %964 = vmatprep.subr.mxu0 0.0
  %965 = vmatpush1.msra.mxu0 0.0
  %966 = vmatprep.subr.mxu0 0.0
  %967 = vmatpush1.msra.mxu0 0.0
  %968 = vmatprep.subr.mxu0 0.0
  %969 = vmatpush1.msra.mxu0 0.0
  %970 = vmatprep.subr.mxu0 0.0
  %971 = vmatpush1.msra.mxu0 0.0
  %972 = vmatprep.subr.mxu0 0.0
  %973 = vmatpush1.msra.mxu0 0.0
  %974 = vmatprep.subr.mxu0 0.0
  %975 = vmatpush1.msra.mxu0 0.0
  %976 = vmatprep.subr.mxu0 0.0
  %977 = vmatpush1.msra.mxu0 0.0
  %978 = vmatprep.subr.mxu0 0.0
  %979 = vmatpush1.msra.mxu0 0.0
  %980 = vmatprep.subr.mxu0 0.0
  %981 = vmatpush1.msra.mxu0 0.0
  %982 = vmatprep.subr.mxu0 0.0
  %983 = vmatpush1.msra.mxu0 0.0
  %984 = vmatprep.subr.mxu0 0.0
  %985 = vmatpush1.msra.mxu0 0.0
  %986 = vmatprep.subr.mxu0 0.0
  %987 = vmatpush1.msra.mxu0 0.0
  %988 = vmatprep.subr.mxu0 0.0
  %989 = vmatpush1.msra.mxu0 0.0
  %990 = vmatprep.mubr.f32.mxu0 0.0
  %991 = vmatmul.mubr.f32.gmra.mrb[0].mxu0 %v921
  %v992 = vpop.f32.mrb[0].mxu0
  %v993 = vadd.f32 0.0, %v992
  %v994 = vpop.f32.mrb[0].mxu0
  %995 = vmatprep.mubr.f32.mxu0 0.0
  %996 = vmatmul.mubr.f32.gmra.mrb[0].mxu0 %v924
  %v997 = vpop.f32.mrb[0].mxu0
  %v998 = vadd.f32 0.0, %v997
  %v999 = vpop.f32.mrb[0].mxu0
  %1000 = vdwg.mxu0
  %v1002 = vsel %vm775, %v845, 0
  %v1005 = vsel %vm775, %v847, 0
  %1007 = vmatprep.subr.mxu0 0.0
  %1008 = vmatpush1.msra.mxu0 %v48
  %1009 = vmatprep.subr.mxu0 0.0
  %1010 = vmatpush1.msra.mxu0 %v49
  %1011 = vmatprep.subr.mxu0 0.0
  %1012 = vmatpush1.msra.mxu0 0.0
  %1013 = vmatprep.subr.mxu0 0.0
  %1014 = vmatpush1.msra.mxu0 0.0
  %1015 = vmatprep.subr.mxu0 0.0
  %1016 = vmatpush1.msra.mxu0 0.0
  %1017 = vmatprep.subr.mxu0 0.0
  %1018 = vmatpush1.msra.mxu0 0.0
  %1019 = vmatprep.subr.mxu0 0.0
  %1020 = vmatpush1.msra.mxu0 0.0
  %1021 = vmatprep.subr.mxu0 0.0
  %1022 = vmatpush1.msra.mxu0 0.0
  %1023 = vmatprep.subr.mxu0 0.0
  %1024 = vmatpush1.msra.mxu0 0.0
  %1025 = vmatprep.subr.mxu0 0.0
  %1026 = vmatpush1.msra.mxu0 0.0
  %1027 = vmatprep.subr.mxu0 0.0
  %1028 = vmatpush1.msra.mxu0 0.0
  %1029 = vmatprep.subr.mxu0 0.0
  %1030 = vmatpush1.msra.mxu0 0.0
  %1031 = vmatprep.subr.mxu0 0.0
  %1032 = vmatpush1.msra.mxu0 0.0
  %1033 = vmatprep.subr.mxu0 0.0
  %1034 = vmatpush1.msra.mxu0 0.0
  %1035 = vmatprep.subr.mxu0 0.0
  %1036 = vmatpush1.msra.mxu0 0.0
  %1037 = vmatprep.subr.mxu0 0.0
  %1038 = vmatpush1.msra.mxu0 0.0
  %1039 = vmatprep.subr.mxu0 0.0
  %1040 = vmatpush1.msra.mxu0 0.0
  %1041 = vmatprep.subr.mxu0 0.0
  %1042 = vmatpush1.msra.mxu0 0.0
  %1043 = vmatprep.subr.mxu0 0.0
  %1044 = vmatpush1.msra.mxu0 0.0
  %1045 = vmatprep.subr.mxu0 0.0
  %1046 = vmatpush1.msra.mxu0 0.0
  %1047 = vmatprep.subr.mxu0 0.0
  %1048 = vmatpush1.msra.mxu0 0.0
  %1049 = vmatprep.subr.mxu0 0.0
  %1050 = vmatpush1.msra.mxu0 0.0
  %1051 = vmatprep.subr.mxu0 0.0
  %1052 = vmatpush1.msra.mxu0 0.0
  %1053 = vmatprep.subr.mxu0 0.0
  %1054 = vmatpush1.msra.mxu0 0.0
  %1055 = vmatprep.subr.mxu0 0.0
  %1056 = vmatpush1.msra.mxu0 0.0
  %1057 = vmatprep.subr.mxu0 0.0
  %1058 = vmatpush1.msra.mxu0 0.0
  %1059 = vmatprep.subr.mxu0 0.0
  %1060 = vmatpush1.msra.mxu0 0.0
  %1061 = vmatprep.subr.mxu0 0.0
  %1062 = vmatpush1.msra.mxu0 0.0
  %1063 = vmatprep.subr.mxu0 0.0
  %1064 = vmatpush1.msra.mxu0 0.0
  %1065 = vmatprep.subr.mxu0 0.0
  %1066 = vmatpush1.msra.mxu0 0.0
  %1067 = vmatprep.subr.mxu0 0.0
  %1068 = vmatpush1.msra.mxu0 0.0
  %1069 = vmatprep.subr.mxu0 0.0
  %1070 = vmatpush1.msra.mxu0 0.0
  %1071 = vmatprep.mubr.f32.mxu0 0.0
  %1072 = vmatmul.mubr.f32.gmra.mrb[0].mxu0 %v1002
  %v1073 = vpop.f32.mrb[0].mxu0
  %v1074 = vadd.f32 0.0, %v1073
  %v1075 = vpop.f32.mrb[0].mxu0
  %1076 = vmatprep.mubr.f32.mxu0 0.0
  %1077 = vmatmul.mubr.f32.gmra.mrb[0].mxu0 %v1005
  %v1078 = vpop.f32.mrb[0].mxu0
  %v1079 = vadd.f32 0.0, %v1078
  %v1080 = vpop.f32.mrb[0].mxu0
  %1081 = vdwg.mxu0
  %v1083 = vsel %vm775, %v849, 0
  %v1086 = vsel %vm775, %v851, 0
  %1088 = vmatprep.subr.mxu0 0.0
  %1089 = vmatpush1.msra.mxu0 %v50
  %1090 = vmatprep.subr.mxu0 0.0
  %1091 = vmatpush1.msra.mxu0 %v51
  %1092 = vmatprep.subr.mxu0 0.0
  %1093 = vmatpush1.msra.mxu0 0.0
  %1094 = vmatprep.subr.mxu0 0.0
  %1095 = vmatpush1.msra.mxu0 0.0
  %1096 = vmatprep.subr.mxu0 0.0
  %1097 = vmatpush1.msra.mxu0 0.0
  %1098 = vmatprep.subr.mxu0 0.0
  %1099 = vmatpush1.msra.mxu0 0.0
  %1100 = vmatprep.subr.mxu0 0.0
  %1101 = vmatpush1.msra.mxu0 0.0
  %1102 = vmatprep.subr.mxu0 0.0
  %1103 = vmatpush1.msra.mxu0 0.0
  %1104 = vmatprep.subr.mxu0 0.0
  %1105 = vmatpush1.msra.mxu0 0.0
  %1106 = vmatprep.subr.mxu0 0.0
  %1107 = vmatpush1.msra.mxu0 0.0
  %1108 = vmatprep.subr.mxu0 0.0
  %1109 = vmatpush1.msra.mxu0 0.0
  %1110 = vmatprep.subr.mxu0 0.0
  %1111 = vmatpush1.msra.mxu0 0.0
  %1112 = vmatprep.subr.mxu0 0.0
  %1113 = vmatpush1.msra.mxu0 0.0
  %1114 = vmatprep.subr.mxu0 0.0
  %1115 = vmatpush1.msra.mxu0 0.0
  %1116 = vmatprep.subr.mxu0 0.0
  %1117 = vmatpush1.msra.mxu0 0.0
  %1118 = vmatprep.subr.mxu0 0.0
  %1119 = vmatpush1.msra.mxu0 0.0
  %1120 = vmatprep.subr.mxu0 0.0
  %1121 = vmatpush1.msra.mxu0 0.0
  %1122 = vmatprep.subr.mxu0 0.0
  %1123 = vmatpush1.msra.mxu0 0.0
  %1124 = vmatprep.subr.mxu0 0.0
  %1125 = vmatpush1.msra.mxu0 0.0
  %1126 = vmatprep.subr.mxu0 0.0
  %1127 = vmatpush1.msra.mxu0 0.0
  %1128 = vmatprep.subr.mxu0 0.0
  %1129 = vmatpush1.msra.mxu0 0.0
  %1130 = vmatprep.subr.mxu0 0.0
  %1131 = vmatpush1.msra.mxu0 0.0
  %1132 = vmatprep.subr.mxu0 0.0
  %1133 = vmatpush1.msra.mxu0 0.0
  %1134 = vmatprep.subr.mxu0 0.0
  %1135 = vmatpush1.msra.mxu0 0.0
  %1136 = vmatprep.subr.mxu0 0.0
  %1137 = vmatpush1.msra.mxu0 0.0
  %1138 = vmatprep.subr.mxu0 0.0
  %1139 = vmatpush1.msra.mxu0 0.0
  %1140 = vmatprep.subr.mxu0 0.0
  %1141 = vmatpush1.msra.mxu0 0.0
  %1142 = vmatprep.subr.mxu0 0.0
  %1143 = vmatpush1.msra.mxu0 0.0
  %1144 = vmatprep.subr.mxu0 0.0
  %1145 = vmatpush1.msra.mxu0 0.0
  %1146 = vmatprep.subr.mxu0 0.0
  %1147 = vmatpush1.msra.mxu0 0.0
  %1148 = vmatprep.subr.mxu0 0.0
  %1149 = vmatpush1.msra.mxu0 0.0
  %1150 = vmatprep.subr.mxu0 0.0
  %1151 = vmatpush1.msra.mxu0 0.0
  %1152 = vmatprep.mubr.f32.mxu0 0.0
  %1153 = vmatmul.mubr.f32.gmra.mrb[0].mxu0 %v1083
  %v1154 = vpop.f32.mrb[0].mxu0
  %v1155 = vadd.f32 0.0, %v1154
  %v1156 = vpop.f32.mrb[0].mxu0
  %1157 = vmatprep.mubr.f32.mxu0 0.0
  %1158 = vmatmul.mubr.f32.gmra.mrb[0].mxu0 %v1086
  %v1159 = vpop.f32.mrb[0].mxu0
  %v1160 = vadd.f32 0.0, %v1159
  %v1161 = vpop.f32.mrb[0].mxu0
  %1162 = vdwg.mxu0
  %v1164 = vsel %vm775, %v853, 0
  %v1167 = vsel %vm775, %v855, 0
  %1169 = vmatprep.subr.mxu0 0.0
  %1170 = vmatpush1.msra.mxu0 %v52
  %1171 = vmatprep.subr.mxu0 0.0
  %1172 = vmatpush1.msra.mxu0 %v53
  %1173 = vmatprep.subr.mxu0 0.0
  %1174 = vmatpush1.msra.mxu0 0.0
  %1175 = vmatprep.subr.mxu0 0.0
  %1176 = vmatpush1.msra.mxu0 0.0
  %1177 = vmatprep.subr.mxu0 0.0
  %1178 = vmatpush1.msra.mxu0 0.0
  %1179 = vmatprep.subr.mxu0 0.0
  %1180 = vmatpush1.msra.mxu0 0.0
  %1181 = vmatprep.subr.mxu0 0.0
  %1182 = vmatpush1.msra.mxu0 0.0
  %1183 = vmatprep.subr.mxu0 0.0
  %1184 = vmatpush1.msra.mxu0 0.0
  %1185 = vmatprep.subr.mxu0 0.0
  %1186 = vmatpush1.msra.mxu0 0.0
  %1187 = vmatprep.subr.mxu0 0.0
  %1188 = vmatpush1.msra.mxu0 0.0
  %1189 = vmatprep.subr.mxu0 0.0
  %1190 = vmatpush1.msra.mxu0 0.0
  %1191 = vmatprep.subr.mxu0 0.0
  %1192 = vmatpush1.msra.mxu0 0.0
  %1193 = vmatprep.subr.mxu0 0.0
  %1194 = vmatpush1.msra.mxu0 0.0
  %1195 = vmatprep.subr.mxu0 0.0
  %1196 = vmatpush1.msra.mxu0 0.0
  %1197 = vmatprep.subr.mxu0 0.0
  %1198 = vmatpush1.msra.mxu0 0.0
  %1199 = vmatprep.subr.mxu0 0.0
  %1200 = vmatpush1.msra.mxu0 0.0
  %1201 = vmatprep.subr.mxu0 0.0
  %1202 = vmatpush1.msra.mxu0 0.0
  %1203 = vmatprep.subr.mxu0 0.0
  %1204 = vmatpush1.msra.mxu0 0.0
  %1205 = vmatprep.subr.mxu0 0.0
  %1206 = vmatpush1.msra.mxu0 0.0
  %1207 = vmatprep.subr.mxu0 0.0
  %1208 = vmatpush1.msra.mxu0 0.0
  %1209 = vmatprep.subr.mxu0 0.0
  %1210 = vmatpush1.msra.mxu0 0.0
  %1211 = vmatprep.subr.mxu0 0.0
  %1212 = vmatpush1.msra.mxu0 0.0
  %1213 = vmatprep.subr.mxu0 0.0
  %1214 = vmatpush1.msra.mxu0 0.0
  %1215 = vmatprep.subr.mxu0 0.0
  %1216 = vmatpush1.msra.mxu0 0.0
  %1217 = vmatprep.subr.mxu0 0.0
  %1218 = vmatpush1.msra.mxu0 0.0
  %1219 = vmatprep.subr.mxu0 0.0
  %1220 = vmatpush1.msra.mxu0 0.0
  %1221 = vmatprep.subr.mxu0 0.0
  %1222 = vmatpush1.msra.mxu0 0.0
  %1223 = vmatprep.subr.mxu0 0.0
  %1224 = vmatpush1.msra.mxu0 0.0
  %1225 = vmatprep.subr.mxu0 0.0
  %1226 = vmatpush1.msra.mxu0 0.0
  %1227 = vmatprep.subr.mxu0 0.0
  %1228 = vmatpush1.msra.mxu0 0.0
  %1229 = vmatprep.subr.mxu0 0.0
  %1230 = vmatpush1.msra.mxu0 0.0
  %1231 = vmatprep.subr.mxu0 0.0
  %1232 = vmatpush1.msra.mxu0 0.0
  %1233 = vmatprep.mubr.f32.mxu0 0.0
  %1234 = vmatmul.mubr.f32.gmra.mrb[0].mxu0 %v1164
  %v1235 = vpop.f32.mrb[0].mxu0
  %v1236 = vadd.f32 0.0, %v1235
  %v1237 = vpop.f32.mrb[0].mxu0
  %1238 = vmatprep.mubr.f32.mxu0 0.0
  %1239 = vmatmul.mubr.f32.gmra.mrb[0].mxu0 %v1167
  %v1240 = vpop.f32.mrb[0].mxu0
  %v1241 = vadd.f32 0.0, %v1240
  %v1242 = vpop.f32.mrb[0].mxu0
  %1243 = vdwg.mxu0
  %v1245 = vsel %vm775, %v857, 0
  %v1248 = vsel %vm775, %v859, 0
  %1250 = vmatprep.subr.mxu0 0.0
  %1251 = vmatpush1.msra.mxu0 %v54
  %1252 = vmatprep.subr.mxu0 0.0
  %1253 = vmatpush1.msra.mxu0 %v55
  %1254 = vmatprep.subr.mxu0 0.0
  %1255 = vmatpush1.msra.mxu0 0.0
  %1256 = vmatprep.subr.mxu0 0.0
  %1257 = vmatpush1.msra.mxu0 0.0
  %1258 = vmatprep.subr.mxu0 0.0
  %1259 = vmatpush1.msra.mxu0 0.0
  %1260 = vmatprep.subr.mxu0 0.0
  %1261 = vmatpush1.msra.mxu0 0.0
  %1262 = vmatprep.subr.mxu0 0.0
  %1263 = vmatpush1.msra.mxu0 0.0
  %1264 = vmatprep.subr.mxu0 0.0
  %1265 = vmatpush1.msra.mxu0 0.0
  %1266 = vmatprep.subr.mxu0 0.0
  %1267 = vmatpush1.msra.mxu0 0.0
  %1268 = vmatprep.subr.mxu0 0.0
  %1269 = vmatpush1.msra.mxu0 0.0
  %1270 = vmatprep.subr.mxu0 0.0
  %1271 = vmatpush1.msra.mxu0 0.0
  %1272 = vmatprep.subr.mxu0 0.0
  %1273 = vmatpush1.msra.mxu0 0.0
  %1274 = vmatprep.subr.mxu0 0.0
  %1275 = vmatpush1.msra.mxu0 0.0
  %1276 = vmatprep.subr.mxu0 0.0
  %1277 = vmatpush1.msra.mxu0 0.0
  %1278 = vmatprep.subr.mxu0 0.0
  %1279 = vmatpush1.msra.mxu0 0.0
  %1280 = vmatprep.subr.mxu0 0.0
  %1281 = vmatpush1.msra.mxu0 0.0
  %1282 = vmatprep.subr.mxu0 0.0
  %1283 = vmatpush1.msra.mxu0 0.0
  %1284 = vmatprep.subr.mxu0 0.0
  %1285 = vmatpush1.msra.mxu0 0.0
  %1286 = vmatprep.subr.mxu0 0.0
  %1287 = vmatpush1.msra.mxu0 0.0
  %1288 = vmatprep.subr.mxu0 0.0
  %1289 = vmatpush1.msra.mxu0 0.0
  %1290 = vmatprep.subr.mxu0 0.0
  %1291 = vmatpush1.msra.mxu0 0.0
  %1292 = vmatprep.subr.mxu0 0.0
  %1293 = vmatpush1.msra.mxu0 0.0
  %1294 = vmatprep.subr.mxu0 0.0
  %1295 = vmatpush1.msra.mxu0 0.0
  %1296 = vmatprep.subr.mxu0 0.0
  %1297 = vmatpush1.msra.mxu0 0.0
  %1298 = vmatprep.subr.mxu0 0.0
  %1299 = vmatpush1.msra.mxu0 0.0
  %1300 = vmatprep.subr.mxu0 0.0
  %1301 = vmatpush1.msra.mxu0 0.0
  %1302 = vmatprep.subr.mxu0 0.0
  %1303 = vmatpush1.msra.mxu0 0.0
  %1304 = vmatprep.subr.mxu0 0.0
  %1305 = vmatpush1.msra.mxu0 0.0
  %1306 = vmatprep.subr.mxu0 0.0
  %1307 = vmatpush1.msra.mxu0 0.0
  %1308 = vmatprep.subr.mxu0 0.0
  %1309 = vmatpush1.msra.mxu0 0.0
  %1310 = vmatprep.subr.mxu0 0.0
  %1311 = vmatpush1.msra.mxu0 0.0
  %1312 = vmatprep.subr.mxu0 0.0
  %1313 = vmatpush1.msra.mxu0 0.0
  %1314 = vmatprep.mubr.f32.mxu0 0.0
  %1315 = vmatmul.mubr.f32.gmra.mrb[0].mxu0 %v1245
  %v1316 = vpop.f32.mrb[0].mxu0
  %v1317 = vadd.f32 0.0, %v1316
  %v1318 = vpop.f32.mrb[0].mxu0
  %1319 = vmatprep.mubr.f32.mxu0 0.0
  %1320 = vmatmul.mubr.f32.gmra.mrb[0].mxu0 %v1248
  %v1321 = vpop.f32.mrb[0].mxu0
  %v1322 = vadd.f32 0.0, %v1321
  %v1323 = vpop.f32.mrb[0].mxu0
  %1324 = vdwg.mxu0
  %v1326 = vsel %vm775, %v861, 0
  %v1329 = vsel %vm775, %v863, 0
  %1331 = vmatprep.subr.mxu0 0.0
  %1332 = vmatpush1.msra.mxu0 %v56
  %1333 = vmatprep.subr.mxu0 0.0
  %1334 = vmatpush1.msra.mxu0 %v57
  %1335 = vmatprep.subr.mxu0 0.0
  %1336 = vmatpush1.msra.mxu0 0.0
  %1337 = vmatprep.subr.mxu0 0.0
  %1338 = vmatpush1.msra.mxu0 0.0
  %1339 = vmatprep.subr.mxu0 0.0
  %1340 = vmatpush1.msra.mxu0 0.0
  %1341 = vmatprep.subr.mxu0 0.0
  %1342 = vmatpush1.msra.mxu0 0.0
  %1343 = vmatprep.subr.mxu0 0.0
  %1344 = vmatpush1.msra.mxu0 0.0
  %1345 = vmatprep.subr.mxu0 0.0
  %1346 = vmatpush1.msra.mxu0 0.0
  %1347 = vmatprep.subr.mxu0 0.0
  %1348 = vmatpush1.msra.mxu0 0.0
  %1349 = vmatprep.subr.mxu0 0.0
  %1350 = vmatpush1.msra.mxu0 0.0
  %1351 = vmatprep.subr.mxu0 0.0
  %1352 = vmatpush1.msra.mxu0 0.0
  %1353 = vmatprep.subr.mxu0 0.0
  %1354 = vmatpush1.msra.mxu0 0.0
  %1355 = vmatprep.subr.mxu0 0.0
  %1356 = vmatpush1.msra.mxu0 0.0
  %1357 = vmatprep.subr.mxu0 0.0
  %1358 = vmatpush1.msra.mxu0 0.0
  %1359 = vmatprep.subr.mxu0 0.0
  %1360 = vmatpush1.msra.mxu0 0.0
  %1361 = vmatprep.subr.mxu0 0.0
  %1362 = vmatpush1.msra.mxu0 0.0
  %1363 = vmatprep.subr.mxu0 0.0
  %1364 = vmatpush1.msra.mxu0 0.0
  %1365 = vmatprep.subr.mxu0 0.0
  %1366 = vmatpush1.msra.mxu0 0.0
  %1367 = vmatprep.subr.mxu0 0.0
  %1368 = vmatpush1.msra.mxu0 0.0
  %1369 = vmatprep.subr.mxu0 0.0
  %1370 = vmatpush1.msra.mxu0 0.0
  %1371 = vmatprep.subr.mxu0 0.0
  %1372 = vmatpush1.msra.mxu0 0.0
  %1373 = vmatprep.subr.mxu0 0.0
  %1374 = vmatpush1.msra.mxu0 0.0
  %1375 = vmatprep.subr.mxu0 0.0
  %1376 = vmatpush1.msra.mxu0 0.0
  %1377 = vmatprep.subr.mxu0 0.0
  %1378 = vmatpush1.msra.mxu0 0.0
  %1379 = vmatprep.subr.mxu0 0.0
  %1380 = vmatpush1.msra.mxu0 0.0
  %1381 = vmatprep.subr.mxu0 0.0
  %1382 = vmatpush1.msra.mxu0 0.0
  %1383 = vmatprep.subr.mxu0 0.0
  %1384 = vmatpush1.msra.mxu0 0.0
  %1385 = vmatprep.subr.mxu0 0.0
  %1386 = vmatpush1.msra.mxu0 0.0
  %1387 = vmatprep.subr.mxu0 0.0
  %1388 = vmatpush1.msra.mxu0 0.0
  %1389 = vmatprep.subr.mxu0 0.0
  %1390 = vmatpush1.msra.mxu0 0.0
  %1391 = vmatprep.subr.mxu0 0.0
  %1392 = vmatpush1.msra.mxu0 0.0
  %1393 = vmatprep.subr.mxu0 0.0
  %1394 = vmatpush1.msra.mxu0 0.0
  %1395 = vmatprep.mubr.f32.mxu0 0.0
  %1396 = vmatmul.mubr.f32.gmra.mrb[0].mxu0 %v1326
  %v1397 = vpop.f32.mrb[0].mxu0
  %v1398 = vadd.f32 0.0, %v1397
  %v1399 = vpop.f32.mrb[0].mxu0
  %1400 = vmatprep.mubr.f32.mxu0 0.0
  %1401 = vmatmul.mubr.f32.gmra.mrb[0].mxu0 %v1329
  %v1402 = vpop.f32.mrb[0].mxu0
  %v1403 = vadd.f32 0.0, %v1402
  %v1404 = vpop.f32.mrb[0].mxu0
  %1405 = vdwg.mxu0
  %v1407 = vsel %vm775, %v865, 0
  %v1410 = vsel %vm775, %v867, 0
  %1412 = vmatprep.subr.mxu0 0.0
  %1413 = vmatpush1.msra.mxu0 %v58
  %1414 = vmatprep.subr.mxu0 0.0
  %1415 = vmatpush1.msra.mxu0 %v59
  %1416 = vmatprep.subr.mxu0 0.0
  %1417 = vmatpush1.msra.mxu0 0.0
  %1418 = vmatprep.subr.mxu0 0.0
  %1419 = vmatpush1.msra.mxu0 0.0
  %1420 = vmatprep.subr.mxu0 0.0
  %1421 = vmatpush1.msra.mxu0 0.0
  %1422 = vmatprep.subr.mxu0 0.0
  %1423 = vmatpush1.msra.mxu0 0.0
  %1424 = vmatprep.subr.mxu0 0.0
  %1425 = vmatpush1.msra.mxu0 0.0
  %1426 = vmatprep.subr.mxu0 0.0
  %1427 = vmatpush1.msra.mxu0 0.0
  %1428 = vmatprep.subr.mxu0 0.0
  %1429 = vmatpush1.msra.mxu0 0.0
  %1430 = vmatprep.subr.mxu0 0.0
  %1431 = vmatpush1.msra.mxu0 0.0
  %1432 = vmatprep.subr.mxu0 0.0
  %1433 = vmatpush1.msra.mxu0 0.0
  %1434 = vmatprep.subr.mxu0 0.0
  %1435 = vmatpush1.msra.mxu0 0.0
  %1436 = vmatprep.subr.mxu0 0.0
  %1437 = vmatpush1.msra.mxu0 0.0
  %1438 = vmatprep.subr.mxu0 0.0
  %1439 = vmatpush1.msra.mxu0 0.0
  %1440 = vmatprep.subr.mxu0 0.0
  %1441 = vmatpush1.msra.mxu0 0.0
  %1442 = vmatprep.subr.mxu0 0.0
  %1443 = vmatpush1.msra.mxu0 0.0
  %1444 = vmatprep.subr.mxu0 0.0
  %1445 = vmatpush1.msra.mxu0 0.0
  %1446 = vmatprep.subr.mxu0 0.0
  %1447 = vmatpush1.msra.mxu0 0.0
  %1448 = vmatprep.subr.mxu0 0.0
  %1449 = vmatpush1.msra.mxu0 0.0
  %1450 = vmatprep.subr.mxu0 0.0
  %1451 = vmatpush1.msra.mxu0 0.0
  %1452 = vmatprep.subr.mxu0 0.0
  %1453 = vmatpush1.msra.mxu0 0.0
  %1454 = vmatprep.subr.mxu0 0.0
  %1455 = vmatpush1.msra.mxu0 0.0
  %1456 = vmatprep.subr.mxu0 0.0
  %1457 = vmatpush1.msra.mxu0 0.0
  %1458 = vmatprep.subr.mxu0 0.0
  %1459 = vmatpush1.msra.mxu0 0.0
  %1460 = vmatprep.subr.mxu0 0.0
  %1461 = vmatpush1.msra.mxu0 0.0
  %1462 = vmatprep.subr.mxu0 0.0
  %1463 = vmatpush1.msra.mxu0 0.0
  %1464 = vmatprep.subr.mxu0 0.0
  %1465 = vmatpush1.msra.mxu0 0.0
  %1466 = vmatprep.subr.mxu0 0.0
  %1467 = vmatpush1.msra.mxu0 0.0
  %1468 = vmatprep.subr.mxu0 0.0
  %1469 = vmatpush1.msra.mxu0 0.0
  %1470 = vmatprep.subr.mxu0 0.0
  %1471 = vmatpush1.msra.mxu0 0.0
  %1472 = vmatprep.subr.mxu0 0.0
  %1473 = vmatpush1.msra.mxu0 0.0
  %1474 = vmatprep.subr.mxu0 0.0
  %1475 = vmatpush1.msra.mxu0 0.0
  %1476 = vmatprep.mubr.f32.mxu0 0.0
  %1477 = vmatmul.mubr.f32.gmra.mrb[0].mxu0 %v1407
  %v1478 = vpop.f32.mrb[0].mxu0
  %v1479 = vadd.f32 0.0, %v1478
  %v1480 = vpop.f32.mrb[0].mxu0
  %1481 = vmatprep.mubr.f32.mxu0 0.0
  %1482 = vmatmul.mubr.f32.gmra.mrb[0].mxu0 %v1410
  %v1483 = vpop.f32.mrb[0].mxu0
  %v1484 = vadd.f32 0.0, %v1483
  %v1485 = vpop.f32.mrb[0].mxu0
  %1486 = vdwg.mxu0
  %v1488 = vsel %vm775, %v869, 0
  %v1491 = vsel %vm775, %v871, 0
  %1493 = vmatprep.subr.mxu0 0.0
  %1494 = vmatpush1.msra.mxu0 %v60
  %1495 = vmatprep.subr.mxu0 0.0
  %1496 = vmatpush1.msra.mxu0 %v61
  %1497 = vmatprep.subr.mxu0 0.0
  %1498 = vmatpush1.msra.mxu0 0.0
  %1499 = vmatprep.subr.mxu0 0.0
  %1500 = vmatpush1.msra.mxu0 0.0
  %1501 = vmatprep.subr.mxu0 0.0
  %1502 = vmatpush1.msra.mxu0 0.0
  %1503 = vmatprep.subr.mxu0 0.0
  %1504 = vmatpush1.msra.mxu0 0.0
  %1505 = vmatprep.subr.mxu0 0.0
  %1506 = vmatpush1.msra.mxu0 0.0
  %1507 = vmatprep.subr.mxu0 0.0
  %1508 = vmatpush1.msra.mxu0 0.0
  %1509 = vmatprep.subr.mxu0 0.0
  %1510 = vmatpush1.msra.mxu0 0.0
  %1511 = vmatprep.subr.mxu0 0.0
  %1512 = vmatpush1.msra.mxu0 0.0
  %1513 = vmatprep.subr.mxu0 0.0
  %1514 = vmatpush1.msra.mxu0 0.0
  %1515 = vmatprep.subr.mxu0 0.0
  %1516 = vmatpush1.msra.mxu0 0.0
  %1517 = vmatprep.subr.mxu0 0.0
  %1518 = vmatpush1.msra.mxu0 0.0
  %1519 = vmatprep.subr.mxu0 0.0
  %1520 = vmatpush1.msra.mxu0 0.0
  %1521 = vmatprep.subr.mxu0 0.0
  %1522 = vmatpush1.msra.mxu0 0.0
  %1523 = vmatprep.subr.mxu0 0.0
  %1524 = vmatpush1.msra.mxu0 0.0
  %1525 = vmatprep.subr.mxu0 0.0
  %1526 = vmatpush1.msra.mxu0 0.0
  %1527 = vmatprep.subr.mxu0 0.0
  %1528 = vmatpush1.msra.mxu0 0.0
  %1529 = vmatprep.subr.mxu0 0.0
  %1530 = vmatpush1.msra.mxu0 0.0
  %1531 = vmatprep.subr.mxu0 0.0
  %1532 = vmatpush1.msra.mxu0 0.0
  %1533 = vmatprep.subr.mxu0 0.0
  %1534 = vmatpush1.msra.mxu0 0.0
  %1535 = vmatprep.subr.mxu0 0.0
  %1536 = vmatpush1.msra.mxu0 0.0
  %1537 = vmatprep.subr.mxu0 0.0
  %1538 = vmatpush1.msra.mxu0 0.0
  %1539 = vmatprep.subr.mxu0 0.0
  %1540 = vmatpush1.msra.mxu0 0.0
  %1541 = vmatprep.subr.mxu0 0.0
  %1542 = vmatpush1.msra.mxu0 0.0
  %1543 = vmatprep.subr.mxu0 0.0
  %1544 = vmatpush1.msra.mxu0 0.0
  %1545 = vmatprep.subr.mxu0 0.0
  %1546 = vmatpush1.msra.mxu0 0.0
  %1547 = vmatprep.subr.mxu0 0.0
  %1548 = vmatpush1.msra.mxu0 0.0
  %1549 = vmatprep.subr.mxu0 0.0
  %1550 = vmatpush1.msra.mxu0 0.0
  %1551 = vmatprep.subr.mxu0 0.0
  %1552 = vmatpush1.msra.mxu0 0.0
  %1553 = vmatprep.subr.mxu0 0.0
  %1554 = vmatpush1.msra.mxu0 0.0
  %1555 = vmatprep.subr.mxu0 0.0
  %1556 = vmatpush1.msra.mxu0 0.0
  %1557 = vmatprep.mubr.f32.mxu0 0.0
  %1558 = vmatmul.mubr.f32.gmra.mrb[0].mxu0 %v1488
  %v1559 = vpop.f32.mrb[0].mxu0
  %v1560 = vadd.f32 0.0, %v1559
  %v1561 = vpop.f32.mrb[0].mxu0
  %1562 = vmatprep.mubr.f32.mxu0 0.0
  %1563 = vmatmul.mubr.f32.gmra.mrb[0].mxu0 %v1491
  %v1564 = vpop.f32.mrb[0].mxu0
  %v1565 = vadd.f32 0.0, %v1564
  %v1566 = vpop.f32.mrb[0].mxu0
  %1567 = vdwg.mxu0
  %v1568 = vrcp.pop %v874
  %v1569 = vrcp.pop %v877
  %v1570 = vrcp.pop %v880
  %v1571 = vrcp.pop %v883
  %v1572 = vrcp.pop %v886
  %v1573 = vrcp.pop %v889
  %v1574 = vrcp.pop %v892
  %v1575 = vrcp.pop %v895
  %v1576 = vrcp.pop %v898
  %v1577 = vrcp.pop %v901
  %v1578 = vrcp.pop %v904
  %v1579 = vrcp.pop %v907
  %v1580 = vrcp.pop %v910
  %v1581 = vrcp.pop %v913
  %v1582 = vrcp.pop %v916
  %v1583 = vrcp.pop %v919
  %v1584 = vmul.f32 %v993, %v1568
  %v1585 = vmul.f32 %v998, %v1569
  %v1586 = vmul.f32 %v1074, %v1570
  %v1587 = vmul.f32 %v1079, %v1571
  %v1588 = vmul.f32 %v1155, %v1572
  %v1589 = vmul.f32 %v1160, %v1573
  %v1590 = vmul.f32 %v1236, %v1574
  %v1591 = vmul.f32 %v1241, %v1575
  %v1592 = vmul.f32 %v1317, %v1576
  %v1593 = vmul.f32 %v1322, %v1577
  %v1594 = vmul.f32 %v1398, %v1578
  %v1595 = vmul.f32 %v1403, %v1579
  %v1596 = vmul.f32 %v1479, %v1580
  %v1597 = vmul.f32 %v1484, %v1581
  %v1598 = vmul.f32 %v1560, %v1582
  %v1599 = vmul.f32 %v1565, %v1583
  %1600 = vst.msk [vmem:[%s3] sm:$0xff] %vm62, %v1584
  %1601 = vst.msk [vmem:[%s3 + $0x8] sm:$0xff] %vm62, %v1585
  %1602 = vst.msk [vmem:[%s3 + $0x10] sm:$0xff] %vm62, %v1586
  %1603 = vst.msk [vmem:[%s3 + $0x18] sm:$0xff] %vm62, %v1587
  %1604 = vst.msk [vmem:[%s3 + $0x20] sm:$0xff] %vm62, %v1588
  %1605 = vst.msk [vmem:[%s3 + $0x28] sm:$0xff] %vm62, %v1589
  %1606 = vst.msk [vmem:[%s3 + $0x30] sm:$0xff] %vm62, %v1590
  %1607 = vst.msk [vmem:[%s3 + $0x38] sm:$0xff] %vm62, %v1591
  %1608 = vst.msk [vmem:[%s3 + $0x40] sm:$0xff] %vm62, %v1592
  %1609 = vst.msk [vmem:[%s3 + $0x48] sm:$0xff] %vm62, %v1593
  %1610 = vst.msk [vmem:[%s3 + $0x50] sm:$0xff] %vm62, %v1594
  %1611 = vst.msk [vmem:[%s3 + $0x58] sm:$0xff] %vm62, %v1595
  %1612 = vst.msk [vmem:[%s3 + $0x60] sm:$0xff] %vm62, %v1596
  %1613 = vst.msk [vmem:[%s3 + $0x68] sm:$0xff] %vm62, %v1597
  %1614 = vst.msk [vmem:[%s3 + $0x70] sm:$0xff] %vm62, %v1598
  %1615 = vst.msk [vmem:[%s3 + $0x78] sm:$0xff] %vm62, %v1599
  // Predicated region
  $region14: #{ak_bert_forward.22} parent=0 // pred_check
    _
  $region15: #{ak_bert_forward.22} parent=0 // pred_check_branch
    %1617 = sbr.rel (0) target = $region17
  $region16: #{ak_bert_forward.22} parent=0 // pred_region
    _
  $region17: #{ak_bert_forward.22} parent=0 // pred_fallthru
    _
  // Predicated region
  $region18: #{ak_bert_forward.22} parent=0 // pred_check
    _
  $region19: #{ak_bert_forward.22} parent=0 // pred_check_branch
    %1619 = sbr.rel (0) target = $region21
  $region20: #{ak_bert_forward.22} parent=0 // pred_region
    _
  $region21: #{ak_bert_forward.22} parent=0 // pred_fallthru
    _

// kernel: ak_bert_forward.24
$region0: #{ak_bert_forward.24}
  #allocation0 [shape = 'u32[]', space=smem, size = 0x4, offset = 0x4, fixed_abs, tag = 'smem constant byte address 0x4 - core index']
  #allocation1 [shape = 'u32[144,128]{1,0:T(1,128)}', space=vmem, size = 0x12000, scoped, tag = 'internal scratch']
  %s0 = inlined_call_operand.vmem [shape: f32[32,128], index: 0, kind: input, shape index: {}]
  %s1 = inlined_call_operand.vmem [shape: f32[128,256], index: 1, kind: input, shape index: {}]
  %s2 = inlined_call_operand.vmem [shape: f32[1,256], index: 2, kind: input, shape index: {}]
  %s3 = inlined_call_operand.vmem [shape: f32[256,128], index: 3, kind: input, shape index: {}]
  %s4 = inlined_call_operand.vmem [shape: f32[1,128], index: 4, kind: input, shape index: {}, may-alias: {4,6}]
  %s5 = inlined_call_operand.vmem [shape: f32[1,128], index: 5, kind: input, shape index: {}]
  %s6 = inlined_call_operand.vmem [shape: f32[1,128], index: 6, kind: input, shape index: {}, may-alias: {4,6}]
  %s7 = inlined_call_operand.vmem [shape: f32[32,128], index: 7, kind: output, shape index: {}]
  %s8 = sld [smem:[#allocation0]]
  $region38: #{ak_bert_forward.24} parent=0
    _
  %s10 = ssub.s32 1, %s8
  %s11 = scalar_select 0, %s10, %s8
  // Predicated region
  $region2: #{ak_bert_forward.24} parent=0 // pred_check
    _
  $region3: #{ak_bert_forward.24} parent=0 // pred_check_branch
    %13 = sbr.rel (0) target = $region5
  $region4: #{ak_bert_forward.24} parent=0 // pred_region
    _
  $region5: #{ak_bert_forward.24} parent=0 // pred_fallthru
    _
  // Predicated region
  $region6: #{ak_bert_forward.24} parent=0 // pred_check
    _
  $region7: #{ak_bert_forward.24} parent=0 // pred_check_branch
    %15 = sbr.rel (0) target = $region9
  $region8: #{ak_bert_forward.24} parent=0 // pred_region
    _
  $region9: #{ak_bert_forward.24} parent=0 // pred_fallthru
    _
  // Predicated region
  $region10: #{ak_bert_forward.24} parent=0 // pred_check
    _
  $region11: #{ak_bert_forward.24} parent=0 // pred_check_branch
    %17 = sbr.rel (0) target = $region13
  $region12: #{ak_bert_forward.24} parent=0 // pred_region
    _
  $region13: #{ak_bert_forward.24} parent=0 // pred_fallthru
    _
  // Predicated region
  $region14: #{ak_bert_forward.24} parent=0 // pred_check
    _
  $region15: #{ak_bert_forward.24} parent=0 // pred_check_branch
    %19 = sbr.rel (0) target = $region17
  $region16: #{ak_bert_forward.24} parent=0 // pred_region
    _
  $region17: #{ak_bert_forward.24} parent=0 // pred_fallthru
    _
  // Predicated region
  $region18: #{ak_bert_forward.24} parent=0 // pred_check
    _
  $region19: #{ak_bert_forward.24} parent=0 // pred_check_branch
    %21 = sbr.rel (0) target = $region21
  $region20: #{ak_bert_forward.24} parent=0 // pred_region
    _
  $region21: #{ak_bert_forward.24} parent=0 // pred_fallthru
    _
  // Predicated region
  $region22: #{ak_bert_forward.24} parent=0 // pred_check
    _
  $region23: #{ak_bert_forward.24} parent=0 // pred_check_branch
    %23 = sbr.rel (0) target = $region25
  $region24: #{ak_bert_forward.24} parent=0 // pred_region
    _
  $region25: #{ak_bert_forward.24} parent=0 // pred_fallthru
    _
  // Predicated region
  $region26: #{ak_bert_forward.24} parent=0 // pred_check
    _
  $region27: #{ak_bert_forward.24} parent=0 // pred_check_branch
    %25 = sbr.rel (0) target = $region29
  $region28: #{ak_bert_forward.24} parent=0 // pred_region
    _
  $region29: #{ak_bert_forward.24} parent=0 // pred_fallthru
    _
  %v26 = vld [vmem:[%s0] sm:$0xff]
  %v27 = vld [vmem:[%s0 + $0x8] sm:$0xff]
  %v28 = vld [vmem:[%s0 + $0x10] sm:$0xff]
  %v29 = vld [vmem:[%s0 + $0x18] sm:$0xff]
  %v30 = vld [vmem:[%s1] sm:$0xff]
  %v31 = vld [vmem:[%s1 + $0x8] sm:$0xff]
  %v32 = vld [vmem:[%s1 + $0x10] sm:$0xff]
  %v33 = vld [vmem:[%s1 + $0x18] sm:$0xff]
  %v34 = vld [vmem:[%s1 + $0x20] sm:$0xff]
  %v35 = vld [vmem:[%s1 + $0x28] sm:$0xff]
  %v36 = vld [vmem:[%s1 + $0x30] sm:$0xff]
  %v37 = vld [vmem:[%s1 + $0x38] sm:$0xff]
  %v38 = vld [vmem:[%s1 + $0x40] sm:$0xff]
  %v39 = vld [vmem:[%s1 + $0x48] sm:$0xff]
  %v40 = vld [vmem:[%s1 + $0x50] sm:$0xff]
  %v41 = vld [vmem:[%s1 + $0x58] sm:$0xff]
  %v42 = vld [vmem:[%s1 + $0x60] sm:$0xff]
  %v43 = vld [vmem:[%s1 + $0x68] sm:$0xff]
  %v44 = vld [vmem:[%s1 + $0x70] sm:$0xff]
  %v45 = vld [vmem:[%s1 + $0x78] sm:$0xff]
  %v46 = vld [vmem:[%s1 + $0x80] sm:$0xff]
  %v47 = vld [vmem:[%s1 + $0x88] sm:$0xff]
  %v48 = vld [vmem:[%s1 + $0x90] sm:$0xff]
  %v49 = vld [vmem:[%s1 + $0x98] sm:$0xff]
  %v50 = vld [vmem:[%s1 + $0xa0] sm:$0xff]
  %v51 = vld [vmem:[%s1 + $0xa8] sm:$0xff]
  %v52 = vld [vmem:[%s1 + $0xb0] sm:$0xff]
  %v53 = vld [vmem:[%s1 + $0xb8] sm:$0xff]
  %v54 = vld [vmem:[%s1 + $0xc0] sm:$0xff]
  %v55 = vld [vmem:[%s1 + $0xc8] sm:$0xff]
  %v56 = vld [vmem:[%s1 + $0xd0] sm:$0xff]
  %v57 = vld [vmem:[%s1 + $0xd8] sm:$0xff]
  %v58 = vld [vmem:[%s1 + $0xe0] sm:$0xff]
  %v59 = vld [vmem:[%s1 + $0xe8] sm:$0xff]
  %v60 = vld [vmem:[%s1 + $0xf0] sm:$0xff]
  %v61 = vld [vmem:[%s1 + $0xf8] sm:$0xff]
  %v62 = vld [vmem:[%s2] sm:$0x3]
  %v64 = vlaneseq
  %v65 = vshrl.u32 %v64, 7
  %v66 = vsub.s32 0, %v65
  %v67 = vrot.slane %v62, %v66
  %v68 = vlaneseq
  %v69 = vshrl.u32 %v68, 7
  %v70 = vsub.s32 1, %v69
  %v71 = vrot.slane %v62, %v70
  %74 = vmatprep.subr.mxu0 %v31
  %75 = vmatpush1.msra.mxu0 %v30
  %76 = vmatprep.subr.mxu0 %v33
  %77 = vmatpush1.msra.mxu0 %v32
  %78 = vmatprep.subr.mxu0 %v35
  %79 = vmatpush1.msra.mxu0 %v34
  %80 = vmatprep.subr.mxu0 %v37
  %81 = vmatpush1.msra.mxu0 %v36
  %82 = vmatprep.subr.mxu0 %v39
  %83 = vmatpush1.msra.mxu0 %v38
  %84 = vmatprep.subr.mxu0 %v41
  %85 = vmatpush1.msra.mxu0 %v40
  %86 = vmatprep.subr.mxu0 %v43
  %87 = vmatpush1.msra.mxu0 %v42
  %88 = vmatprep.subr.mxu0 %v45
  %89 = vmatpush1.msra.mxu0 %v44
  %90 = vmatprep.subr.mxu0 %v47
  %91 = vmatpush1.msra.mxu0 %v46
  %92 = vmatprep.subr.mxu0 %v49
  %93 = vmatpush1.msra.mxu0 %v48
  %94 = vmatprep.subr.mxu0 %v51
  %95 = vmatpush1.msra.mxu0 %v50
  %96 = vmatprep.subr.mxu0 %v53
  %97 = vmatpush1.msra.mxu0 %v52
  %98 = vmatprep.subr.mxu0 %v55
  %99 = vmatpush1.msra.mxu0 %v54
  %100 = vmatprep.subr.mxu0 %v57
  %101 = vmatpush1.msra.mxu0 %v56
  %102 = vmatprep.subr.mxu0 %v59
  %103 = vmatpush1.msra.mxu0 %v58
  %104 = vmatprep.subr.mxu0 %v61
  %105 = vmatpush1.msra.mxu0 %v60
  %106 = vmatprep.subr.mxu0 0.0
  %107 = vmatpush1.msra.mxu0 0.0
  %108 = vmatprep.subr.mxu0 0.0
  %109 = vmatpush1.msra.mxu0 0.0
  %110 = vmatprep.subr.mxu0 0.0
  %111 = vmatpush1.msra.mxu0 0.0
  %112 = vmatprep.subr.mxu0 0.0
  %113 = vmatpush1.msra.mxu0 0.0
  %114 = vmatprep.subr.mxu0 0.0
  %115 = vmatpush1.msra.mxu0 0.0
  %116 = vmatprep.subr.mxu0 0.0
  %117 = vmatpush1.msra.mxu0 0.0
  %118 = vmatprep.subr.mxu0 0.0
  %119 = vmatpush1.msra.mxu0 0.0
  %120 = vmatprep.subr.mxu0 0.0
  %121 = vmatpush1.msra.mxu0 0.0
  %122 = vmatprep.subr.mxu0 0.0
  %123 = vmatpush1.msra.mxu0 0.0
  %124 = vmatprep.subr.mxu0 0.0
  %125 = vmatpush1.msra.mxu0 0.0
  %126 = vmatprep.subr.mxu0 0.0
  %127 = vmatpush1.msra.mxu0 0.0
  %128 = vmatprep.subr.mxu0 0.0
  %129 = vmatpush1.msra.mxu0 0.0
  %130 = vmatprep.subr.mxu0 0.0
  %131 = vmatpush1.msra.mxu0 0.0
  %132 = vmatprep.subr.mxu0 0.0
  %133 = vmatpush1.msra.mxu0 0.0
  %134 = vmatprep.subr.mxu0 0.0
  %135 = vmatpush1.msra.mxu0 0.0
  %136 = vmatprep.subr.mxu0 0.0
  %137 = vmatpush1.msra.mxu0 0.0
  %138 = vmatprep.mubr.f32.mxu0 0.0
  %139 = vmatmul.mubr.f32.gmra.mrb[0].mxu0 %v26
  %v140 = vpop.f32.mrb[0].mxu0
  %v141 = vadd.f32 %v67, %v140
  %v142 = vpop.f32.mrb[0].mxu0
  %v143 = vadd.f32 %v71, %v142
  %144 = vmatprep.mubr.f32.mxu0 0.0
  %145 = vmatmul.mubr.f32.gmra.mrb[0].mxu0 %v27
  %v146 = vpop.f32.mrb[0].mxu0
  %v147 = vadd.f32 %v67, %v146
  %v148 = vpop.f32.mrb[0].mxu0
  %v149 = vadd.f32 %v71, %v148
  %150 = vmatprep.mubr.f32.mxu0 0.0
  %151 = vmatmul.mubr.f32.gmra.mrb[0].mxu0 %v28
  %v152 = vpop.f32.mrb[0].mxu0
  %v153 = vadd.f32 %v67, %v152
  %v154 = vpop.f32.mrb[0].mxu0
  %v155 = vadd.f32 %v71, %v154
  %156 = vmatprep.mubr.f32.mxu0 0.0
  %157 = vmatmul.mubr.f32.gmra.mrb[0].mxu0 %v29
  %v158 = vpop.f32.mrb[0].mxu0
  %v159 = vadd.f32 %v67, %v158
  %v160 = vpop.f32.mrb[0].mxu0
  %v161 = vadd.f32 %v71, %v160
  %162 = vdwg.mxu0
  %v163 = vmul.f32 %v141, %v141
  %v164 = vmul.f32 %v143, %v143
  %v165 = vmul.f32 %v147, %v147
  %v166 = vmul.f32 %v149, %v149
  %v167 = vmul.f32 %v153, %v153
  %v168 = vmul.f32 %v155, %v155
  %v169 = vmul.f32 %v159, %v159
  %v170 = vmul.f32 %v161, %v161
  %v171 = vmul.f32 %v141, %v163
  %v172 = vmul.f32 %v143, %v164
  %v173 = vmul.f32 %v147, %v165
  %v174 = vmul.f32 %v149, %v166
  %v175 = vmul.f32 %v153, %v167
  %v176 = vmul.f32 %v155, %v168
  %v177 = vmul.f32 %v159, %v169
  %v178 = vmul.f32 %v161, %v170
  %v179 = vmul.f32 %v171, 0.044715
  %v180 = vmul.f32 %v172, 0.044715
  %v181 = vmul.f32 %v173, 0.044715
  %v182 = vmul.f32 %v174, 0.044715
  %v183 = vmul.f32 %v175, 0.044715
  %v184 = vmul.f32 %v176, 0.044715
  %v185 = vmul.f32 %v177, 0.044715
  %v186 = vmul.f32 %v178, 0.044715
  %v187 = vadd.f32 %v141, %v179
  %v188 = vadd.f32 %v143, %v180
  %v189 = vadd.f32 %v147, %v181
  %v190 = vadd.f32 %v149, %v182
  %v191 = vadd.f32 %v153, %v183
  %v192 = vadd.f32 %v155, %v184
  %v193 = vadd.f32 %v159, %v185
  %v194 = vadd.f32 %v161, %v186
  %v195 = vmul.f32 %v187, 0.7978846
  %v196 = vmul.f32 %v188, 0.7978846
  %v197 = vmul.f32 %v189, 0.7978846
  %v198 = vmul.f32 %v190, 0.7978846
  %v199 = vmul.f32 %v191, 0.7978846
  %v200 = vmul.f32 %v192, 0.7978846
  %v201 = vmul.f32 %v193, 0.7978846
  %v202 = vmul.f32 %v194, 0.7978846
  %v203 = vtanh.pop %v195
  %v204 = vtanh.pop %v196
  %v205 = vtanh.pop %v197
  %v206 = vtanh.pop %v198
  %v207 = vtanh.pop %v199
  %v208 = vtanh.pop %v200
  %v209 = vtanh.pop %v201
  %v210 = vtanh.pop %v202
  %v211 = vadd.f32 %v203, 1.0
  %v212 = vadd.f32 %v204, 1.0
  %v213 = vadd.f32 %v205, 1.0
  %v214 = vadd.f32 %v206, 1.0
  %v215 = vadd.f32 %v207, 1.0
  %v216 = vadd.f32 %v208, 1.0
  %v217 = vadd.f32 %v209, 1.0
  %v218 = vadd.f32 %v210, 1.0
  %v219 = vmul.f32 %v211, 0.5
  %v220 = vmul.f32 %v212, 0.5
  %v221 = vmul.f32 %v213, 0.5
  %v222 = vmul.f32 %v214, 0.5
  %v223 = vmul.f32 %v215, 0.5
  %v224 = vmul.f32 %v216, 0.5
  %v225 = vmul.f32 %v217, 0.5
  %v226 = vmul.f32 %v218, 0.5
  %v227 = vmul.f32 %v141, %v219
  %v228 = vmul.f32 %v143, %v220
  %v229 = vmul.f32 %v147, %v221
  %v230 = vmul.f32 %v149, %v222
  %v231 = vmul.f32 %v153, %v223
  %v232 = vmul.f32 %v155, %v224
  %v233 = vmul.f32 %v159, %v225
  %v234 = vmul.f32 %v161, %v226
  %v235 = vld [vmem:[%s3] sm:$0xff]
  %v236 = vld [vmem:[%s3 + $0x8] sm:$0xff]
  %v237 = vld [vmem:[%s3 + $0x10] sm:$0xff]
  %v238 = vld [vmem:[%s3 + $0x18] sm:$0xff]
  %v239 = vld [vmem:[%s3 + $0x20] sm:$0xff]
  %v240 = vld [vmem:[%s3 + $0x28] sm:$0xff]
  %v241 = vld [vmem:[%s3 + $0x30] sm:$0xff]
  %v242 = vld [vmem:[%s3 + $0x38] sm:$0xff]
  %v243 = vld [vmem:[%s3 + $0x40] sm:$0xff]
  %v244 = vld [vmem:[%s3 + $0x48] sm:$0xff]
  %v245 = vld [vmem:[%s3 + $0x50] sm:$0xff]
  %v246 = vld [vmem:[%s3 + $0x58] sm:$0xff]
  %v247 = vld [vmem:[%s3 + $0x60] sm:$0xff]
  %v248 = vld [vmem:[%s3 + $0x68] sm:$0xff]
  %v249 = vld [vmem:[%s3 + $0x70] sm:$0xff]
  %v250 = vld [vmem:[%s3 + $0x78] sm:$0xff]
  %v251 = vld [vmem:[%s3 + $0x80] sm:$0xff]
  %v252 = vld [vmem:[%s3 + $0x88] sm:$0xff]
  %v253 = vld [vmem:[%s3 + $0x90] sm:$0xff]
  %v254 = vld [vmem:[%s3 + $0x98] sm:$0xff]
  %v255 = vld [vmem:[%s3 + $0xa0] sm:$0xff]
  %v256 = vld [vmem:[%s3 + $0xa8] sm:$0xff]
  %v257 = vld [vmem:[%s3 + $0xb0] sm:$0xff]
  %v258 = vld [vmem:[%s3 + $0xb8] sm:$0xff]
  %v259 = vld [vmem:[%s3 + $0xc0] sm:$0xff]
  %v260 = vld [vmem:[%s3 + $0xc8] sm:$0xff]
  %v261 = vld [vmem:[%s3 + $0xd0] sm:$0xff]
  %v262 = vld [vmem:[%s3 + $0xd8] sm:$0xff]
  %v263 = vld [vmem:[%s3 + $0xe0] sm:$0xff]
  %v264 = vld [vmem:[%s3 + $0xe8] sm:$0xff]
  %v265 = vld [vmem:[%s3 + $0xf0] sm:$0xff]
  %v266 = vld [vmem:[%s3 + $0xf8] sm:$0xff]
  %v267 = vld [vmem:[%s4] sm:$0x1]
  %v269 = vlaneseq
  %v270 = vshrl.u32 %v269, 7
  %v271 = vsub.s32 0, %v270
  %v272 = vrot.slane %v267, %v271
  %274 = vmatprep.subr.mxu0 0.0
  %275 = vmatpush1.msra.mxu0 %v235
  %276 = vmatprep.subr.mxu0 0.0
  %277 = vmatpush1.msra.mxu0 %v236
  %278 = vmatprep.subr.mxu0 0.0
  %279 = vmatpush1.msra.mxu0 %v237
  %280 = vmatprep.subr.mxu0 0.0
  %281 = vmatpush1.msra.mxu0 %v238
  %282 = vmatprep.subr.mxu0 0.0
  %283 = vmatpush1.msra.mxu0 %v239
  %284 = vmatprep.subr.mxu0 0.0
  %285 = vmatpush1.msra.mxu0 %v240
  %286 = vmatprep.subr.mxu0 0.0
  %287 = vmatpush1.msra.mxu0 %v241
  %288 = vmatprep.subr.mxu0 0.0
  %289 = vmatpush1.msra.mxu0 %v242
  %290 = vmatprep.subr.mxu0 0.0
  %291 = vmatpush1.msra.mxu0 %v243
  %292 = vmatprep.subr.mxu0 0.0
  %293 = vmatpush1.msra.mxu0 %v244
  %294 = vmatprep.subr.mxu0 0.0
  %295 = vmatpush1.msra.mxu0 %v245
  %296 = vmatprep.subr.mxu0 0.0
  %297 = vmatpush1.msra.mxu0 %v246
  %298 = vmatprep.subr.mxu0 0.0
  %299 = vmatpush1.msra.mxu0 %v247
  %300 = vmatprep.subr.mxu0 0.0
  %301 = vmatpush1.msra.mxu0 %v248
  %302 = vmatprep.subr.mxu0 0.0
  %303 = vmatpush1.msra.mxu0 %v249
  %304 = vmatprep.subr.mxu0 0.0
  %305 = vmatpush1.msra.mxu0 %v250
  %306 = vmatprep.subr.mxu0 0.0
  %307 = vmatpush1.msra.mxu0 %v251
  %308 = vmatprep.subr.mxu0 0.0
  %309 = vmatpush1.msra.mxu0 %v252
  %310 = vmatprep.subr.mxu0 0.0
  %311 = vmatpush1.msra.mxu0 %v253
  %312 = vmatprep.subr.mxu0 0.0
  %313 = vmatpush1.msra.mxu0 %v254
  %314 = vmatprep.subr.mxu0 0.0
  %315 = vmatpush1.msra.mxu0 %v255
  %316 = vmatprep.subr.mxu0 0.0
  %317 = vmatpush1.msra.mxu0 %v256
  %318 = vmatprep.subr.mxu0 0.0
  %319 = vmatpush1.msra.mxu0 %v257
  %320 = vmatprep.subr.mxu0 0.0
  %321 = vmatpush1.msra.mxu0 %v258
  %322 = vmatprep.subr.mxu0 0.0
  %323 = vmatpush1.msra.mxu0 %v259
  %324 = vmatprep.subr.mxu0 0.0
  %325 = vmatpush1.msra.mxu0 %v260
  %326 = vmatprep.subr.mxu0 0.0
  %327 = vmatpush1.msra.mxu0 %v261
  %328 = vmatprep.subr.mxu0 0.0
  %329 = vmatpush1.msra.mxu0 %v262
  %330 = vmatprep.subr.mxu0 0.0
  %331 = vmatpush1.msra.mxu0 %v263
  %332 = vmatprep.subr.mxu0 0.0
  %333 = vmatpush1.msra.mxu0 %v264
  %334 = vmatprep.subr.mxu0 0.0
  %335 = vmatpush1.msra.mxu0 %v265
  %336 = vmatprep.subr.mxu0 0.0
  %337 = vmatpush1.msra.mxu0 %v266
  %338 = vmatprep.mubr.f32.mxu0 %v228
  %339 = vmatmul.mubr.f32.gmra.mrb[0].mxu0 %v227
  %v340 = vpop.f32.mrb[0].mxu0
  %v341 = vadd.f32 %v272, %v340
  %v342 = vpop.f32.mrb[0].mxu0
  %343 = vmatprep.mubr.f32.mxu0 %v230
  %344 = vmatmul.mubr.f32.gmra.mrb[0].mxu0 %v229
  %v345 = vpop.f32.mrb[0].mxu0
  %v346 = vadd.f32 %v272, %v345
  %v347 = vpop.f32.mrb[0].mxu0
  %348 = vmatprep.mubr.f32.mxu0 %v232
  %349 = vmatmul.mubr.f32.gmra.mrb[0].mxu0 %v231
  %v350 = vpop.f32.mrb[0].mxu0
  %v351 = vadd.f32 %v272, %v350
  %v352 = vpop.f32.mrb[0].mxu0
  %353 = vmatprep.mubr.f32.mxu0 %v234
  %354 = vmatmul.mubr.f32.gmra.mrb[0].mxu0 %v233
  %v355 = vpop.f32.mrb[0].mxu0
  %v356 = vadd.f32 %v272, %v355
  %v357 = vpop.f32.mrb[0].mxu0
  %358 = vdwg.mxu0
  %v359 = vadd.f32 %v341, %v26
  %v360 = vadd.f32 %v346, %v27
  %v361 = vadd.f32 %v351, %v28
  %v362 = vadd.f32 %v356, %v29
  %v363 = vld [vmem:[%s5] sm:$0x1]
  %v364 = vld [vmem:[%s6] sm:$0x1]
  %365 = vadd.xlane.f32.xlu0 %v359
  %v366 = vpop.xlane.xlu0 %365
  %367 = vadd.xlane.f32.xlu0 %v360
  %v368 = vpop.xlane.xlu0 %367
  %369 = vadd.xlane.f32.xlu0 %v361
  %v370 = vpop.xlane.xlu0 %369
  %371 = vadd.xlane.f32.xlu0 %v362
  %v372 = vpop.xlane.xlu0 %371
  %v373 = vrcp.pop 128.0
  %v374 = vmul.f32 %v366, %v373
  %v375 = vmul.f32 %v368, %v373
  %v376 = vmul.f32 %v370, %v373
  %v377 = vmul.f32 %v372, %v373
  %v378 = vsub.f32 %v359, %v374
  %v379 = vsub.f32 %v360, %v375
  %v380 = vsub.f32 %v361, %v376
  %v381 = vsub.f32 %v362, %v377
  %v382 = vmul.f32 %v378, %v378
  %v383 = vmul.f32 %v379, %v379
  %v384 = vmul.f32 %v380, %v380
  %v385 = vmul.f32 %v381, %v381
  %386 = vadd.xlane.f32.xlu0 %v382
  %v387 = vpop.xlane.xlu0 %386
  %388 = vadd.xlane.f32.xlu0 %v383
  %v389 = vpop.xlane.xlu0 %388
  %390 = vadd.xlane.f32.xlu0 %v384
  %v391 = vpop.xlane.xlu0 %390
  %392 = vadd.xlane.f32.xlu0 %v385
  %v393 = vpop.xlane.xlu0 %392
  %v394 = vmul.f32 %v387, %v373
  %v395 = vmul.f32 %v389, %v373
  %v396 = vmul.f32 %v391, %v373
  %v397 = vmul.f32 %v393, %v373
  %v398 = vadd.f32 %v394, 1e-12
  %v399 = vadd.f32 %v395, 1e-12
  %v400 = vadd.f32 %v396, 1e-12
  %v401 = vadd.f32 %v397, 1e-12
  %v402 = vrsqrt.pop %v398
  %v403 = vrsqrt.pop %v399
  %v404 = vrsqrt.pop %v400
  %v405 = vrsqrt.pop %v401
  %v406 = vmul.f32 %v378, %v402
  %v407 = vmul.f32 %v379, %v403
  %v408 = vmul.f32 %v380, %v404
  %v409 = vmul.f32 %v381, %v405
  %v411 = vlaneseq
  %v412 = vshrl.u32 %v411, 7
  %v413 = vsub.s32 0, %v412
  %v414 = vrot.slane %v363, %v413
  %v416 = vmul.f32 %v406, %v414
  %v417 = vmul.f32 %v407, %v414
  %v418 = vmul.f32 %v408, %v414
  %v419 = vmul.f32 %v409, %v414
  %v421 = vlaneseq
  %v422 = vshrl.u32 %v421, 7
  %v423 = vsub.s32 0, %v422
  %v424 = vrot.slane %v364, %v423
  %v426 = vadd.f32 %v416, %v424
  %v427 = vadd.f32 %v417, %v424
  %v428 = vadd.f32 %v418, %v424
  %v429 = vadd.f32 %v419, %v424
  %430 = vst [vmem:[%s7] sm:$0xff] %v426
  %431 = vst [vmem:[%s7 + $0x8] sm:$0xff] %v427
  %432 = vst [vmem:[%s7 + $0x10] sm:$0xff] %v428
  %433 = vst [vmem:[%s7 + $0x18] sm:$0xff] %v429
  // Predicated region
  $region30: #{ak_bert_forward.24} parent=0 // pred_check
    _
  $region31: #{ak_bert_forward.24} parent=0 // pred_check_branch
    %435 = sbr.rel (0) target = $region33
  $region32: #{ak_bert_forward.24} parent=0 // pred_region
    _
  $region33: #{ak_bert_forward.24} parent=0 // pred_fallthru
    _
  // Predicated region
  $region34: #{ak_bert_forward.24} parent=0 // pred_check
    _
  $region35: #{ak_bert_forward.24} parent=0 // pred_check_branch
    %437 = sbr.rel (0) target = $region37
  $region36: #{ak_bert_forward.24} parent=0 // pred_region
    _
  $region37: #{ak_bert_forward.24} parent=0 // pred_fallthru
    _

</llo_original>
